<compile_context>
chip_gen: v6e
topology: v6e:2x2x1
jax: 0.10.0
libtpu: 0.0.40
codegen_flags: <defaults>
</compile_context>

<pallas_src>
import functools

import jax
import jax.numpy as jnp
from jax import lax
from jax.experimental import pallas as pl
from jax.experimental.pallas import tpu as pltpu

# ----------------------------- model config (small) -------------------------
NODE_FEAT = 32        # Config.NODE_FEAT_DIM (scaled down)
GNN_HID = 32          # Config.GNN_HIDDEN_DIM (scaled down)
LSTM_HID = 32         # Config.LSTM_HIDDEN_DIM (scaled down)
NUM_CLASSES = 5       # Config.NUM_CLASSES
NUM_LSTM_LAYERS = 2   # Config.NUM_LSTM_LAYERS
LN_EPS = 1e-5
BN_EPS = 1e-5


def _round_up(x, m):
    return (x + m - 1) // m * m


_VMEM = pl.BlockSpec(memory_space=pltpu.MemorySpace.VMEM)


def _vmem_specs(n):
    return [pl.BlockSpec(memory_space=pltpu.MemorySpace.VMEM) for _ in range(n)]


# ------------------------------ Pallas kernels -------------------------------
def conv_bn_relu_kernel(p_ref, w_ref, shift_ref, o_ref):
    # BN scale is pre-folded into the weight columns; epilogue = + shift ; relu
    y = jnp.dot(p_ref[...], w_ref[...], preferred_element_type=jnp.float32)
    o_ref[...] = jnp.maximum(y + shift_ref[...], 0.0)


def conv_pool_kernel(p_ref, w_ref, shift_ref, pool_ref, o_ref, *, inv_len):
    # conv3 (im2col matmul, BN folded) + shift + ReLU + AdaptiveAvgPool1d(1)
    y = jnp.maximum(
        jnp.dot(p_ref[...], w_ref[...], preferred_element_type=jnp.float32)
        + shift_ref[...], 0.0)
    # mean over the l_out time positions of each series via a ones-matrix matmul
    o_ref[...] = jnp.dot(pool_ref[...], y.astype(jnp.bfloat16),
                         preferred_element_type=jnp.float32) * inv_len


def gcn_fused_kernel(h_ref, a_ref, p_ref, w1_ref, b1_ref, w2_ref, b2_ref,
                     g_ref, be_ref, o_ref):
    # Fused: gcn1 -> ReLU -> gcn2 -> LayerNorm -> mean over nodes (per graph).
    # a_ref is a tiny block-diagonal normalized adjacency for this block of graphs
    # (bf16), p_ref is the (graphs x nodes) mean-pooling matrix (bf16); every dot
    # is bf16 x bf16 with f32 accumulation.
    h = h_ref[...]                                                   # (tg*C, F) bf16
    a = a_ref[...]                                                   # (tg*C, tg*C) bf16
    hw = jnp.dot(h, w1_ref[...], preferred_element_type=jnp.float32)
    h1 = jnp.maximum(
        jnp.dot(a, hw.astype(jnp.bfloat16), preferred_element_type=jnp.float32)
        + b1_ref[...], 0.0)
    hw2 = jnp.dot(h1.astype(jnp.bfloat16), w2_ref[...],
                  preferred_element_type=jnp.float32)
    h2 = (jnp.dot(a, hw2.astype(jnp.bfloat16), preferred_element_type=jnp.float32)
          + b2_ref[...])
    # LayerNorm over features
    mu = jnp.mean(h2, axis=-1, keepdims=True)
    xc = h2 - mu
    var = jnp.mean(xc * xc, axis=-1, keepdims=True)
    hn = xc * lax.rsqrt(var + LN_EPS) * g_ref[...] + be_ref[...]
    # mean over nodes per graph as a tiny pooling matmul -> (tg, H)
    o_ref[...] = jnp.dot(p_ref[...], hn.astype(jnp.bfloat16),
                         preferred_element_type=jnp.float32)


def lstm_head_kernel(*refs, seq, bsz, hidden, num_layers, eps):
    # Fused 2-layer BiLSTM + LayerNorm + classifier.  refs layout:
    #   [0]            x (S*B, In0) f32, time-major rows (row = t*B + b)
    #   per layer l:   wih_f (In,4H) bf16, wih_b (In,4H) bf16,
    #                  whhm = blockdiag(Whh_f, Whh_b) (2H,8H) bf16,
    #                  bias_f (1,4H) f32, bias_b (1,4H) f32
    #   tail:          ln_g (1,2H), ln_b (1,2H), cls_w (2H,classes) bf16,
    #                  cls_b (1,classes); out (S*B, classes) f32
    x_ref = refs[0]
    lrefs = refs[1:1 + 5 * num_layers]
    ln_g_ref, ln_b_ref, cls_w_ref, cls_b_ref = refs[1 + 5 * num_layers:
                                                    5 + 5 * num_layers]
    out_ref = refs[5 + 5 * num_layers]

    h3 = 3 * hidden
    h4 = 4 * hidden
    seq_x = x_ref[...].astype(jnp.bfloat16)                 # (S*B, In)
    seq_y = None
    for l in range(num_layers):
        wih_f = lrefs[5 * l + 0][...]
        wih_b = lrefs[5 * l + 1][...]
        whhm = lrefs[5 * l + 2][...]
        b_f = lrefs[5 * l + 3][...]
        b_b = lrefs[5 * l + 4][...]

        # Hoisted input projection: one MXU matmul per direction for all S steps;
        # only the recurrent matmul + cell math stay on the serial critical path.
        xw_f = jnp.dot(seq_x, wih_f, preferred_element_type=jnp.float32) + b_f
        xw_b = jnp.dot(seq_x, wih_b, preferred_element_type=jnp.float32) + b_b

        hf = jnp.zeros((bsz, hidden), jnp.float32)
        hb = jnp.zeros((bsz, hidden), jnp.float32)
        cf = jnp.zeros((bsz, hidden), jnp.float32)
        cb = jnp.zeros((bsz, hidden), jnp.float32)
        fwd = [None] * seq
        bwd = [None] * seq
        # Static unroll over S: the fwd and bwd chains are independent, so the
        # scheduler interleaves them (hiding MXU/EUP latency of one behind the
        # VPU work of the other).
        for t in range(seq):
            rt = seq - 1 - t
            hcat = jnp.concatenate([hf, hb], axis=-1).astype(jnp.bfloat16)
            rec = jnp.dot(hcat, whhm, preferred_element_type=jnp.float32)  # (B, 8H)
            gate_f = rec[:, :h4] + xw_f[t * bsz:(t + 1) * bsz]
            gate_b = rec[:, h4:] + xw_b[rt * bsz:(rt + 1) * bsz]
            # [i, f, o, g] column order: one sigmoid over 3H lanes, one tanh over H.
            sf = jax.nn.sigmoid(gate_f[:, :h3])
            gf = jnp.tanh(gate_f[:, h3:])
            sb = jax.nn.sigmoid(gate_b[:, :h3])
            gb = jnp.tanh(gate_b[:, h3:])
            cf = sf[:, hidden:2 * hidden] * cf + sf[:, :hidden] * gf
            hf = sf[:, 2 * hidden:] * jnp.tanh(cf)
            cb = sb[:, hidden:2 * hidden] * cb + sb[:, :hidden] * gb
            hb = sb[:, 2 * hidden:] * jnp.tanh(cb)
            fwd[t] = hf
            bwd[rt] = hb
        # lane-dense (S*B, 2H) layer output assembled on chip (no HBM round trip)
        seq_y = jnp.concatenate(
            [jnp.concatenate([fwd[t], bwd[t]], axis=-1) for t in range(seq)],
            axis=0)
        seq_x = seq_y.astype(jnp.bfloat16)   # inter-layer dropout = identity (eval)

    # Fused LayerNorm + classifier.
    mu = jnp.mean(seq_y, axis=-1, keepdims=True)
    yc = seq_y - mu
    var = jnp.mean(yc * yc, axis=-1, keepdims=True)
    yn = yc * lax.rsqrt(var + eps) * ln_g_ref[...] + ln_b_ref[...]
    out_ref[...] = (jnp.dot(yn.astype(jnp.bfloat16), cls_w_ref[...],
                            preferred_element_type=jnp.float32) + cls_b_ref[...])


# ------------------------------ kernel wrappers -------------------------------
def conv_bn_relu(patches, w, shift, tm=1024):
    """patches: (M, K*Cin) bf16 ; w: (K*Cin, Cout) bf16 (BN folded) ; shift: (1, Cout)."""
    m, kdim = patches.shape
    cout = w.shape[1]
    tm = min(tm, _round_up(m, 8))
    m_pad = _round_up(m, tm)
    if m_pad != m:
        patches = jnp.pad(patches, ((0, m_pad - m), (0, 0)))
    out = pl.pallas_call(
        conv_bn_relu_kernel,
        out_shape=jax.ShapeDtypeStruct((m_pad, cout), jnp.float32),
        grid=(m_pad // tm,),
        in_specs=[pl.BlockSpec((tm, kdim), lambda i: (i, 0)),
                  pl.BlockSpec((kdim, cout), lambda i: (0, 0)),
                  pl.BlockSpec((1, cout), lambda i: (0, 0))],
        out_specs=pl.BlockSpec((tm, cout), lambda i: (i, 0)),
        compiler_params=pltpu.CompilerParams(dimension_semantics=("parallel",)),
    )(patches, w, shift)
    return out[:m]


def conv3_avgpool(patches, w, shift, pool, n_series, l_out):
    """Fused conv3+BN+ReLU+AdaptiveAvgPool1d(1): patches (n*l_out, K*Cin) bf16 -> (n, Cout)."""
    cout = w.shape[1]
    return pl.pallas_call(
        functools.partial(conv_pool_kernel, inv_len=1.0 / l_out),
        out_shape=jax.ShapeDtypeStruct((n_series, cout), jnp.float32),
        in_specs=_vmem_specs(4),
        out_specs=_VMEM,
    )(patches, w, shift, pool)


def gcn_stack(node_feat, a_norm, params, n_graphs, c, tg=8):
    """node_feat: (n_graphs*c, F) -> graph embeddings (n_graphs, GNN_HID)."""
    tg = min(tg, n_graphs)
    g_pad = _round_up(n_graphs, tg)
    h = node_feat
    if g_pad != n_graphs:
        h = jnp.pad(h, ((0, (g_pad - n_graphs) * c), (0, 0)))
    h = h.astype(jnp.bfloat16)
    # tiny per-block block-diagonal adjacency and node-mean pooling matrix (bf16)
    a_blk = jnp.kron(jnp.eye(tg, dtype=jnp.float32), a_norm).astype(jnp.bfloat16)
    pool = jnp.kron(jnp.eye(tg, dtype=jnp.float32),
                    jnp.full((1, c), 1.0 / c, jnp.float32)).astype(jnp.bfloat16)
    out = pl.pallas_call(
        gcn_fused_kernel,
        out_shape=jax.ShapeDtypeStruct((g_pad, GNN_HID), jnp.float32),
        grid=(g_pad // tg,),
        in_specs=[
            pl.BlockSpec((tg * c, NODE_FEAT), lambda i: (i, 0)),
            pl.BlockSpec((tg * c, tg * c), lambda i: (0, 0)),
            pl.BlockSpec((tg, tg * c), lambda i: (0, 0)),
            pl.BlockSpec((NODE_FEAT, GNN_HID), lambda i: (0, 0)),
            pl.BlockSpec((1, GNN_HID), lambda i: (0, 0)),
            pl.BlockSpec((GNN_HID, GNN_HID), lambda i: (0, 0)),
            pl.BlockSpec((1, GNN_HID), lambda i: (0, 0)),
            pl.BlockSpec((1, GNN_HID), lambda i: (0, 0)),
            pl.BlockSpec((1, GNN_HID), lambda i: (0, 0)),
        ],
        out_specs=pl.BlockSpec((tg, GNN_HID), lambda i: (i, 0)),
        compiler_params=pltpu.CompilerParams(dimension_semantics=("parallel",)),
    )(h, a_blk, pool, params['gcn1_w'], params['gcn1_b'],
      params['gcn2_w'], params['gcn2_b'], params['gnn_ln_g'], params['gnn_ln_b'])
    return out[:n_graphs]


def lstm_head(x_tm, lstm_layers, ln_g, ln_b, cls_w, cls_b, *, seq, bsz):
    """x_tm: (S*B, In) time-major -> logits (S*B, NUM_CLASSES). One pallas_call."""
    args = [x_tm]
    for lp in lstm_layers:
        args += [lp['wih_f'], lp['wih_b'], lp['whhm'], lp['bf'], lp['bb']]
    args += [ln_g, ln_b, cls_w, cls_b]
    return pl.pallas_call(
        functools.partial(lstm_head_kernel, seq=seq, bsz=bsz, hidden=LSTM_HID,
                          num_layers=len(lstm_layers), eps=LN_EPS),
        out_shape=jax.ShapeDtypeStruct((seq * bsz, NUM_CLASSES), jnp.float32),
        in_specs=_vmem_specs(len(args)),
        out_specs=_VMEM,
    )(*args)


# ------------------------------ plain-JAX glue --------------------------------
# TODO(synk): im2col patches are still materialized in HBM and the two maxpools run
# as plain-JAX glue; fusing them into the conv kernels (and a VPU direct conv for
# layer 1) is left for a later pass.
def im2col_1d(x, kernel, stride, pad):
    """x: (N, L, Cin) channels-last -> (N*L_out, K*Cin) bf16, L_out.
    Patch layout is (K, Cin); the matching permutation is folded into the weight."""
    n, l, c = x.shape
    x_pad = jnp.pad(x, ((0, 0), (pad, pad), (0, 0)))
    l_out = (l + 2 * pad - kernel) // stride + 1
    idx = jnp.arange(l_out)[:, None] * stride + jnp.arange(kernel)[None, :]
    patches = x_pad[:, idx, :]                       # (N, L_out, K, Cin)
    return patches.reshape(n * l_out, kernel * c).astype(jnp.bfloat16), l_out


def maxpool1d(x, k=3, s=3):
    """x: (N, L, C), stride == kernel (nn.MaxPool1d(3, 3))."""
    n, l, c = x.shape
    l_out = (l - k) // s + 1
    return jnp.max(x[:, :l_out * k, :].reshape(n, l_out, k, c), axis=2)


def gcn_norm(edge_index, n_nodes):
    """Dense symmetric-normalized adjacency with self loops (GCNConv semantics)."""
    src, dst = edge_index[0], edge_index[1]
    a = jnp.zeros((n_nodes, n_nodes), jnp.float32).at[dst, src].add(1.0)
    a = a + jnp.eye(n_nodes, dtype=jnp.float32)
    deg = jnp.sum(a, axis=1)
    dinv = jnp.where(deg > 0, 1.0 / jnp.sqrt(deg), 0.0)
    return a * dinv[:, None] * dinv[None, :]


# ------------------------------ forward pass ----------------------------------
def forward(params, x, edge_index_batched):
    """x: (B, S, C, T) float32; edge_index_batched: (B, 2, E) int32."""
    b, s, c, t = x.shape
    edge_index = edge_index_batched[0]               # mirrors batch['edge_index'][0]

    # Time-major ordering up front so the GCN output rows are already (s, b) and
    # feed the fused LSTM head without a mid-pipeline transpose.
    x_sm = jnp.transpose(x, (1, 0, 2, 3))            # (S, B, C, T)

    # ---- channel CNN (each channel of each epoch is an independent 1-ch series)
    n = b * s * c
    xc = x_sm.reshape(n, t, 1)                       # (N, L, Cin=1) channels-last
    p1, l1 = im2col_1d(xc, 7, 2, 3)
    h = conv_bn_relu(p1, params['conv1_w'], params['conv1_shift'])
    h = maxpool1d(h.reshape(n, l1, 16))
    p2, l2 = im2col_1d(h, 5, 2, 2)
    h = conv_bn_relu(p2, params['conv2_w'], params['conv2_shift'])
    h = maxpool1d(h.reshape(n, l2, 32))
    p3, l3 = im2col_1d(h, 3, 1, 1)
    # conv3 + BN + ReLU + AdaptiveAvgPool1d(1) fused into one kernel
    pool3 = jnp.kron(jnp.eye(n, dtype=jnp.float32),
                     jnp.ones((1, l3), jnp.float32)).astype(jnp.bfloat16)
    node_feat = conv3_avgpool(p3, params['conv3_w'], params['conv3_shift'],
                              pool3, n, l3)          # (N, NODE_FEAT)

    # ---- fused GCN (gcn1 + relu + gcn2 + LayerNorm + mean-over-nodes)
    n_graphs = s * b
    a_norm = gcn_norm(edge_index, c)
    graph_emb = gcn_stack(node_feat, a_norm, params, n_graphs, c)   # (S*B, GNN_HID)

    # ---- fused 2-layer BiLSTM + LayerNorm + classifier (single pallas_call)
    logits = lstm_head(graph_emb, params['lstm'], params['lstm_ln_g'],
                       params['lstm_ln_b'], params['cls_w'], params['cls_b'],
                       seq=s, bsz=b)                 # (S*B, NUM_CLASSES) time-major
    return jnp.transpose(logits.reshape(s, b, NUM_CLASSES), (1, 0, 2))


# ------------------------------ parameter init --------------------------------
def init_params(key):
    keys = jax.random.split(key, 64)
    kit = iter(keys)

    def xavier(shape, fan_in, fan_out):
        lim = (6.0 / (fan_in + fan_out)) ** 0.5
        return jax.random.uniform(next(kit), shape, jnp.float32, -lim, lim)

    p = {}

    # conv weights: PyTorch layout (Cout, Cin, K) -> (K*Cin, Cout) matching the
    # im2col (K, Cin) patch order; BN (eval-mode default stats) scale folded in.
    def conv_params(name, cout, cin, k):
        w = xavier((cout, cin, k), cin * k, cout * k)
        w_mat = jnp.transpose(w, (2, 1, 0)).reshape(k * cin, cout)
        gamma = jnp.ones((cout,), jnp.float32)
        beta = jnp.zeros((cout,), jnp.float32)
        mean = jnp.zeros((cout,), jnp.float32)
        var = jnp.ones((cout,), jnp.float32)
        scale = gamma / jnp.sqrt(var + BN_EPS)
        shift = beta - mean * scale                  # conv bias (0) folded too
        p[f'{name}_w'] = (w_mat * scale[None, :]).astype(jnp.bfloat16)
        p[f'{name}_shift'] = shift.reshape(1, cout)

    conv_params('conv1', 16, 1, 7)
    conv_params('conv2', 32, 16, 5)
    conv_params('conv3', NODE_FEAT, 32, 3)

    # GCN layers (weight stored (in, out), bf16 for the MXU)
    p['gcn1_w'] = xavier((NODE_FEAT, GNN_HID), NODE_FEAT, GNN_HID).astype(jnp.bfloat16)
    p['gcn1_b'] = jnp.zeros((1, GNN_HID), jnp.float32)
    p['gcn2_w'] = xavier((GNN_HID, GNN_HID), GNN_HID, GNN_HID).astype(jnp.bfloat16)
    p['gcn2_b'] = jnp.zeros((1, GNN_HID), jnp.float32)
    p['gnn_ln_g'] = jnp.ones((1, GNN_HID), jnp.float32)
    p['gnn_ln_b'] = jnp.zeros((1, GNN_HID), jnp.float32)

    # LSTM: xavier W_ih, orthogonal W_hh, zero biases.  Gate columns are stored in
    # [i, f, o, g] order (one sigmoid over 3H, one tanh over H); the fwd/bwd
    # recurrent weights are packed block-diagonally into one (2H, 8H) matrix so
    # both directions share a single MXU matmul per timestep.
    orth = jax.nn.initializers.orthogonal()
    layers = []
    for layer in range(NUM_LSTM_LAYERS):
        in_dim = GNN_HID if layer == 0 else 2 * LSTM_HID

        def direction():
            wih = xavier((4 * LSTM_HID, in_dim), in_dim, 4 * LSTM_HID)
            whh = orth(next(kit), (4 * LSTM_HID, LSTM_HID), jnp.float32)
            return jnp.transpose(wih), jnp.transpose(whh)     # (In,4H), (H,4H)

        wih_f, whh_f = direction()
        wih_b, whh_b = direction()
        whhm = jnp.zeros((2 * LSTM_HID, 8 * LSTM_HID), jnp.float32)
        whhm = whhm.at[:LSTM_HID, :4 * LSTM_HID].set(whh_f)
        whhm = whhm.at[LSTM_HID:, 4 * LSTM_HID:].set(whh_b)
        layers.append({
            'wih_f': wih_f.astype(jnp.bfloat16),
            'wih_b': wih_b.astype(jnp.bfloat16),
            'whhm': whhm.astype(jnp.bfloat16),
            'bf': jnp.zeros((1, 4 * LSTM_HID), jnp.float32),  # b_ih + b_hh
            'bb': jnp.zeros((1, 4 * LSTM_HID), jnp.float32),
        })
    p['lstm'] = layers

    p['lstm_ln_g'] = jnp.ones((1, 2 * LSTM_HID), jnp.float32)
    p['lstm_ln_b'] = jnp.zeros((1, 2 * LSTM_HID), jnp.float32)
    p['cls_w'] = xavier((2 * LSTM_HID, NUM_CLASSES),
                        2 * LSTM_HID, NUM_CLASSES).astype(jnp.bfloat16)
    p['cls_b'] = jnp.zeros((1, NUM_CLASSES), jnp.float32)
    return p


# ----------------------------------- main --------------------------------------
if __name__ == "__main__":
    key = jax.random.PRNGKey(0)
    kp, kx = jax.random.split(key)
    params = init_params(kp)

    B, S, C, T = 2, 8, 4, 128          # batch, seq_length, num_channels, time_points
    x = jax.random.normal(kx, (B, S, C, T), jnp.float32)

    # fully-connected (no self-loop) edge list, batched like a DataLoader: (B, 2, E)
    src = [i for i in range(C) for j in range(C) if i != j]
    dst = [j for i in range(C) for j in range(C) if i != j]
    edge_index_single = jnp.array([src, dst], dtype=jnp.int32)
    edge_index = jnp.broadcast_to(edge_index_single, (B,) + edge_index_single.shape)

    out = jax.jit(forward)(params, x, edge_index)
    out = jax.block_until_ready(out)
    assert out.shape == (B, S, NUM_CLASSES) and out.dtype == jnp.float32
    assert bool(jnp.all(jnp.isfinite(out)))
    print("KERNEL_OK")
</pallas_src>

<mosaic_0001>
module attributes {stable_mosaic.version = 11 : i64} {
  func.func @conv_bn_relu_kernel(%arg0: i32, %arg1: memref<1024x7xbf16, #tpu.memory_space<vmem>>, %arg2: memref<7x16xbf16, #tpu.memory_space<vmem>>, %arg3: memref<1x16xf32, #tpu.memory_space<vmem>>, %arg4: memref<1024x16xf32, #tpu.memory_space<vmem>>) attributes {dimension_semantics = [#tpu.dimension_semantics<parallel>], iteration_bounds = array<i64: 4>, scalar_prefetch = 0 : i64, scratch_operands = 0 : i64, tpu.core_type = #tpu.core_type<tc>, window_params = [{transform_indices = @transform_0, window_bounds = array<i64: 1024, 7>}, {pipeline_mode = #tpu.pipeline_mode<synchronous>, transform_indices = @transform_1, window_bounds = array<i64: 7, 16>}, {pipeline_mode = #tpu.pipeline_mode<synchronous>, transform_indices = @transform_2, window_bounds = array<i64: 1, 16>}, {transform_indices = @transform_3, window_bounds = array<i64: 1024, 16>}]} {
    %c0 = arith.constant 0 : index
    %c0_0 = arith.constant 0 : index
    %0 = vector.load %arg1[%c0, %c0_0] : memref<1024x7xbf16, #tpu.memory_space<vmem>>, vector<1024x7xbf16>
    %c0_1 = arith.constant 0 : index
    %c0_2 = arith.constant 0 : index
    %1 = vector.load %arg2[%c0_1, %c0_2] : memref<7x16xbf16, #tpu.memory_space<vmem>>, vector<7x16xbf16>
    %cst = arith.constant dense<0.000000e+00> : vector<1024x16xf32>
    %2 = tpu.matmul %0, %1, %cst {dimension_numbers = #tpu.dot_dimension_numbers<[1], [0], [0], [1], [0, 0, 1, 1], [], []>} : vector<1024x7xbf16>, vector<7x16xbf16>, vector<1024x16xf32> -> vector<1024x16xf32>
    %c0_3 = arith.constant 0 : index
    %c0_4 = arith.constant 0 : index
    %3 = vector.load %arg3[%c0_3, %c0_4] : memref<1x16xf32, #tpu.memory_space<vmem>>, vector<1x16xf32>
    %4 = vector.broadcast %3 : vector<1x16xf32> to vector<1024x16xf32>
    %5 = arith.addf %2, %4 : vector<1024x16xf32>
    %cst_5 = arith.constant 0.000000e+00 : f32
    %6 = vector.broadcast %cst_5 : f32 to vector<1024x16xf32>
    %7 = arith.maximumf %5, %6 : vector<1024x16xf32>
    %c0_6 = arith.constant 0 : index
    %c0_7 = arith.constant 0 : index
    %8 = vector.load %arg4[%c0_6, %c0_7] : memref<1024x16xf32, #tpu.memory_space<vmem>>, vector<1024x16xf32>
    tpu.vector_store %arg4[%c0_6, %c0_7], %7 {strides = array<i32>} : memref<1024x16xf32, #tpu.memory_space<vmem>>, vector<1024x16xf32>,
    return
  }
  func.func @transform_0(%arg0: i32) -> (i32, i32) {
    %c0_i32 = arith.constant 0 : i32
    %c0_i32_0 = arith.constant 0 : i32
    return %arg0, %c0_i32 : i32, i32
  }
  func.func @transform_1(%arg0: i32) -> (i32, i32) {
    %c0_i32 = arith.constant 0 : i32
    %c0_i32_0 = arith.constant 0 : i32
    %c0_i32_1 = arith.constant 0 : i32
    return %c0_i32, %c0_i32_0 : i32, i32
  }
  func.func @transform_2(%arg0: i32) -> (i32, i32) {
    %c0_i32 = arith.constant 0 : i32
    %c0_i32_0 = arith.constant 0 : i32
    %c0_i32_1 = arith.constant 0 : i32
    return %c0_i32, %c0_i32_0 : i32, i32
  }
  func.func @transform_3(%arg0: i32) -> (i32, i32) {
    %c0_i32 = arith.constant 0 : i32
    %c0_i32_0 = arith.constant 0 : i32
    return %arg0, %c0_i32 : i32, i32
  }
}

module attributes {stable_mosaic.version = 11 : i64} {
  func.func @conv_bn_relu_kernel(%arg0: i32, %arg1: memref<704x80xbf16, #tpu.memory_space<vmem>>, %arg2: memref<80x32xbf16, #tpu.memory_space<vmem>>, %arg3: memref<1x32xf32, #tpu.memory_space<vmem>>, %arg4: memref<704x32xf32, #tpu.memory_space<vmem>>) attributes {dimension_semantics = [#tpu.dimension_semantics<parallel>], iteration_bounds = array<i64: 1>, scalar_prefetch = 0 : i64, scratch_operands = 0 : i64, tpu.core_type = #tpu.core_type<tc>, window_params = [{transform_indices = @transform_0, window_bounds = array<i64: 704, 80>}, {pipeline_mode = #tpu.pipeline_mode<synchronous>, transform_indices = @transform_1, window_bounds = array<i64: 80, 32>}, {pipeline_mode = #tpu.pipeline_mode<synchronous>, transform_indices = @transform_2, window_bounds = array<i64: 1, 32>}, {transform_indices = @transform_3, window_bounds = array<i64: 704, 32>}]} {
    %c0 = arith.constant 0 : index
    %c0_0 = arith.constant 0 : index
    %0 = vector.load %arg1[%c0, %c0_0] : memref<704x80xbf16, #tpu.memory_space<vmem>>, vector<704x80xbf16>
    %c0_1 = arith.constant 0 : index
    %c0_2 = arith.constant 0 : index
    %1 = vector.load %arg2[%c0_1, %c0_2] : memref<80x32xbf16, #tpu.memory_space<vmem>>, vector<80x32xbf16>
    %cst = arith.constant dense<0.000000e+00> : vector<704x32xf32>
    %2 = tpu.matmul %0, %1, %cst {dimension_numbers = #tpu.dot_dimension_numbers<[1], [0], [0], [1], [0, 0, 1, 1], [], []>} : vector<704x80xbf16>, vector<80x32xbf16>, vector<704x32xf32> -> vector<704x32xf32>
    %c0_3 = arith.constant 0 : index
    %c0_4 = arith.constant 0 : index
    %3 = vector.load %arg3[%c0_3, %c0_4] : memref<1x32xf32, #tpu.memory_space<vmem>>, vector<1x32xf32>
    %4 = vector.broadcast %3 : vector<1x32xf32> to vector<704x32xf32>
    %5 = arith.addf %2, %4 : vector<704x32xf32>
    %cst_5 = arith.constant 0.000000e+00 : f32
    %6 = vector.broadcast %cst_5 : f32 to vector<704x32xf32>
    %7 = arith.maximumf %5, %6 : vector<704x32xf32>
    %c0_6 = arith.constant 0 : index
    %c0_7 = arith.constant 0 : index
    %8 = vector.load %arg4[%c0_6, %c0_7] : memref<704x32xf32, #tpu.memory_space<vmem>>, vector<704x32xf32>
    tpu.vector_store %arg4[%c0_6, %c0_7], %7 {strides = array<i32>} : memref<704x32xf32, #tpu.memory_space<vmem>>, vector<704x32xf32>,
    return
  }
  func.func @transform_0(%arg0: i32) -> (i32, i32) {
    %c0_i32 = arith.constant 0 : i32
    %c0_i32_0 = arith.constant 0 : i32
    return %arg0, %c0_i32 : i32, i32
  }
  func.func @transform_1(%arg0: i32) -> (i32, i32) {
    %c0_i32 = arith.constant 0 : i32
    %c0_i32_0 = arith.constant 0 : i32
    %c0_i32_1 = arith.constant 0 : i32
    return %c0_i32, %c0_i32_0 : i32, i32
  }
  func.func @transform_2(%arg0: i32) -> (i32, i32) {
    %c0_i32 = arith.constant 0 : i32
    %c0_i32_0 = arith.constant 0 : i32
    %c0_i32_1 = arith.constant 0 : i32
    return %c0_i32, %c0_i32_0 : i32, i32
  }
  func.func @transform_3(%arg0: i32) -> (i32, i32) {
    %c0_i32 = arith.constant 0 : i32
    %c0_i32_0 = arith.constant 0 : i32
    return %arg0, %c0_i32 : i32, i32
  }
}

module attributes {stable_mosaic.version = 11 : i64} {
  func.func @conv_pool_kernel(%arg0: memref<192x96xbf16, #tpu.memory_space<vmem>>, %arg1: memref<96x32xbf16, #tpu.memory_space<vmem>>, %arg2: memref<1x32xf32, #tpu.memory_space<vmem>>, %arg3: memref<64x192xbf16, #tpu.memory_space<vmem>>, %arg4: memref<64x32xf32, #tpu.memory_space<vmem>>) attributes {dimension_semantics = [], scalar_prefetch = 0 : i64, scratch_operands = 0 : i64, tpu.core_type = #tpu.core_type<tc>} {
    %c0 = arith.constant 0 : index
    %c0_0 = arith.constant 0 : index
    %0 = vector.load %arg0[%c0, %c0_0] : memref<192x96xbf16, #tpu.memory_space<vmem>>, vector<192x96xbf16>
    %c0_1 = arith.constant 0 : index
    %c0_2 = arith.constant 0 : index
    %1 = vector.load %arg1[%c0_1, %c0_2] : memref<96x32xbf16, #tpu.memory_space<vmem>>, vector<96x32xbf16>
    %cst = arith.constant dense<0.000000e+00> : vector<192x32xf32>
    %2 = tpu.matmul %0, %1, %cst {dimension_numbers = #tpu.dot_dimension_numbers<[1], [0], [0], [1], [0, 0, 1, 1], [], []>} : vector<192x96xbf16>, vector<96x32xbf16>, vector<192x32xf32> -> vector<192x32xf32>
    %c0_3 = arith.constant 0 : index
    %c0_4 = arith.constant 0 : index
    %3 = vector.load %arg2[%c0_3, %c0_4] : memref<1x32xf32, #tpu.memory_space<vmem>>, vector<1x32xf32>
    %4 = vector.broadcast %3 : vector<1x32xf32> to vector<192x32xf32>
    %5 = arith.addf %2, %4 : vector<192x32xf32>
    %cst_5 = arith.constant 0.000000e+00 : f32
    %6 = vector.broadcast %cst_5 : f32 to vector<192x32xf32>
    %7 = arith.maximumf %5, %6 : vector<192x32xf32>
    %c0_6 = arith.constant 0 : index
    %c0_7 = arith.constant 0 : index
    %8 = vector.load %arg3[%c0_6, %c0_7] : memref<64x192xbf16, #tpu.memory_space<vmem>>, vector<64x192xbf16>
    %9 = arith.truncf %7 : vector<192x32xf32> to vector<192x32xbf16>
    %cst_8 = arith.constant dense<0.000000e+00> : vector<64x32xf32>
    %10 = tpu.matmul %8, %9, %cst_8 {dimension_numbers = #tpu.dot_dimension_numbers<[1], [0], [0], [1], [0, 0, 1, 1], [], []>} : vector<64x192xbf16>, vector<192x32xbf16>, vector<64x32xf32> -> vector<64x32xf32>
    %cst_9 = arith.constant 0.333333343 : f32
    %11 = vector.broadcast %cst_9 : f32 to vector<64x32xf32>
    %12 = arith.mulf %10, %11 : vector<64x32xf32>
    %c0_10 = arith.constant 0 : index
    %c0_11 = arith.constant 0 : index
    %13 = vector.load %arg4[%c0_10, %c0_11] : memref<64x32xf32, #tpu.memory_space<vmem>>, vector<64x32xf32>
    tpu.vector_store %arg4[%c0_10, %c0_11], %12 {strides = array<i32>} : memref<64x32xf32, #tpu.memory_space<vmem>>, vector<64x32xf32>,
    return
  }
}

module attributes {stable_mosaic.version = 11 : i64} {
  func.func @gcn_fused_kernel(%arg0: i32, %arg1: memref<32x32xbf16, #tpu.memory_space<vmem>>, %arg2: memref<32x32xbf16, #tpu.memory_space<vmem>>, %arg3: memref<8x32xbf16, #tpu.memory_space<vmem>>, %arg4: memref<32x32xbf16, #tpu.memory_space<vmem>>, %arg5: memref<1x32xf32, #tpu.memory_space<vmem>>, %arg6: memref<32x32xbf16, #tpu.memory_space<vmem>>, %arg7: memref<1x32xf32, #tpu.memory_space<vmem>>, %arg8: memref<1x32xf32, #tpu.memory_space<vmem>>, %arg9: memref<1x32xf32, #tpu.memory_space<vmem>>, %arg10: memref<8x32xf32, #tpu.memory_space<vmem>>) attributes {dimension_semantics = [#tpu.dimension_semantics<parallel>], iteration_bounds = array<i64: 2>, scalar_prefetch = 0 : i64, scratch_operands = 0 : i64, tpu.core_type = #tpu.core_type<tc>, window_params = [{transform_indices = @transform_0, window_bounds = array<i64: 32, 32>}, {pipeline_mode = #tpu.pipeline_mode<synchronous>, transform_indices = @transform_1, window_bounds = array<i64: 32, 32>}, {pipeline_mode = #tpu.pipeline_mode<synchronous>, transform_indices = @transform_2, window_bounds = array<i64: 8, 32>}, {pipeline_mode = #tpu.pipeline_mode<synchronous>, transform_indices = @transform_3, window_bounds = array<i64: 32, 32>}, {pipeline_mode = #tpu.pipeline_mode<synchronous>, transform_indices = @transform_4, window_bounds = array<i64: 1, 32>}, {pipeline_mode = #tpu.pipeline_mode<synchronous>, transform_indices = @transform_5, window_bounds = array<i64: 32, 32>}, {pipeline_mode = #tpu.pipeline_mode<synchronous>, transform_indices = @transform_6, window_bounds = array<i64: 1, 32>}, {pipeline_mode = #tpu.pipeline_mode<synchronous>, transform_indices = @transform_7, window_bounds = array<i64: 1, 32>}, {pipeline_mode = #tpu.pipeline_mode<synchronous>, transform_indices = @transform_8, window_bounds = array<i64: 1, 32>}, {transform_indices = @transform_9, window_bounds = array<i64: 8, 32>}]} {
    %c0 = arith.constant 0 : index
    %c0_0 = arith.constant 0 : index
    %0 = vector.load %arg1[%c0, %c0_0] : memref<32x32xbf16, #tpu.memory_space<vmem>>, vector<32x32xbf16>
    %c0_1 = arith.constant 0 : index
    %c0_2 = arith.constant 0 : index
    %1 = vector.load %arg2[%c0_1, %c0_2] : memref<32x32xbf16, #tpu.memory_space<vmem>>, vector<32x32xbf16>
    %c0_3 = arith.constant 0 : index
    %c0_4 = arith.constant 0 : index
    %2 = vector.load %arg4[%c0_3, %c0_4] : memref<32x32xbf16, #tpu.memory_space<vmem>>, vector<32x32xbf16>
    %cst = arith.constant dense<0.000000e+00> : vector<32x32xf32>
    %3 = tpu.matmul %0, %2, %cst {dimension_numbers = #tpu.dot_dimension_numbers<[1], [0], [0], [1], [0, 0, 1, 1], [], []>} : vector<32x32xbf16>, vector<32x32xbf16>, vector<32x32xf32> -> vector<32x32xf32>
    %4 = arith.truncf %3 : vector<32x32xf32> to vector<32x32xbf16>
    %cst_5 = arith.constant dense<0.000000e+00> : vector<32x32xf32>
    %5 = tpu.matmul %1, %4, %cst_5 {dimension_numbers = #tpu.dot_dimension_numbers<[1], [0], [0], [1], [0, 0, 1, 1], [], []>} : vector<32x32xbf16>, vector<32x32xbf16>, vector<32x32xf32> -> vector<32x32xf32>
    %c0_6 = arith.constant 0 : index
    %c0_7 = arith.constant 0 : index
    %6 = vector.load %arg5[%c0_6, %c0_7] : memref<1x32xf32, #tpu.memory_space<vmem>>, vector<1x32xf32>
    %7 = vector.broadcast %6 : vector<1x32xf32> to vector<32x32xf32>
    %8 = arith.addf %5, %7 : vector<32x32xf32>
    %cst_8 = arith.constant 0.000000e+00 : f32
    %9 = vector.broadcast %cst_8 : f32 to vector<32x32xf32>
    %10 = arith.maximumf %8, %9 : vector<32x32xf32>
    %11 = arith.truncf %10 : vector<32x32xf32> to vector<32x32xbf16>
    %c0_9 = arith.constant 0 : index
    %c0_10 = arith.constant 0 : index
    %12 = vector.load %arg6[%c0_9, %c0_10] : memref<32x32xbf16, #tpu.memory_space<vmem>>, vector<32x32xbf16>
    %cst_11 = arith.constant dense<0.000000e+00> : vector<32x32xf32>
    %13 = tpu.matmul %11, %12, %cst_11 {dimension_numbers = #tpu.dot_dimension_numbers<[1], [0], [0], [1], [0, 0, 1, 1], [], []>} : vector<32x32xbf16>, vector<32x32xbf16>, vector<32x32xf32> -> vector<32x32xf32>
    %14 = arith.truncf %13 : vector<32x32xf32> to vector<32x32xbf16>
    %cst_12 = arith.constant dense<0.000000e+00> : vector<32x32xf32>
    %15 = tpu.matmul %1, %14, %cst_12 {dimension_numbers = #tpu.dot_dimension_numbers<[1], [0], [0], [1], [0, 0, 1, 1], [], []>} : vector<32x32xbf16>, vector<32x32xbf16>, vector<32x32xf32> -> vector<32x32xf32>
    %c0_13 = arith.constant 0 : index
    %c0_14 = arith.constant 0 : index
    %16 = vector.load %arg7[%c0_13, %c0_14] : memref<1x32xf32, #tpu.memory_space<vmem>>, vector<1x32xf32>
    %17 = vector.broadcast %16 : vector<1x32xf32> to vector<32x32xf32>
    %18 = arith.addf %15, %17 : vector<32x32xf32>
    %cst_15 = arith.constant dense<0.000000e+00> : vector<32xf32>
    %19 = vector.multi_reduction <add>, %18, %cst_15 [1] : vector<32x32xf32> to vector<32xf32>
    %20 = vector.shape_cast %19 : vector<32xf32> to vector<32x1xf32>
    %cst_16 = arith.constant 3.200000e+01 : f32
    %21 = vector.broadcast %cst_16 : f32 to vector<32x1xf32>
    %22 = arith.divf %20, %21 : vector<32x1xf32>
    %23 = vector.broadcast %22 : vector<32x1xf32> to vector<32x32xf32>
    %24 = arith.subf %18, %23 : vector<32x32xf32>
    %25 = arith.mulf %24, %24 : vector<32x32xf32>
    %cst_17 = arith.constant dense<0.000000e+00> : vector<32xf32>
    %26 = vector.multi_reduction <add>, %25, %cst_17 [1] : vector<32x32xf32> to vector<32xf32>
    %27 = vector.shape_cast %26 : vector<32xf32> to vector<32x1xf32>
    %cst_18 = arith.constant 3.200000e+01 : f32
    %28 = vector.broadcast %cst_18 : f32 to vector<32x1xf32>
    %29 = arith.divf %27, %28 : vector<32x1xf32>
    %cst_19 = arith.constant 9.99999974E-6 : f32
    %30 = vector.broadcast %cst_19 : f32 to vector<32x1xf32>
    %31 = arith.addf %29, %30 : vector<32x1xf32>
    %32 = math.rsqrt %31 : vector<32x1xf32>
    %33 = vector.broadcast %32 : vector<32x1xf32> to vector<32x32xf32>
    %34 = arith.mulf %24, %33 : vector<32x32xf32>
    %c0_20 = arith.constant 0 : index
    %c0_21 = arith.constant 0 : index
    %35 = vector.load %arg8[%c0_20, %c0_21] : memref<1x32xf32, #tpu.memory_space<vmem>>, vector<1x32xf32>
    %36 = vector.broadcast %35 : vector<1x32xf32> to vector<32x32xf32>
    %37 = arith.mulf %34, %36 : vector<32x32xf32>
    %c0_22 = arith.constant 0 : index
    %c0_23 = arith.constant 0 : index
    %38 = vector.load %arg9[%c0_22, %c0_23] : memref<1x32xf32, #tpu.memory_space<vmem>>, vector<1x32xf32>
    %39 = vector.broadcast %38 : vector<1x32xf32> to vector<32x32xf32>
    %40 = arith.addf %37, %39 : vector<32x32xf32>
    %c0_24 = arith.constant 0 : index
    %c0_25 = arith.constant 0 : index
    %41 = vector.load %arg3[%c0_24, %c0_25] : memref<8x32xbf16, #tpu.memory_space<vmem>>, vector<8x32xbf16>
    %42 = arith.truncf %40 : vector<32x32xf32> to vector<32x32xbf16>
    %cst_26 = arith.constant dense<0.000000e+00> : vector<8x32xf32>
    %43 = tpu.matmul %41, %42, %cst_26 {dimension_numbers = #tpu.dot_dimension_numbers<[1], [0], [0], [1], [0, 0, 1, 1], [], []>} : vector<8x32xbf16>, vector<32x32xbf16>, vector<8x32xf32> -> vector<8x32xf32>
    %c0_27 = arith.constant 0 : index
    %c0_28 = arith.constant 0 : index
    %44 = vector.load %arg10[%c0_27, %c0_28] : memref<8x32xf32, #tpu.memory_space<vmem>>, vector<8x32xf32>
    tpu.vector_store %arg10[%c0_27, %c0_28], %43 {strides = array<i32>} : memref<8x32xf32, #tpu.memory_space<vmem>>, vector<8x32xf32>,
    return
  }
  func.func @transform_0(%arg0: i32) -> (i32, i32) {
    %c0_i32 = arith.constant 0 : i32
    %c0_i32_0 = arith.constant 0 : i32
    return %arg0, %c0_i32 : i32, i32
  }
  func.func @transform_1(%arg0: i32) -> (i32, i32) {
    %c0_i32 = arith.constant 0 : i32
    %c0_i32_0 = arith.constant 0 : i32
    %c0_i32_1 = arith.constant 0 : i32
    return %c0_i32, %c0_i32_0 : i32, i32
  }
  func.func @transform_2(%arg0: i32) -> (i32, i32) {
    %c0_i32 = arith.constant 0 : i32
    %c0_i32_0 = arith.constant 0 : i32
    %c0_i32_1 = arith.constant 0 : i32
    return %c0_i32, %c0_i32_0 : i32, i32
  }
  func.func @transform_3(%arg0: i32) -> (i32, i32) {
    %c0_i32 = arith.constant 0 : i32
    %c0_i32_0 = arith.constant 0 : i32
    %c0_i32_1 = arith.constant 0 : i32
    return %c0_i32, %c0_i32_0 : i32, i32
  }
  func.func @transform_4(%arg0: i32) -> (i32, i32) {
    %c0_i32 = arith.constant 0 : i32
    %c0_i32_0 = arith.constant 0 : i32
    %c0_i32_1 = arith.constant 0 : i32
    return %c0_i32, %c0_i32_0 : i32, i32
  }
  func.func @transform_5(%arg0: i32) -> (i32, i32) {
    %c0_i32 = arith.constant 0 : i32
    %c0_i32_0 = arith.constant 0 : i32
    %c0_i32_1 = arith.constant 0 : i32
    return %c0_i32, %c0_i32_0 : i32, i32
  }
  func.func @transform_6(%arg0: i32) -> (i32, i32) {
    %c0_i32 = arith.constant 0 : i32
    %c0_i32_0 = arith.constant 0 : i32
    %c0_i32_1 = arith.constant 0 : i32
    return %c0_i32, %c0_i32_0 : i32, i32
  }
  func.func @transform_7(%arg0: i32) -> (i32, i32) {
    %c0_i32 = arith.constant 0 : i32
    %c0_i32_0 = arith.constant 0 : i32
    %c0_i32_1 = arith.constant 0 : i32
    return %c0_i32, %c0_i32_0 : i32, i32
  }
  func.func @transform_8(%arg0: i32) -> (i32, i32) {
    %c0_i32 = arith.constant 0 : i32
    %c0_i32_0 = arith.constant 0 : i32
    %c0_i32_1 = arith.constant 0 : i32
    return %c0_i32, %c0_i32_0 : i32, i32
  }
  func.func @transform_9(%arg0: i32) -> (i32, i32) {
    %c0_i32 = arith.constant 0 : i32
    %c0_i32_0 = arith.constant 0 : i32
    return %arg0, %c0_i32 : i32, i32
  }
}

module attributes {stable_mosaic.version = 11 : i64} {
  func.func @lstm_head_kernel(%arg0: memref<16x32xf32, #tpu.memory_space<vmem>>, %arg1: memref<32x128xbf16, #tpu.memory_space<vmem>>, %arg2: memref<32x128xbf16, #tpu.memory_space<vmem>>, %arg3: memref<64x256xbf16, #tpu.memory_space<vmem>>, %arg4: memref<1x128xf32, #tpu.memory_space<vmem>>, %arg5: memref<1x128xf32, #tpu.memory_space<vmem>>, %arg6: memref<64x128xbf16, #tpu.memory_space<vmem>>, %arg7: memref<64x128xbf16, #tpu.memory_space<vmem>>, %arg8: memref<64x256xbf16, #tpu.memory_space<vmem>>, %arg9: memref<1x128xf32, #tpu.memory_space<vmem>>, %arg10: memref<1x128xf32, #tpu.memory_space<vmem>>, %arg11: memref<1x64xf32, #tpu.memory_space<vmem>>, %arg12: memref<1x64xf32, #tpu.memory_space<vmem>>, %arg13: memref<64x5xbf16, #tpu.memory_space<vmem>>, %arg14: memref<1x5xf32, #tpu.memory_space<vmem>>, %arg15: memref<16x5xf32, #tpu.memory_space<vmem>>) attributes {dimension_semantics = [], scalar_prefetch = 0 : i64, scratch_operands = 0 : i64, tpu.core_type = #tpu.core_type<tc>} {
    %c0 = arith.constant 0 : index
    %c0_0 = arith.constant 0 : index
    %0 = vector.load %arg0[%c0, %c0_0] : memref<16x32xf32, #tpu.memory_space<vmem>>, vector<16x32xf32>
    %1 = arith.truncf %0 : vector<16x32xf32> to vector<16x32xbf16>
    %c0_1 = arith.constant 0 : index
    %c0_2 = arith.constant 0 : index
    %2 = vector.load %arg1[%c0_1, %c0_2] : memref<32x128xbf16, #tpu.memory_space<vmem>>, vector<32x128xbf16>
    %c0_3 = arith.constant 0 : index
    %c0_4 = arith.constant 0 : index
    %3 = vector.load %arg2[%c0_3, %c0_4] : memref<32x128xbf16, #tpu.memory_space<vmem>>, vector<32x128xbf16>
    %c0_5 = arith.constant 0 : index
    %c0_6 = arith.constant 0 : index
    %4 = vector.load %arg3[%c0_5, %c0_6] : memref<64x256xbf16, #tpu.memory_space<vmem>>, vector<64x256xbf16>
    %c0_7 = arith.constant 0 : index
    %c0_8 = arith.constant 0 : index
    %5 = vector.load %arg4[%c0_7, %c0_8] : memref<1x128xf32, #tpu.memory_space<vmem>>, vector<1x128xf32>
    %c0_9 = arith.constant 0 : index
    %c0_10 = arith.constant 0 : index
    %6 = vector.load %arg5[%c0_9, %c0_10] : memref<1x128xf32, #tpu.memory_space<vmem>>, vector<1x128xf32>
    %cst = arith.constant dense<0.000000e+00> : vector<16x128xf32>
    %7 = tpu.matmul %1, %2, %cst {dimension_numbers = #tpu.dot_dimension_numbers<[1], [0], [0], [1], [0, 0, 1, 1], [], []>} : vector<16x32xbf16>, vector<32x128xbf16>, vector<16x128xf32> -> vector<16x128xf32>
    %8 = vector.broadcast %5 : vector<1x128xf32> to vector<16x128xf32>
    %9 = arith.addf %7, %8 : vector<16x128xf32>
    %cst_11 = arith.constant dense<0.000000e+00> : vector<16x128xf32>
    %10 = tpu.matmul %1, %3, %cst_11 {dimension_numbers = #tpu.dot_dimension_numbers<[1], [0], [0], [1], [0, 0, 1, 1], [], []>} : vector<16x32xbf16>, vector<32x128xbf16>, vector<16x128xf32> -> vector<16x128xf32>
    %11 = vector.broadcast %6 : vector<1x128xf32> to vector<16x128xf32>
    %12 = arith.addf %10, %11 : vector<16x128xf32>
    %cst_12 = arith.constant 0.000000e+00 : f32
    %13 = vector.broadcast %cst_12 : f32 to vector<2x32xf32>
    %cst_13 = arith.constant 0.000000e+00 : f32
    %14 = vector.broadcast %cst_13 : f32 to vector<2x32xf32>
    %cst_14 = arith.constant 0.000000e+00 : f32
    %15 = vector.broadcast %cst_14 : f32 to vector<2x32xf32>
    %cst_15 = arith.constant 0.000000e+00 : f32
    %16 = vector.broadcast %cst_15 : f32 to vector<2x32xf32>
    %17 = tpu.concatenate %13, %14 in 1 : vector<2x32xf32>, vector<2x32xf32> -> vector<2x64xf32>
    %18 = arith.truncf %17 : vector<2x64xf32> to vector<2x64xbf16>
    %cst_16 = arith.constant dense<0.000000e+00> : vector<2x256xf32>
    %19 = tpu.matmul %18, %4, %cst_16 {dimension_numbers = #tpu.dot_dimension_numbers<[1], [0], [0], [1], [0, 0, 1, 1], [], []>} : vector<2x64xbf16>, vector<64x256xbf16>, vector<2x256xf32> -> vector<2x256xf32>
    %20 = vector.extract_strided_slice %19 {offsets = [0, 0], sizes = [2, 128], strides = [1, 1]} : vector<2x256xf32> to vector<2x128xf32>
    %21 = vector.extract_strided_slice %9 {offsets = [0, 0], sizes = [2, 128], strides = [1, 1]} : vector<16x128xf32> to vector<2x128xf32>
    %22 = arith.addf %20, %21 : vector<2x128xf32>
    %23 = vector.extract_strided_slice %19 {offsets = [0, 128], sizes = [2, 128], strides = [1, 1]} : vector<2x256xf32> to vector<2x128xf32>
    %24 = vector.extract_strided_slice %12 {offsets = [14, 0], sizes = [2, 128], strides = [1, 1]} : vector<16x128xf32> to vector<2x128xf32>
    %25 = arith.addf %23, %24 : vector<2x128xf32>
    %26 = vector.extract_strided_slice %22 {offsets = [0, 0], sizes = [2, 96], strides = [1, 1]} : vector<2x128xf32> to vector<2x96xf32>
    %27 = arith.negf %26 : vector<2x96xf32>
    %28 = math.exp %27 : vector<2x96xf32>
    %cst_17 = arith.constant 1.000000e+00 : f32
    %29 = vector.broadcast %cst_17 : f32 to vector<2x96xf32>
    %30 = arith.addf %29, %28 : vector<2x96xf32>
    %31 = arith.divf %29, %30 : vector<2x96xf32>
    %32 = vector.extract_strided_slice %22 {offsets = [0, 96], sizes = [2, 32], strides = [1, 1]} : vector<2x128xf32> to vector<2x32xf32>
    %33 = math.tanh %32 : vector<2x32xf32>
    %34 = vector.extract_strided_slice %25 {offsets = [0, 0], sizes = [2, 96], strides = [1, 1]} : vector<2x128xf32> to vector<2x96xf32>
    %35 = arith.negf %34 : vector<2x96xf32>
    %36 = math.exp %35 : vector<2x96xf32>
    %cst_18 = arith.constant 1.000000e+00 : f32
    %37 = vector.broadcast %cst_18 : f32 to vector<2x96xf32>
    %38 = arith.addf %37, %36 : vector<2x96xf32>
    %39 = arith.divf %37, %38 : vector<2x96xf32>
    %40 = vector.extract_strided_slice %25 {offsets = [0, 96], sizes = [2, 32], strides = [1, 1]} : vector<2x128xf32> to vector<2x32xf32>
    %41 = math.tanh %40 : vector<2x32xf32>
    %42 = vector.extract_strided_slice %31 {offsets = [0, 32], sizes = [2, 32], strides = [1, 1]} : vector<2x96xf32> to vector<2x32xf32>
    %43 = arith.mulf %42, %15 : vector<2x32xf32>
    %44 = vector.extract_strided_slice %31 {offsets = [0, 0], sizes = [2, 32], strides = [1, 1]} : vector<2x96xf32> to vector<2x32xf32>
    %45 = arith.mulf %44, %33 : vector<2x32xf32>
    %46 = arith.addf %43, %45 : vector<2x32xf32>
    %47 = vector.extract_strided_slice %31 {offsets = [0, 64], sizes = [2, 32], strides = [1, 1]} : vector<2x96xf32> to vector<2x32xf32>
    %48 = math.tanh %46 : vector<2x32xf32>
    %49 = arith.mulf %47, %48 : vector<2x32xf32>
    %50 = vector.extract_strided_slice %39 {offsets = [0, 32], sizes = [2, 32], strides = [1, 1]} : vector<2x96xf32> to vector<2x32xf32>
    %51 = arith.mulf %50, %16 : vector<2x32xf32>
    %52 = vector.extract_strided_slice %39 {offsets = [0, 0], sizes = [2, 32], strides = [1, 1]} : vector<2x96xf32> to vector<2x32xf32>
    %53 = arith.mulf %52, %41 : vector<2x32xf32>
    %54 = arith.addf %51, %53 : vector<2x32xf32>
    %55 = vector.extract_strided_slice %39 {offsets = [0, 64], sizes = [2, 32], strides = [1, 1]} : vector<2x96xf32> to vector<2x32xf32>
    %56 = math.tanh %54 : vector<2x32xf32>
    %57 = arith.mulf %55, %56 : vector<2x32xf32>
    %58 = tpu.concatenate %49, %57 in 1 : vector<2x32xf32>, vector<2x32xf32> -> vector<2x64xf32>
    %59 = arith.truncf %58 : vector<2x64xf32> to vector<2x64xbf16>
    %cst_19 = arith.constant dense<0.000000e+00> : vector<2x256xf32>
    %60 = tpu.matmul %59, %4, %cst_19 {dimension_numbers = #tpu.dot_dimension_numbers<[1], [0], [0], [1], [0, 0, 1, 1], [], []>} : vector<2x64xbf16>, vector<64x256xbf16>, vector<2x256xf32> -> vector<2x256xf32>
    %61 = vector.extract_strided_slice %60 {offsets = [0, 0], sizes = [2, 128], strides = [1, 1]} : vector<2x256xf32> to vector<2x128xf32>
    %62 = vector.extract_strided_slice %9 {offsets = [2, 0], sizes = [2, 128], strides = [1, 1]} : vector<16x128xf32> to vector<2x128xf32>
    %63 = arith.addf %61, %62 : vector<2x128xf32>
    %64 = vector.extract_strided_slice %60 {offsets = [0, 128], sizes = [2, 128], strides = [1, 1]} : vector<2x256xf32> to vector<2x128xf32>
    %65 = vector.extract_strided_slice %12 {offsets = [12, 0], sizes = [2, 128], strides = [1, 1]} : vector<16x128xf32> to vector<2x128xf32>
    %66 = arith.addf %64, %65 : vector<2x128xf32>
    %67 = vector.extract_strided_slice %63 {offsets = [0, 0], sizes = [2, 96], strides = [1, 1]} : vector<2x128xf32> to vector<2x96xf32>
    %68 = arith.negf %67 : vector<2x96xf32>
    %69 = math.exp %68 : vector<2x96xf32>
    %cst_20 = arith.constant 1.000000e+00 : f32
    %70 = vector.broadcast %cst_20 : f32 to vector<2x96xf32>
    %71 = arith.addf %70, %69 : vector<2x96xf32>
    %72 = arith.divf %70, %71 : vector<2x96xf32>
    %73 = vector.extract_strided_slice %63 {offsets = [0, 96], sizes = [2, 32], strides = [1, 1]} : vector<2x128xf32> to vector<2x32xf32>
    %74 = math.tanh %73 : vector<2x32xf32>
    %75 = vector.extract_strided_slice %66 {offsets = [0, 0], sizes = [2, 96], strides = [1, 1]} : vector<2x128xf32> to vector<2x96xf32>
    %76 = arith.negf %75 : vector<2x96xf32>
    %77 = math.exp %76 : vector<2x96xf32>
    %cst_21 = arith.constant 1.000000e+00 : f32
    %78 = vector.broadcast %cst_21 : f32 to vector<2x96xf32>
    %79 = arith.addf %78, %77 : vector<2x96xf32>
    %80 = arith.divf %78, %79 : vector<2x96xf32>
    %81 = vector.extract_strided_slice %66 {offsets = [0, 96], sizes = [2, 32], strides = [1, 1]} : vector<2x128xf32> to vector<2x32xf32>
    %82 = math.tanh %81 : vector<2x32xf32>
    %83 = vector.extract_strided_slice %72 {offsets = [0, 32], sizes = [2, 32], strides = [1, 1]} : vector<2x96xf32> to vector<2x32xf32>
    %84 = arith.mulf %83, %46 : vector<2x32xf32>
    %85 = vector.extract_strided_slice %72 {offsets = [0, 0], sizes = [2, 32], strides = [1, 1]} : vector<2x96xf32> to vector<2x32xf32>
    %86 = arith.mulf %85, %74 : vector<2x32xf32>
    %87 = arith.addf %84, %86 : vector<2x32xf32>
    %88 = vector.extract_strided_slice %72 {offsets = [0, 64], sizes = [2, 32], strides = [1, 1]} : vector<2x96xf32> to vector<2x32xf32>
    %89 = math.tanh %87 : vector<2x32xf32>
    %90 = arith.mulf %88, %89 : vector<2x32xf32>
    %91 = vector.extract_strided_slice %80 {offsets = [0, 32], sizes = [2, 32], strides = [1, 1]} : vector<2x96xf32> to vector<2x32xf32>
    %92 = arith.mulf %91, %54 : vector<2x32xf32>
    %93 = vector.extract_strided_slice %80 {offsets = [0, 0], sizes = [2, 32], strides = [1, 1]} : vector<2x96xf32> to vector<2x32xf32>
    %94 = arith.mulf %93, %82 : vector<2x32xf32>
    %95 = arith.addf %92, %94 : vector<2x32xf32>
    %96 = vector.extract_strided_slice %80 {offsets = [0, 64], sizes = [2, 32], strides = [1, 1]} : vector<2x96xf32> to vector<2x32xf32>
    %97 = math.tanh %95 : vector<2x32xf32>
    %98 = arith.mulf %96, %97 : vector<2x32xf32>
    %99 = tpu.concatenate %90, %98 in 1 : vector<2x32xf32>, vector<2x32xf32> -> vector<2x64xf32>
    %100 = arith.truncf %99 : vector<2x64xf32> to vector<2x64xbf16>
    %cst_22 = arith.constant dense<0.000000e+00> : vector<2x256xf32>
    %101 = tpu.matmul %100, %4, %cst_22 {dimension_numbers = #tpu.dot_dimension_numbers<[1], [0], [0], [1], [0, 0, 1, 1], [], []>} : vector<2x64xbf16>, vector<64x256xbf16>, vector<2x256xf32> -> vector<2x256xf32>
    %102 = vector.extract_strided_slice %101 {offsets = [0, 0], sizes = [2, 128], strides = [1, 1]} : vector<2x256xf32> to vector<2x128xf32>
    %103 = vector.extract_strided_slice %9 {offsets = [4, 0], sizes = [2, 128], strides = [1, 1]} : vector<16x128xf32> to vector<2x128xf32>
    %104 = arith.addf %102, %103 : vector<2x128xf32>
    %105 = vector.extract_strided_slice %101 {offsets = [0, 128], sizes = [2, 128], strides = [1, 1]} : vector<2x256xf32> to vector<2x128xf32>
    %106 = vector.extract_strided_slice %12 {offsets = [10, 0], sizes = [2, 128], strides = [1, 1]} : vector<16x128xf32> to vector<2x128xf32>
    %107 = arith.addf %105, %106 : vector<2x128xf32>
    %108 = vector.extract_strided_slice %104 {offsets = [0, 0], sizes = [2, 96], strides = [1, 1]} : vector<2x128xf32> to vector<2x96xf32>
    %109 = arith.negf %108 : vector<2x96xf32>
    %110 = math.exp %109 : vector<2x96xf32>
    %cst_23 = arith.constant 1.000000e+00 : f32
    %111 = vector.broadcast %cst_23 : f32 to vector<2x96xf32>
    %112 = arith.addf %111, %110 : vector<2x96xf32>
    %113 = arith.divf %111, %112 : vector<2x96xf32>
    %114 = vector.extract_strided_slice %104 {offsets = [0, 96], sizes = [2, 32], strides = [1, 1]} : vector<2x128xf32> to vector<2x32xf32>
    %115 = math.tanh %114 : vector<2x32xf32>
    %116 = vector.extract_strided_slice %107 {offsets = [0, 0], sizes = [2, 96], strides = [1, 1]} : vector<2x128xf32> to vector<2x96xf32>
    %117 = arith.negf %116 : vector<2x96xf32>
    %118 = math.exp %117 : vector<2x96xf32>
    %cst_24 = arith.constant 1.000000e+00 : f32
    %119 = vector.broadcast %cst_24 : f32 to vector<2x96xf32>
    %120 = arith.addf %119, %118 : vector<2x96xf32>
    %121 = arith.divf %119, %120 : vector<2x96xf32>
    %122 = vector.extract_strided_slice %107 {offsets = [0, 96], sizes = [2, 32], strides = [1, 1]} : vector<2x128xf32> to vector<2x32xf32>
    %123 = math.tanh %122 : vector<2x32xf32>
    %124 = vector.extract_strided_slice %113 {offsets = [0, 32], sizes = [2, 32], strides = [1, 1]} : vector<2x96xf32> to vector<2x32xf32>
    %125 = arith.mulf %124, %87 : vector<2x32xf32>
    %126 = vector.extract_strided_slice %113 {offsets = [0, 0], sizes = [2, 32], strides = [1, 1]} : vector<2x96xf32> to vector<2x32xf32>
    %127 = arith.mulf %126, %115 : vector<2x32xf32>
    %128 = arith.addf %125, %127 : vector<2x32xf32>
    %129 = vector.extract_strided_slice %113 {offsets = [0, 64], sizes = [2, 32], strides = [1, 1]} : vector<2x96xf32> to vector<2x32xf32>
    %130 = math.tanh %128 : vector<2x32xf32>
    %131 = arith.mulf %129, %130 : vector<2x32xf32>
    %132 = vector.extract_strided_slice %121 {offsets = [0, 32], sizes = [2, 32], strides = [1, 1]} : vector<2x96xf32> to vector<2x32xf32>
    %133 = arith.mulf %132, %95 : vector<2x32xf32>
    %134 = vector.extract_strided_slice %121 {offsets = [0, 0], sizes = [2, 32], strides = [1, 1]} : vector<2x96xf32> to vector<2x32xf32>
    %135 = arith.mulf %134, %123 : vector<2x32xf32>
    %136 = arith.addf %133, %135 : vector<2x32xf32>
    %137 = vector.extract_strided_slice %121 {offsets = [0, 64], sizes = [2, 32], strides = [1, 1]} : vector<2x96xf32> to vector<2x32xf32>
    %138 = math.tanh %136 : vector<2x32xf32>
    %139 = arith.mulf %137, %138 : vector<2x32xf32>
    %140 = tpu.concatenate %131, %139 in 1 : vector<2x32xf32>, vector<2x32xf32> -> vector<2x64xf32>
    %141 = arith.truncf %140 : vector<2x64xf32> to vector<2x64xbf16>
    %cst_25 = arith.constant dense<0.000000e+00> : vector<2x256xf32>
    %142 = tpu.matmul %141, %4, %cst_25 {dimension_numbers = #tpu.dot_dimension_numbers<[1], [0], [0], [1], [0, 0, 1, 1], [], []>} : vector<2x64xbf16>, vector<64x256xbf16>, vector<2x256xf32> -> vector<2x256xf32>
    %143 = vector.extract_strided_slice %142 {offsets = [0, 0], sizes = [2, 128], strides = [1, 1]} : vector<2x256xf32> to vector<2x128xf32>
    %144 = vector.extract_strided_slice %9 {offsets = [6, 0], sizes = [2, 128], strides = [1, 1]} : vector<16x128xf32> to vector<2x128xf32>
    %145 = arith.addf %143, %144 : vector<2x128xf32>
    %146 = vector.extract_strided_slice %142 {offsets = [0, 128], sizes = [2, 128], strides = [1, 1]} : vector<2x256xf32> to vector<2x128xf32>
    %147 = vector.extract_strided_slice %12 {offsets = [8, 0], sizes = [2, 128], strides = [1, 1]} : vector<16x128xf32> to vector<2x128xf32>
    %148 = arith.addf %146, %147 : vector<2x128xf32>
    %149 = vector.extract_strided_slice %145 {offsets = [0, 0], sizes = [2, 96], strides = [1, 1]} : vector<2x128xf32> to vector<2x96xf32>
    %150 = arith.negf %149 : vector<2x96xf32>
    %151 = math.exp %150 : vector<2x96xf32>
    %cst_26 = arith.constant 1.000000e+00 : f32
    %152 = vector.broadcast %cst_26 : f32 to vector<2x96xf32>
    %153 = arith.addf %152, %151 : vector<2x96xf32>
    %154 = arith.divf %152, %153 : vector<2x96xf32>
    %155 = vector.extract_strided_slice %145 {offsets = [0, 96], sizes = [2, 32], strides = [1, 1]} : vector<2x128xf32> to vector<2x32xf32>
    %156 = math.tanh %155 : vector<2x32xf32>
    %157 = vector.extract_strided_slice %148 {offsets = [0, 0], sizes = [2, 96], strides = [1, 1]} : vector<2x128xf32> to vector<2x96xf32>
    %158 = arith.negf %157 : vector<2x96xf32>
    %159 = math.exp %158 : vector<2x96xf32>
    %cst_27 = arith.constant 1.000000e+00 : f32
    %160 = vector.broadcast %cst_27 : f32 to vector<2x96xf32>
    %161 = arith.addf %160, %159 : vector<2x96xf32>
    %162 = arith.divf %160, %161 : vector<2x96xf32>
    %163 = vector.extract_strided_slice %148 {offsets = [0, 96], sizes = [2, 32], strides = [1, 1]} : vector<2x128xf32> to vector<2x32xf32>
    %164 = math.tanh %163 : vector<2x32xf32>
    %165 = vector.extract_strided_slice %154 {offsets = [0, 32], sizes = [2, 32], strides = [1, 1]} : vector<2x96xf32> to vector<2x32xf32>
    %166 = arith.mulf %165, %128 : vector<2x32xf32>
    %167 = vector.extract_strided_slice %154 {offsets = [0, 0], sizes = [2, 32], strides = [1, 1]} : vector<2x96xf32> to vector<2x32xf32>
    %168 = arith.mulf %167, %156 : vector<2x32xf32>
    %169 = arith.addf %166, %168 : vector<2x32xf32>
    %170 = vector.extract_strided_slice %154 {offsets = [0, 64], sizes = [2, 32], strides = [1, 1]} : vector<2x96xf32> to vector<2x32xf32>
    %171 = math.tanh %169 : vector<2x32xf32>
    %172 = arith.mulf %170, %171 : vector<2x32xf32>
    %173 = vector.extract_strided_slice %162 {offsets = [0, 32], sizes = [2, 32], strides = [1, 1]} : vector<2x96xf32> to vector<2x32xf32>
    %174 = arith.mulf %173, %136 : vector<2x32xf32>
    %175 = vector.extract_strided_slice %162 {offsets = [0, 0], sizes = [2, 32], strides = [1, 1]} : vector<2x96xf32> to vector<2x32xf32>
    %176 = arith.mulf %175, %164 : vector<2x32xf32>
    %177 = arith.addf %174, %176 : vector<2x32xf32>
    %178 = vector.extract_strided_slice %162 {offsets = [0, 64], sizes = [2, 32], strides = [1, 1]} : vector<2x96xf32> to vector<2x32xf32>
    %179 = math.tanh %177 : vector<2x32xf32>
    %180 = arith.mulf %178, %179 : vector<2x32xf32>
    %181 = tpu.concatenate %172, %180 in 1 : vector<2x32xf32>, vector<2x32xf32> -> vector<2x64xf32>
    %182 = arith.truncf %181 : vector<2x64xf32> to vector<2x64xbf16>
    %cst_28 = arith.constant dense<0.000000e+00> : vector<2x256xf32>
    %183 = tpu.matmul %182, %4, %cst_28 {dimension_numbers = #tpu.dot_dimension_numbers<[1], [0], [0], [1], [0, 0, 1, 1], [], []>} : vector<2x64xbf16>, vector<64x256xbf16>, vector<2x256xf32> -> vector<2x256xf32>
    %184 = vector.extract_strided_slice %183 {offsets = [0, 0], sizes = [2, 128], strides = [1, 1]} : vector<2x256xf32> to vector<2x128xf32>
    %185 = vector.extract_strided_slice %9 {offsets = [8, 0], sizes = [2, 128], strides = [1, 1]} : vector<16x128xf32> to vector<2x128xf32>
    %186 = arith.addf %184, %185 : vector<2x128xf32>
    %187 = vector.extract_strided_slice %183 {offsets = [0, 128], sizes = [2, 128], strides = [1, 1]} : vector<2x256xf32> to vector<2x128xf32>
    %188 = vector.extract_strided_slice %12 {offsets = [6, 0], sizes = [2, 128], strides = [1, 1]} : vector<16x128xf32> to vector<2x128xf32>
    %189 = arith.addf %187, %188 : vector<2x128xf32>
    %190 = vector.extract_strided_slice %186 {offsets = [0, 0], sizes = [2, 96], strides = [1, 1]} : vector<2x128xf32> to vector<2x96xf32>
    %191 = arith.negf %190 : vector<2x96xf32>
    %192 = math.exp %191 : vector<2x96xf32>
    %cst_29 = arith.constant 1.000000e+00 : f32
    %193 = vector.broadcast %cst_29 : f32 to vector<2x96xf32>
    %194 = arith.addf %193, %192 : vector<2x96xf32>
    %195 = arith.divf %193, %194 : vector<2x96xf32>
    %196 = vector.extract_strided_slice %186 {offsets = [0, 96], sizes = [2, 32], strides = [1, 1]} : vector<2x128xf32> to vector<2x32xf32>
    %197 = math.tanh %196 : vector<2x32xf32>
    %198 = vector.extract_strided_slice %189 {offsets = [0, 0], sizes = [2, 96], strides = [1, 1]} : vector<2x128xf32> to vector<2x96xf32>
    %199 = arith.negf %198 : vector<2x96xf32>
    %200 = math.exp %199 : vector<2x96xf32>
    %cst_30 = arith.constant 1.000000e+00 : f32
    %201 = vector.broadcast %cst_30 : f32 to vector<2x96xf32>
    %202 = arith.addf %201, %200 : vector<2x96xf32>
    %203 = arith.divf %201, %202 : vector<2x96xf32>
    %204 = vector.extract_strided_slice %189 {offsets = [0, 96], sizes = [2, 32], strides = [1, 1]} : vector<2x128xf32> to vector<2x32xf32>
    %205 = math.tanh %204 : vector<2x32xf32>
    %206 = vector.extract_strided_slice %195 {offsets = [0, 32], sizes = [2, 32], strides = [1, 1]} : vector<2x96xf32> to vector<2x32xf32>
    %207 = arith.mulf %206, %169 : vector<2x32xf32>
    %208 = vector.extract_strided_slice %195 {offsets = [0, 0], sizes = [2, 32], strides = [1, 1]} : vector<2x96xf32> to vector<2x32xf32>
    %209 = arith.mulf %208, %197 : vector<2x32xf32>
    %210 = arith.addf %207, %209 : vector<2x32xf32>
    %211 = vector.extract_strided_slice %195 {offsets = [0, 64], sizes = [2, 32], strides = [1, 1]} : vector<2x96xf32> to vector<2x32xf32>
    %212 = math.tanh %210 : vector<2x32xf32>
    %213 = arith.mulf %211, %212 : vector<2x32xf32>
    %214 = vector.extract_strided_slice %203 {offsets = [0, 32], sizes = [2, 32], strides = [1, 1]} : vector<2x96xf32> to vector<2x32xf32>
    %215 = arith.mulf %214, %177 : vector<2x32xf32>
    %216 = vector.extract_strided_slice %203 {offsets = [0, 0], sizes = [2, 32], strides = [1, 1]} : vector<2x96xf32> to vector<2x32xf32>
    %217 = arith.mulf %216, %205 : vector<2x32xf32>
    %218 = arith.addf %215, %217 : vector<2x32xf32>
    %219 = vector.extract_strided_slice %203 {offsets = [0, 64], sizes = [2, 32], strides = [1, 1]} : vector<2x96xf32> to vector<2x32xf32>
    %220 = math.tanh %218 : vector<2x32xf32>
    %221 = arith.mulf %219, %220 : vector<2x32xf32>
    %222 = tpu.concatenate %213, %221 in 1 : vector<2x32xf32>, vector<2x32xf32> -> vector<2x64xf32>
    %223 = arith.truncf %222 : vector<2x64xf32> to vector<2x64xbf16>
    %cst_31 = arith.constant dense<0.000000e+00> : vector<2x256xf32>
    %224 = tpu.matmul %223, %4, %cst_31 {dimension_numbers = #tpu.dot_dimension_numbers<[1], [0], [0], [1], [0, 0, 1, 1], [], []>} : vector<2x64xbf16>, vector<64x256xbf16>, vector<2x256xf32> -> vector<2x256xf32>
    %225 = vector.extract_strided_slice %224 {offsets = [0, 0], sizes = [2, 128], strides = [1, 1]} : vector<2x256xf32> to vector<2x128xf32>
    %226 = vector.extract_strided_slice %9 {offsets = [10, 0], sizes = [2, 128], strides = [1, 1]} : vector<16x128xf32> to vector<2x128xf32>
    %227 = arith.addf %225, %226 : vector<2x128xf32>
    %228 = vector.extract_strided_slice %224 {offsets = [0, 128], sizes = [2, 128], strides = [1, 1]} : vector<2x256xf32> to vector<2x128xf32>
    %229 = vector.extract_strided_slice %12 {offsets = [4, 0], sizes = [2, 128], strides = [1, 1]} : vector<16x128xf32> to vector<2x128xf32>
    %230 = arith.addf %228, %229 : vector<2x128xf32>
    %231 = vector.extract_strided_slice %227 {offsets = [0, 0], sizes = [2, 96], strides = [1, 1]} : vector<2x128xf32> to vector<2x96xf32>
    %232 = arith.negf %231 : vector<2x96xf32>
    %233 = math.exp %232 : vector<2x96xf32>
    %cst_32 = arith.constant 1.000000e+00 : f32
    %234 = vector.broadcast %cst_32 : f32 to vector<2x96xf32>
    %235 = arith.addf %234, %233 : vector<2x96xf32>
    %236 = arith.divf %234, %235 : vector<2x96xf32>
    %237 = vector.extract_strided_slice %227 {offsets = [0, 96], sizes = [2, 32], strides = [1, 1]} : vector<2x128xf32> to vector<2x32xf32>
    %238 = math.tanh %237 : vector<2x32xf32>
    %239 = vector.extract_strided_slice %230 {offsets = [0, 0], sizes = [2, 96], strides = [1, 1]} : vector<2x128xf32> to vector<2x96xf32>
    %240 = arith.negf %239 : vector<2x96xf32>
    %241 = math.exp %240 : vector<2x96xf32>
    %cst_33 = arith.constant 1.000000e+00 : f32
    %242 = vector.broadcast %cst_33 : f32 to vector<2x96xf32>
    %243 = arith.addf %242, %241 : vector<2x96xf32>
    %244 = arith.divf %242, %243 : vector<2x96xf32>
    %245 = vector.extract_strided_slice %230 {offsets = [0, 96], sizes = [2, 32], strides = [1, 1]} : vector<2x128xf32> to vector<2x32xf32>
    %246 = math.tanh %245 : vector<2x32xf32>
    %247 = vector.extract_strided_slice %236 {offsets = [0, 32], sizes = [2, 32], strides = [1, 1]} : vector<2x96xf32> to vector<2x32xf32>
    %248 = arith.mulf %247, %210 : vector<2x32xf32>
    %249 = vector.extract_strided_slice %236 {offsets = [0, 0], sizes = [2, 32], strides = [1, 1]} : vector<2x96xf32> to vector<2x32xf32>
    %250 = arith.mulf %249, %238 : vector<2x32xf32>
    %251 = arith.addf %248, %250 : vector<2x32xf32>
    %252 = vector.extract_strided_slice %236 {offsets = [0, 64], sizes = [2, 32], strides = [1, 1]} : vector<2x96xf32> to vector<2x32xf32>
    %253 = math.tanh %251 : vector<2x32xf32>
    %254 = arith.mulf %252, %253 : vector<2x32xf32>
    %255 = vector.extract_strided_slice %244 {offsets = [0, 32], sizes = [2, 32], strides = [1, 1]} : vector<2x96xf32> to vector<2x32xf32>
    %256 = arith.mulf %255, %218 : vector<2x32xf32>
    %257 = vector.extract_strided_slice %244 {offsets = [0, 0], sizes = [2, 32], strides = [1, 1]} : vector<2x96xf32> to vector<2x32xf32>
    %258 = arith.mulf %257, %246 : vector<2x32xf32>
    %259 = arith.addf %256, %258 : vector<2x32xf32>
    %260 = vector.extract_strided_slice %244 {offsets = [0, 64], sizes = [2, 32], strides = [1, 1]} : vector<2x96xf32> to vector<2x32xf32>
    %261 = math.tanh %259 : vector<2x32xf32>
    %262 = arith.mulf %260, %261 : vector<2x32xf32>
    %263 = tpu.concatenate %254, %262 in 1 : vector<2x32xf32>, vector<2x32xf32> -> vector<2x64xf32>
    %264 = arith.truncf %263 : vector<2x64xf32> to vector<2x64xbf16>
    %cst_34 = arith.constant dense<0.000000e+00> : vector<2x256xf32>
    %265 = tpu.matmul %264, %4, %cst_34 {dimension_numbers = #tpu.dot_dimension_numbers<[1], [0], [0], [1], [0, 0, 1, 1], [], []>} : vector<2x64xbf16>, vector<64x256xbf16>, vector<2x256xf32> -> vector<2x256xf32>
    %266 = vector.extract_strided_slice %265 {offsets = [0, 0], sizes = [2, 128], strides = [1, 1]} : vector<2x256xf32> to vector<2x128xf32>
    %267 = vector.extract_strided_slice %9 {offsets = [12, 0], sizes = [2, 128], strides = [1, 1]} : vector<16x128xf32> to vector<2x128xf32>
    %268 = arith.addf %266, %267 : vector<2x128xf32>
    %269 = vector.extract_strided_slice %265 {offsets = [0, 128], sizes = [2, 128], strides = [1, 1]} : vector<2x256xf32> to vector<2x128xf32>
    %270 = vector.extract_strided_slice %12 {offsets = [2, 0], sizes = [2, 128], strides = [1, 1]} : vector<16x128xf32> to vector<2x128xf32>
    %271 = arith.addf %269, %270 : vector<2x128xf32>
    %272 = vector.extract_strided_slice %268 {offsets = [0, 0], sizes = [2, 96], strides = [1, 1]} : vector<2x128xf32> to vector<2x96xf32>
    %273 = arith.negf %272 : vector<2x96xf32>
    %274 = math.exp %273 : vector<2x96xf32>
    %cst_35 = arith.constant 1.000000e+00 : f32
    %275 = vector.broadcast %cst_35 : f32 to vector<2x96xf32>
    %276 = arith.addf %275, %274 : vector<2x96xf32>
    %277 = arith.divf %275, %276 : vector<2x96xf32>
    %278 = vector.extract_strided_slice %268 {offsets = [0, 96], sizes = [2, 32], strides = [1, 1]} : vector<2x128xf32> to vector<2x32xf32>
    %279 = math.tanh %278 : vector<2x32xf32>
    %280 = vector.extract_strided_slice %271 {offsets = [0, 0], sizes = [2, 96], strides = [1, 1]} : vector<2x128xf32> to vector<2x96xf32>
    %281 = arith.negf %280 : vector<2x96xf32>
    %282 = math.exp %281 : vector<2x96xf32>
    %cst_36 = arith.constant 1.000000e+00 : f32
    %283 = vector.broadcast %cst_36 : f32 to vector<2x96xf32>
    %284 = arith.addf %283, %282 : vector<2x96xf32>
    %285 = arith.divf %283, %284 : vector<2x96xf32>
    %286 = vector.extract_strided_slice %271 {offsets = [0, 96], sizes = [2, 32], strides = [1, 1]} : vector<2x128xf32> to vector<2x32xf32>
    %287 = math.tanh %286 : vector<2x32xf32>
    %288 = vector.extract_strided_slice %277 {offsets = [0, 32], sizes = [2, 32], strides = [1, 1]} : vector<2x96xf32> to vector<2x32xf32>
    %289 = arith.mulf %288, %251 : vector<2x32xf32>
    %290 = vector.extract_strided_slice %277 {offsets = [0, 0], sizes = [2, 32], strides = [1, 1]} : vector<2x96xf32> to vector<2x32xf32>
    %291 = arith.mulf %290, %279 : vector<2x32xf32>
    %292 = arith.addf %289, %291 : vector<2x32xf32>
    %293 = vector.extract_strided_slice %277 {offsets = [0, 64], sizes = [2, 32], strides = [1, 1]} : vector<2x96xf32> to vector<2x32xf32>
    %294 = math.tanh %292 : vector<2x32xf32>
    %295 = arith.mulf %293, %294 : vector<2x32xf32>
    %296 = vector.extract_strided_slice %285 {offsets = [0, 32], sizes = [2, 32], strides = [1, 1]} : vector<2x96xf32> to vector<2x32xf32>
    %297 = arith.mulf %296, %259 : vector<2x32xf32>
    %298 = vector.extract_strided_slice %285 {offsets = [0, 0], sizes = [2, 32], strides = [1, 1]} : vector<2x96xf32> to vector<2x32xf32>
    %299 = arith.mulf %298, %287 : vector<2x32xf32>
    %300 = arith.addf %297, %299 : vector<2x32xf32>
    %301 = vector.extract_strided_slice %285 {offsets = [0, 64], sizes = [2, 32], strides = [1, 1]} : vector<2x96xf32> to vector<2x32xf32>
    %302 = math.tanh %300 : vector<2x32xf32>
    %303 = arith.mulf %301, %302 : vector<2x32xf32>
    %304 = tpu.concatenate %295, %303 in 1 : vector<2x32xf32>, vector<2x32xf32> -> vector<2x64xf32>
    %305 = arith.truncf %304 : vector<2x64xf32> to vector<2x64xbf16>
    %cst_37 = arith.constant dense<0.000000e+00> : vector<2x256xf32>
    %306 = tpu.matmul %305, %4, %cst_37 {dimension_numbers = #tpu.dot_dimension_numbers<[1], [0], [0], [1], [0, 0, 1, 1], [], []>} : vector<2x64xbf16>, vector<64x256xbf16>, vector<2x256xf32> -> vector<2x256xf32>
    %307 = vector.extract_strided_slice %306 {offsets = [0, 0], sizes = [2, 128], strides = [1, 1]} : vector<2x256xf32> to vector<2x128xf32>
    %308 = vector.extract_strided_slice %9 {offsets = [14, 0], sizes = [2, 128], strides = [1, 1]} : vector<16x128xf32> to vector<2x128xf32>
    %309 = arith.addf %307, %308 : vector<2x128xf32>
    %310 = vector.extract_strided_slice %306 {offsets = [0, 128], sizes = [2, 128], strides = [1, 1]} : vector<2x256xf32> to vector<2x128xf32>
    %311 = vector.extract_strided_slice %12 {offsets = [0, 0], sizes = [2, 128], strides = [1, 1]} : vector<16x128xf32> to vector<2x128xf32>
    %312 = arith.addf %310, %311 : vector<2x128xf32>
    %313 = vector.extract_strided_slice %309 {offsets = [0, 0], sizes = [2, 96], strides = [1, 1]} : vector<2x128xf32> to vector<2x96xf32>
    %314 = arith.negf %313 : vector<2x96xf32>
    %315 = math.exp %314 : vector<2x96xf32>
    %cst_38 = arith.constant 1.000000e+00 : f32
    %316 = vector.broadcast %cst_38 : f32 to vector<2x96xf32>
    %317 = arith.addf %316, %315 : vector<2x96xf32>
    %318 = arith.divf %316, %317 : vector<2x96xf32>
    %319 = vector.extract_strided_slice %309 {offsets = [0, 96], sizes = [2, 32], strides = [1, 1]} : vector<2x128xf32> to vector<2x32xf32>
    %320 = math.tanh %319 : vector<2x32xf32>
    %321 = vector.extract_strided_slice %312 {offsets = [0, 0], sizes = [2, 96], strides = [1, 1]} : vector<2x128xf32> to vector<2x96xf32>
    %322 = arith.negf %321 : vector<2x96xf32>
    %323 = math.exp %322 : vector<2x96xf32>
    %cst_39 = arith.constant 1.000000e+00 : f32
    %324 = vector.broadcast %cst_39 : f32 to vector<2x96xf32>
    %325 = arith.addf %324, %323 : vector<2x96xf32>
    %326 = arith.divf %324, %325 : vector<2x96xf32>
    %327 = vector.extract_strided_slice %312 {offsets = [0, 96], sizes = [2, 32], strides = [1, 1]} : vector<2x128xf32> to vector<2x32xf32>
    %328 = math.tanh %327 : vector<2x32xf32>
    %329 = vector.extract_strided_slice %318 {offsets = [0, 32], sizes = [2, 32], strides = [1, 1]} : vector<2x96xf32> to vector<2x32xf32>
    %330 = arith.mulf %329, %292 : vector<2x32xf32>
    %331 = vector.extract_strided_slice %318 {offsets = [0, 0], sizes = [2, 32], strides = [1, 1]} : vector<2x96xf32> to vector<2x32xf32>
    %332 = arith.mulf %331, %320 : vector<2x32xf32>
    %333 = arith.addf %330, %332 : vector<2x32xf32>
    %334 = vector.extract_strided_slice %318 {offsets = [0, 64], sizes = [2, 32], strides = [1, 1]} : vector<2x96xf32> to vector<2x32xf32>
    %335 = math.tanh %333 : vector<2x32xf32>
    %336 = arith.mulf %334, %335 : vector<2x32xf32>
    %337 = vector.extract_strided_slice %326 {offsets = [0, 32], sizes = [2, 32], strides = [1, 1]} : vector<2x96xf32> to vector<2x32xf32>
    %338 = arith.mulf %337, %300 : vector<2x32xf32>
    %339 = vector.extract_strided_slice %326 {offsets = [0, 0], sizes = [2, 32], strides = [1, 1]} : vector<2x96xf32> to vector<2x32xf32>
    %340 = arith.mulf %339, %328 : vector<2x32xf32>
    %341 = arith.addf %338, %340 : vector<2x32xf32>
    %342 = vector.extract_strided_slice %326 {offsets = [0, 64], sizes = [2, 32], strides = [1, 1]} : vector<2x96xf32> to vector<2x32xf32>
    %343 = math.tanh %341 : vector<2x32xf32>
    %344 = arith.mulf %342, %343 : vector<2x32xf32>
    %345 = tpu.concatenate %49, %344 in 1 : vector<2x32xf32>, vector<2x32xf32> -> vector<2x64xf32>
    %346 = tpu.concatenate %90, %303 in 1 : vector<2x32xf32>, vector<2x32xf32> -> vector<2x64xf32>
    %347 = tpu.concatenate %131, %262 in 1 : vector<2x32xf32>, vector<2x32xf32> -> vector<2x64xf32>
    %348 = tpu.concatenate %172, %221 in 1 : vector<2x32xf32>, vector<2x32xf32> -> vector<2x64xf32>
    %349 = tpu.concatenate %213, %180 in 1 : vector<2x32xf32>, vector<2x32xf32> -> vector<2x64xf32>
    %350 = tpu.concatenate %254, %139 in 1 : vector<2x32xf32>, vector<2x32xf32> -> vector<2x64xf32>
    %351 = tpu.concatenate %295, %98 in 1 : vector<2x32xf32>, vector<2x32xf32> -> vector<2x64xf32>
    %352 = tpu.concatenate %336, %57 in 1 : vector<2x32xf32>, vector<2x32xf32> -> vector<2x64xf32>
    %353 = tpu.concatenate %345, %346, %347, %348, %349, %350, %351, %352 in 0 : vector<2x64xf32>, vector<2x64xf32>, vector<2x64xf32>, vector<2x64xf32>, vector<2x64xf32>, vector<2x64xf32>, vector<2x64xf32>, vector<2x64xf32> -> vector<16x64xf32>
    %354 = arith.truncf %353 : vector<16x64xf32> to vector<16x64xbf16>
    %c0_40 = arith.constant 0 : index
    %c0_41 = arith.constant 0 : index
    %355 = vector.load %arg6[%c0_40, %c0_41] : memref<64x128xbf16, #tpu.memory_space<vmem>>, vector<64x128xbf16>
    %c0_42 = arith.constant 0 : index
    %c0_43 = arith.constant 0 : index
    %356 = vector.load %arg7[%c0_42, %c0_43] : memref<64x128xbf16, #tpu.memory_space<vmem>>, vector<64x128xbf16>
    %c0_44 = arith.constant 0 : index
    %c0_45 = arith.constant 0 : index
    %357 = vector.load %arg8[%c0_44, %c0_45] : memref<64x256xbf16, #tpu.memory_space<vmem>>, vector<64x256xbf16>
    %c0_46 = arith.constant 0 : index
    %c0_47 = arith.constant 0 : index
    %358 = vector.load %arg9[%c0_46, %c0_47] : memref<1x128xf32, #tpu.memory_space<vmem>>, vector<1x128xf32>
    %c0_48 = arith.constant 0 : index
    %c0_49 = arith.constant 0 : index
    %359 = vector.load %arg10[%c0_48, %c0_49] : memref<1x128xf32, #tpu.memory_space<vmem>>, vector<1x128xf32>
    %cst_50 = arith.constant dense<0.000000e+00> : vector<16x128xf32>
    %360 = tpu.matmul %354, %355, %cst_50 {dimension_numbers = #tpu.dot_dimension_numbers<[1], [0], [0], [1], [0, 0, 1, 1], [], []>} : vector<16x64xbf16>, vector<64x128xbf16>, vector<16x128xf32> -> vector<16x128xf32>
    %361 = vector.broadcast %358 : vector<1x128xf32> to vector<16x128xf32>
    %362 = arith.addf %360, %361 : vector<16x128xf32>
    %cst_51 = arith.constant dense<0.000000e+00> : vector<16x128xf32>
    %363 = tpu.matmul %354, %356, %cst_51 {dimension_numbers = #tpu.dot_dimension_numbers<[1], [0], [0], [1], [0, 0, 1, 1], [], []>} : vector<16x64xbf16>, vector<64x128xbf16>, vector<16x128xf32> -> vector<16x128xf32>
    %364 = vector.broadcast %359 : vector<1x128xf32> to vector<16x128xf32>
    %365 = arith.addf %363, %364 : vector<16x128xf32>
    %cst_52 = arith.constant 0.000000e+00 : f32
    %366 = vector.broadcast %cst_52 : f32 to vector<2x32xf32>
    %cst_53 = arith.constant 0.000000e+00 : f32
    %367 = vector.broadcast %cst_53 : f32 to vector<2x32xf32>
    %cst_54 = arith.constant 0.000000e+00 : f32
    %368 = vector.broadcast %cst_54 : f32 to vector<2x32xf32>
    %cst_55 = arith.constant 0.000000e+00 : f32
    %369 = vector.broadcast %cst_55 : f32 to vector<2x32xf32>
    %370 = tpu.concatenate %366, %367 in 1 : vector<2x32xf32>, vector<2x32xf32> -> vector<2x64xf32>
    %371 = arith.truncf %370 : vector<2x64xf32> to vector<2x64xbf16>
    %cst_56 = arith.constant dense<0.000000e+00> : vector<2x256xf32>
    %372 = tpu.matmul %371, %357, %cst_56 {dimension_numbers = #tpu.dot_dimension_numbers<[1], [0], [0], [1], [0, 0, 1, 1], [], []>} : vector<2x64xbf16>, vector<64x256xbf16>, vector<2x256xf32> -> vector<2x256xf32>
    %373 = vector.extract_strided_slice %372 {offsets = [0, 0], sizes = [2, 128], strides = [1, 1]} : vector<2x256xf32> to vector<2x128xf32>
    %374 = vector.extract_strided_slice %362 {offsets = [0, 0], sizes = [2, 128], strides = [1, 1]} : vector<16x128xf32> to vector<2x128xf32>
    %375 = arith.addf %373, %374 : vector<2x128xf32>
    %376 = vector.extract_strided_slice %372 {offsets = [0, 128], sizes = [2, 128], strides = [1, 1]} : vector<2x256xf32> to vector<2x128xf32>
    %377 = vector.extract_strided_slice %365 {offsets = [14, 0], sizes = [2, 128], strides = [1, 1]} : vector<16x128xf32> to vector<2x128xf32>
    %378 = arith.addf %376, %377 : vector<2x128xf32>
    %379 = vector.extract_strided_slice %375 {offsets = [0, 0], sizes = [2, 96], strides = [1, 1]} : vector<2x128xf32> to vector<2x96xf32>
    %380 = arith.negf %379 : vector<2x96xf32>
    %381 = math.exp %380 : vector<2x96xf32>
    %cst_57 = arith.constant 1.000000e+00 : f32
    %382 = vector.broadcast %cst_57 : f32 to vector<2x96xf32>
    %383 = arith.addf %382, %381 : vector<2x96xf32>
    %384 = arith.divf %382, %383 : vector<2x96xf32>
    %385 = vector.extract_strided_slice %375 {offsets = [0, 96], sizes = [2, 32], strides = [1, 1]} : vector<2x128xf32> to vector<2x32xf32>
    %386 = math.tanh %385 : vector<2x32xf32>
    %387 = vector.extract_strided_slice %378 {offsets = [0, 0], sizes = [2, 96], strides = [1, 1]} : vector<2x128xf32> to vector<2x96xf32>
    %388 = arith.negf %387 : vector<2x96xf32>
    %389 = math.exp %388 : vector<2x96xf32>
    %cst_58 = arith.constant 1.000000e+00 : f32
    %390 = vector.broadcast %cst_58 : f32 to vector<2x96xf32>
    %391 = arith.addf %390, %389 : vector<2x96xf32>
    %392 = arith.divf %390, %391 : vector<2x96xf32>
    %393 = vector.extract_strided_slice %378 {offsets = [0, 96], sizes = [2, 32], strides = [1, 1]} : vector<2x128xf32> to vector<2x32xf32>
    %394 = math.tanh %393 : vector<2x32xf32>
    %395 = vector.extract_strided_slice %384 {offsets = [0, 32], sizes = [2, 32], strides = [1, 1]} : vector<2x96xf32> to vector<2x32xf32>
    %396 = arith.mulf %395, %368 : vector<2x32xf32>
    %397 = vector.extract_strided_slice %384 {offsets = [0, 0], sizes = [2, 32], strides = [1, 1]} : vector<2x96xf32> to vector<2x32xf32>
    %398 = arith.mulf %397, %386 : vector<2x32xf32>
    %399 = arith.addf %396, %398 : vector<2x32xf32>
    %400 = vector.extract_strided_slice %384 {offsets = [0, 64], sizes = [2, 32], strides = [1, 1]} : vector<2x96xf32> to vector<2x32xf32>
    %401 = math.tanh %399 : vector<2x32xf32>
    %402 = arith.mulf %400, %401 : vector<2x32xf32>
    %403 = vector.extract_strided_slice %392 {offsets = [0, 32], sizes = [2, 32], strides = [1, 1]} : vector<2x96xf32> to vector<2x32xf32>
    %404 = arith.mulf %403, %369 : vector<2x32xf32>
    %405 = vector.extract_strided_slice %392 {offsets = [0, 0], sizes = [2, 32], strides = [1, 1]} : vector<2x96xf32> to vector<2x32xf32>
    %406 = arith.mulf %405, %394 : vector<2x32xf32>
    %407 = arith.addf %404, %406 : vector<2x32xf32>
    %408 = vector.extract_strided_slice %392 {offsets = [0, 64], sizes = [2, 32], strides = [1, 1]} : vector<2x96xf32> to vector<2x32xf32>
    %409 = math.tanh %407 : vector<2x32xf32>
    %410 = arith.mulf %408, %409 : vector<2x32xf32>
    %411 = tpu.concatenate %402, %410 in 1 : vector<2x32xf32>, vector<2x32xf32> -> vector<2x64xf32>
    %412 = arith.truncf %411 : vector<2x64xf32> to vector<2x64xbf16>
    %cst_59 = arith.constant dense<0.000000e+00> : vector<2x256xf32>
    %413 = tpu.matmul %412, %357, %cst_59 {dimension_numbers = #tpu.dot_dimension_numbers<[1], [0], [0], [1], [0, 0, 1, 1], [], []>} : vector<2x64xbf16>, vector<64x256xbf16>, vector<2x256xf32> -> vector<2x256xf32>
    %414 = vector.extract_strided_slice %413 {offsets = [0, 0], sizes = [2, 128], strides = [1, 1]} : vector<2x256xf32> to vector<2x128xf32>
    %415 = vector.extract_strided_slice %362 {offsets = [2, 0], sizes = [2, 128], strides = [1, 1]} : vector<16x128xf32> to vector<2x128xf32>
    %416 = arith.addf %414, %415 : vector<2x128xf32>
    %417 = vector.extract_strided_slice %413 {offsets = [0, 128], sizes = [2, 128], strides = [1, 1]} : vector<2x256xf32> to vector<2x128xf32>
    %418 = vector.extract_strided_slice %365 {offsets = [12, 0], sizes = [2, 128], strides = [1, 1]} : vector<16x128xf32> to vector<2x128xf32>
    %419 = arith.addf %417, %418 : vector<2x128xf32>
    %420 = vector.extract_strided_slice %416 {offsets = [0, 0], sizes = [2, 96], strides = [1, 1]} : vector<2x128xf32> to vector<2x96xf32>
    %421 = arith.negf %420 : vector<2x96xf32>
    %422 = math.exp %421 : vector<2x96xf32>
    %cst_60 = arith.constant 1.000000e+00 : f32
    %423 = vector.broadcast %cst_60 : f32 to vector<2x96xf32>
    %424 = arith.addf %423, %422 : vector<2x96xf32>
    %425 = arith.divf %423, %424 : vector<2x96xf32>
    %426 = vector.extract_strided_slice %416 {offsets = [0, 96], sizes = [2, 32], strides = [1, 1]} : vector<2x128xf32> to vector<2x32xf32>
    %427 = math.tanh %426 : vector<2x32xf32>
    %428 = vector.extract_strided_slice %419 {offsets = [0, 0], sizes = [2, 96], strides = [1, 1]} : vector<2x128xf32> to vector<2x96xf32>
    %429 = arith.negf %428 : vector<2x96xf32>
    %430 = math.exp %429 : vector<2x96xf32>
    %cst_61 = arith.constant 1.000000e+00 : f32
    %431 = vector.broadcast %cst_61 : f32 to vector<2x96xf32>
    %432 = arith.addf %431, %430 : vector<2x96xf32>
    %433 = arith.divf %431, %432 : vector<2x96xf32>
    %434 = vector.extract_strided_slice %419 {offsets = [0, 96], sizes = [2, 32], strides = [1, 1]} : vector<2x128xf32> to vector<2x32xf32>
    %435 = math.tanh %434 : vector<2x32xf32>
    %436 = vector.extract_strided_slice %425 {offsets = [0, 32], sizes = [2, 32], strides = [1, 1]} : vector<2x96xf32> to vector<2x32xf32>
    %437 = arith.mulf %436, %399 : vector<2x32xf32>
    %438 = vector.extract_strided_slice %425 {offsets = [0, 0], sizes = [2, 32], strides = [1, 1]} : vector<2x96xf32> to vector<2x32xf32>
    %439 = arith.mulf %438, %427 : vector<2x32xf32>
    %440 = arith.addf %437, %439 : vector<2x32xf32>
    %441 = vector.extract_strided_slice %425 {offsets = [0, 64], sizes = [2, 32], strides = [1, 1]} : vector<2x96xf32> to vector<2x32xf32>
    %442 = math.tanh %440 : vector<2x32xf32>
    %443 = arith.mulf %441, %442 : vector<2x32xf32>
    %444 = vector.extract_strided_slice %433 {offsets = [0, 32], sizes = [2, 32], strides = [1, 1]} : vector<2x96xf32> to vector<2x32xf32>
    %445 = arith.mulf %444, %407 : vector<2x32xf32>
    %446 = vector.extract_strided_slice %433 {offsets = [0, 0], sizes = [2, 32], strides = [1, 1]} : vector<2x96xf32> to vector<2x32xf32>
    %447 = arith.mulf %446, %435 : vector<2x32xf32>
    %448 = arith.addf %445, %447 : vector<2x32xf32>
    %449 = vector.extract_strided_slice %433 {offsets = [0, 64], sizes = [2, 32], strides = [1, 1]} : vector<2x96xf32> to vector<2x32xf32>
    %450 = math.tanh %448 : vector<2x32xf32>
    %451 = arith.mulf %449, %450 : vector<2x32xf32>
    %452 = tpu.concatenate %443, %451 in 1 : vector<2x32xf32>, vector<2x32xf32> -> vector<2x64xf32>
    %453 = arith.truncf %452 : vector<2x64xf32> to vector<2x64xbf16>
    %cst_62 = arith.constant dense<0.000000e+00> : vector<2x256xf32>
    %454 = tpu.matmul %453, %357, %cst_62 {dimension_numbers = #tpu.dot_dimension_numbers<[1], [0], [0], [1], [0, 0, 1, 1], [], []>} : vector<2x64xbf16>, vector<64x256xbf16>, vector<2x256xf32> -> vector<2x256xf32>
    %455 = vector.extract_strided_slice %454 {offsets = [0, 0], sizes = [2, 128], strides = [1, 1]} : vector<2x256xf32> to vector<2x128xf32>
    %456 = vector.extract_strided_slice %362 {offsets = [4, 0], sizes = [2, 128], strides = [1, 1]} : vector<16x128xf32> to vector<2x128xf32>
    %457 = arith.addf %455, %456 : vector<2x128xf32>
    %458 = vector.extract_strided_slice %454 {offsets = [0, 128], sizes = [2, 128], strides = [1, 1]} : vector<2x256xf32> to vector<2x128xf32>
    %459 = vector.extract_strided_slice %365 {offsets = [10, 0], sizes = [2, 128], strides = [1, 1]} : vector<16x128xf32> to vector<2x128xf32>
    %460 = arith.addf %458, %459 : vector<2x128xf32>
    %461 = vector.extract_strided_slice %457 {offsets = [0, 0], sizes = [2, 96], strides = [1, 1]} : vector<2x128xf32> to vector<2x96xf32>
    %462 = arith.negf %461 : vector<2x96xf32>
    %463 = math.exp %462 : vector<2x96xf32>
    %cst_63 = arith.constant 1.000000e+00 : f32
    %464 = vector.broadcast %cst_63 : f32 to vector<2x96xf32>
    %465 = arith.addf %464, %463 : vector<2x96xf32>
    %466 = arith.divf %464, %465 : vector<2x96xf32>
    %467 = vector.extract_strided_slice %457 {offsets = [0, 96], sizes = [2, 32], strides = [1, 1]} : vector<2x128xf32> to vector<2x32xf32>
    %468 = math.tanh %467 : vector<2x32xf32>
    %469 = vector.extract_strided_slice %460 {offsets = [0, 0], sizes = [2, 96], strides = [1, 1]} : vector<2x128xf32> to vector<2x96xf32>
    %470 = arith.negf %469 : vector<2x96xf32>
    %471 = math.exp %470 : vector<2x96xf32>
    %cst_64 = arith.constant 1.000000e+00 : f32
    %472 = vector.broadcast %cst_64 : f32 to vector<2x96xf32>
    %473 = arith.addf %472, %471 : vector<2x96xf32>
    %474 = arith.divf %472, %473 : vector<2x96xf32>
    %475 = vector.extract_strided_slice %460 {offsets = [0, 96], sizes = [2, 32], strides = [1, 1]} : vector<2x128xf32> to vector<2x32xf32>
    %476 = math.tanh %475 : vector<2x32xf32>
    %477 = vector.extract_strided_slice %466 {offsets = [0, 32], sizes = [2, 32], strides = [1, 1]} : vector<2x96xf32> to vector<2x32xf32>
    %478 = arith.mulf %477, %440 : vector<2x32xf32>
    %479 = vector.extract_strided_slice %466 {offsets = [0, 0], sizes = [2, 32], strides = [1, 1]} : vector<2x96xf32> to vector<2x32xf32>
    %480 = arith.mulf %479, %468 : vector<2x32xf32>
    %481 = arith.addf %478, %480 : vector<2x32xf32>
    %482 = vector.extract_strided_slice %466 {offsets = [0, 64], sizes = [2, 32], strides = [1, 1]} : vector<2x96xf32> to vector<2x32xf32>
    %483 = math.tanh %481 : vector<2x32xf32>
    %484 = arith.mulf %482, %483 : vector<2x32xf32>
    %485 = vector.extract_strided_slice %474 {offsets = [0, 32], sizes = [2, 32], strides = [1, 1]} : vector<2x96xf32> to vector<2x32xf32>
    %486 = arith.mulf %485, %448 : vector<2x32xf32>
    %487 = vector.extract_strided_slice %474 {offsets = [0, 0], sizes = [2, 32], strides = [1, 1]} : vector<2x96xf32> to vector<2x32xf32>
    %488 = arith.mulf %487, %476 : vector<2x32xf32>
    %489 = arith.addf %486, %488 : vector<2x32xf32>
    %490 = vector.extract_strided_slice %474 {offsets = [0, 64], sizes = [2, 32], strides = [1, 1]} : vector<2x96xf32> to vector<2x32xf32>
    %491 = math.tanh %489 : vector<2x32xf32>
    %492 = arith.mulf %490, %491 : vector<2x32xf32>
    %493 = tpu.concatenate %484, %492 in 1 : vector<2x32xf32>, vector<2x32xf32> -> vector<2x64xf32>
    %494 = arith.truncf %493 : vector<2x64xf32> to vector<2x64xbf16>
    %cst_65 = arith.constant dense<0.000000e+00> : vector<2x256xf32>
    %495 = tpu.matmul %494, %357, %cst_65 {dimension_numbers = #tpu.dot_dimension_numbers<[1], [0], [0], [1], [0, 0, 1, 1], [], []>} : vector<2x64xbf16>, vector<64x256xbf16>, vector<2x256xf32> -> vector<2x256xf32>
    %496 = vector.extract_strided_slice %495 {offsets = [0, 0], sizes = [2, 128], strides = [1, 1]} : vector<2x256xf32> to vector<2x128xf32>
    %497 = vector.extract_strided_slice %362 {offsets = [6, 0], sizes = [2, 128], strides = [1, 1]} : vector<16x128xf32> to vector<2x128xf32>
    %498 = arith.addf %496, %497 : vector<2x128xf32>
    %499 = vector.extract_strided_slice %495 {offsets = [0, 128], sizes = [2, 128], strides = [1, 1]} : vector<2x256xf32> to vector<2x128xf32>
    %500 = vector.extract_strided_slice %365 {offsets = [8, 0], sizes = [2, 128], strides = [1, 1]} : vector<16x128xf32> to vector<2x128xf32>
    %501 = arith.addf %499, %500 : vector<2x128xf32>
    %502 = vector.extract_strided_slice %498 {offsets = [0, 0], sizes = [2, 96], strides = [1, 1]} : vector<2x128xf32> to vector<2x96xf32>
    %503 = arith.negf %502 : vector<2x96xf32>
    %504 = math.exp %503 : vector<2x96xf32>
    %cst_66 = arith.constant 1.000000e+00 : f32
    %505 = vector.broadcast %cst_66 : f32 to vector<2x96xf32>
    %506 = arith.addf %505, %504 : vector<2x96xf32>
    %507 = arith.divf %505, %506 : vector<2x96xf32>
    %508 = vector.extract_strided_slice %498 {offsets = [0, 96], sizes = [2, 32], strides = [1, 1]} : vector<2x128xf32> to vector<2x32xf32>
    %509 = math.tanh %508 : vector<2x32xf32>
    %510 = vector.extract_strided_slice %501 {offsets = [0, 0], sizes = [2, 96], strides = [1, 1]} : vector<2x128xf32> to vector<2x96xf32>
    %511 = arith.negf %510 : vector<2x96xf32>
    %512 = math.exp %511 : vector<2x96xf32>
    %cst_67 = arith.constant 1.000000e+00 : f32
    %513 = vector.broadcast %cst_67 : f32 to vector<2x96xf32>
    %514 = arith.addf %513, %512 : vector<2x96xf32>
    %515 = arith.divf %513, %514 : vector<2x96xf32>
    %516 = vector.extract_strided_slice %501 {offsets = [0, 96], sizes = [2, 32], strides = [1, 1]} : vector<2x128xf32> to vector<2x32xf32>
    %517 = math.tanh %516 : vector<2x32xf32>
    %518 = vector.extract_strided_slice %507 {offsets = [0, 32], sizes = [2, 32], strides = [1, 1]} : vector<2x96xf32> to vector<2x32xf32>
    %519 = arith.mulf %518, %481 : vector<2x32xf32>
    %520 = vector.extract_strided_slice %507 {offsets = [0, 0], sizes = [2, 32], strides = [1, 1]} : vector<2x96xf32> to vector<2x32xf32>
    %521 = arith.mulf %520, %509 : vector<2x32xf32>
    %522 = arith.addf %519, %521 : vector<2x32xf32>
    %523 = vector.extract_strided_slice %507 {offsets = [0, 64], sizes = [2, 32], strides = [1, 1]} : vector<2x96xf32> to vector<2x32xf32>
    %524 = math.tanh %522 : vector<2x32xf32>
    %525 = arith.mulf %523, %524 : vector<2x32xf32>
    %526 = vector.extract_strided_slice %515 {offsets = [0, 32], sizes = [2, 32], strides = [1, 1]} : vector<2x96xf32> to vector<2x32xf32>
    %527 = arith.mulf %526, %489 : vector<2x32xf32>
    %528 = vector.extract_strided_slice %515 {offsets = [0, 0], sizes = [2, 32], strides = [1, 1]} : vector<2x96xf32> to vector<2x32xf32>
    %529 = arith.mulf %528, %517 : vector<2x32xf32>
    %530 = arith.addf %527, %529 : vector<2x32xf32>
    %531 = vector.extract_strided_slice %515 {offsets = [0, 64], sizes = [2, 32], strides = [1, 1]} : vector<2x96xf32> to vector<2x32xf32>
    %532 = math.tanh %530 : vector<2x32xf32>
    %533 = arith.mulf %531, %532 : vector<2x32xf32>
    %534 = tpu.concatenate %525, %533 in 1 : vector<2x32xf32>, vector<2x32xf32> -> vector<2x64xf32>
    %535 = arith.truncf %534 : vector<2x64xf32> to vector<2x64xbf16>
    %cst_68 = arith.constant dense<0.000000e+00> : vector<2x256xf32>
    %536 = tpu.matmul %535, %357, %cst_68 {dimension_numbers = #tpu.dot_dimension_numbers<[1], [0], [0], [1], [0, 0, 1, 1], [], []>} : vector<2x64xbf16>, vector<64x256xbf16>, vector<2x256xf32> -> vector<2x256xf32>
    %537 = vector.extract_strided_slice %536 {offsets = [0, 0], sizes = [2, 128], strides = [1, 1]} : vector<2x256xf32> to vector<2x128xf32>
    %538 = vector.extract_strided_slice %362 {offsets = [8, 0], sizes = [2, 128], strides = [1, 1]} : vector<16x128xf32> to vector<2x128xf32>
    %539 = arith.addf %537, %538 : vector<2x128xf32>
    %540 = vector.extract_strided_slice %536 {offsets = [0, 128], sizes = [2, 128], strides = [1, 1]} : vector<2x256xf32> to vector<2x128xf32>
    %541 = vector.extract_strided_slice %365 {offsets = [6, 0], sizes = [2, 128], strides = [1, 1]} : vector<16x128xf32> to vector<2x128xf32>
    %542 = arith.addf %540, %541 : vector<2x128xf32>
    %543 = vector.extract_strided_slice %539 {offsets = [0, 0], sizes = [2, 96], strides = [1, 1]} : vector<2x128xf32> to vector<2x96xf32>
    %544 = arith.negf %543 : vector<2x96xf32>
    %545 = math.exp %544 : vector<2x96xf32>
    %cst_69 = arith.constant 1.000000e+00 : f32
    %546 = vector.broadcast %cst_69 : f32 to vector<2x96xf32>
    %547 = arith.addf %546, %545 : vector<2x96xf32>
    %548 = arith.divf %546, %547 : vector<2x96xf32>
    %549 = vector.extract_strided_slice %539 {offsets = [0, 96], sizes = [2, 32], strides = [1, 1]} : vector<2x128xf32> to vector<2x32xf32>
    %550 = math.tanh %549 : vector<2x32xf32>
    %551 = vector.extract_strided_slice %542 {offsets = [0, 0], sizes = [2, 96], strides = [1, 1]} : vector<2x128xf32> to vector<2x96xf32>
    %552 = arith.negf %551 : vector<2x96xf32>
    %553 = math.exp %552 : vector<2x96xf32>
    %cst_70 = arith.constant 1.000000e+00 : f32
    %554 = vector.broadcast %cst_70 : f32 to vector<2x96xf32>
    %555 = arith.addf %554, %553 : vector<2x96xf32>
    %556 = arith.divf %554, %555 : vector<2x96xf32>
    %557 = vector.extract_strided_slice %542 {offsets = [0, 96], sizes = [2, 32], strides = [1, 1]} : vector<2x128xf32> to vector<2x32xf32>
    %558 = math.tanh %557 : vector<2x32xf32>
    %559 = vector.extract_strided_slice %548 {offsets = [0, 32], sizes = [2, 32], strides = [1, 1]} : vector<2x96xf32> to vector<2x32xf32>
    %560 = arith.mulf %559, %522 : vector<2x32xf32>
    %561 = vector.extract_strided_slice %548 {offsets = [0, 0], sizes = [2, 32], strides = [1, 1]} : vector<2x96xf32> to vector<2x32xf32>
    %562 = arith.mulf %561, %550 : vector<2x32xf32>
    %563 = arith.addf %560, %562 : vector<2x32xf32>
    %564 = vector.extract_strided_slice %548 {offsets = [0, 64], sizes = [2, 32], strides = [1, 1]} : vector<2x96xf32> to vector<2x32xf32>
    %565 = math.tanh %563 : vector<2x32xf32>
    %566 = arith.mulf %564, %565 : vector<2x32xf32>
    %567 = vector.extract_strided_slice %556 {offsets = [0, 32], sizes = [2, 32], strides = [1, 1]} : vector<2x96xf32> to vector<2x32xf32>
    %568 = arith.mulf %567, %530 : vector<2x32xf32>
    %569 = vector.extract_strided_slice %556 {offsets = [0, 0], sizes = [2, 32], strides = [1, 1]} : vector<2x96xf32> to vector<2x32xf32>
    %570 = arith.mulf %569, %558 : vector<2x32xf32>
    %571 = arith.addf %568, %570 : vector<2x32xf32>
    %572 = vector.extract_strided_slice %556 {offsets = [0, 64], sizes = [2, 32], strides = [1, 1]} : vector<2x96xf32> to vector<2x32xf32>
    %573 = math.tanh %571 : vector<2x32xf32>
    %574 = arith.mulf %572, %573 : vector<2x32xf32>
    %575 = tpu.concatenate %566, %574 in 1 : vector<2x32xf32>, vector<2x32xf32> -> vector<2x64xf32>
    %576 = arith.truncf %575 : vector<2x64xf32> to vector<2x64xbf16>
    %cst_71 = arith.constant dense<0.000000e+00> : vector<2x256xf32>
    %577 = tpu.matmul %576, %357, %cst_71 {dimension_numbers = #tpu.dot_dimension_numbers<[1], [0], [0], [1], [0, 0, 1, 1], [], []>} : vector<2x64xbf16>, vector<64x256xbf16>, vector<2x256xf32> -> vector<2x256xf32>
    %578 = vector.extract_strided_slice %577 {offsets = [0, 0], sizes = [2, 128], strides = [1, 1]} : vector<2x256xf32> to vector<2x128xf32>
    %579 = vector.extract_strided_slice %362 {offsets = [10, 0], sizes = [2, 128], strides = [1, 1]} : vector<16x128xf32> to vector<2x128xf32>
    %580 = arith.addf %578, %579 : vector<2x128xf32>
    %581 = vector.extract_strided_slice %577 {offsets = [0, 128], sizes = [2, 128], strides = [1, 1]} : vector<2x256xf32> to vector<2x128xf32>
    %582 = vector.extract_strided_slice %365 {offsets = [4, 0], sizes = [2, 128], strides = [1, 1]} : vector<16x128xf32> to vector<2x128xf32>
    %583 = arith.addf %581, %582 : vector<2x128xf32>
    %584 = vector.extract_strided_slice %580 {offsets = [0, 0], sizes = [2, 96], strides = [1, 1]} : vector<2x128xf32> to vector<2x96xf32>
    %585 = arith.negf %584 : vector<2x96xf32>
    %586 = math.exp %585 : vector<2x96xf32>
    %cst_72 = arith.constant 1.000000e+00 : f32
    %587 = vector.broadcast %cst_72 : f32 to vector<2x96xf32>
    %588 = arith.addf %587, %586 : vector<2x96xf32>
    %589 = arith.divf %587, %588 : vector<2x96xf32>
    %590 = vector.extract_strided_slice %580 {offsets = [0, 96], sizes = [2, 32], strides = [1, 1]} : vector<2x128xf32> to vector<2x32xf32>
    %591 = math.tanh %590 : vector<2x32xf32>
    %592 = vector.extract_strided_slice %583 {offsets = [0, 0], sizes = [2, 96], strides = [1, 1]} : vector<2x128xf32> to vector<2x96xf32>
    %593 = arith.negf %592 : vector<2x96xf32>
    %594 = math.exp %593 : vector<2x96xf32>
    %cst_73 = arith.constant 1.000000e+00 : f32
    %595 = vector.broadcast %cst_73 : f32 to vector<2x96xf32>
    %596 = arith.addf %595, %594 : vector<2x96xf32>
    %597 = arith.divf %595, %596 : vector<2x96xf32>
    %598 = vector.extract_strided_slice %583 {offsets = [0, 96], sizes = [2, 32], strides = [1, 1]} : vector<2x128xf32> to vector<2x32xf32>
    %599 = math.tanh %598 : vector<2x32xf32>
    %600 = vector.extract_strided_slice %589 {offsets = [0, 32], sizes = [2, 32], strides = [1, 1]} : vector<2x96xf32> to vector<2x32xf32>
    %601 = arith.mulf %600, %563 : vector<2x32xf32>
    %602 = vector.extract_strided_slice %589 {offsets = [0, 0], sizes = [2, 32], strides = [1, 1]} : vector<2x96xf32> to vector<2x32xf32>
    %603 = arith.mulf %602, %591 : vector<2x32xf32>
    %604 = arith.addf %601, %603 : vector<2x32xf32>
    %605 = vector.extract_strided_slice %589 {offsets = [0, 64], sizes = [2, 32], strides = [1, 1]} : vector<2x96xf32> to vector<2x32xf32>
    %606 = math.tanh %604 : vector<2x32xf32>
    %607 = arith.mulf %605, %606 : vector<2x32xf32>
    %608 = vector.extract_strided_slice %597 {offsets = [0, 32], sizes = [2, 32], strides = [1, 1]} : vector<2x96xf32> to vector<2x32xf32>
    %609 = arith.mulf %608, %571 : vector<2x32xf32>
    %610 = vector.extract_strided_slice %597 {offsets = [0, 0], sizes = [2, 32], strides = [1, 1]} : vector<2x96xf32> to vector<2x32xf32>
    %611 = arith.mulf %610, %599 : vector<2x32xf32>
    %612 = arith.addf %609, %611 : vector<2x32xf32>
    %613 = vector.extract_strided_slice %597 {offsets = [0, 64], sizes = [2, 32], strides = [1, 1]} : vector<2x96xf32> to vector<2x32xf32>
    %614 = math.tanh %612 : vector<2x32xf32>
    %615 = arith.mulf %613, %614 : vector<2x32xf32>
    %616 = tpu.concatenate %607, %615 in 1 : vector<2x32xf32>, vector<2x32xf32> -> vector<2x64xf32>
    %617 = arith.truncf %616 : vector<2x64xf32> to vector<2x64xbf16>
    %cst_74 = arith.constant dense<0.000000e+00> : vector<2x256xf32>
    %618 = tpu.matmul %617, %357, %cst_74 {dimension_numbers = #tpu.dot_dimension_numbers<[1], [0], [0], [1], [0, 0, 1, 1], [], []>} : vector<2x64xbf16>, vector<64x256xbf16>, vector<2x256xf32> -> vector<2x256xf32>
    %619 = vector.extract_strided_slice %618 {offsets = [0, 0], sizes = [2, 128], strides = [1, 1]} : vector<2x256xf32> to vector<2x128xf32>
    %620 = vector.extract_strided_slice %362 {offsets = [12, 0], sizes = [2, 128], strides = [1, 1]} : vector<16x128xf32> to vector<2x128xf32>
    %621 = arith.addf %619, %620 : vector<2x128xf32>
    %622 = vector.extract_strided_slice %618 {offsets = [0, 128], sizes = [2, 128], strides = [1, 1]} : vector<2x256xf32> to vector<2x128xf32>
    %623 = vector.extract_strided_slice %365 {offsets = [2, 0], sizes = [2, 128], strides = [1, 1]} : vector<16x128xf32> to vector<2x128xf32>
    %624 = arith.addf %622, %623 : vector<2x128xf32>
    %625 = vector.extract_strided_slice %621 {offsets = [0, 0], sizes = [2, 96], strides = [1, 1]} : vector<2x128xf32> to vector<2x96xf32>
    %626 = arith.negf %625 : vector<2x96xf32>
    %627 = math.exp %626 : vector<2x96xf32>
    %cst_75 = arith.constant 1.000000e+00 : f32
    %628 = vector.broadcast %cst_75 : f32 to vector<2x96xf32>
    %629 = arith.addf %628, %627 : vector<2x96xf32>
    %630 = arith.divf %628, %629 : vector<2x96xf32>
    %631 = vector.extract_strided_slice %621 {offsets = [0, 96], sizes = [2, 32], strides = [1, 1]} : vector<2x128xf32> to vector<2x32xf32>
    %632 = math.tanh %631 : vector<2x32xf32>
    %633 = vector.extract_strided_slice %624 {offsets = [0, 0], sizes = [2, 96], strides = [1, 1]} : vector<2x128xf32> to vector<2x96xf32>
    %634 = arith.negf %633 : vector<2x96xf32>
    %635 = math.exp %634 : vector<2x96xf32>
    %cst_76 = arith.constant 1.000000e+00 : f32
    %636 = vector.broadcast %cst_76 : f32 to vector<2x96xf32>
    %637 = arith.addf %636, %635 : vector<2x96xf32>
    %638 = arith.divf %636, %637 : vector<2x96xf32>
    %639 = vector.extract_strided_slice %624 {offsets = [0, 96], sizes = [2, 32], strides = [1, 1]} : vector<2x128xf32> to vector<2x32xf32>
    %640 = math.tanh %639 : vector<2x32xf32>
    %641 = vector.extract_strided_slice %630 {offsets = [0, 32], sizes = [2, 32], strides = [1, 1]} : vector<2x96xf32> to vector<2x32xf32>
    %642 = arith.mulf %641, %604 : vector<2x32xf32>
    %643 = vector.extract_strided_slice %630 {offsets = [0, 0], sizes = [2, 32], strides = [1, 1]} : vector<2x96xf32> to vector<2x32xf32>
    %644 = arith.mulf %643, %632 : vector<2x32xf32>
    %645 = arith.addf %642, %644 : vector<2x32xf32>
    %646 = vector.extract_strided_slice %630 {offsets = [0, 64], sizes = [2, 32], strides = [1, 1]} : vector<2x96xf32> to vector<2x32xf32>
    %647 = math.tanh %645 : vector<2x32xf32>
    %648 = arith.mulf %646, %647 : vector<2x32xf32>
    %649 = vector.extract_strided_slice %638 {offsets = [0, 32], sizes = [2, 32], strides = [1, 1]} : vector<2x96xf32> to vector<2x32xf32>
    %650 = arith.mulf %649, %612 : vector<2x32xf32>
    %651 = vector.extract_strided_slice %638 {offsets = [0, 0], sizes = [2, 32], strides = [1, 1]} : vector<2x96xf32> to vector<2x32xf32>
    %652 = arith.mulf %651, %640 : vector<2x32xf32>
    %653 = arith.addf %650, %652 : vector<2x32xf32>
    %654 = vector.extract_strided_slice %638 {offsets = [0, 64], sizes = [2, 32], strides = [1, 1]} : vector<2x96xf32> to vector<2x32xf32>
    %655 = math.tanh %653 : vector<2x32xf32>
    %656 = arith.mulf %654, %655 : vector<2x32xf32>
    %657 = tpu.concatenate %648, %656 in 1 : vector<2x32xf32>, vector<2x32xf32> -> vector<2x64xf32>
    %658 = arith.truncf %657 : vector<2x64xf32> to vector<2x64xbf16>
    %cst_77 = arith.constant dense<0.000000e+00> : vector<2x256xf32>
    %659 = tpu.matmul %658, %357, %cst_77 {dimension_numbers = #tpu.dot_dimension_numbers<[1], [0], [0], [1], [0, 0, 1, 1], [], []>} : vector<2x64xbf16>, vector<64x256xbf16>, vector<2x256xf32> -> vector<2x256xf32>
    %660 = vector.extract_strided_slice %659 {offsets = [0, 0], sizes = [2, 128], strides = [1, 1]} : vector<2x256xf32> to vector<2x128xf32>
    %661 = vector.extract_strided_slice %362 {offsets = [14, 0], sizes = [2, 128], strides = [1, 1]} : vector<16x128xf32> to vector<2x128xf32>
    %662 = arith.addf %660, %661 : vector<2x128xf32>
    %663 = vector.extract_strided_slice %659 {offsets = [0, 128], sizes = [2, 128], strides = [1, 1]} : vector<2x256xf32> to vector<2x128xf32>
    %664 = vector.extract_strided_slice %365 {offsets = [0, 0], sizes = [2, 128], strides = [1, 1]} : vector<16x128xf32> to vector<2x128xf32>
    %665 = arith.addf %663, %664 : vector<2x128xf32>
    %666 = vector.extract_strided_slice %662 {offsets = [0, 0], sizes = [2, 96], strides = [1, 1]} : vector<2x128xf32> to vector<2x96xf32>
    %667 = arith.negf %666 : vector<2x96xf32>
    %668 = math.exp %667 : vector<2x96xf32>
    %cst_78 = arith.constant 1.000000e+00 : f32
    %669 = vector.broadcast %cst_78 : f32 to vector<2x96xf32>
    %670 = arith.addf %669, %668 : vector<2x96xf32>
    %671 = arith.divf %669, %670 : vector<2x96xf32>
    %672 = vector.extract_strided_slice %662 {offsets = [0, 96], sizes = [2, 32], strides = [1, 1]} : vector<2x128xf32> to vector<2x32xf32>
    %673 = math.tanh %672 : vector<2x32xf32>
    %674 = vector.extract_strided_slice %665 {offsets = [0, 0], sizes = [2, 96], strides = [1, 1]} : vector<2x128xf32> to vector<2x96xf32>
    %675 = arith.negf %674 : vector<2x96xf32>
    %676 = math.exp %675 : vector<2x96xf32>
    %cst_79 = arith.constant 1.000000e+00 : f32
    %677 = vector.broadcast %cst_79 : f32 to vector<2x96xf32>
    %678 = arith.addf %677, %676 : vector<2x96xf32>
    %679 = arith.divf %677, %678 : vector<2x96xf32>
    %680 = vector.extract_strided_slice %665 {offsets = [0, 96], sizes = [2, 32], strides = [1, 1]} : vector<2x128xf32> to vector<2x32xf32>
    %681 = math.tanh %680 : vector<2x32xf32>
    %682 = vector.extract_strided_slice %671 {offsets = [0, 32], sizes = [2, 32], strides = [1, 1]} : vector<2x96xf32> to vector<2x32xf32>
    %683 = arith.mulf %682, %645 : vector<2x32xf32>
    %684 = vector.extract_strided_slice %671 {offsets = [0, 0], sizes = [2, 32], strides = [1, 1]} : vector<2x96xf32> to vector<2x32xf32>
    %685 = arith.mulf %684, %673 : vector<2x32xf32>
    %686 = arith.addf %683, %685 : vector<2x32xf32>
    %687 = vector.extract_strided_slice %671 {offsets = [0, 64], sizes = [2, 32], strides = [1, 1]} : vector<2x96xf32> to vector<2x32xf32>
    %688 = math.tanh %686 : vector<2x32xf32>
    %689 = arith.mulf %687, %688 : vector<2x32xf32>
    %690 = vector.extract_strided_slice %679 {offsets = [0, 32], sizes = [2, 32], strides = [1, 1]} : vector<2x96xf32> to vector<2x32xf32>
    %691 = arith.mulf %690, %653 : vector<2x32xf32>
    %692 = vector.extract_strided_slice %679 {offsets = [0, 0], sizes = [2, 32], strides = [1, 1]} : vector<2x96xf32> to vector<2x32xf32>
    %693 = arith.mulf %692, %681 : vector<2x32xf32>
    %694 = arith.addf %691, %693 : vector<2x32xf32>
    %695 = vector.extract_strided_slice %679 {offsets = [0, 64], sizes = [2, 32], strides = [1, 1]} : vector<2x96xf32> to vector<2x32xf32>
    %696 = math.tanh %694 : vector<2x32xf32>
    %697 = arith.mulf %695, %696 : vector<2x32xf32>
    %698 = tpu.concatenate %402, %697 in 1 : vector<2x32xf32>, vector<2x32xf32> -> vector<2x64xf32>
    %699 = tpu.concatenate %443, %656 in 1 : vector<2x32xf32>, vector<2x32xf32> -> vector<2x64xf32>
    %700 = tpu.concatenate %484, %615 in 1 : vector<2x32xf32>, vector<2x32xf32> -> vector<2x64xf32>
    %701 = tpu.concatenate %525, %574 in 1 : vector<2x32xf32>, vector<2x32xf32> -> vector<2x64xf32>
    %702 = tpu.concatenate %566, %533 in 1 : vector<2x32xf32>, vector<2x32xf32> -> vector<2x64xf32>
    %703 = tpu.concatenate %607, %492 in 1 : vector<2x32xf32>, vector<2x32xf32> -> vector<2x64xf32>
    %704 = tpu.concatenate %648, %451 in 1 : vector<2x32xf32>, vector<2x32xf32> -> vector<2x64xf32>
    %705 = tpu.concatenate %689, %410 in 1 : vector<2x32xf32>, vector<2x32xf32> -> vector<2x64xf32>
    %706 = tpu.concatenate %698, %699, %700, %701, %702, %703, %704, %705 in 0 : vector<2x64xf32>, vector<2x64xf32>, vector<2x64xf32>, vector<2x64xf32>, vector<2x64xf32>, vector<2x64xf32>, vector<2x64xf32>, vector<2x64xf32> -> vector<16x64xf32>
    %cst_80 = arith.constant dense<0.000000e+00> : vector<16xf32>
    %707 = vector.multi_reduction <add>, %706, %cst_80 [1] : vector<16x64xf32> to vector<16xf32>
    %708 = vector.shape_cast %707 : vector<16xf32> to vector<16x1xf32>
    %cst_81 = arith.constant 6.400000e+01 : f32
    %709 = vector.broadcast %cst_81 : f32 to vector<16x1xf32>
    %710 = arith.divf %708, %709 : vector<16x1xf32>
    %711 = vector.broadcast %710 : vector<16x1xf32> to vector<16x64xf32>
    %712 = arith.subf %706, %711 : vector<16x64xf32>
    %713 = arith.mulf %712, %712 : vector<16x64xf32>
    %cst_82 = arith.constant dense<0.000000e+00> : vector<16xf32>
    %714 = vector.multi_reduction <add>, %713, %cst_82 [1] : vector<16x64xf32> to vector<16xf32>
    %715 = vector.shape_cast %714 : vector<16xf32> to vector<16x1xf32>
    %cst_83 = arith.constant 6.400000e+01 : f32
    %716 = vector.broadcast %cst_83 : f32 to vector<16x1xf32>
    %717 = arith.divf %715, %716 : vector<16x1xf32>
    %cst_84 = arith.constant 9.99999974E-6 : f32
    %718 = vector.broadcast %cst_84 : f32 to vector<16x1xf32>
    %719 = arith.addf %717, %718 : vector<16x1xf32>
    %720 = math.rsqrt %719 : vector<16x1xf32>
    %721 = vector.broadcast %720 : vector<16x1xf32> to vector<16x64xf32>
    %722 = arith.mulf %712, %721 : vector<16x64xf32>
    %c0_85 = arith.constant 0 : index
    %c0_86 = arith.constant 0 : index
    %723 = vector.load %arg11[%c0_85, %c0_86] : memref<1x64xf32, #tpu.memory_space<vmem>>, vector<1x64xf32>
    %724 = vector.broadcast %723 : vector<1x64xf32> to vector<16x64xf32>
    %725 = arith.mulf %722, %724 : vector<16x64xf32>
    %c0_87 = arith.constant 0 : index
    %c0_88 = arith.constant 0 : index
    %726 = vector.load %arg12[%c0_87, %c0_88] : memref<1x64xf32, #tpu.memory_space<vmem>>, vector<1x64xf32>
    %727 = vector.broadcast %726 : vector<1x64xf32> to vector<16x64xf32>
    %728 = arith.addf %725, %727 : vector<16x64xf32>
    %729 = arith.truncf %728 : vector<16x64xf32> to vector<16x64xbf16>
    %c0_89 = arith.constant 0 : index
    %c0_90 = arith.constant 0 : index
    %730 = vector.load %arg13[%c0_89, %c0_90] : memref<64x5xbf16, #tpu.memory_space<vmem>>, vector<64x5xbf16>
    %cst_91 = arith.constant dense<0.000000e+00> : vector<16x5xf32>
    %731 = tpu.matmul %729, %730, %cst_91 {dimension_numbers = #tpu.dot_dimension_numbers<[1], [0], [0], [1], [0, 0, 1, 1], [], []>} : vector<16x64xbf16>, vector<64x5xbf16>, vector<16x5xf32> -> vector<16x5xf32>
    %c0_92 = arith.constant 0 : index
    %c0_93 = arith.constant 0 : index
    %732 = vector.load %arg14[%c0_92, %c0_93] : memref<1x5xf32, #tpu.memory_space<vmem>>, vector<1x5xf32>
    %733 = vector.broadcast %732 : vector<1x5xf32> to vector<16x5xf32>
    %734 = arith.addf %731, %733 : vector<16x5xf32>
    %c0_94 = arith.constant 0 : index
    %c0_95 = arith.constant 0 : index
    %735 = vector.load %arg15[%c0_94, %c0_95] : memref<16x5xf32, #tpu.memory_space<vmem>>, vector<16x5xf32>
    tpu.vector_store %arg15[%c0_94, %c0_95], %734 {strides = array<i32>} : memref<16x5xf32, #tpu.memory_space<vmem>>, vector<16x5xf32>,
    return
  }
}

</mosaic_0001>

<llo_original>
// kernel: forward.5
$region0: #{forward.5}
  #allocation0 [shape = 'u32[]', space=smem, size = 0x4, offset = 0x4, fixed_abs, tag = 'smem constant byte address 0x4 - core index']
  #allocation1 [shape = 'u32[144,128]{1,0:T(1,128)}', space=vmem, size = 0x12000, scoped, tag = 'internal scratch']
  %s0 = inlined_call_operand.vmem [shape: bf16[4096,7], index: 0, kind: input, shape index: {}]
  %s1 = inlined_call_operand.vmem [shape: bf16[7,16], index: 1, kind: input, shape index: {}]
  %s2 = inlined_call_operand.vmem [shape: f32[1,16], index: 2, kind: input, shape index: {}]
  %s3 = inlined_call_operand.vmem [shape: f32[4096,16], index: 3, kind: output, shape index: {}]
  %s4 = sld [smem:[#allocation0]]
  $region45: #{forward.5} parent=0
    _
  %s6 = ssub.s32 1, %s4
  %s7 = scalar_select 0, %s6, %s4
  loop: start=0, step=1, limit=6
  $region2: #{forward.5} parent=0 // loop_pre_header
    _
  $region3: #{forward.5} parent=0 // loop_header
    %s9 = sphi 0, %s13
    %p10 = scmp.ge.s32.totalorder %s9, 6
    %s19 = sphi 0, %s21
    %s22 = sphi 0, %s19
    %s23 = sphi 0, %s22
    %s39 = sphi 0, %s23
    %s43 = sphi 0, %s43
    %s45 = sphi 0, %s43
    %s46 = sphi 0, %s45
    %s60 = sphi 0, %s46
    %s64 = sphi 0, %s64
    %s66 = sphi 0, %s64
    %s67 = sphi 0, %s66
    %s81 = sphi 0, %s67
    %s87 = sphi 0, %s89
    %s90 = sphi 0, %s87
    %s91 = sphi 0, %s90
    %s107 = sphi 0, %s91
  $region4: #{forward.5} parent=0 // loop_header_branch
    %12 = sbr.rel (%p10) target = $region8
  $region5: #{forward.5} parent=0 // loop_body
    %s14 = ssub.s32 %s9, 1
    %s15 = ssub.s32 %s9, 2
    %s16 = sadd.s32 %s9, 1
    %s17 = ssub.s32 %s9, %s16
    %p18 = scmp.eq.s32.totalorder %s17, 0
    %s20 = sadd.s32 %s19, 1
    %s21 = scalar_select %p18, %s19, %s20
    %p24 = pneg %p18
    %p25 = scmp.eq.s32.totalorder %s9, 3
    %p26 = por %p24, %p25
    %p27 = scmp.ne.s32.totalorder %s19, %s22
    %p28 = scmp.eq.s32.totalorder %s9, 0
    %p29 = por %p27, %p28
    %p30 = scmp.ne.s32.totalorder %s19, %s22
    %p31 = scmp.eq.s32.totalorder %s14, 3
    %p32 = por %p30, %p31
    %p33 = scmp.ne.s32.totalorder %s22, %s23
    %p34 = scmp.eq.s32.totalorder %s14, 0
    %p35 = por %p33, %p34
    %p36 = scmp.ne.s32.totalorder %s22, %s23
    %p37 = scmp.eq.s32.totalorder %s15, 3
    %p38 = por %p36, %p37
    %p40 = scmp.ne.s32.totalorder %s23, %s39
    %p41 = scmp.eq.s32.totalorder %s15, 0
    %p42 = por %p40, %p41
    %s44 = sadd.s32 %s43, 1
    %p47 = scmp.eq.s32.totalorder %s9, 3
    %p48 = scmp.ne.s32.totalorder %s43, %s45
    %p49 = scmp.eq.s32.totalorder %s9, 0
    %p50 = por %p48, %p49
    %p51 = scmp.ne.s32.totalorder %s43, %s45
    %p52 = scmp.eq.s32.totalorder %s14, 3
    %p53 = por %p51, %p52
    %p54 = scmp.ne.s32.totalorder %s45, %s46
    %p55 = scmp.eq.s32.totalorder %s14, 0
    %p56 = por %p54, %p55
    %p57 = scmp.ne.s32.totalorder %s45, %s46
    %p58 = scmp.eq.s32.totalorder %s15, 3
    %p59 = por %p57, %p58
    %p61 = scmp.ne.s32.totalorder %s46, %s60
    %p62 = scmp.eq.s32.totalorder %s15, 0
    %p63 = por %p61, %p62
    %s65 = sadd.s32 %s64, 1
    %p68 = scmp.eq.s32.totalorder %s9, 3
    %p69 = scmp.ne.s32.totalorder %s64, %s66
    %p70 = scmp.eq.s32.totalorder %s9, 0
    %p71 = por %p69, %p70
    %p72 = scmp.ne.s32.totalorder %s64, %s66
    %p73 = scmp.eq.s32.totalorder %s14, 3
    %p74 = por %p72, %p73
    %p75 = scmp.ne.s32.totalorder %s66, %s67
    %p76 = scmp.eq.s32.totalorder %s14, 0
    %p77 = por %p75, %p76
    %p78 = scmp.ne.s32.totalorder %s66, %s67
    %p79 = scmp.eq.s32.totalorder %s15, 3
    %p80 = por %p78, %p79
    %p82 = scmp.ne.s32.totalorder %s67, %s81
    %p83 = scmp.eq.s32.totalorder %s15, 0
    %p84 = por %p82, %p83
    %s85 = ssub.s32 %s9, %s16
    %p86 = scmp.eq.s32.totalorder %s85, 0
    %s88 = sadd.s32 %s87, 1
    %s89 = scalar_select %p86, %s87, %s88
    %p92 = pneg %p86
    %p93 = scmp.eq.s32.totalorder %s9, 3
    %p94 = por %p92, %p93
    %p95 = scmp.ne.s32.totalorder %s87, %s90
    %p96 = scmp.eq.s32.totalorder %s9, 0
    %p97 = por %p95, %p96
    %p98 = scmp.ne.s32.totalorder %s87, %s90
    %p99 = scmp.eq.s32.totalorder %s14, 3
    %p100 = por %p98, %p99
    %p101 = scmp.ne.s32.totalorder %s90, %s91
    %p102 = scmp.eq.s32.totalorder %s14, 0
    %p103 = por %p101, %p102
    %p104 = scmp.ne.s32.totalorder %s90, %s91
    %p105 = scmp.eq.s32.totalorder %s15, 3
    %p106 = por %p104, %p105
    %p108 = scmp.ne.s32.totalorder %s91, %s107
    %p109 = scmp.eq.s32.totalorder %s15, 0
    %p110 = por %p108, %p109
    %p111 = scmp.le.s32.totalorder 1, %s9
    %p112 = scmp.lt.s32.totalorder %s9, 5
    %p113 = pnand %p111, %p112
    %p114 = pneg %p113
    // Predicated region
    $region9: #{forward.5} parent=5 // pred_check
      _
    $region10: #{forward.5} parent=5 // pred_check_branch
      %116 = sbr.rel (%p113) target = $region12
    $region11: #{forward.5} parent=5 // pred_region
      %s117 = ssub.s32 %s9, 1
      // Predicated region
      $region13: #{forward.5} parent=11 // pred_check
        %p118 = pneg %p56
      $region14: #{forward.5} parent=11 // pred_check_branch
        %120 = sbr.rel (%p118) target = $region16
      $region15: #{forward.5} parent=11 // pred_region
        _
      $region16: #{forward.5} parent=11 // pred_fallthru
        _
      // Predicated region
      $region17: #{forward.5} parent=11 // pred_check
        %p121 = pneg %p77
      $region18: #{forward.5} parent=11 // pred_check_branch
        %123 = sbr.rel (%p121) target = $region20
      $region19: #{forward.5} parent=11 // pred_region
        _
      $region20: #{forward.5} parent=11 // pred_fallthru
        _
    $region12: #{forward.5} parent=5 // pred_fallthru
      _
    %p124 = scmp.lt.s32.totalorder %s9, 4
    // Predicated region
    $region21: #{forward.5} parent=5 // pred_check
      %p125 = pneg %p124
    $region22: #{forward.5} parent=5 // pred_check_branch
      %127 = sbr.rel (%p125) target = $region24
    $region23: #{forward.5} parent=5 // pred_region
      // Predicated region
      $region25: #{forward.5} parent=23 // pred_check
        %p128 = pneg %p29
      $region26: #{forward.5} parent=23 // pred_check_branch
        %130 = sbr.rel (%p128) target = $region28
      $region27: #{forward.5} parent=23 // pred_region
        %s131 = smul.u32 128, %s9
        %p132 = scmp.lt.s32.totalorder %s131, 511
        %s133 = scalar_select %p132, %s131, 511
        %s134 = smul.addr %s133, 4
        %s135 = scalar_lea.vmem %s0, %s134
        %s136 = smul.u32 128, %s9
      $region28: #{forward.5} parent=23 // pred_fallthru
        _
    $region24: #{forward.5} parent=5 // pred_fallthru
      _
    %p137 = scmp.le.s32.totalorder 1, %s9
    %p138 = scmp.lt.s32.totalorder %s9, 5
    %p139 = pnand %p137, %p138
    %p140 = pneg %p139
    // Predicated region
    $region29: #{forward.5} parent=5 // pred_check
      _
    $region30: #{forward.5} parent=5 // pred_check_branch
      %142 = sbr.rel (%p139) target = $region32
    $region31: #{forward.5} parent=5 // pred_region
      %s143 = ssub.s32 %s9, 1
      %s144 = smul.u32 128, %s14
      %p145 = scmp.lt.s32.totalorder %s144, 511
      %s146 = scalar_select %p145, %s144, 511
      %s147 = smul.addr %s146, 4
      %s148 = scalar_lea.vmem %s0, %s147
      %p149 = pneg %p35
      %p150 = pneg %p32
      %p151 = pneg %p56
      %p152 = pneg %p53
      %p153 = pneg %p77
      %p154 = pneg %p74
      %p155 = pneg %p103
      %p156 = pneg %p100
      %s157 = smul.u32 128, %s14
      %p158 = scmp.lt.s32.totalorder %s157, 511
      %s159 = scalar_select %p158, %s157, 511
      %s160 = smul.addr %s159, 8
      %s161 = scalar_lea.vmem %s3, %s160
      %s162 = smul.u32 128, %s14
      %p163 = scmp.lt.s32.totalorder %s162, 511
      %s164 = scalar_select %p163, %s162, 511
      %s165 = smul.addr %s164, 4
      %s166 = scalar_lea.vmem %s0, %s165
      %s167 = smul.u32 128, %s14
      %s168 = smul.u32 128, %s14
      %p169 = scmp.lt.s32.totalorder %s168, 511
      %s170 = scalar_select %p169, %s168, 511
      %s171 = smul.addr %s170, 8
      %s172 = scalar_lea.vmem %s3, %s171
      %s173 = smul.u32 128, %s14
      %v175 = vld [vmem:[%s166] sm:$0xf]
      %v176 = vld [vmem:[%s166 + $0x4] sm:$0xf]
      %v177 = vld [vmem:[%s166 + $0x8] sm:$0xf]
      %v178 = vld [vmem:[%s166 + $0xc] sm:$0xf]
      %v179 = vld [vmem:[%s166 + $0x10] sm:$0xf]
      %v180 = vld [vmem:[%s166 + $0x14] sm:$0xf]
      %v181 = vld [vmem:[%s166 + $0x18] sm:$0xf]
      %v182 = vld [vmem:[%s166 + $0x1c] sm:$0xf]
      %v183 = vld [vmem:[%s166 + $0x20] sm:$0xf]
      %v184 = vld [vmem:[%s166 + $0x24] sm:$0xf]
      %v185 = vld [vmem:[%s166 + $0x28] sm:$0xf]
      %v186 = vld [vmem:[%s166 + $0x2c] sm:$0xf]
      %v187 = vld [vmem:[%s166 + $0x30] sm:$0xf]
      %v188 = vld [vmem:[%s166 + $0x34] sm:$0xf]
      %v189 = vld [vmem:[%s166 + $0x38] sm:$0xf]
      %v190 = vld [vmem:[%s166 + $0x3c] sm:$0xf]
      %v191 = vld [vmem:[%s166 + $0x40] sm:$0xf]
      %v192 = vld [vmem:[%s166 + $0x44] sm:$0xf]
      %v193 = vld [vmem:[%s166 + $0x48] sm:$0xf]
      %v194 = vld [vmem:[%s166 + $0x4c] sm:$0xf]
      %v195 = vld [vmem:[%s166 + $0x50] sm:$0xf]
      %v196 = vld [vmem:[%s166 + $0x54] sm:$0xf]
      %v197 = vld [vmem:[%s166 + $0x58] sm:$0xf]
      %v198 = vld [vmem:[%s166 + $0x5c] sm:$0xf]
      %v199 = vld [vmem:[%s166 + $0x60] sm:$0xf]
      %v200 = vld [vmem:[%s166 + $0x64] sm:$0xf]
      %v201 = vld [vmem:[%s166 + $0x68] sm:$0xf]
      %v202 = vld [vmem:[%s166 + $0x6c] sm:$0xf]
      %v203 = vld [vmem:[%s166 + $0x70] sm:$0xf]
      %v204 = vld [vmem:[%s166 + $0x74] sm:$0xf]
      %v205 = vld [vmem:[%s166 + $0x78] sm:$0xf]
      %v206 = vld [vmem:[%s166 + $0x7c] sm:$0xf]
      %v207 = vld [vmem:[%s166 + $0x80] sm:$0xf]
      %v208 = vld [vmem:[%s166 + $0x84] sm:$0xf]
      %v209 = vld [vmem:[%s166 + $0x88] sm:$0xf]
      %v210 = vld [vmem:[%s166 + $0x8c] sm:$0xf]
      %v211 = vld [vmem:[%s166 + $0x90] sm:$0xf]
      %v212 = vld [vmem:[%s166 + $0x94] sm:$0xf]
      %v213 = vld [vmem:[%s166 + $0x98] sm:$0xf]
      %v214 = vld [vmem:[%s166 + $0x9c] sm:$0xf]
      %v215 = vld [vmem:[%s166 + $0xa0] sm:$0xf]
      %v216 = vld [vmem:[%s166 + $0xa4] sm:$0xf]
      %v217 = vld [vmem:[%s166 + $0xa8] sm:$0xf]
      %v218 = vld [vmem:[%s166 + $0xac] sm:$0xf]
      %v219 = vld [vmem:[%s166 + $0xb0] sm:$0xf]
      %v220 = vld [vmem:[%s166 + $0xb4] sm:$0xf]
      %v221 = vld [vmem:[%s166 + $0xb8] sm:$0xf]
      %v222 = vld [vmem:[%s166 + $0xbc] sm:$0xf]
      %v223 = vld [vmem:[%s166 + $0xc0] sm:$0xf]
      %v224 = vld [vmem:[%s166 + $0xc4] sm:$0xf]
      %v225 = vld [vmem:[%s166 + $0xc8] sm:$0xf]
      %v226 = vld [vmem:[%s166 + $0xcc] sm:$0xf]
      %v227 = vld [vmem:[%s166 + $0xd0] sm:$0xf]
      %v228 = vld [vmem:[%s166 + $0xd4] sm:$0xf]
      %v229 = vld [vmem:[%s166 + $0xd8] sm:$0xf]
      %v230 = vld [vmem:[%s166 + $0xdc] sm:$0xf]
      %v231 = vld [vmem:[%s166 + $0xe0] sm:$0xf]
      %v232 = vld [vmem:[%s166 + $0xe4] sm:$0xf]
      %v233 = vld [vmem:[%s166 + $0xe8] sm:$0xf]
      %v234 = vld [vmem:[%s166 + $0xec] sm:$0xf]
      %v235 = vld [vmem:[%s166 + $0xf0] sm:$0xf]
      %v236 = vld [vmem:[%s166 + $0xf4] sm:$0xf]
      %v237 = vld [vmem:[%s166 + $0xf8] sm:$0xf]
      %v238 = vld [vmem:[%s166 + $0xfc] sm:$0xf]
      %v239 = vld [vmem:[%s166 + $0x100] sm:$0xf]
      %v240 = vld [vmem:[%s166 + $0x104] sm:$0xf]
      %v241 = vld [vmem:[%s166 + $0x108] sm:$0xf]
      %v242 = vld [vmem:[%s166 + $0x10c] sm:$0xf]
      %v243 = vld [vmem:[%s166 + $0x110] sm:$0xf]
      %v244 = vld [vmem:[%s166 + $0x114] sm:$0xf]
      %v245 = vld [vmem:[%s166 + $0x118] sm:$0xf]
      %v246 = vld [vmem:[%s166 + $0x11c] sm:$0xf]
      %v247 = vld [vmem:[%s166 + $0x120] sm:$0xf]
      %v248 = vld [vmem:[%s166 + $0x124] sm:$0xf]
      %v249 = vld [vmem:[%s166 + $0x128] sm:$0xf]
      %v250 = vld [vmem:[%s166 + $0x12c] sm:$0xf]
      %v251 = vld [vmem:[%s166 + $0x130] sm:$0xf]
      %v252 = vld [vmem:[%s166 + $0x134] sm:$0xf]
      %v253 = vld [vmem:[%s166 + $0x138] sm:$0xf]
      %v254 = vld [vmem:[%s166 + $0x13c] sm:$0xf]
      %v255 = vld [vmem:[%s166 + $0x140] sm:$0xf]
      %v256 = vld [vmem:[%s166 + $0x144] sm:$0xf]
      %v257 = vld [vmem:[%s166 + $0x148] sm:$0xf]
      %v258 = vld [vmem:[%s166 + $0x14c] sm:$0xf]
      %v259 = vld [vmem:[%s166 + $0x150] sm:$0xf]
      %v260 = vld [vmem:[%s166 + $0x154] sm:$0xf]
      %v261 = vld [vmem:[%s166 + $0x158] sm:$0xf]
      %v262 = vld [vmem:[%s166 + $0x15c] sm:$0xf]
      %v263 = vld [vmem:[%s166 + $0x160] sm:$0xf]
      %v264 = vld [vmem:[%s166 + $0x164] sm:$0xf]
      %v265 = vld [vmem:[%s166 + $0x168] sm:$0xf]
      %v266 = vld [vmem:[%s166 + $0x16c] sm:$0xf]
      %v267 = vld [vmem:[%s166 + $0x170] sm:$0xf]
      %v268 = vld [vmem:[%s166 + $0x174] sm:$0xf]
      %v269 = vld [vmem:[%s166 + $0x178] sm:$0xf]
      %v270 = vld [vmem:[%s166 + $0x17c] sm:$0xf]
      %v271 = vld [vmem:[%s166 + $0x180] sm:$0xf]
      %v272 = vld [vmem:[%s166 + $0x184] sm:$0xf]
      %v273 = vld [vmem:[%s166 + $0x188] sm:$0xf]
      %v274 = vld [vmem:[%s166 + $0x18c] sm:$0xf]
      %v275 = vld [vmem:[%s166 + $0x190] sm:$0xf]
      %v276 = vld [vmem:[%s166 + $0x194] sm:$0xf]
      %v277 = vld [vmem:[%s166 + $0x198] sm:$0xf]
      %v278 = vld [vmem:[%s166 + $0x19c] sm:$0xf]
      %v279 = vld [vmem:[%s166 + $0x1a0] sm:$0xf]
      %v280 = vld [vmem:[%s166 + $0x1a4] sm:$0xf]
      %v281 = vld [vmem:[%s166 + $0x1a8] sm:$0xf]
      %v282 = vld [vmem:[%s166 + $0x1ac] sm:$0xf]
      %v283 = vld [vmem:[%s166 + $0x1b0] sm:$0xf]
      %v284 = vld [vmem:[%s166 + $0x1b4] sm:$0xf]
      %v285 = vld [vmem:[%s166 + $0x1b8] sm:$0xf]
      %v286 = vld [vmem:[%s166 + $0x1bc] sm:$0xf]
      %v287 = vld [vmem:[%s166 + $0x1c0] sm:$0xf]
      %v288 = vld [vmem:[%s166 + $0x1c4] sm:$0xf]
      %v289 = vld [vmem:[%s166 + $0x1c8] sm:$0xf]
      %v290 = vld [vmem:[%s166 + $0x1cc] sm:$0xf]
      %v291 = vld [vmem:[%s166 + $0x1d0] sm:$0xf]
      %v292 = vld [vmem:[%s166 + $0x1d4] sm:$0xf]
      %v293 = vld [vmem:[%s166 + $0x1d8] sm:$0xf]
      %v294 = vld [vmem:[%s166 + $0x1dc] sm:$0xf]
      %v295 = vld [vmem:[%s166 + $0x1e0] sm:$0xf]
      %v296 = vld [vmem:[%s166 + $0x1e4] sm:$0xf]
      %v297 = vld [vmem:[%s166 + $0x1e8] sm:$0xf]
      %v298 = vld [vmem:[%s166 + $0x1ec] sm:$0xf]
      %v299 = vld [vmem:[%s166 + $0x1f0] sm:$0xf]
      %v300 = vld [vmem:[%s166 + $0x1f4] sm:$0xf]
      %v301 = vld [vmem:[%s166 + $0x1f8] sm:$0xf]
      %v302 = vld [vmem:[%s166 + $0x1fc] sm:$0xf]
      %v303 = vld [vmem:[%s1] sm:$0xf]
      %v304 = vld [vmem:[%s2] sm:$0x1]
      %v306 = vlaneseq
      %v307 = vshrl.u32 %v306, 7
      %v308 = vsub.s32 0, %v307
      %v309 = vrot.slane %v304, %v308
      %v439 = vunpack.c.l.b16 %v175
      %v440 = vunpack.c.l.b16 %v176
      %v441 = vunpack.c.l.b16 %v177
      %v442 = vunpack.c.l.b16 %v178
      %v443 = vunpack.c.l.b16 %v179
      %v444 = vunpack.c.l.b16 %v180
      %v445 = vunpack.c.l.b16 %v181
      %v446 = vunpack.c.l.b16 %v182
      %v447 = vunpack.c.l.b16 %v183
      %v448 = vunpack.c.l.b16 %v184
      %v449 = vunpack.c.l.b16 %v185
      %v450 = vunpack.c.l.b16 %v186
      %v451 = vunpack.c.l.b16 %v187
      %v452 = vunpack.c.l.b16 %v188
      %v453 = vunpack.c.l.b16 %v189
      %v454 = vunpack.c.l.b16 %v190
      %v455 = vunpack.c.l.b16 %v191
      %v456 = vunpack.c.l.b16 %v192
      %v457 = vunpack.c.l.b16 %v193
      %v458 = vunpack.c.l.b16 %v194
      %v459 = vunpack.c.l.b16 %v195
      %v460 = vunpack.c.l.b16 %v196
      %v461 = vunpack.c.l.b16 %v197
      %v462 = vunpack.c.l.b16 %v198
      %v463 = vunpack.c.l.b16 %v199
      %v464 = vunpack.c.l.b16 %v200
      %v465 = vunpack.c.l.b16 %v201
      %v466 = vunpack.c.l.b16 %v202
      %v467 = vunpack.c.l.b16 %v203
      %v468 = vunpack.c.l.b16 %v204
      %v469 = vunpack.c.l.b16 %v205
      %v470 = vunpack.c.l.b16 %v206
      %v471 = vunpack.c.l.b16 %v207
      %v472 = vunpack.c.l.b16 %v208
      %v473 = vunpack.c.l.b16 %v209
      %v474 = vunpack.c.l.b16 %v210
      %v475 = vunpack.c.l.b16 %v211
      %v476 = vunpack.c.l.b16 %v212
      %v477 = vunpack.c.l.b16 %v213
      %v478 = vunpack.c.l.b16 %v214
      %v479 = vunpack.c.l.b16 %v215
      %v480 = vunpack.c.l.b16 %v216
      %v481 = vunpack.c.l.b16 %v217
      %v482 = vunpack.c.l.b16 %v218
      %v483 = vunpack.c.l.b16 %v219
      %v484 = vunpack.c.l.b16 %v220
      %v485 = vunpack.c.l.b16 %v221
      %v486 = vunpack.c.l.b16 %v222
      %v487 = vunpack.c.l.b16 %v223
      %v488 = vunpack.c.l.b16 %v224
      %v489 = vunpack.c.l.b16 %v225
      %v490 = vunpack.c.l.b16 %v226
      %v491 = vunpack.c.l.b16 %v227
      %v492 = vunpack.c.l.b16 %v228
      %v493 = vunpack.c.l.b16 %v229
      %v494 = vunpack.c.l.b16 %v230
      %v495 = vunpack.c.l.b16 %v231
      %v496 = vunpack.c.l.b16 %v232
      %v497 = vunpack.c.l.b16 %v233
      %v498 = vunpack.c.l.b16 %v234
      %v499 = vunpack.c.l.b16 %v235
      %v500 = vunpack.c.l.b16 %v236
      %v501 = vunpack.c.l.b16 %v237
      %v502 = vunpack.c.l.b16 %v238
      %v503 = vunpack.c.l.b16 %v239
      %v504 = vunpack.c.l.b16 %v240
      %v505 = vunpack.c.l.b16 %v241
      %v506 = vunpack.c.l.b16 %v242
      %v507 = vunpack.c.l.b16 %v243
      %v508 = vunpack.c.l.b16 %v244
      %v509 = vunpack.c.l.b16 %v245
      %v510 = vunpack.c.l.b16 %v246
      %v511 = vunpack.c.l.b16 %v247
      %v512 = vunpack.c.l.b16 %v248
      %v513 = vunpack.c.l.b16 %v249
      %v514 = vunpack.c.l.b16 %v250
      %v515 = vunpack.c.l.b16 %v251
      %v516 = vunpack.c.l.b16 %v252
      %v517 = vunpack.c.l.b16 %v253
      %v518 = vunpack.c.l.b16 %v254
      %v519 = vunpack.c.l.b16 %v255
      %v520 = vunpack.c.l.b16 %v256
      %v521 = vunpack.c.l.b16 %v257
      %v522 = vunpack.c.l.b16 %v258
      %v523 = vunpack.c.l.b16 %v259
      %v524 = vunpack.c.l.b16 %v260
      %v525 = vunpack.c.l.b16 %v261
      %v526 = vunpack.c.l.b16 %v262
      %v527 = vunpack.c.l.b16 %v263
      %v528 = vunpack.c.l.b16 %v264
      %v529 = vunpack.c.l.b16 %v265
      %v530 = vunpack.c.l.b16 %v266
      %v531 = vunpack.c.l.b16 %v267
      %v532 = vunpack.c.l.b16 %v268
      %v533 = vunpack.c.l.b16 %v269
      %v534 = vunpack.c.l.b16 %v270
      %v535 = vunpack.c.l.b16 %v271
      %v536 = vunpack.c.l.b16 %v272
      %v537 = vunpack.c.l.b16 %v273
      %v538 = vunpack.c.l.b16 %v274
      %v539 = vunpack.c.l.b16 %v275
      %v540 = vunpack.c.l.b16 %v276
      %v541 = vunpack.c.l.b16 %v277
      %v542 = vunpack.c.l.b16 %v278
      %v543 = vunpack.c.l.b16 %v279
      %v544 = vunpack.c.l.b16 %v280
      %v545 = vunpack.c.l.b16 %v281
      %v546 = vunpack.c.l.b16 %v282
      %v547 = vunpack.c.l.b16 %v283
      %v548 = vunpack.c.l.b16 %v284
      %v549 = vunpack.c.l.b16 %v285
      %v550 = vunpack.c.l.b16 %v286
      %v551 = vunpack.c.l.b16 %v287
      %v552 = vunpack.c.l.b16 %v288
      %v553 = vunpack.c.l.b16 %v289
      %v554 = vunpack.c.l.b16 %v290
      %v555 = vunpack.c.l.b16 %v291
      %v556 = vunpack.c.l.b16 %v292
      %v557 = vunpack.c.l.b16 %v293
      %v558 = vunpack.c.l.b16 %v294
      %v559 = vunpack.c.l.b16 %v295
      %v560 = vunpack.c.l.b16 %v296
      %v561 = vunpack.c.l.b16 %v297
      %v562 = vunpack.c.l.b16 %v298
      %v563 = vunpack.c.l.b16 %v299
      %v564 = vunpack.c.l.b16 %v300
      %v565 = vunpack.c.l.b16 %v301
      %v566 = vunpack.c.l.b16 %v302
      %v567 = vpack.c.b16 %v440, %v439
      %v568 = vpack.c.b16 %v442, %v441
      %v569 = vpack.c.b16 %v444, %v443
      %v570 = vpack.c.b16 %v446, %v445
      %v571 = vpack.c.b16 %v448, %v447
      %v572 = vpack.c.b16 %v450, %v449
      %v573 = vpack.c.b16 %v452, %v451
      %v574 = vpack.c.b16 %v454, %v453
      %v575 = vpack.c.b16 %v456, %v455
      %v576 = vpack.c.b16 %v458, %v457
      %v577 = vpack.c.b16 %v460, %v459
      %v578 = vpack.c.b16 %v462, %v461
      %v579 = vpack.c.b16 %v464, %v463
      %v580 = vpack.c.b16 %v466, %v465
      %v581 = vpack.c.b16 %v468, %v467
      %v582 = vpack.c.b16 %v470, %v469
      %v583 = vpack.c.b16 %v472, %v471
      %v584 = vpack.c.b16 %v474, %v473
      %v585 = vpack.c.b16 %v476, %v475
      %v586 = vpack.c.b16 %v478, %v477
      %v587 = vpack.c.b16 %v480, %v479
      %v588 = vpack.c.b16 %v482, %v481
      %v589 = vpack.c.b16 %v484, %v483
      %v590 = vpack.c.b16 %v486, %v485
      %v591 = vpack.c.b16 %v488, %v487
      %v592 = vpack.c.b16 %v490, %v489
      %v593 = vpack.c.b16 %v492, %v491
      %v594 = vpack.c.b16 %v494, %v493
      %v595 = vpack.c.b16 %v496, %v495
      %v596 = vpack.c.b16 %v498, %v497
      %v597 = vpack.c.b16 %v500, %v499
      %v598 = vpack.c.b16 %v502, %v501
      %v599 = vpack.c.b16 %v504, %v503
      %v600 = vpack.c.b16 %v506, %v505
      %v601 = vpack.c.b16 %v508, %v507
      %v602 = vpack.c.b16 %v510, %v509
      %v603 = vpack.c.b16 %v512, %v511
      %v604 = vpack.c.b16 %v514, %v513
      %v605 = vpack.c.b16 %v516, %v515
      %v606 = vpack.c.b16 %v518, %v517
      %v607 = vpack.c.b16 %v520, %v519
      %v608 = vpack.c.b16 %v522, %v521
      %v609 = vpack.c.b16 %v524, %v523
      %v610 = vpack.c.b16 %v526, %v525
      %v611 = vpack.c.b16 %v528, %v527
      %v612 = vpack.c.b16 %v530, %v529
      %v613 = vpack.c.b16 %v532, %v531
      %v614 = vpack.c.b16 %v534, %v533
      %v615 = vpack.c.b16 %v536, %v535
      %v616 = vpack.c.b16 %v538, %v537
      %v617 = vpack.c.b16 %v540, %v539
      %v618 = vpack.c.b16 %v542, %v541
      %v619 = vpack.c.b16 %v544, %v543
      %v620 = vpack.c.b16 %v546, %v545
      %v621 = vpack.c.b16 %v548, %v547
      %v622 = vpack.c.b16 %v550, %v549
      %v623 = vpack.c.b16 %v552, %v551
      %v624 = vpack.c.b16 %v554, %v553
      %v625 = vpack.c.b16 %v556, %v555
      %v626 = vpack.c.b16 %v558, %v557
      %v627 = vpack.c.b16 %v560, %v559
      %v628 = vpack.c.b16 %v562, %v561
      %v629 = vpack.c.b16 %v564, %v563
      %v630 = vpack.c.b16 %v566, %v565
      %vm631 = vcmask 56320
      %v633 = vsel %vm631, %v567, 0
      %v636 = vsel %vm631, %v568, 0
      %v639 = vsel %vm631, %v569, 0
      %v642 = vsel %vm631, %v570, 0
      %v645 = vsel %vm631, %v571, 0
      %v648 = vsel %vm631, %v572, 0
      %v651 = vsel %vm631, %v573, 0
      %v654 = vsel %vm631, %v574, 0
      %v657 = vsel %vm631, %v575, 0
      %v660 = vsel %vm631, %v576, 0
      %v663 = vsel %vm631, %v577, 0
      %v666 = vsel %vm631, %v578, 0
      %v669 = vsel %vm631, %v579, 0
      %v672 = vsel %vm631, %v580, 0
      %v675 = vsel %vm631, %v581, 0
      %v678 = vsel %vm631, %v582, 0
      %v681 = vsel %vm631, %v583, 0
      %v684 = vsel %vm631, %v584, 0
      %v687 = vsel %vm631, %v585, 0
      %v690 = vsel %vm631, %v586, 0
      %v693 = vsel %vm631, %v587, 0
      %v696 = vsel %vm631, %v588, 0
      %v699 = vsel %vm631, %v589, 0
      %v702 = vsel %vm631, %v590, 0
      %v705 = vsel %vm631, %v591, 0
      %v708 = vsel %vm631, %v592, 0
      %v711 = vsel %vm631, %v593, 0
      %v714 = vsel %vm631, %v594, 0
      %v717 = vsel %vm631, %v595, 0
      %v720 = vsel %vm631, %v596, 0
      %v723 = vsel %vm631, %v597, 0
      %v726 = vsel %vm631, %v598, 0
      %v729 = vsel %vm631, %v599, 0
      %v732 = vsel %vm631, %v600, 0
      %v735 = vsel %vm631, %v601, 0
      %v738 = vsel %vm631, %v602, 0
      %v741 = vsel %vm631, %v603, 0
      %v744 = vsel %vm631, %v604, 0
      %v747 = vsel %vm631, %v605, 0
      %v750 = vsel %vm631, %v606, 0
      %v753 = vsel %vm631, %v607, 0
      %v756 = vsel %vm631, %v608, 0
      %v759 = vsel %vm631, %v609, 0
      %v762 = vsel %vm631, %v610, 0
      %v765 = vsel %vm631, %v611, 0
      %v768 = vsel %vm631, %v612, 0
      %v771 = vsel %vm631, %v613, 0
      %v774 = vsel %vm631, %v614, 0
      %v777 = vsel %vm631, %v615, 0
      %v780 = vsel %vm631, %v616, 0
      %v783 = vsel %vm631, %v617, 0
      %v786 = vsel %vm631, %v618, 0
      %v789 = vsel %vm631, %v619, 0
      %v792 = vsel %vm631, %v620, 0
      %v795 = vsel %vm631, %v621, 0
      %v798 = vsel %vm631, %v622, 0
      %v801 = vsel %vm631, %v623, 0
      %v804 = vsel %vm631, %v624, 0
      %v807 = vsel %vm631, %v625, 0
      %v810 = vsel %vm631, %v626, 0
      %v813 = vsel %vm631, %v627, 0
      %v816 = vsel %vm631, %v628, 0
      %v819 = vsel %vm631, %v629, 0
      %v822 = vsel %vm631, %v630, 0
      %vm824 = vcmask 1042432
      %vm825 = vcmask 1043456
      %v826 = vsel %vm824, 4294967295, 65535
      %v827 = vsel %vm825, %v826, 0
      %v829 = vand.u32 %v303, %v827
      %831 = vmatprep.subr.bf16.mxu0 0
      %832 = vmatpush1.bf16.msra.mxu0 0
      %833 = vmatprep.subr.bf16.mxu0 0
      %834 = vmatpush1.bf16.msra.mxu0 0
      %835 = vmatprep.subr.bf16.mxu0 0
      %836 = vmatpush1.bf16.msra.mxu0 0
      %837 = vmatprep.subr.bf16.mxu0 0
      %838 = vmatpush1.bf16.msra.mxu0 0
      %839 = vmatprep.subr.bf16.mxu0 0
      %840 = vmatpush1.bf16.msra.mxu0 0
      %841 = vmatprep.subr.bf16.mxu0 0
      %842 = vmatpush1.bf16.msra.mxu0 0
      %843 = vmatprep.subr.bf16.mxu0 0
      %844 = vmatpush1.bf16.msra.mxu0 0
      %845 = vmatprep.subr.bf16.mxu0 0
      %846 = vmatpush1.bf16.msra.mxu0 %v829
      %847 = vmatprep.subr.bf16.mxu0 0
      %848 = vmatpush2.bf16.msra.mxu0 0
      %849 = vmatprep.subr.bf16.mxu0 0
      %850 = vmatpush2.bf16.msra.mxu0 0
      %851 = vmatprep.subr.bf16.mxu0 0
      %852 = vmatpush2.bf16.msra.mxu0 0
      %853 = vmatprep.subr.bf16.mxu0 0
      %854 = vmatpush2.bf16.msra.mxu0 0
      %855 = vmatprep.subr.bf16.mxu0 0
      %856 = vmatpush2.bf16.msra.mxu0 0
      %857 = vmatprep.subr.bf16.mxu0 0
      %858 = vmatpush2.bf16.msra.mxu0 0
      %859 = vmatprep.subr.bf16.mxu0 0
      %860 = vmatpush2.bf16.msra.mxu0 0
      %861 = vmatprep.subr.bf16.mxu0 0
      %862 = vmatpush2.bf16.msra.mxu0 0
      %863 = vmatprep.mubr.bf16.mxu0 0
      %864 = vmatmul.mubr.bf16.gmra.mxu0 %v633
      %v865 = vpop.f32.mrf.mxu0
      %v866 = vadd.f32 %v309, %v865
      %v867 = vpop.f32.mrf.mxu0
      %v868 = vpop.f32.mrf.mxu0
      %v869 = vadd.f32 %v309, %v868
      %v870 = vpop.f32.mrf.mxu0
      %871 = vmatprep.mubr.bf16.mxu0 0
      %872 = vmatmul.mubr.bf16.gmra.mxu0 %v636
      %v873 = vpop.f32.mrf.mxu0
      %v874 = vadd.f32 %v309, %v873
      %v875 = vpop.f32.mrf.mxu0
      %v876 = vpop.f32.mrf.mxu0
      %v877 = vadd.f32 %v309, %v876
      %v878 = vpop.f32.mrf.mxu0
      %879 = vmatprep.mubr.bf16.mxu0 0
      %880 = vmatmul.mubr.bf16.gmra.mxu0 %v639
      %v881 = vpop.f32.mrf.mxu0
      %v882 = vadd.f32 %v309, %v881
      %v883 = vpop.f32.mrf.mxu0
      %v884 = vpop.f32.mrf.mxu0
      %v885 = vadd.f32 %v309, %v884
      %v886 = vpop.f32.mrf.mxu0
      %887 = vmatprep.mubr.bf16.mxu0 0
      %888 = vmatmul.mubr.bf16.gmra.mxu0 %v642
      %v889 = vpop.f32.mrf.mxu0
      %v890 = vadd.f32 %v309, %v889
      %v891 = vpop.f32.mrf.mxu0
      %v892 = vpop.f32.mrf.mxu0
      %v893 = vadd.f32 %v309, %v892
      %v894 = vpop.f32.mrf.mxu0
      %895 = vmatprep.mubr.bf16.mxu0 0
      %896 = vmatmul.mubr.bf16.gmra.mxu0 %v645
      %v897 = vpop.f32.mrf.mxu0
      %v898 = vadd.f32 %v309, %v897
      %v899 = vpop.f32.mrf.mxu0
      %v900 = vpop.f32.mrf.mxu0
      %v901 = vadd.f32 %v309, %v900
      %v902 = vpop.f32.mrf.mxu0
      %903 = vmatprep.mubr.bf16.mxu0 0
      %904 = vmatmul.mubr.bf16.gmra.mxu0 %v648
      %v905 = vpop.f32.mrf.mxu0
      %v906 = vadd.f32 %v309, %v905
      %v907 = vpop.f32.mrf.mxu0
      %v908 = vpop.f32.mrf.mxu0
      %v909 = vadd.f32 %v309, %v908
      %v910 = vpop.f32.mrf.mxu0
      %911 = vmatprep.mubr.bf16.mxu0 0
      %912 = vmatmul.mubr.bf16.gmra.mxu0 %v651
      %v913 = vpop.f32.mrf.mxu0
      %v914 = vadd.f32 %v309, %v913
      %v915 = vpop.f32.mrf.mxu0
      %v916 = vpop.f32.mrf.mxu0
      %v917 = vadd.f32 %v309, %v916
      %v918 = vpop.f32.mrf.mxu0
      %919 = vmatprep.mubr.bf16.mxu0 0
      %920 = vmatmul.mubr.bf16.gmra.mxu0 %v654
      %v921 = vpop.f32.mrf.mxu0
      %v922 = vadd.f32 %v309, %v921
      %v923 = vpop.f32.mrf.mxu0
      %v924 = vpop.f32.mrf.mxu0
      %v925 = vadd.f32 %v309, %v924
      %v926 = vpop.f32.mrf.mxu0
      %927 = vmatprep.mubr.bf16.mxu0 0
      %928 = vmatmul.mubr.bf16.gmra.mxu0 %v657
      %v929 = vpop.f32.mrf.mxu0
      %v930 = vadd.f32 %v309, %v929
      %v931 = vpop.f32.mrf.mxu0
      %v932 = vpop.f32.mrf.mxu0
      %v933 = vadd.f32 %v309, %v932
      %v934 = vpop.f32.mrf.mxu0
      %935 = vmatprep.mubr.bf16.mxu0 0
      %936 = vmatmul.mubr.bf16.gmra.mxu0 %v660
      %v937 = vpop.f32.mrf.mxu0
      %v938 = vadd.f32 %v309, %v937
      %v939 = vpop.f32.mrf.mxu0
      %v940 = vpop.f32.mrf.mxu0
      %v941 = vadd.f32 %v309, %v940
      %v942 = vpop.f32.mrf.mxu0
      %943 = vmatprep.mubr.bf16.mxu0 0
      %944 = vmatmul.mubr.bf16.gmra.mxu0 %v663
      %v945 = vpop.f32.mrf.mxu0
      %v946 = vadd.f32 %v309, %v945
      %v947 = vpop.f32.mrf.mxu0
      %v948 = vpop.f32.mrf.mxu0
      %v949 = vadd.f32 %v309, %v948
      %v950 = vpop.f32.mrf.mxu0
      %951 = vmatprep.mubr.bf16.mxu0 0
      %952 = vmatmul.mubr.bf16.gmra.mxu0 %v666
      %v953 = vpop.f32.mrf.mxu0
      %v954 = vadd.f32 %v309, %v953
      %v955 = vpop.f32.mrf.mxu0
      %v956 = vpop.f32.mrf.mxu0
      %v957 = vadd.f32 %v309, %v956
      %v958 = vpop.f32.mrf.mxu0
      %959 = vmatprep.mubr.bf16.mxu0 0
      %960 = vmatmul.mubr.bf16.gmra.mxu0 %v669
      %v961 = vpop.f32.mrf.mxu0
      %v962 = vadd.f32 %v309, %v961
      %v963 = vpop.f32.mrf.mxu0
      %v964 = vpop.f32.mrf.mxu0
      %v965 = vadd.f32 %v309, %v964
      %v966 = vpop.f32.mrf.mxu0
      %967 = vmatprep.mubr.bf16.mxu0 0
      %968 = vmatmul.mubr.bf16.gmra.mxu0 %v672
      %v969 = vpop.f32.mrf.mxu0
      %v970 = vadd.f32 %v309, %v969
      %v971 = vpop.f32.mrf.mxu0
      %v972 = vpop.f32.mrf.mxu0
      %v973 = vadd.f32 %v309, %v972
      %v974 = vpop.f32.mrf.mxu0
      %975 = vmatprep.mubr.bf16.mxu0 0
      %976 = vmatmul.mubr.bf16.gmra.mxu0 %v675
      %v977 = vpop.f32.mrf.mxu0
      %v978 = vadd.f32 %v309, %v977
      %v979 = vpop.f32.mrf.mxu0
      %v980 = vpop.f32.mrf.mxu0
      %v981 = vadd.f32 %v309, %v980
      %v982 = vpop.f32.mrf.mxu0
      %983 = vmatprep.mubr.bf16.mxu0 0
      %984 = vmatmul.mubr.bf16.gmra.mxu0 %v678
      %v985 = vpop.f32.mrf.mxu0
      %v986 = vadd.f32 %v309, %v985
      %v987 = vpop.f32.mrf.mxu0
      %v988 = vpop.f32.mrf.mxu0
      %v989 = vadd.f32 %v309, %v988
      %v990 = vpop.f32.mrf.mxu0
      %991 = vmatprep.mubr.bf16.mxu0 0
      %992 = vmatmul.mubr.bf16.gmra.mxu0 %v681
      %v993 = vpop.f32.mrf.mxu0
      %v994 = vadd.f32 %v309, %v993
      %v995 = vpop.f32.mrf.mxu0
      %v996 = vpop.f32.mrf.mxu0
      %v997 = vadd.f32 %v309, %v996
      %v998 = vpop.f32.mrf.mxu0
      %999 = vmatprep.mubr.bf16.mxu0 0
      %1000 = vmatmul.mubr.bf16.gmra.mxu0 %v684
      %v1001 = vpop.f32.mrf.mxu0
      %v1002 = vadd.f32 %v309, %v1001
      %v1003 = vpop.f32.mrf.mxu0
      %v1004 = vpop.f32.mrf.mxu0
      %v1005 = vadd.f32 %v309, %v1004
      %v1006 = vpop.f32.mrf.mxu0
      %1007 = vmatprep.mubr.bf16.mxu0 0
      %1008 = vmatmul.mubr.bf16.gmra.mxu0 %v687
      %v1009 = vpop.f32.mrf.mxu0
      %v1010 = vadd.f32 %v309, %v1009
      %v1011 = vpop.f32.mrf.mxu0
      %v1012 = vpop.f32.mrf.mxu0
      %v1013 = vadd.f32 %v309, %v1012
      %v1014 = vpop.f32.mrf.mxu0
      %1015 = vmatprep.mubr.bf16.mxu0 0
      %1016 = vmatmul.mubr.bf16.gmra.mxu0 %v690
      %v1017 = vpop.f32.mrf.mxu0
      %v1018 = vadd.f32 %v309, %v1017
      %v1019 = vpop.f32.mrf.mxu0
      %v1020 = vpop.f32.mrf.mxu0
      %v1021 = vadd.f32 %v309, %v1020
      %v1022 = vpop.f32.mrf.mxu0
      %1023 = vmatprep.mubr.bf16.mxu0 0
      %1024 = vmatmul.mubr.bf16.gmra.mxu0 %v693
      %v1025 = vpop.f32.mrf.mxu0
      %v1026 = vadd.f32 %v309, %v1025
      %v1027 = vpop.f32.mrf.mxu0
      %v1028 = vpop.f32.mrf.mxu0
      %v1029 = vadd.f32 %v309, %v1028
      %v1030 = vpop.f32.mrf.mxu0
      %1031 = vmatprep.mubr.bf16.mxu0 0
      %1032 = vmatmul.mubr.bf16.gmra.mxu0 %v696
      %v1033 = vpop.f32.mrf.mxu0
      %v1034 = vadd.f32 %v309, %v1033
      %v1035 = vpop.f32.mrf.mxu0
      %v1036 = vpop.f32.mrf.mxu0
      %v1037 = vadd.f32 %v309, %v1036
      %v1038 = vpop.f32.mrf.mxu0
      %1039 = vmatprep.mubr.bf16.mxu0 0
      %1040 = vmatmul.mubr.bf16.gmra.mxu0 %v699
      %v1041 = vpop.f32.mrf.mxu0
      %v1042 = vadd.f32 %v309, %v1041
      %v1043 = vpop.f32.mrf.mxu0
      %v1044 = vpop.f32.mrf.mxu0
      %v1045 = vadd.f32 %v309, %v1044
      %v1046 = vpop.f32.mrf.mxu0
      %1047 = vmatprep.mubr.bf16.mxu0 0
      %1048 = vmatmul.mubr.bf16.gmra.mxu0 %v702
      %v1049 = vpop.f32.mrf.mxu0
      %v1050 = vadd.f32 %v309, %v1049
      %v1051 = vpop.f32.mrf.mxu0
      %v1052 = vpop.f32.mrf.mxu0
      %v1053 = vadd.f32 %v309, %v1052
      %v1054 = vpop.f32.mrf.mxu0
      %1055 = vmatprep.mubr.bf16.mxu0 0
      %1056 = vmatmul.mubr.bf16.gmra.mxu0 %v705
      %v1057 = vpop.f32.mrf.mxu0
      %v1058 = vadd.f32 %v309, %v1057
      %v1059 = vpop.f32.mrf.mxu0
      %v1060 = vpop.f32.mrf.mxu0
      %v1061 = vadd.f32 %v309, %v1060
      %v1062 = vpop.f32.mrf.mxu0
      %1063 = vmatprep.mubr.bf16.mxu0 0
      %1064 = vmatmul.mubr.bf16.gmra.mxu0 %v708
      %v1065 = vpop.f32.mrf.mxu0
      %v1066 = vadd.f32 %v309, %v1065
      %v1067 = vpop.f32.mrf.mxu0
      %v1068 = vpop.f32.mrf.mxu0
      %v1069 = vadd.f32 %v309, %v1068
      %v1070 = vpop.f32.mrf.mxu0
      %1071 = vmatprep.mubr.bf16.mxu0 0
      %1072 = vmatmul.mubr.bf16.gmra.mxu0 %v711
      %v1073 = vpop.f32.mrf.mxu0
      %v1074 = vadd.f32 %v309, %v1073
      %v1075 = vpop.f32.mrf.mxu0
      %v1076 = vpop.f32.mrf.mxu0
      %v1077 = vadd.f32 %v309, %v1076
      %v1078 = vpop.f32.mrf.mxu0
      %1079 = vmatprep.mubr.bf16.mxu0 0
      %1080 = vmatmul.mubr.bf16.gmra.mxu0 %v714
      %v1081 = vpop.f32.mrf.mxu0
      %v1082 = vadd.f32 %v309, %v1081
      %v1083 = vpop.f32.mrf.mxu0
      %v1084 = vpop.f32.mrf.mxu0
      %v1085 = vadd.f32 %v309, %v1084
      %v1086 = vpop.f32.mrf.mxu0
      %1087 = vmatprep.mubr.bf16.mxu0 0
      %1088 = vmatmul.mubr.bf16.gmra.mxu0 %v717
      %v1089 = vpop.f32.mrf.mxu0
      %v1090 = vadd.f32 %v309, %v1089
      %v1091 = vpop.f32.mrf.mxu0
      %v1092 = vpop.f32.mrf.mxu0
      %v1093 = vadd.f32 %v309, %v1092
      %v1094 = vpop.f32.mrf.mxu0
      %1095 = vmatprep.mubr.bf16.mxu0 0
      %1096 = vmatmul.mubr.bf16.gmra.mxu0 %v720
      %v1097 = vpop.f32.mrf.mxu0
      %v1098 = vadd.f32 %v309, %v1097
      %v1099 = vpop.f32.mrf.mxu0
      %v1100 = vpop.f32.mrf.mxu0
      %v1101 = vadd.f32 %v309, %v1100
      %v1102 = vpop.f32.mrf.mxu0
      %1103 = vmatprep.mubr.bf16.mxu0 0
      %1104 = vmatmul.mubr.bf16.gmra.mxu0 %v723
      %v1105 = vpop.f32.mrf.mxu0
      %v1106 = vadd.f32 %v309, %v1105
      %v1107 = vpop.f32.mrf.mxu0
      %v1108 = vpop.f32.mrf.mxu0
      %v1109 = vadd.f32 %v309, %v1108
      %v1110 = vpop.f32.mrf.mxu0
      %1111 = vmatprep.mubr.bf16.mxu0 0
      %1112 = vmatmul.mubr.bf16.gmra.mxu0 %v726
      %v1113 = vpop.f32.mrf.mxu0
      %v1114 = vadd.f32 %v309, %v1113
      %v1115 = vpop.f32.mrf.mxu0
      %v1116 = vpop.f32.mrf.mxu0
      %v1117 = vadd.f32 %v309, %v1116
      %v1118 = vpop.f32.mrf.mxu0
      %1119 = vmatprep.mubr.bf16.mxu0 0
      %1120 = vmatmul.mubr.bf16.gmra.mxu0 %v729
      %v1121 = vpop.f32.mrf.mxu0
      %v1122 = vadd.f32 %v309, %v1121
      %v1123 = vpop.f32.mrf.mxu0
      %v1124 = vpop.f32.mrf.mxu0
      %v1125 = vadd.f32 %v309, %v1124
      %v1126 = vpop.f32.mrf.mxu0
      %1127 = vmatprep.mubr.bf16.mxu0 0
      %1128 = vmatmul.mubr.bf16.gmra.mxu0 %v732
      %v1129 = vpop.f32.mrf.mxu0
      %v1130 = vadd.f32 %v309, %v1129
      %v1131 = vpop.f32.mrf.mxu0
      %v1132 = vpop.f32.mrf.mxu0
      %v1133 = vadd.f32 %v309, %v1132
      %v1134 = vpop.f32.mrf.mxu0
      %1135 = vmatprep.mubr.bf16.mxu0 0
      %1136 = vmatmul.mubr.bf16.gmra.mxu0 %v735
      %v1137 = vpop.f32.mrf.mxu0
      %v1138 = vadd.f32 %v309, %v1137
      %v1139 = vpop.f32.mrf.mxu0
      %v1140 = vpop.f32.mrf.mxu0
      %v1141 = vadd.f32 %v309, %v1140
      %v1142 = vpop.f32.mrf.mxu0
      %1143 = vmatprep.mubr.bf16.mxu0 0
      %1144 = vmatmul.mubr.bf16.gmra.mxu0 %v738
      %v1145 = vpop.f32.mrf.mxu0
      %v1146 = vadd.f32 %v309, %v1145
      %v1147 = vpop.f32.mrf.mxu0
      %v1148 = vpop.f32.mrf.mxu0
      %v1149 = vadd.f32 %v309, %v1148
      %v1150 = vpop.f32.mrf.mxu0
      %1151 = vmatprep.mubr.bf16.mxu0 0
      %1152 = vmatmul.mubr.bf16.gmra.mxu0 %v741
      %v1153 = vpop.f32.mrf.mxu0
      %v1154 = vadd.f32 %v309, %v1153
      %v1155 = vpop.f32.mrf.mxu0
      %v1156 = vpop.f32.mrf.mxu0
      %v1157 = vadd.f32 %v309, %v1156
      %v1158 = vpop.f32.mrf.mxu0
      %1159 = vmatprep.mubr.bf16.mxu0 0
      %1160 = vmatmul.mubr.bf16.gmra.mxu0 %v744
      %v1161 = vpop.f32.mrf.mxu0
      %v1162 = vadd.f32 %v309, %v1161
      %v1163 = vpop.f32.mrf.mxu0
      %v1164 = vpop.f32.mrf.mxu0
      %v1165 = vadd.f32 %v309, %v1164
      %v1166 = vpop.f32.mrf.mxu0
      %1167 = vmatprep.mubr.bf16.mxu0 0
      %1168 = vmatmul.mubr.bf16.gmra.mxu0 %v747
      %v1169 = vpop.f32.mrf.mxu0
      %v1170 = vadd.f32 %v309, %v1169
      %v1171 = vpop.f32.mrf.mxu0
      %v1172 = vpop.f32.mrf.mxu0
      %v1173 = vadd.f32 %v309, %v1172
      %v1174 = vpop.f32.mrf.mxu0
      %1175 = vmatprep.mubr.bf16.mxu0 0
      %1176 = vmatmul.mubr.bf16.gmra.mxu0 %v750
      %v1177 = vpop.f32.mrf.mxu0
      %v1178 = vadd.f32 %v309, %v1177
      %v1179 = vpop.f32.mrf.mxu0
      %v1180 = vpop.f32.mrf.mxu0
      %v1181 = vadd.f32 %v309, %v1180
      %v1182 = vpop.f32.mrf.mxu0
      %1183 = vmatprep.mubr.bf16.mxu0 0
      %1184 = vmatmul.mubr.bf16.gmra.mxu0 %v753
      %v1185 = vpop.f32.mrf.mxu0
      %v1186 = vadd.f32 %v309, %v1185
      %v1187 = vpop.f32.mrf.mxu0
      %v1188 = vpop.f32.mrf.mxu0
      %v1189 = vadd.f32 %v309, %v1188
      %v1190 = vpop.f32.mrf.mxu0
      %1191 = vmatprep.mubr.bf16.mxu0 0
      %1192 = vmatmul.mubr.bf16.gmra.mxu0 %v756
      %v1193 = vpop.f32.mrf.mxu0
      %v1194 = vadd.f32 %v309, %v1193
      %v1195 = vpop.f32.mrf.mxu0
      %v1196 = vpop.f32.mrf.mxu0
      %v1197 = vadd.f32 %v309, %v1196
      %v1198 = vpop.f32.mrf.mxu0
      %1199 = vmatprep.mubr.bf16.mxu0 0
      %1200 = vmatmul.mubr.bf16.gmra.mxu0 %v759
      %v1201 = vpop.f32.mrf.mxu0
      %v1202 = vadd.f32 %v309, %v1201
      %v1203 = vpop.f32.mrf.mxu0
      %v1204 = vpop.f32.mrf.mxu0
      %v1205 = vadd.f32 %v309, %v1204
      %v1206 = vpop.f32.mrf.mxu0
      %1207 = vmatprep.mubr.bf16.mxu0 0
      %1208 = vmatmul.mubr.bf16.gmra.mxu0 %v762
      %v1209 = vpop.f32.mrf.mxu0
      %v1210 = vadd.f32 %v309, %v1209
      %v1211 = vpop.f32.mrf.mxu0
      %v1212 = vpop.f32.mrf.mxu0
      %v1213 = vadd.f32 %v309, %v1212
      %v1214 = vpop.f32.mrf.mxu0
      %1215 = vmatprep.mubr.bf16.mxu0 0
      %1216 = vmatmul.mubr.bf16.gmra.mxu0 %v765
      %v1217 = vpop.f32.mrf.mxu0
      %v1218 = vadd.f32 %v309, %v1217
      %v1219 = vpop.f32.mrf.mxu0
      %v1220 = vpop.f32.mrf.mxu0
      %v1221 = vadd.f32 %v309, %v1220
      %v1222 = vpop.f32.mrf.mxu0
      %1223 = vmatprep.mubr.bf16.mxu0 0
      %1224 = vmatmul.mubr.bf16.gmra.mxu0 %v768
      %v1225 = vpop.f32.mrf.mxu0
      %v1226 = vadd.f32 %v309, %v1225
      %v1227 = vpop.f32.mrf.mxu0
      %v1228 = vpop.f32.mrf.mxu0
      %v1229 = vadd.f32 %v309, %v1228
      %v1230 = vpop.f32.mrf.mxu0
      %1231 = vmatprep.mubr.bf16.mxu0 0
      %1232 = vmatmul.mubr.bf16.gmra.mxu0 %v771
      %v1233 = vpop.f32.mrf.mxu0
      %v1234 = vadd.f32 %v309, %v1233
      %v1235 = vpop.f32.mrf.mxu0
      %v1236 = vpop.f32.mrf.mxu0
      %v1237 = vadd.f32 %v309, %v1236
      %v1238 = vpop.f32.mrf.mxu0
      %1239 = vmatprep.mubr.bf16.mxu0 0
      %1240 = vmatmul.mubr.bf16.gmra.mxu0 %v774
      %v1241 = vpop.f32.mrf.mxu0
      %v1242 = vadd.f32 %v309, %v1241
      %v1243 = vpop.f32.mrf.mxu0
      %v1244 = vpop.f32.mrf.mxu0
      %v1245 = vadd.f32 %v309, %v1244
      %v1246 = vpop.f32.mrf.mxu0
      %1247 = vmatprep.mubr.bf16.mxu0 0
      %1248 = vmatmul.mubr.bf16.gmra.mxu0 %v777
      %v1249 = vpop.f32.mrf.mxu0
      %v1250 = vadd.f32 %v309, %v1249
      %v1251 = vpop.f32.mrf.mxu0
      %v1252 = vpop.f32.mrf.mxu0
      %v1253 = vadd.f32 %v309, %v1252
      %v1254 = vpop.f32.mrf.mxu0
      %1255 = vmatprep.mubr.bf16.mxu0 0
      %1256 = vmatmul.mubr.bf16.gmra.mxu0 %v780
      %v1257 = vpop.f32.mrf.mxu0
      %v1258 = vadd.f32 %v309, %v1257
      %v1259 = vpop.f32.mrf.mxu0
      %v1260 = vpop.f32.mrf.mxu0
      %v1261 = vadd.f32 %v309, %v1260
      %v1262 = vpop.f32.mrf.mxu0
      %1263 = vmatprep.mubr.bf16.mxu0 0
      %1264 = vmatmul.mubr.bf16.gmra.mxu0 %v783
      %v1265 = vpop.f32.mrf.mxu0
      %v1266 = vadd.f32 %v309, %v1265
      %v1267 = vpop.f32.mrf.mxu0
      %v1268 = vpop.f32.mrf.mxu0
      %v1269 = vadd.f32 %v309, %v1268
      %v1270 = vpop.f32.mrf.mxu0
      %1271 = vmatprep.mubr.bf16.mxu0 0
      %1272 = vmatmul.mubr.bf16.gmra.mxu0 %v786
      %v1273 = vpop.f32.mrf.mxu0
      %v1274 = vadd.f32 %v309, %v1273
      %v1275 = vpop.f32.mrf.mxu0
      %v1276 = vpop.f32.mrf.mxu0
      %v1277 = vadd.f32 %v309, %v1276
      %v1278 = vpop.f32.mrf.mxu0
      %1279 = vmatprep.mubr.bf16.mxu0 0
      %1280 = vmatmul.mubr.bf16.gmra.mxu0 %v789
      %v1281 = vpop.f32.mrf.mxu0
      %v1282 = vadd.f32 %v309, %v1281
      %v1283 = vpop.f32.mrf.mxu0
      %v1284 = vpop.f32.mrf.mxu0
      %v1285 = vadd.f32 %v309, %v1284
      %v1286 = vpop.f32.mrf.mxu0
      %1287 = vmatprep.mubr.bf16.mxu0 0
      %1288 = vmatmul.mubr.bf16.gmra.mxu0 %v792
      %v1289 = vpop.f32.mrf.mxu0
      %v1290 = vadd.f32 %v309, %v1289
      %v1291 = vpop.f32.mrf.mxu0
      %v1292 = vpop.f32.mrf.mxu0
      %v1293 = vadd.f32 %v309, %v1292
      %v1294 = vpop.f32.mrf.mxu0
      %1295 = vmatprep.mubr.bf16.mxu0 0
      %1296 = vmatmul.mubr.bf16.gmra.mxu0 %v795
      %v1297 = vpop.f32.mrf.mxu0
      %v1298 = vadd.f32 %v309, %v1297
      %v1299 = vpop.f32.mrf.mxu0
      %v1300 = vpop.f32.mrf.mxu0
      %v1301 = vadd.f32 %v309, %v1300
      %v1302 = vpop.f32.mrf.mxu0
      %1303 = vmatprep.mubr.bf16.mxu0 0
      %1304 = vmatmul.mubr.bf16.gmra.mxu0 %v798
      %v1305 = vpop.f32.mrf.mxu0
      %v1306 = vadd.f32 %v309, %v1305
      %v1307 = vpop.f32.mrf.mxu0
      %v1308 = vpop.f32.mrf.mxu0
      %v1309 = vadd.f32 %v309, %v1308
      %v1310 = vpop.f32.mrf.mxu0
      %1311 = vmatprep.mubr.bf16.mxu0 0
      %1312 = vmatmul.mubr.bf16.gmra.mxu0 %v801
      %v1313 = vpop.f32.mrf.mxu0
      %v1314 = vadd.f32 %v309, %v1313
      %v1315 = vpop.f32.mrf.mxu0
      %v1316 = vpop.f32.mrf.mxu0
      %v1317 = vadd.f32 %v309, %v1316
      %v1318 = vpop.f32.mrf.mxu0
      %1319 = vmatprep.mubr.bf16.mxu0 0
      %1320 = vmatmul.mubr.bf16.gmra.mxu0 %v804
      %v1321 = vpop.f32.mrf.mxu0
      %v1322 = vadd.f32 %v309, %v1321
      %v1323 = vpop.f32.mrf.mxu0
      %v1324 = vpop.f32.mrf.mxu0
      %v1325 = vadd.f32 %v309, %v1324
      %v1326 = vpop.f32.mrf.mxu0
      %1327 = vmatprep.mubr.bf16.mxu0 0
      %1328 = vmatmul.mubr.bf16.gmra.mxu0 %v807
      %v1329 = vpop.f32.mrf.mxu0
      %v1330 = vadd.f32 %v309, %v1329
      %v1331 = vpop.f32.mrf.mxu0
      %v1332 = vpop.f32.mrf.mxu0
      %v1333 = vadd.f32 %v309, %v1332
      %v1334 = vpop.f32.mrf.mxu0
      %1335 = vmatprep.mubr.bf16.mxu0 0
      %1336 = vmatmul.mubr.bf16.gmra.mxu0 %v810
      %v1337 = vpop.f32.mrf.mxu0
      %v1338 = vadd.f32 %v309, %v1337
      %v1339 = vpop.f32.mrf.mxu0
      %v1340 = vpop.f32.mrf.mxu0
      %v1341 = vadd.f32 %v309, %v1340
      %v1342 = vpop.f32.mrf.mxu0
      %1343 = vmatprep.mubr.bf16.mxu0 0
      %1344 = vmatmul.mubr.bf16.gmra.mxu0 %v813
      %v1345 = vpop.f32.mrf.mxu0
      %v1346 = vadd.f32 %v309, %v1345
      %v1347 = vpop.f32.mrf.mxu0
      %v1348 = vpop.f32.mrf.mxu0
      %v1349 = vadd.f32 %v309, %v1348
      %v1350 = vpop.f32.mrf.mxu0
      %1351 = vmatprep.mubr.bf16.mxu0 0
      %1352 = vmatmul.mubr.bf16.gmra.mxu0 %v816
      %v1353 = vpop.f32.mrf.mxu0
      %v1354 = vadd.f32 %v309, %v1353
      %v1355 = vpop.f32.mrf.mxu0
      %v1356 = vpop.f32.mrf.mxu0
      %v1357 = vadd.f32 %v309, %v1356
      %v1358 = vpop.f32.mrf.mxu0
      %1359 = vmatprep.mubr.bf16.mxu0 0
      %1360 = vmatmul.mubr.bf16.gmra.mxu0 %v819
      %v1361 = vpop.f32.mrf.mxu0
      %v1362 = vadd.f32 %v309, %v1361
      %v1363 = vpop.f32.mrf.mxu0
      %v1364 = vpop.f32.mrf.mxu0
      %v1365 = vadd.f32 %v309, %v1364
      %v1366 = vpop.f32.mrf.mxu0
      %1367 = vmatprep.mubr.bf16.mxu0 0
      %1368 = vmatmul.mubr.bf16.gmra.mxu0 %v822
      %v1369 = vpop.f32.mrf.mxu0
      %v1370 = vadd.f32 %v309, %v1369
      %v1371 = vpop.f32.mrf.mxu0
      %v1372 = vpop.f32.mrf.mxu0
      %v1373 = vadd.f32 %v309, %v1372
      %v1374 = vpop.f32.mrf.mxu0
      %1375 = vdwg.mxu0
      %v1376 = vmax.f32 %v866, 0.0
      %v1377 = vmax.f32 %v869, 0.0
      %v1378 = vmax.f32 %v874, 0.0
      %v1379 = vmax.f32 %v877, 0.0
      %v1380 = vmax.f32 %v882, 0.0
      %v1381 = vmax.f32 %v885, 0.0
      %v1382 = vmax.f32 %v890, 0.0
      %v1383 = vmax.f32 %v893, 0.0
      %v1384 = vmax.f32 %v898, 0.0
      %v1385 = vmax.f32 %v901, 0.0
      %v1386 = vmax.f32 %v906, 0.0
      %v1387 = vmax.f32 %v909, 0.0
      %v1388 = vmax.f32 %v914, 0.0
      %v1389 = vmax.f32 %v917, 0.0
      %v1390 = vmax.f32 %v922, 0.0
      %v1391 = vmax.f32 %v925, 0.0
      %v1392 = vmax.f32 %v930, 0.0
      %v1393 = vmax.f32 %v933, 0.0
      %v1394 = vmax.f32 %v938, 0.0
      %v1395 = vmax.f32 %v941, 0.0
      %v1396 = vmax.f32 %v946, 0.0
      %v1397 = vmax.f32 %v949, 0.0
      %v1398 = vmax.f32 %v954, 0.0
      %v1399 = vmax.f32 %v957, 0.0
      %v1400 = vmax.f32 %v962, 0.0
      %v1401 = vmax.f32 %v965, 0.0
      %v1402 = vmax.f32 %v970, 0.0
      %v1403 = vmax.f32 %v973, 0.0
      %v1404 = vmax.f32 %v978, 0.0
      %v1405 = vmax.f32 %v981, 0.0
      %v1406 = vmax.f32 %v986, 0.0
      %v1407 = vmax.f32 %v989, 0.0
      %v1408 = vmax.f32 %v994, 0.0
      %v1409 = vmax.f32 %v997, 0.0
      %v1410 = vmax.f32 %v1002, 0.0
      %v1411 = vmax.f32 %v1005, 0.0
      %v1412 = vmax.f32 %v1010, 0.0
      %v1413 = vmax.f32 %v1013, 0.0
      %v1414 = vmax.f32 %v1018, 0.0
      %v1415 = vmax.f32 %v1021, 0.0
      %v1416 = vmax.f32 %v1026, 0.0
      %v1417 = vmax.f32 %v1029, 0.0
      %v1418 = vmax.f32 %v1034, 0.0
      %v1419 = vmax.f32 %v1037, 0.0
      %v1420 = vmax.f32 %v1042, 0.0
      %v1421 = vmax.f32 %v1045, 0.0
      %v1422 = vmax.f32 %v1050, 0.0
      %v1423 = vmax.f32 %v1053, 0.0
      %v1424 = vmax.f32 %v1058, 0.0
      %v1425 = vmax.f32 %v1061, 0.0
      %v1426 = vmax.f32 %v1066, 0.0
      %v1427 = vmax.f32 %v1069, 0.0
      %v1428 = vmax.f32 %v1074, 0.0
      %v1429 = vmax.f32 %v1077, 0.0
      %v1430 = vmax.f32 %v1082, 0.0
      %v1431 = vmax.f32 %v1085, 0.0
      %v1432 = vmax.f32 %v1090, 0.0
      %v1433 = vmax.f32 %v1093, 0.0
      %v1434 = vmax.f32 %v1098, 0.0
      %v1435 = vmax.f32 %v1101, 0.0
      %v1436 = vmax.f32 %v1106, 0.0
      %v1437 = vmax.f32 %v1109, 0.0
      %v1438 = vmax.f32 %v1114, 0.0
      %v1439 = vmax.f32 %v1117, 0.0
      %v1440 = vmax.f32 %v1122, 0.0
      %v1441 = vmax.f32 %v1125, 0.0
      %v1442 = vmax.f32 %v1130, 0.0
      %v1443 = vmax.f32 %v1133, 0.0
      %v1444 = vmax.f32 %v1138, 0.0
      %v1445 = vmax.f32 %v1141, 0.0
      %v1446 = vmax.f32 %v1146, 0.0
      %v1447 = vmax.f32 %v1149, 0.0
      %v1448 = vmax.f32 %v1154, 0.0
      %v1449 = vmax.f32 %v1157, 0.0
      %v1450 = vmax.f32 %v1162, 0.0
      %v1451 = vmax.f32 %v1165, 0.0
      %v1452 = vmax.f32 %v1170, 0.0
      %v1453 = vmax.f32 %v1173, 0.0
      %v1454 = vmax.f32 %v1178, 0.0
      %v1455 = vmax.f32 %v1181, 0.0
      %v1456 = vmax.f32 %v1186, 0.0
      %v1457 = vmax.f32 %v1189, 0.0
      %v1458 = vmax.f32 %v1194, 0.0
      %v1459 = vmax.f32 %v1197, 0.0
      %v1460 = vmax.f32 %v1202, 0.0
      %v1461 = vmax.f32 %v1205, 0.0
      %v1462 = vmax.f32 %v1210, 0.0
      %v1463 = vmax.f32 %v1213, 0.0
      %v1464 = vmax.f32 %v1218, 0.0
      %v1465 = vmax.f32 %v1221, 0.0
      %v1466 = vmax.f32 %v1226, 0.0
      %v1467 = vmax.f32 %v1229, 0.0
      %v1468 = vmax.f32 %v1234, 0.0
      %v1469 = vmax.f32 %v1237, 0.0
      %v1470 = vmax.f32 %v1242, 0.0
      %v1471 = vmax.f32 %v1245, 0.0
      %v1472 = vmax.f32 %v1250, 0.0
      %v1473 = vmax.f32 %v1253, 0.0
      %v1474 = vmax.f32 %v1258, 0.0
      %v1475 = vmax.f32 %v1261, 0.0
      %v1476 = vmax.f32 %v1266, 0.0
      %v1477 = vmax.f32 %v1269, 0.0
      %v1478 = vmax.f32 %v1274, 0.0
      %v1479 = vmax.f32 %v1277, 0.0
      %v1480 = vmax.f32 %v1282, 0.0
      %v1481 = vmax.f32 %v1285, 0.0
      %v1482 = vmax.f32 %v1290, 0.0
      %v1483 = vmax.f32 %v1293, 0.0
      %v1484 = vmax.f32 %v1298, 0.0
      %v1485 = vmax.f32 %v1301, 0.0
      %v1486 = vmax.f32 %v1306, 0.0
      %v1487 = vmax.f32 %v1309, 0.0
      %v1488 = vmax.f32 %v1314, 0.0
      %v1489 = vmax.f32 %v1317, 0.0
      %v1490 = vmax.f32 %v1322, 0.0
      %v1491 = vmax.f32 %v1325, 0.0
      %v1492 = vmax.f32 %v1330, 0.0
      %v1493 = vmax.f32 %v1333, 0.0
      %v1494 = vmax.f32 %v1338, 0.0
      %v1495 = vmax.f32 %v1341, 0.0
      %v1496 = vmax.f32 %v1346, 0.0
      %v1497 = vmax.f32 %v1349, 0.0
      %v1498 = vmax.f32 %v1354, 0.0
      %v1499 = vmax.f32 %v1357, 0.0
      %v1500 = vmax.f32 %v1362, 0.0
      %v1501 = vmax.f32 %v1365, 0.0
      %v1502 = vmax.f32 %v1370, 0.0
      %v1503 = vmax.f32 %v1373, 0.0
      %vm1504 = vcmask 130048
      %1505 = vst.msk [vmem:[%s172] sm:$0xff] %vm1504, %v1376
      %1506 = vst.msk [vmem:[%s172 + $0x8] sm:$0xff] %vm1504, %v1377
      %1507 = vst.msk [vmem:[%s172 + $0x10] sm:$0xff] %vm1504, %v1378
      %1508 = vst.msk [vmem:[%s172 + $0x18] sm:$0xff] %vm1504, %v1379
      %1509 = vst.msk [vmem:[%s172 + $0x20] sm:$0xff] %vm1504, %v1380
      %1510 = vst.msk [vmem:[%s172 + $0x28] sm:$0xff] %vm1504, %v1381
      %1511 = vst.msk [vmem:[%s172 + $0x30] sm:$0xff] %vm1504, %v1382
      %1512 = vst.msk [vmem:[%s172 + $0x38] sm:$0xff] %vm1504, %v1383
      %1513 = vst.msk [vmem:[%s172 + $0x40] sm:$0xff] %vm1504, %v1384
      %1514 = vst.msk [vmem:[%s172 + $0x48] sm:$0xff] %vm1504, %v1385
      %1515 = vst.msk [vmem:[%s172 + $0x50] sm:$0xff] %vm1504, %v1386
      %1516 = vst.msk [vmem:[%s172 + $0x58] sm:$0xff] %vm1504, %v1387
      %1517 = vst.msk [vmem:[%s172 + $0x60] sm:$0xff] %vm1504, %v1388
      %1518 = vst.msk [vmem:[%s172 + $0x68] sm:$0xff] %vm1504, %v1389
      %1519 = vst.msk [vmem:[%s172 + $0x70] sm:$0xff] %vm1504, %v1390
      %1520 = vst.msk [vmem:[%s172 + $0x78] sm:$0xff] %vm1504, %v1391
      %1521 = vst.msk [vmem:[%s172 + $0x80] sm:$0xff] %vm1504, %v1392
      %1522 = vst.msk [vmem:[%s172 + $0x88] sm:$0xff] %vm1504, %v1393
      %1523 = vst.msk [vmem:[%s172 + $0x90] sm:$0xff] %vm1504, %v1394
      %1524 = vst.msk [vmem:[%s172 + $0x98] sm:$0xff] %vm1504, %v1395
      %1525 = vst.msk [vmem:[%s172 + $0xa0] sm:$0xff] %vm1504, %v1396
      %1526 = vst.msk [vmem:[%s172 + $0xa8] sm:$0xff] %vm1504, %v1397
      %1527 = vst.msk [vmem:[%s172 + $0xb0] sm:$0xff] %vm1504, %v1398
      %1528 = vst.msk [vmem:[%s172 + $0xb8] sm:$0xff] %vm1504, %v1399
      %1529 = vst.msk [vmem:[%s172 + $0xc0] sm:$0xff] %vm1504, %v1400
      %1530 = vst.msk [vmem:[%s172 + $0xc8] sm:$0xff] %vm1504, %v1401
      %1531 = vst.msk [vmem:[%s172 + $0xd0] sm:$0xff] %vm1504, %v1402
      %1532 = vst.msk [vmem:[%s172 + $0xd8] sm:$0xff] %vm1504, %v1403
      %1533 = vst.msk [vmem:[%s172 + $0xe0] sm:$0xff] %vm1504, %v1404
      %1534 = vst.msk [vmem:[%s172 + $0xe8] sm:$0xff] %vm1504, %v1405
      %1535 = vst.msk [vmem:[%s172 + $0xf0] sm:$0xff] %vm1504, %v1406
      %1536 = vst.msk [vmem:[%s172 + $0xf8] sm:$0xff] %vm1504, %v1407
      %1537 = vst.msk [vmem:[%s172 + $0x100] sm:$0xff] %vm1504, %v1408
      %1538 = vst.msk [vmem:[%s172 + $0x108] sm:$0xff] %vm1504, %v1409
      %1539 = vst.msk [vmem:[%s172 + $0x110] sm:$0xff] %vm1504, %v1410
      %1540 = vst.msk [vmem:[%s172 + $0x118] sm:$0xff] %vm1504, %v1411
      %1541 = vst.msk [vmem:[%s172 + $0x120] sm:$0xff] %vm1504, %v1412
      %1542 = vst.msk [vmem:[%s172 + $0x128] sm:$0xff] %vm1504, %v1413
      %1543 = vst.msk [vmem:[%s172 + $0x130] sm:$0xff] %vm1504, %v1414
      %1544 = vst.msk [vmem:[%s172 + $0x138] sm:$0xff] %vm1504, %v1415
      %1545 = vst.msk [vmem:[%s172 + $0x140] sm:$0xff] %vm1504, %v1416
      %1546 = vst.msk [vmem:[%s172 + $0x148] sm:$0xff] %vm1504, %v1417
      %1547 = vst.msk [vmem:[%s172 + $0x150] sm:$0xff] %vm1504, %v1418
      %1548 = vst.msk [vmem:[%s172 + $0x158] sm:$0xff] %vm1504, %v1419
      %1549 = vst.msk [vmem:[%s172 + $0x160] sm:$0xff] %vm1504, %v1420
      %1550 = vst.msk [vmem:[%s172 + $0x168] sm:$0xff] %vm1504, %v1421
      %1551 = vst.msk [vmem:[%s172 + $0x170] sm:$0xff] %vm1504, %v1422
      %1552 = vst.msk [vmem:[%s172 + $0x178] sm:$0xff] %vm1504, %v1423
      %1553 = vst.msk [vmem:[%s172 + $0x180] sm:$0xff] %vm1504, %v1424
      %1554 = vst.msk [vmem:[%s172 + $0x188] sm:$0xff] %vm1504, %v1425
      %1555 = vst.msk [vmem:[%s172 + $0x190] sm:$0xff] %vm1504, %v1426
      %1556 = vst.msk [vmem:[%s172 + $0x198] sm:$0xff] %vm1504, %v1427
      %1557 = vst.msk [vmem:[%s172 + $0x1a0] sm:$0xff] %vm1504, %v1428
      %1558 = vst.msk [vmem:[%s172 + $0x1a8] sm:$0xff] %vm1504, %v1429
      %1559 = vst.msk [vmem:[%s172 + $0x1b0] sm:$0xff] %vm1504, %v1430
      %1560 = vst.msk [vmem:[%s172 + $0x1b8] sm:$0xff] %vm1504, %v1431
      %1561 = vst.msk [vmem:[%s172 + $0x1c0] sm:$0xff] %vm1504, %v1432
      %1562 = vst.msk [vmem:[%s172 + $0x1c8] sm:$0xff] %vm1504, %v1433
      %1563 = vst.msk [vmem:[%s172 + $0x1d0] sm:$0xff] %vm1504, %v1434
      %1564 = vst.msk [vmem:[%s172 + $0x1d8] sm:$0xff] %vm1504, %v1435
      %1565 = vst.msk [vmem:[%s172 + $0x1e0] sm:$0xff] %vm1504, %v1436
      %1566 = vst.msk [vmem:[%s172 + $0x1e8] sm:$0xff] %vm1504, %v1437
      %1567 = vst.msk [vmem:[%s172 + $0x1f0] sm:$0xff] %vm1504, %v1438
      %1568 = vst.msk [vmem:[%s172 + $0x1f8] sm:$0xff] %vm1504, %v1439
      %1569 = vst.msk [vmem:[%s172 + $0x200] sm:$0xff] %vm1504, %v1440
      %1570 = vst.msk [vmem:[%s172 + $0x208] sm:$0xff] %vm1504, %v1441
      %1571 = vst.msk [vmem:[%s172 + $0x210] sm:$0xff] %vm1504, %v1442
      %1572 = vst.msk [vmem:[%s172 + $0x218] sm:$0xff] %vm1504, %v1443
      %1573 = vst.msk [vmem:[%s172 + $0x220] sm:$0xff] %vm1504, %v1444
      %1574 = vst.msk [vmem:[%s172 + $0x228] sm:$0xff] %vm1504, %v1445
      %1575 = vst.msk [vmem:[%s172 + $0x230] sm:$0xff] %vm1504, %v1446
      %1576 = vst.msk [vmem:[%s172 + $0x238] sm:$0xff] %vm1504, %v1447
      %1577 = vst.msk [vmem:[%s172 + $0x240] sm:$0xff] %vm1504, %v1448
      %1578 = vst.msk [vmem:[%s172 + $0x248] sm:$0xff] %vm1504, %v1449
      %1579 = vst.msk [vmem:[%s172 + $0x250] sm:$0xff] %vm1504, %v1450
      %1580 = vst.msk [vmem:[%s172 + $0x258] sm:$0xff] %vm1504, %v1451
      %1581 = vst.msk [vmem:[%s172 + $0x260] sm:$0xff] %vm1504, %v1452
      %1582 = vst.msk [vmem:[%s172 + $0x268] sm:$0xff] %vm1504, %v1453
      %1583 = vst.msk [vmem:[%s172 + $0x270] sm:$0xff] %vm1504, %v1454
      %1584 = vst.msk [vmem:[%s172 + $0x278] sm:$0xff] %vm1504, %v1455
      %1585 = vst.msk [vmem:[%s172 + $0x280] sm:$0xff] %vm1504, %v1456
      %1586 = vst.msk [vmem:[%s172 + $0x288] sm:$0xff] %vm1504, %v1457
      %1587 = vst.msk [vmem:[%s172 + $0x290] sm:$0xff] %vm1504, %v1458
      %1588 = vst.msk [vmem:[%s172 + $0x298] sm:$0xff] %vm1504, %v1459
      %1589 = vst.msk [vmem:[%s172 + $0x2a0] sm:$0xff] %vm1504, %v1460
      %1590 = vst.msk [vmem:[%s172 + $0x2a8] sm:$0xff] %vm1504, %v1461
      %1591 = vst.msk [vmem:[%s172 + $0x2b0] sm:$0xff] %vm1504, %v1462
      %1592 = vst.msk [vmem:[%s172 + $0x2b8] sm:$0xff] %vm1504, %v1463
      %1593 = vst.msk [vmem:[%s172 + $0x2c0] sm:$0xff] %vm1504, %v1464
      %1594 = vst.msk [vmem:[%s172 + $0x2c8] sm:$0xff] %vm1504, %v1465
      %1595 = vst.msk [vmem:[%s172 + $0x2d0] sm:$0xff] %vm1504, %v1466
      %1596 = vst.msk [vmem:[%s172 + $0x2d8] sm:$0xff] %vm1504, %v1467
      %1597 = vst.msk [vmem:[%s172 + $0x2e0] sm:$0xff] %vm1504, %v1468
      %1598 = vst.msk [vmem:[%s172 + $0x2e8] sm:$0xff] %vm1504, %v1469
      %1599 = vst.msk [vmem:[%s172 + $0x2f0] sm:$0xff] %vm1504, %v1470
      %1600 = vst.msk [vmem:[%s172 + $0x2f8] sm:$0xff] %vm1504, %v1471
      %1601 = vst.msk [vmem:[%s172 + $0x300] sm:$0xff] %vm1504, %v1472
      %1602 = vst.msk [vmem:[%s172 + $0x308] sm:$0xff] %vm1504, %v1473
      %1603 = vst.msk [vmem:[%s172 + $0x310] sm:$0xff] %vm1504, %v1474
      %1604 = vst.msk [vmem:[%s172 + $0x318] sm:$0xff] %vm1504, %v1475
      %1605 = vst.msk [vmem:[%s172 + $0x320] sm:$0xff] %vm1504, %v1476
      %1606 = vst.msk [vmem:[%s172 + $0x328] sm:$0xff] %vm1504, %v1477
      %1607 = vst.msk [vmem:[%s172 + $0x330] sm:$0xff] %vm1504, %v1478
      %1608 = vst.msk [vmem:[%s172 + $0x338] sm:$0xff] %vm1504, %v1479
      %1609 = vst.msk [vmem:[%s172 + $0x340] sm:$0xff] %vm1504, %v1480
      %1610 = vst.msk [vmem:[%s172 + $0x348] sm:$0xff] %vm1504, %v1481
      %1611 = vst.msk [vmem:[%s172 + $0x350] sm:$0xff] %vm1504, %v1482
      %1612 = vst.msk [vmem:[%s172 + $0x358] sm:$0xff] %vm1504, %v1483
      %1613 = vst.msk [vmem:[%s172 + $0x360] sm:$0xff] %vm1504, %v1484
      %1614 = vst.msk [vmem:[%s172 + $0x368] sm:$0xff] %vm1504, %v1485
      %1615 = vst.msk [vmem:[%s172 + $0x370] sm:$0xff] %vm1504, %v1486
      %1616 = vst.msk [vmem:[%s172 + $0x378] sm:$0xff] %vm1504, %v1487
      %1617 = vst.msk [vmem:[%s172 + $0x380] sm:$0xff] %vm1504, %v1488
      %1618 = vst.msk [vmem:[%s172 + $0x388] sm:$0xff] %vm1504, %v1489
      %1619 = vst.msk [vmem:[%s172 + $0x390] sm:$0xff] %vm1504, %v1490
      %1620 = vst.msk [vmem:[%s172 + $0x398] sm:$0xff] %vm1504, %v1491
      %1621 = vst.msk [vmem:[%s172 + $0x3a0] sm:$0xff] %vm1504, %v1492
      %1622 = vst.msk [vmem:[%s172 + $0x3a8] sm:$0xff] %vm1504, %v1493
      %1623 = vst.msk [vmem:[%s172 + $0x3b0] sm:$0xff] %vm1504, %v1494
      %1624 = vst.msk [vmem:[%s172 + $0x3b8] sm:$0xff] %vm1504, %v1495
      %1625 = vst.msk [vmem:[%s172 + $0x3c0] sm:$0xff] %vm1504, %v1496
      %1626 = vst.msk [vmem:[%s172 + $0x3c8] sm:$0xff] %vm1504, %v1497
      %1627 = vst.msk [vmem:[%s172 + $0x3d0] sm:$0xff] %vm1504, %v1498
      %1628 = vst.msk [vmem:[%s172 + $0x3d8] sm:$0xff] %vm1504, %v1499
      %1629 = vst.msk [vmem:[%s172 + $0x3e0] sm:$0xff] %vm1504, %v1500
      %1630 = vst.msk [vmem:[%s172 + $0x3e8] sm:$0xff] %vm1504, %v1501
      %1631 = vst.msk [vmem:[%s172 + $0x3f0] sm:$0xff] %vm1504, %v1502
      %1632 = vst.msk [vmem:[%s172 + $0x3f8] sm:$0xff] %vm1504, %v1503
      %s1633 = smul.u32 128, %s14
      %p1634 = scmp.lt.s32.totalorder %s1633, 511
      %s1635 = scalar_select %p1634, %s1633, 511
      %s1636 = smul.addr %s1635, 8
      %s1637 = scalar_lea.vmem %s3, %s1636
      // Predicated region
      $region33: #{forward.5} parent=31 // pred_check
        %p1638 = pneg %p100
      $region34: #{forward.5} parent=31 // pred_check_branch
        %1640 = sbr.rel (%p1638) target = $region36
      $region35: #{forward.5} parent=31 // pred_region
        %s1641 = smul.u32 128, %s14
      $region36: #{forward.5} parent=31 // pred_fallthru
        _
    $region32: #{forward.5} parent=5 // pred_fallthru
      _
    %p1642 = scmp.le.s32.totalorder 2, %s9
    // Predicated region
    $region37: #{forward.5} parent=5 // pred_check
      %p1643 = pneg %p1642
    $region38: #{forward.5} parent=5 // pred_check_branch
      %1645 = sbr.rel (%p1643) target = $region40
    $region39: #{forward.5} parent=5 // pred_region
      %s1646 = ssub.s32 %s9, 2
      // Predicated region
      $region41: #{forward.5} parent=39 // pred_check
        %p1647 = pneg %p106
      $region42: #{forward.5} parent=39 // pred_check_branch
        %1649 = sbr.rel (%p1647) target = $region44
      $region43: #{forward.5} parent=39 // pred_region
        %s1650 = smul.u32 128, %s15
        %p1651 = scmp.lt.s32.totalorder %s1650, 511
        %s1652 = scalar_select %p1651, %s1650, 511
        %s1653 = smul.addr %s1652, 8
        %s1654 = scalar_lea.vmem %s3, %s1653
      $region44: #{forward.5} parent=39 // pred_fallthru
        _
    $region40: #{forward.5} parent=5 // pred_fallthru
      _
  $region6: #{forward.5} parent=0 // loop_footer
    %s13 = sadd.s32 1, %s9
  $region7: #{forward.5} parent=0 // loop_footer_branch
    %8 = sbr.rel target = $region3
  $region8: #{forward.5} parent=0 // loop_exit
    _

// kernel: forward.6
$region0: #{forward.6}
  #allocation0 [shape = 'u32[]', space=smem, size = 0x4, offset = 0x4, fixed_abs, tag = 'smem constant byte address 0x4 - core index']
  #allocation1 [shape = 'u32[144,128]{1,0:T(1,128)}', space=vmem, size = 0x12000, scoped, tag = 'internal scratch']
  %s0 = inlined_call_operand.vmem [shape: bf16[704,80], index: 0, kind: input, shape index: {}]
  %s1 = inlined_call_operand.vmem [shape: bf16[80,32], index: 1, kind: input, shape index: {}]
  %s2 = inlined_call_operand.vmem [shape: f32[1,32], index: 2, kind: input, shape index: {}]
  %s3 = inlined_call_operand.vmem [shape: f32[704,32], index: 3, kind: output, shape index: {}]
  %s4 = sld [smem:[#allocation0]]
  $region22: #{forward.6} parent=0
    _
  %s6 = ssub.s32 1, %s4
  %s7 = scalar_select 0, %s6, %s4
  // Predicated region
  $region2: #{forward.6} parent=0 // pred_check
    _
  $region3: #{forward.6} parent=0 // pred_check_branch
    %9 = sbr.rel (0) target = $region5
  $region4: #{forward.6} parent=0 // pred_region
    _
  $region5: #{forward.6} parent=0 // pred_fallthru
    _
  // Predicated region
  $region6: #{forward.6} parent=0 // pred_check
    _
  $region7: #{forward.6} parent=0 // pred_check_branch
    %11 = sbr.rel (0) target = $region9
  $region8: #{forward.6} parent=0 // pred_region
    _
  $region9: #{forward.6} parent=0 // pred_fallthru
    _
  // Predicated region
  $region10: #{forward.6} parent=0 // pred_check
    _
  $region11: #{forward.6} parent=0 // pred_check_branch
    %13 = sbr.rel (0) target = $region13
  $region12: #{forward.6} parent=0 // pred_region
    _
  $region13: #{forward.6} parent=0 // pred_fallthru
    _
  %v15 = vld [vmem:[%s0] sm:$0xf]
  %v16 = vld [vmem:[%s0 + $0x4] sm:$0xf]
  %v17 = vld [vmem:[%s0 + $0x8] sm:$0xf]
  %v18 = vld [vmem:[%s0 + $0xc] sm:$0xf]
  %v19 = vld [vmem:[%s0 + $0x10] sm:$0xf]
  %v20 = vld [vmem:[%s0 + $0x14] sm:$0xf]
  %v21 = vld [vmem:[%s0 + $0x18] sm:$0xf]
  %v22 = vld [vmem:[%s0 + $0x1c] sm:$0xf]
  %v23 = vld [vmem:[%s0 + $0x20] sm:$0xf]
  %v24 = vld [vmem:[%s0 + $0x24] sm:$0xf]
  %v25 = vld [vmem:[%s0 + $0x28] sm:$0xf]
  %v26 = vld [vmem:[%s0 + $0x2c] sm:$0xf]
  %v27 = vld [vmem:[%s0 + $0x30] sm:$0xf]
  %v28 = vld [vmem:[%s0 + $0x34] sm:$0xf]
  %v29 = vld [vmem:[%s0 + $0x38] sm:$0xf]
  %v30 = vld [vmem:[%s0 + $0x3c] sm:$0xf]
  %v31 = vld [vmem:[%s0 + $0x40] sm:$0xf]
  %v32 = vld [vmem:[%s0 + $0x44] sm:$0xf]
  %v33 = vld [vmem:[%s0 + $0x48] sm:$0xf]
  %v34 = vld [vmem:[%s0 + $0x4c] sm:$0xf]
  %v35 = vld [vmem:[%s0 + $0x50] sm:$0xf]
  %v36 = vld [vmem:[%s0 + $0x54] sm:$0xf]
  %v37 = vld [vmem:[%s0 + $0x58] sm:$0xf]
  %v38 = vld [vmem:[%s0 + $0x5c] sm:$0xf]
  %v39 = vld [vmem:[%s0 + $0x60] sm:$0xf]
  %v40 = vld [vmem:[%s0 + $0x64] sm:$0xf]
  %v41 = vld [vmem:[%s0 + $0x68] sm:$0xf]
  %v42 = vld [vmem:[%s0 + $0x6c] sm:$0xf]
  %v43 = vld [vmem:[%s0 + $0x70] sm:$0xf]
  %v44 = vld [vmem:[%s0 + $0x74] sm:$0xf]
  %v45 = vld [vmem:[%s0 + $0x78] sm:$0xf]
  %v46 = vld [vmem:[%s0 + $0x7c] sm:$0xf]
  %v47 = vld [vmem:[%s0 + $0x80] sm:$0xf]
  %v48 = vld [vmem:[%s0 + $0x84] sm:$0xf]
  %v49 = vld [vmem:[%s0 + $0x88] sm:$0xf]
  %v50 = vld [vmem:[%s0 + $0x8c] sm:$0xf]
  %v51 = vld [vmem:[%s0 + $0x90] sm:$0xf]
  %v52 = vld [vmem:[%s0 + $0x94] sm:$0xf]
  %v53 = vld [vmem:[%s0 + $0x98] sm:$0xf]
  %v54 = vld [vmem:[%s0 + $0x9c] sm:$0xf]
  %v55 = vld [vmem:[%s0 + $0xa0] sm:$0xf]
  %v56 = vld [vmem:[%s0 + $0xa4] sm:$0xf]
  %v57 = vld [vmem:[%s0 + $0xa8] sm:$0xf]
  %v58 = vld [vmem:[%s0 + $0xac] sm:$0xf]
  %v59 = vld [vmem:[%s0 + $0xb0] sm:$0xf]
  %v60 = vld [vmem:[%s0 + $0xb4] sm:$0xf]
  %v61 = vld [vmem:[%s0 + $0xb8] sm:$0xf]
  %v62 = vld [vmem:[%s0 + $0xbc] sm:$0xf]
  %v63 = vld [vmem:[%s0 + $0xc0] sm:$0xf]
  %v64 = vld [vmem:[%s0 + $0xc4] sm:$0xf]
  %v65 = vld [vmem:[%s0 + $0xc8] sm:$0xf]
  %v66 = vld [vmem:[%s0 + $0xcc] sm:$0xf]
  %v67 = vld [vmem:[%s0 + $0xd0] sm:$0xf]
  %v68 = vld [vmem:[%s0 + $0xd4] sm:$0xf]
  %v69 = vld [vmem:[%s0 + $0xd8] sm:$0xf]
  %v70 = vld [vmem:[%s0 + $0xdc] sm:$0xf]
  %v71 = vld [vmem:[%s0 + $0xe0] sm:$0xf]
  %v72 = vld [vmem:[%s0 + $0xe4] sm:$0xf]
  %v73 = vld [vmem:[%s0 + $0xe8] sm:$0xf]
  %v74 = vld [vmem:[%s0 + $0xec] sm:$0xf]
  %v75 = vld [vmem:[%s0 + $0xf0] sm:$0xf]
  %v76 = vld [vmem:[%s0 + $0xf4] sm:$0xf]
  %v77 = vld [vmem:[%s0 + $0xf8] sm:$0xf]
  %v78 = vld [vmem:[%s0 + $0xfc] sm:$0xf]
  %v79 = vld [vmem:[%s0 + $0x100] sm:$0xf]
  %v80 = vld [vmem:[%s0 + $0x104] sm:$0xf]
  %v81 = vld [vmem:[%s0 + $0x108] sm:$0xf]
  %v82 = vld [vmem:[%s0 + $0x10c] sm:$0xf]
  %v83 = vld [vmem:[%s0 + $0x110] sm:$0xf]
  %v84 = vld [vmem:[%s0 + $0x114] sm:$0xf]
  %v85 = vld [vmem:[%s0 + $0x118] sm:$0xf]
  %v86 = vld [vmem:[%s0 + $0x11c] sm:$0xf]
  %v87 = vld [vmem:[%s0 + $0x120] sm:$0xf]
  %v88 = vld [vmem:[%s0 + $0x124] sm:$0xf]
  %v89 = vld [vmem:[%s0 + $0x128] sm:$0xf]
  %v90 = vld [vmem:[%s0 + $0x12c] sm:$0xf]
  %v91 = vld [vmem:[%s0 + $0x130] sm:$0xf]
  %v92 = vld [vmem:[%s0 + $0x134] sm:$0xf]
  %v93 = vld [vmem:[%s0 + $0x138] sm:$0xf]
  %v94 = vld [vmem:[%s0 + $0x13c] sm:$0xf]
  %v95 = vld [vmem:[%s0 + $0x140] sm:$0xf]
  %v96 = vld [vmem:[%s0 + $0x144] sm:$0xf]
  %v97 = vld [vmem:[%s0 + $0x148] sm:$0xf]
  %v98 = vld [vmem:[%s0 + $0x14c] sm:$0xf]
  %v99 = vld [vmem:[%s0 + $0x150] sm:$0xf]
  %v100 = vld [vmem:[%s0 + $0x154] sm:$0xf]
  %v101 = vld [vmem:[%s0 + $0x158] sm:$0xf]
  %v102 = vld [vmem:[%s0 + $0x15c] sm:$0xf]
  %v103 = vld [vmem:[%s1] sm:$0xf]
  %v104 = vld [vmem:[%s1 + $0x4] sm:$0xf]
  %v105 = vld [vmem:[%s1 + $0x8] sm:$0xf]
  %v106 = vld [vmem:[%s1 + $0xc] sm:$0xf]
  %v107 = vld [vmem:[%s1 + $0x10] sm:$0xf]
  %v108 = vld [vmem:[%s1 + $0x14] sm:$0xf]
  %v109 = vld [vmem:[%s1 + $0x18] sm:$0xf]
  %v110 = vld [vmem:[%s1 + $0x1c] sm:$0xf]
  %v111 = vld [vmem:[%s1 + $0x20] sm:$0xf]
  %v112 = vld [vmem:[%s1 + $0x24] sm:$0xf]
  %v113 = vld [vmem:[%s2] sm:$0x1]
  %v115 = vlaneseq
  %v116 = vshrl.u32 %v115, 7
  %v117 = vsub.s32 0, %v116
  %v118 = vrot.slane %v113, %v117
  %v208 = vunpack.c.l.b16 %v15
  %v209 = vunpack.c.l.b16 %v16
  %v210 = vunpack.c.l.b16 %v17
  %v211 = vunpack.c.l.b16 %v18
  %v212 = vunpack.c.l.b16 %v19
  %v213 = vunpack.c.l.b16 %v20
  %v214 = vunpack.c.l.b16 %v21
  %v215 = vunpack.c.l.b16 %v22
  %v216 = vunpack.c.l.b16 %v23
  %v217 = vunpack.c.l.b16 %v24
  %v218 = vunpack.c.l.b16 %v25
  %v219 = vunpack.c.l.b16 %v26
  %v220 = vunpack.c.l.b16 %v27
  %v221 = vunpack.c.l.b16 %v28
  %v222 = vunpack.c.l.b16 %v29
  %v223 = vunpack.c.l.b16 %v30
  %v224 = vunpack.c.l.b16 %v31
  %v225 = vunpack.c.l.b16 %v32
  %v226 = vunpack.c.l.b16 %v33
  %v227 = vunpack.c.l.b16 %v34
  %v228 = vunpack.c.l.b16 %v35
  %v229 = vunpack.c.l.b16 %v36
  %v230 = vunpack.c.l.b16 %v37
  %v231 = vunpack.c.l.b16 %v38
  %v232 = vunpack.c.l.b16 %v39
  %v233 = vunpack.c.l.b16 %v40
  %v234 = vunpack.c.l.b16 %v41
  %v235 = vunpack.c.l.b16 %v42
  %v236 = vunpack.c.l.b16 %v43
  %v237 = vunpack.c.l.b16 %v44
  %v238 = vunpack.c.l.b16 %v45
  %v239 = vunpack.c.l.b16 %v46
  %v240 = vunpack.c.l.b16 %v47
  %v241 = vunpack.c.l.b16 %v48
  %v242 = vunpack.c.l.b16 %v49
  %v243 = vunpack.c.l.b16 %v50
  %v244 = vunpack.c.l.b16 %v51
  %v245 = vunpack.c.l.b16 %v52
  %v246 = vunpack.c.l.b16 %v53
  %v247 = vunpack.c.l.b16 %v54
  %v248 = vunpack.c.l.b16 %v55
  %v249 = vunpack.c.l.b16 %v56
  %v250 = vunpack.c.l.b16 %v57
  %v251 = vunpack.c.l.b16 %v58
  %v252 = vunpack.c.l.b16 %v59
  %v253 = vunpack.c.l.b16 %v60
  %v254 = vunpack.c.l.b16 %v61
  %v255 = vunpack.c.l.b16 %v62
  %v256 = vunpack.c.l.b16 %v63
  %v257 = vunpack.c.l.b16 %v64
  %v258 = vunpack.c.l.b16 %v65
  %v259 = vunpack.c.l.b16 %v66
  %v260 = vunpack.c.l.b16 %v67
  %v261 = vunpack.c.l.b16 %v68
  %v262 = vunpack.c.l.b16 %v69
  %v263 = vunpack.c.l.b16 %v70
  %v264 = vunpack.c.l.b16 %v71
  %v265 = vunpack.c.l.b16 %v72
  %v266 = vunpack.c.l.b16 %v73
  %v267 = vunpack.c.l.b16 %v74
  %v268 = vunpack.c.l.b16 %v75
  %v269 = vunpack.c.l.b16 %v76
  %v270 = vunpack.c.l.b16 %v77
  %v271 = vunpack.c.l.b16 %v78
  %v272 = vunpack.c.l.b16 %v79
  %v273 = vunpack.c.l.b16 %v80
  %v274 = vunpack.c.l.b16 %v81
  %v275 = vunpack.c.l.b16 %v82
  %v276 = vunpack.c.l.b16 %v83
  %v277 = vunpack.c.l.b16 %v84
  %v278 = vunpack.c.l.b16 %v85
  %v279 = vunpack.c.l.b16 %v86
  %v280 = vunpack.c.l.b16 %v87
  %v281 = vunpack.c.l.b16 %v88
  %v282 = vunpack.c.l.b16 %v89
  %v283 = vunpack.c.l.b16 %v90
  %v284 = vunpack.c.l.b16 %v91
  %v285 = vunpack.c.l.b16 %v92
  %v286 = vunpack.c.l.b16 %v93
  %v287 = vunpack.c.l.b16 %v94
  %v288 = vunpack.c.l.b16 %v95
  %v289 = vunpack.c.l.b16 %v96
  %v290 = vunpack.c.l.b16 %v97
  %v291 = vunpack.c.l.b16 %v98
  %v292 = vunpack.c.l.b16 %v99
  %v293 = vunpack.c.l.b16 %v100
  %v294 = vunpack.c.l.b16 %v101
  %v295 = vunpack.c.l.b16 %v102
  %v296 = vpack.c.b16 %v209, %v208
  %v297 = vpack.c.b16 %v211, %v210
  %v298 = vpack.c.b16 %v213, %v212
  %v299 = vpack.c.b16 %v215, %v214
  %v300 = vpack.c.b16 %v217, %v216
  %v301 = vpack.c.b16 %v219, %v218
  %v302 = vpack.c.b16 %v221, %v220
  %v303 = vpack.c.b16 %v223, %v222
  %v304 = vpack.c.b16 %v225, %v224
  %v305 = vpack.c.b16 %v227, %v226
  %v306 = vpack.c.b16 %v229, %v228
  %v307 = vpack.c.b16 %v231, %v230
  %v308 = vpack.c.b16 %v233, %v232
  %v309 = vpack.c.b16 %v235, %v234
  %v310 = vpack.c.b16 %v237, %v236
  %v311 = vpack.c.b16 %v239, %v238
  %v312 = vpack.c.b16 %v241, %v240
  %v313 = vpack.c.b16 %v243, %v242
  %v314 = vpack.c.b16 %v245, %v244
  %v315 = vpack.c.b16 %v247, %v246
  %v316 = vpack.c.b16 %v249, %v248
  %v317 = vpack.c.b16 %v251, %v250
  %v318 = vpack.c.b16 %v253, %v252
  %v319 = vpack.c.b16 %v255, %v254
  %v320 = vpack.c.b16 %v257, %v256
  %v321 = vpack.c.b16 %v259, %v258
  %v322 = vpack.c.b16 %v261, %v260
  %v323 = vpack.c.b16 %v263, %v262
  %v324 = vpack.c.b16 %v265, %v264
  %v325 = vpack.c.b16 %v267, %v266
  %v326 = vpack.c.b16 %v269, %v268
  %v327 = vpack.c.b16 %v271, %v270
  %v328 = vpack.c.b16 %v273, %v272
  %v329 = vpack.c.b16 %v275, %v274
  %v330 = vpack.c.b16 %v277, %v276
  %v331 = vpack.c.b16 %v279, %v278
  %v332 = vpack.c.b16 %v281, %v280
  %v333 = vpack.c.b16 %v283, %v282
  %v334 = vpack.c.b16 %v285, %v284
  %v335 = vpack.c.b16 %v287, %v286
  %v336 = vpack.c.b16 %v289, %v288
  %v337 = vpack.c.b16 %v291, %v290
  %v338 = vpack.c.b16 %v293, %v292
  %v339 = vpack.c.b16 %v295, %v294
  %v350 = vunpack.c.l.b16 %v103
  %v351 = vunpack.c.l.b16 %v104
  %v352 = vunpack.c.l.b16 %v105
  %v353 = vunpack.c.l.b16 %v106
  %v354 = vunpack.c.l.b16 %v107
  %v355 = vunpack.c.l.b16 %v108
  %v356 = vunpack.c.l.b16 %v109
  %v357 = vunpack.c.l.b16 %v110
  %v358 = vunpack.c.l.b16 %v111
  %v359 = vunpack.c.l.b16 %v112
  %v360 = vpack.c.b16 %v351, %v350
  %v361 = vpack.c.b16 %v353, %v352
  %v362 = vpack.c.b16 %v355, %v354
  %v363 = vpack.c.b16 %v357, %v356
  %v364 = vpack.c.b16 %v359, %v358
  %vm370 = vcmask 654336
  %v372 = vsel %vm370, %v296, 0
  %v375 = vsel %vm370, %v297, 0
  %v378 = vsel %vm370, %v298, 0
  %v381 = vsel %vm370, %v299, 0
  %v384 = vsel %vm370, %v300, 0
  %v387 = vsel %vm370, %v301, 0
  %v390 = vsel %vm370, %v302, 0
  %v393 = vsel %vm370, %v303, 0
  %v396 = vsel %vm370, %v304, 0
  %v399 = vsel %vm370, %v305, 0
  %v402 = vsel %vm370, %v306, 0
  %v405 = vsel %vm370, %v307, 0
  %v408 = vsel %vm370, %v308, 0
  %v411 = vsel %vm370, %v309, 0
  %v414 = vsel %vm370, %v310, 0
  %v417 = vsel %vm370, %v311, 0
  %v420 = vsel %vm370, %v312, 0
  %v423 = vsel %vm370, %v313, 0
  %v426 = vsel %vm370, %v314, 0
  %v429 = vsel %vm370, %v315, 0
  %v432 = vsel %vm370, %v316, 0
  %v435 = vsel %vm370, %v317, 0
  %v438 = vsel %vm370, %v318, 0
  %v441 = vsel %vm370, %v319, 0
  %v444 = vsel %vm370, %v320, 0
  %v447 = vsel %vm370, %v321, 0
  %v450 = vsel %vm370, %v322, 0
  %v453 = vsel %vm370, %v323, 0
  %v456 = vsel %vm370, %v324, 0
  %v459 = vsel %vm370, %v325, 0
  %v462 = vsel %vm370, %v326, 0
  %v465 = vsel %vm370, %v327, 0
  %v468 = vsel %vm370, %v328, 0
  %v471 = vsel %vm370, %v329, 0
  %v474 = vsel %vm370, %v330, 0
  %v477 = vsel %vm370, %v331, 0
  %v480 = vsel %vm370, %v332, 0
  %v483 = vsel %vm370, %v333, 0
  %v486 = vsel %vm370, %v334, 0
  %v489 = vsel %vm370, %v335, 0
  %v492 = vsel %vm370, %v336, 0
  %v495 = vsel %vm370, %v337, 0
  %v498 = vsel %vm370, %v338, 0
  %v501 = vsel %vm370, %v339, 0
  %503 = vmatprep.subr.bf16.mxu0 0
  %504 = vmatpush1.bf16.msra.mxu0 0
  %505 = vmatprep.subr.bf16.mxu0 0
  %506 = vmatpush1.bf16.msra.mxu0 0
  %507 = vmatprep.subr.bf16.mxu0 0
  %508 = vmatpush1.bf16.msra.mxu0 0
  %509 = vmatprep.subr.bf16.mxu0 0
  %510 = vmatpush1.bf16.msra.mxu0 %v364
  %511 = vmatprep.subr.bf16.mxu0 0
  %512 = vmatpush1.bf16.msra.mxu0 %v363
  %513 = vmatprep.subr.bf16.mxu0 0
  %514 = vmatpush1.bf16.msra.mxu0 %v362
  %515 = vmatprep.subr.bf16.mxu0 0
  %516 = vmatpush1.bf16.msra.mxu0 %v361
  %517 = vmatprep.subr.bf16.mxu0 0
  %518 = vmatpush1.bf16.msra.mxu0 %v360
  %519 = vmatprep.subr.bf16.mxu0 0
  %520 = vmatpush2.bf16.msra.mxu0 0
  %521 = vmatprep.subr.bf16.mxu0 0
  %522 = vmatpush2.bf16.msra.mxu0 0
  %523 = vmatprep.subr.bf16.mxu0 0
  %524 = vmatpush2.bf16.msra.mxu0 0
  %525 = vmatprep.subr.bf16.mxu0 0
  %526 = vmatpush2.bf16.msra.mxu0 0
  %527 = vmatprep.subr.bf16.mxu0 0
  %528 = vmatpush2.bf16.msra.mxu0 0
  %529 = vmatprep.subr.bf16.mxu0 0
  %530 = vmatpush2.bf16.msra.mxu0 0
  %531 = vmatprep.subr.bf16.mxu0 0
  %532 = vmatpush2.bf16.msra.mxu0 0
  %533 = vmatprep.subr.bf16.mxu0 0
  %534 = vmatpush2.bf16.msra.mxu0 0
  %535 = vmatprep.mubr.bf16.mxu0 0
  %536 = vmatmul.mubr.bf16.gmra.mxu0 %v372
  %v537 = vpop.f32.mrf.mxu0
  %v538 = vadd.f32 %v118, %v537
  %v539 = vpop.f32.mrf.mxu0
  %v540 = vpop.f32.mrf.mxu0
  %v541 = vadd.f32 %v118, %v540
  %v542 = vpop.f32.mrf.mxu0
  %543 = vmatprep.mubr.bf16.mxu0 0
  %544 = vmatmul.mubr.bf16.gmra.mxu0 %v375
  %v545 = vpop.f32.mrf.mxu0
  %v546 = vadd.f32 %v118, %v545
  %v547 = vpop.f32.mrf.mxu0
  %v548 = vpop.f32.mrf.mxu0
  %v549 = vadd.f32 %v118, %v548
  %v550 = vpop.f32.mrf.mxu0
  %551 = vmatprep.mubr.bf16.mxu0 0
  %552 = vmatmul.mubr.bf16.gmra.mxu0 %v378
  %v553 = vpop.f32.mrf.mxu0
  %v554 = vadd.f32 %v118, %v553
  %v555 = vpop.f32.mrf.mxu0
  %v556 = vpop.f32.mrf.mxu0
  %v557 = vadd.f32 %v118, %v556
  %v558 = vpop.f32.mrf.mxu0
  %559 = vmatprep.mubr.bf16.mxu0 0
  %560 = vmatmul.mubr.bf16.gmra.mxu0 %v381
  %v561 = vpop.f32.mrf.mxu0
  %v562 = vadd.f32 %v118, %v561
  %v563 = vpop.f32.mrf.mxu0
  %v564 = vpop.f32.mrf.mxu0
  %v565 = vadd.f32 %v118, %v564
  %v566 = vpop.f32.mrf.mxu0
  %567 = vmatprep.mubr.bf16.mxu0 0
  %568 = vmatmul.mubr.bf16.gmra.mxu0 %v384
  %v569 = vpop.f32.mrf.mxu0
  %v570 = vadd.f32 %v118, %v569
  %v571 = vpop.f32.mrf.mxu0
  %v572 = vpop.f32.mrf.mxu0
  %v573 = vadd.f32 %v118, %v572
  %v574 = vpop.f32.mrf.mxu0
  %575 = vmatprep.mubr.bf16.mxu0 0
  %576 = vmatmul.mubr.bf16.gmra.mxu0 %v387
  %v577 = vpop.f32.mrf.mxu0
  %v578 = vadd.f32 %v118, %v577
  %v579 = vpop.f32.mrf.mxu0
  %v580 = vpop.f32.mrf.mxu0
  %v581 = vadd.f32 %v118, %v580
  %v582 = vpop.f32.mrf.mxu0
  %583 = vmatprep.mubr.bf16.mxu0 0
  %584 = vmatmul.mubr.bf16.gmra.mxu0 %v390
  %v585 = vpop.f32.mrf.mxu0
  %v586 = vadd.f32 %v118, %v585
  %v587 = vpop.f32.mrf.mxu0
  %v588 = vpop.f32.mrf.mxu0
  %v589 = vadd.f32 %v118, %v588
  %v590 = vpop.f32.mrf.mxu0
  %591 = vmatprep.mubr.bf16.mxu0 0
  %592 = vmatmul.mubr.bf16.gmra.mxu0 %v393
  %v593 = vpop.f32.mrf.mxu0
  %v594 = vadd.f32 %v118, %v593
  %v595 = vpop.f32.mrf.mxu0
  %v596 = vpop.f32.mrf.mxu0
  %v597 = vadd.f32 %v118, %v596
  %v598 = vpop.f32.mrf.mxu0
  %599 = vmatprep.mubr.bf16.mxu0 0
  %600 = vmatmul.mubr.bf16.gmra.mxu0 %v396
  %v601 = vpop.f32.mrf.mxu0
  %v602 = vadd.f32 %v118, %v601
  %v603 = vpop.f32.mrf.mxu0
  %v604 = vpop.f32.mrf.mxu0
  %v605 = vadd.f32 %v118, %v604
  %v606 = vpop.f32.mrf.mxu0
  %607 = vmatprep.mubr.bf16.mxu0 0
  %608 = vmatmul.mubr.bf16.gmra.mxu0 %v399
  %v609 = vpop.f32.mrf.mxu0
  %v610 = vadd.f32 %v118, %v609
  %v611 = vpop.f32.mrf.mxu0
  %v612 = vpop.f32.mrf.mxu0
  %v613 = vadd.f32 %v118, %v612
  %v614 = vpop.f32.mrf.mxu0
  %615 = vmatprep.mubr.bf16.mxu0 0
  %616 = vmatmul.mubr.bf16.gmra.mxu0 %v402
  %v617 = vpop.f32.mrf.mxu0
  %v618 = vadd.f32 %v118, %v617
  %v619 = vpop.f32.mrf.mxu0
  %v620 = vpop.f32.mrf.mxu0
  %v621 = vadd.f32 %v118, %v620
  %v622 = vpop.f32.mrf.mxu0
  %623 = vmatprep.mubr.bf16.mxu0 0
  %624 = vmatmul.mubr.bf16.gmra.mxu0 %v405
  %v625 = vpop.f32.mrf.mxu0
  %v626 = vadd.f32 %v118, %v625
  %v627 = vpop.f32.mrf.mxu0
  %v628 = vpop.f32.mrf.mxu0
  %v629 = vadd.f32 %v118, %v628
  %v630 = vpop.f32.mrf.mxu0
  %631 = vmatprep.mubr.bf16.mxu0 0
  %632 = vmatmul.mubr.bf16.gmra.mxu0 %v408
  %v633 = vpop.f32.mrf.mxu0
  %v634 = vadd.f32 %v118, %v633
  %v635 = vpop.f32.mrf.mxu0
  %v636 = vpop.f32.mrf.mxu0
  %v637 = vadd.f32 %v118, %v636
  %v638 = vpop.f32.mrf.mxu0
  %639 = vmatprep.mubr.bf16.mxu0 0
  %640 = vmatmul.mubr.bf16.gmra.mxu0 %v411
  %v641 = vpop.f32.mrf.mxu0
  %v642 = vadd.f32 %v118, %v641
  %v643 = vpop.f32.mrf.mxu0
  %v644 = vpop.f32.mrf.mxu0
  %v645 = vadd.f32 %v118, %v644
  %v646 = vpop.f32.mrf.mxu0
  %647 = vmatprep.mubr.bf16.mxu0 0
  %648 = vmatmul.mubr.bf16.gmra.mxu0 %v414
  %v649 = vpop.f32.mrf.mxu0
  %v650 = vadd.f32 %v118, %v649
  %v651 = vpop.f32.mrf.mxu0
  %v652 = vpop.f32.mrf.mxu0
  %v653 = vadd.f32 %v118, %v652
  %v654 = vpop.f32.mrf.mxu0
  %655 = vmatprep.mubr.bf16.mxu0 0
  %656 = vmatmul.mubr.bf16.gmra.mxu0 %v417
  %v657 = vpop.f32.mrf.mxu0
  %v658 = vadd.f32 %v118, %v657
  %v659 = vpop.f32.mrf.mxu0
  %v660 = vpop.f32.mrf.mxu0
  %v661 = vadd.f32 %v118, %v660
  %v662 = vpop.f32.mrf.mxu0
  %663 = vmatprep.mubr.bf16.mxu0 0
  %664 = vmatmul.mubr.bf16.gmra.mxu0 %v420
  %v665 = vpop.f32.mrf.mxu0
  %v666 = vadd.f32 %v118, %v665
  %v667 = vpop.f32.mrf.mxu0
  %v668 = vpop.f32.mrf.mxu0
  %v669 = vadd.f32 %v118, %v668
  %v670 = vpop.f32.mrf.mxu0
  %671 = vmatprep.mubr.bf16.mxu0 0
  %672 = vmatmul.mubr.bf16.gmra.mxu0 %v423
  %v673 = vpop.f32.mrf.mxu0
  %v674 = vadd.f32 %v118, %v673
  %v675 = vpop.f32.mrf.mxu0
  %v676 = vpop.f32.mrf.mxu0
  %v677 = vadd.f32 %v118, %v676
  %v678 = vpop.f32.mrf.mxu0
  %679 = vmatprep.mubr.bf16.mxu0 0
  %680 = vmatmul.mubr.bf16.gmra.mxu0 %v426
  %v681 = vpop.f32.mrf.mxu0
  %v682 = vadd.f32 %v118, %v681
  %v683 = vpop.f32.mrf.mxu0
  %v684 = vpop.f32.mrf.mxu0
  %v685 = vadd.f32 %v118, %v684
  %v686 = vpop.f32.mrf.mxu0
  %687 = vmatprep.mubr.bf16.mxu0 0
  %688 = vmatmul.mubr.bf16.gmra.mxu0 %v429
  %v689 = vpop.f32.mrf.mxu0
  %v690 = vadd.f32 %v118, %v689
  %v691 = vpop.f32.mrf.mxu0
  %v692 = vpop.f32.mrf.mxu0
  %v693 = vadd.f32 %v118, %v692
  %v694 = vpop.f32.mrf.mxu0
  %695 = vmatprep.mubr.bf16.mxu0 0
  %696 = vmatmul.mubr.bf16.gmra.mxu0 %v432
  %v697 = vpop.f32.mrf.mxu0
  %v698 = vadd.f32 %v118, %v697
  %v699 = vpop.f32.mrf.mxu0
  %v700 = vpop.f32.mrf.mxu0
  %v701 = vadd.f32 %v118, %v700
  %v702 = vpop.f32.mrf.mxu0
  %703 = vmatprep.mubr.bf16.mxu0 0
  %704 = vmatmul.mubr.bf16.gmra.mxu0 %v435
  %v705 = vpop.f32.mrf.mxu0
  %v706 = vadd.f32 %v118, %v705
  %v707 = vpop.f32.mrf.mxu0
  %v708 = vpop.f32.mrf.mxu0
  %v709 = vadd.f32 %v118, %v708
  %v710 = vpop.f32.mrf.mxu0
  %711 = vmatprep.mubr.bf16.mxu0 0
  %712 = vmatmul.mubr.bf16.gmra.mxu0 %v438
  %v713 = vpop.f32.mrf.mxu0
  %v714 = vadd.f32 %v118, %v713
  %v715 = vpop.f32.mrf.mxu0
  %v716 = vpop.f32.mrf.mxu0
  %v717 = vadd.f32 %v118, %v716
  %v718 = vpop.f32.mrf.mxu0
  %719 = vmatprep.mubr.bf16.mxu0 0
  %720 = vmatmul.mubr.bf16.gmra.mxu0 %v441
  %v721 = vpop.f32.mrf.mxu0
  %v722 = vadd.f32 %v118, %v721
  %v723 = vpop.f32.mrf.mxu0
  %v724 = vpop.f32.mrf.mxu0
  %v725 = vadd.f32 %v118, %v724
  %v726 = vpop.f32.mrf.mxu0
  %727 = vmatprep.mubr.bf16.mxu0 0
  %728 = vmatmul.mubr.bf16.gmra.mxu0 %v444
  %v729 = vpop.f32.mrf.mxu0
  %v730 = vadd.f32 %v118, %v729
  %v731 = vpop.f32.mrf.mxu0
  %v732 = vpop.f32.mrf.mxu0
  %v733 = vadd.f32 %v118, %v732
  %v734 = vpop.f32.mrf.mxu0
  %735 = vmatprep.mubr.bf16.mxu0 0
  %736 = vmatmul.mubr.bf16.gmra.mxu0 %v447
  %v737 = vpop.f32.mrf.mxu0
  %v738 = vadd.f32 %v118, %v737
  %v739 = vpop.f32.mrf.mxu0
  %v740 = vpop.f32.mrf.mxu0
  %v741 = vadd.f32 %v118, %v740
  %v742 = vpop.f32.mrf.mxu0
  %743 = vmatprep.mubr.bf16.mxu0 0
  %744 = vmatmul.mubr.bf16.gmra.mxu0 %v450
  %v745 = vpop.f32.mrf.mxu0
  %v746 = vadd.f32 %v118, %v745
  %v747 = vpop.f32.mrf.mxu0
  %v748 = vpop.f32.mrf.mxu0
  %v749 = vadd.f32 %v118, %v748
  %v750 = vpop.f32.mrf.mxu0
  %751 = vmatprep.mubr.bf16.mxu0 0
  %752 = vmatmul.mubr.bf16.gmra.mxu0 %v453
  %v753 = vpop.f32.mrf.mxu0
  %v754 = vadd.f32 %v118, %v753
  %v755 = vpop.f32.mrf.mxu0
  %v756 = vpop.f32.mrf.mxu0
  %v757 = vadd.f32 %v118, %v756
  %v758 = vpop.f32.mrf.mxu0
  %759 = vmatprep.mubr.bf16.mxu0 0
  %760 = vmatmul.mubr.bf16.gmra.mxu0 %v456
  %v761 = vpop.f32.mrf.mxu0
  %v762 = vadd.f32 %v118, %v761
  %v763 = vpop.f32.mrf.mxu0
  %v764 = vpop.f32.mrf.mxu0
  %v765 = vadd.f32 %v118, %v764
  %v766 = vpop.f32.mrf.mxu0
  %767 = vmatprep.mubr.bf16.mxu0 0
  %768 = vmatmul.mubr.bf16.gmra.mxu0 %v459
  %v769 = vpop.f32.mrf.mxu0
  %v770 = vadd.f32 %v118, %v769
  %v771 = vpop.f32.mrf.mxu0
  %v772 = vpop.f32.mrf.mxu0
  %v773 = vadd.f32 %v118, %v772
  %v774 = vpop.f32.mrf.mxu0
  %775 = vmatprep.mubr.bf16.mxu0 0
  %776 = vmatmul.mubr.bf16.gmra.mxu0 %v462
  %v777 = vpop.f32.mrf.mxu0
  %v778 = vadd.f32 %v118, %v777
  %v779 = vpop.f32.mrf.mxu0
  %v780 = vpop.f32.mrf.mxu0
  %v781 = vadd.f32 %v118, %v780
  %v782 = vpop.f32.mrf.mxu0
  %783 = vmatprep.mubr.bf16.mxu0 0
  %784 = vmatmul.mubr.bf16.gmra.mxu0 %v465
  %v785 = vpop.f32.mrf.mxu0
  %v786 = vadd.f32 %v118, %v785
  %v787 = vpop.f32.mrf.mxu0
  %v788 = vpop.f32.mrf.mxu0
  %v789 = vadd.f32 %v118, %v788
  %v790 = vpop.f32.mrf.mxu0
  %791 = vmatprep.mubr.bf16.mxu0 0
  %792 = vmatmul.mubr.bf16.gmra.mxu0 %v468
  %v793 = vpop.f32.mrf.mxu0
  %v794 = vadd.f32 %v118, %v793
  %v795 = vpop.f32.mrf.mxu0
  %v796 = vpop.f32.mrf.mxu0
  %v797 = vadd.f32 %v118, %v796
  %v798 = vpop.f32.mrf.mxu0
  %799 = vmatprep.mubr.bf16.mxu0 0
  %800 = vmatmul.mubr.bf16.gmra.mxu0 %v471
  %v801 = vpop.f32.mrf.mxu0
  %v802 = vadd.f32 %v118, %v801
  %v803 = vpop.f32.mrf.mxu0
  %v804 = vpop.f32.mrf.mxu0
  %v805 = vadd.f32 %v118, %v804
  %v806 = vpop.f32.mrf.mxu0
  %807 = vmatprep.mubr.bf16.mxu0 0
  %808 = vmatmul.mubr.bf16.gmra.mxu0 %v474
  %v809 = vpop.f32.mrf.mxu0
  %v810 = vadd.f32 %v118, %v809
  %v811 = vpop.f32.mrf.mxu0
  %v812 = vpop.f32.mrf.mxu0
  %v813 = vadd.f32 %v118, %v812
  %v814 = vpop.f32.mrf.mxu0
  %815 = vmatprep.mubr.bf16.mxu0 0
  %816 = vmatmul.mubr.bf16.gmra.mxu0 %v477
  %v817 = vpop.f32.mrf.mxu0
  %v818 = vadd.f32 %v118, %v817
  %v819 = vpop.f32.mrf.mxu0
  %v820 = vpop.f32.mrf.mxu0
  %v821 = vadd.f32 %v118, %v820
  %v822 = vpop.f32.mrf.mxu0
  %823 = vmatprep.mubr.bf16.mxu0 0
  %824 = vmatmul.mubr.bf16.gmra.mxu0 %v480
  %v825 = vpop.f32.mrf.mxu0
  %v826 = vadd.f32 %v118, %v825
  %v827 = vpop.f32.mrf.mxu0
  %v828 = vpop.f32.mrf.mxu0
  %v829 = vadd.f32 %v118, %v828
  %v830 = vpop.f32.mrf.mxu0
  %831 = vmatprep.mubr.bf16.mxu0 0
  %832 = vmatmul.mubr.bf16.gmra.mxu0 %v483
  %v833 = vpop.f32.mrf.mxu0
  %v834 = vadd.f32 %v118, %v833
  %v835 = vpop.f32.mrf.mxu0
  %v836 = vpop.f32.mrf.mxu0
  %v837 = vadd.f32 %v118, %v836
  %v838 = vpop.f32.mrf.mxu0
  %839 = vmatprep.mubr.bf16.mxu0 0
  %840 = vmatmul.mubr.bf16.gmra.mxu0 %v486
  %v841 = vpop.f32.mrf.mxu0
  %v842 = vadd.f32 %v118, %v841
  %v843 = vpop.f32.mrf.mxu0
  %v844 = vpop.f32.mrf.mxu0
  %v845 = vadd.f32 %v118, %v844
  %v846 = vpop.f32.mrf.mxu0
  %847 = vmatprep.mubr.bf16.mxu0 0
  %848 = vmatmul.mubr.bf16.gmra.mxu0 %v489
  %v849 = vpop.f32.mrf.mxu0
  %v850 = vadd.f32 %v118, %v849
  %v851 = vpop.f32.mrf.mxu0
  %v852 = vpop.f32.mrf.mxu0
  %v853 = vadd.f32 %v118, %v852
  %v854 = vpop.f32.mrf.mxu0
  %855 = vmatprep.mubr.bf16.mxu0 0
  %856 = vmatmul.mubr.bf16.gmra.mxu0 %v492
  %v857 = vpop.f32.mrf.mxu0
  %v858 = vadd.f32 %v118, %v857
  %v859 = vpop.f32.mrf.mxu0
  %v860 = vpop.f32.mrf.mxu0
  %v861 = vadd.f32 %v118, %v860
  %v862 = vpop.f32.mrf.mxu0
  %863 = vmatprep.mubr.bf16.mxu0 0
  %864 = vmatmul.mubr.bf16.gmra.mxu0 %v495
  %v865 = vpop.f32.mrf.mxu0
  %v866 = vadd.f32 %v118, %v865
  %v867 = vpop.f32.mrf.mxu0
  %v868 = vpop.f32.mrf.mxu0
  %v869 = vadd.f32 %v118, %v868
  %v870 = vpop.f32.mrf.mxu0
  %871 = vmatprep.mubr.bf16.mxu0 0
  %872 = vmatmul.mubr.bf16.gmra.mxu0 %v498
  %v873 = vpop.f32.mrf.mxu0
  %v874 = vadd.f32 %v118, %v873
  %v875 = vpop.f32.mrf.mxu0
  %v876 = vpop.f32.mrf.mxu0
  %v877 = vadd.f32 %v118, %v876
  %v878 = vpop.f32.mrf.mxu0
  %879 = vmatprep.mubr.bf16.mxu0 0
  %880 = vmatmul.mubr.bf16.gmra.mxu0 %v501
  %v881 = vpop.f32.mrf.mxu0
  %v882 = vadd.f32 %v118, %v881
  %v883 = vpop.f32.mrf.mxu0
  %v884 = vpop.f32.mrf.mxu0
  %v885 = vadd.f32 %v118, %v884
  %v886 = vpop.f32.mrf.mxu0
  %887 = vdwg.mxu0
  %v888 = vmax.f32 %v538, 0.0
  %v889 = vmax.f32 %v541, 0.0
  %v890 = vmax.f32 %v546, 0.0
  %v891 = vmax.f32 %v549, 0.0
  %v892 = vmax.f32 %v554, 0.0
  %v893 = vmax.f32 %v557, 0.0
  %v894 = vmax.f32 %v562, 0.0
  %v895 = vmax.f32 %v565, 0.0
  %v896 = vmax.f32 %v570, 0.0
  %v897 = vmax.f32 %v573, 0.0
  %v898 = vmax.f32 %v578, 0.0
  %v899 = vmax.f32 %v581, 0.0
  %v900 = vmax.f32 %v586, 0.0
  %v901 = vmax.f32 %v589, 0.0
  %v902 = vmax.f32 %v594, 0.0
  %v903 = vmax.f32 %v597, 0.0
  %v904 = vmax.f32 %v602, 0.0
  %v905 = vmax.f32 %v605, 0.0
  %v906 = vmax.f32 %v610, 0.0
  %v907 = vmax.f32 %v613, 0.0
  %v908 = vmax.f32 %v618, 0.0
  %v909 = vmax.f32 %v621, 0.0
  %v910 = vmax.f32 %v626, 0.0
  %v911 = vmax.f32 %v629, 0.0
  %v912 = vmax.f32 %v634, 0.0
  %v913 = vmax.f32 %v637, 0.0
  %v914 = vmax.f32 %v642, 0.0
  %v915 = vmax.f32 %v645, 0.0
  %v916 = vmax.f32 %v650, 0.0
  %v917 = vmax.f32 %v653, 0.0
  %v918 = vmax.f32 %v658, 0.0
  %v919 = vmax.f32 %v661, 0.0
  %v920 = vmax.f32 %v666, 0.0
  %v921 = vmax.f32 %v669, 0.0
  %v922 = vmax.f32 %v674, 0.0
  %v923 = vmax.f32 %v677, 0.0
  %v924 = vmax.f32 %v682, 0.0
  %v925 = vmax.f32 %v685, 0.0
  %v926 = vmax.f32 %v690, 0.0
  %v927 = vmax.f32 %v693, 0.0
  %v928 = vmax.f32 %v698, 0.0
  %v929 = vmax.f32 %v701, 0.0
  %v930 = vmax.f32 %v706, 0.0
  %v931 = vmax.f32 %v709, 0.0
  %v932 = vmax.f32 %v714, 0.0
  %v933 = vmax.f32 %v717, 0.0
  %v934 = vmax.f32 %v722, 0.0
  %v935 = vmax.f32 %v725, 0.0
  %v936 = vmax.f32 %v730, 0.0
  %v937 = vmax.f32 %v733, 0.0
  %v938 = vmax.f32 %v738, 0.0
  %v939 = vmax.f32 %v741, 0.0
  %v940 = vmax.f32 %v746, 0.0
  %v941 = vmax.f32 %v749, 0.0
  %v942 = vmax.f32 %v754, 0.0
  %v943 = vmax.f32 %v757, 0.0
  %v944 = vmax.f32 %v762, 0.0
  %v945 = vmax.f32 %v765, 0.0
  %v946 = vmax.f32 %v770, 0.0
  %v947 = vmax.f32 %v773, 0.0
  %v948 = vmax.f32 %v778, 0.0
  %v949 = vmax.f32 %v781, 0.0
  %v950 = vmax.f32 %v786, 0.0
  %v951 = vmax.f32 %v789, 0.0
  %v952 = vmax.f32 %v794, 0.0
  %v953 = vmax.f32 %v797, 0.0
  %v954 = vmax.f32 %v802, 0.0
  %v955 = vmax.f32 %v805, 0.0
  %v956 = vmax.f32 %v810, 0.0
  %v957 = vmax.f32 %v813, 0.0
  %v958 = vmax.f32 %v818, 0.0
  %v959 = vmax.f32 %v821, 0.0
  %v960 = vmax.f32 %v826, 0.0
  %v961 = vmax.f32 %v829, 0.0
  %v962 = vmax.f32 %v834, 0.0
  %v963 = vmax.f32 %v837, 0.0
  %v964 = vmax.f32 %v842, 0.0
  %v965 = vmax.f32 %v845, 0.0
  %v966 = vmax.f32 %v850, 0.0
  %v967 = vmax.f32 %v853, 0.0
  %v968 = vmax.f32 %v858, 0.0
  %v969 = vmax.f32 %v861, 0.0
  %v970 = vmax.f32 %v866, 0.0
  %v971 = vmax.f32 %v869, 0.0
  %v972 = vmax.f32 %v874, 0.0
  %v973 = vmax.f32 %v877, 0.0
  %v974 = vmax.f32 %v882, 0.0
  %v975 = vmax.f32 %v885, 0.0
  %vm976 = vcmask 261120
  %977 = vst.msk [vmem:[%s3] sm:$0xff] %vm976, %v888
  %978 = vst.msk [vmem:[%s3 + $0x8] sm:$0xff] %vm976, %v889
  %979 = vst.msk [vmem:[%s3 + $0x10] sm:$0xff] %vm976, %v890
  %980 = vst.msk [vmem:[%s3 + $0x18] sm:$0xff] %vm976, %v891
  %981 = vst.msk [vmem:[%s3 + $0x20] sm:$0xff] %vm976, %v892
  %982 = vst.msk [vmem:[%s3 + $0x28] sm:$0xff] %vm976, %v893
  %983 = vst.msk [vmem:[%s3 + $0x30] sm:$0xff] %vm976, %v894
  %984 = vst.msk [vmem:[%s3 + $0x38] sm:$0xff] %vm976, %v895
  %985 = vst.msk [vmem:[%s3 + $0x40] sm:$0xff] %vm976, %v896
  %986 = vst.msk [vmem:[%s3 + $0x48] sm:$0xff] %vm976, %v897
  %987 = vst.msk [vmem:[%s3 + $0x50] sm:$0xff] %vm976, %v898
  %988 = vst.msk [vmem:[%s3 + $0x58] sm:$0xff] %vm976, %v899
  %989 = vst.msk [vmem:[%s3 + $0x60] sm:$0xff] %vm976, %v900
  %990 = vst.msk [vmem:[%s3 + $0x68] sm:$0xff] %vm976, %v901
  %991 = vst.msk [vmem:[%s3 + $0x70] sm:$0xff] %vm976, %v902
  %992 = vst.msk [vmem:[%s3 + $0x78] sm:$0xff] %vm976, %v903
  %993 = vst.msk [vmem:[%s3 + $0x80] sm:$0xff] %vm976, %v904
  %994 = vst.msk [vmem:[%s3 + $0x88] sm:$0xff] %vm976, %v905
  %995 = vst.msk [vmem:[%s3 + $0x90] sm:$0xff] %vm976, %v906
  %996 = vst.msk [vmem:[%s3 + $0x98] sm:$0xff] %vm976, %v907
  %997 = vst.msk [vmem:[%s3 + $0xa0] sm:$0xff] %vm976, %v908
  %998 = vst.msk [vmem:[%s3 + $0xa8] sm:$0xff] %vm976, %v909
  %999 = vst.msk [vmem:[%s3 + $0xb0] sm:$0xff] %vm976, %v910
  %1000 = vst.msk [vmem:[%s3 + $0xb8] sm:$0xff] %vm976, %v911
  %1001 = vst.msk [vmem:[%s3 + $0xc0] sm:$0xff] %vm976, %v912
  %1002 = vst.msk [vmem:[%s3 + $0xc8] sm:$0xff] %vm976, %v913
  %1003 = vst.msk [vmem:[%s3 + $0xd0] sm:$0xff] %vm976, %v914
  %1004 = vst.msk [vmem:[%s3 + $0xd8] sm:$0xff] %vm976, %v915
  %1005 = vst.msk [vmem:[%s3 + $0xe0] sm:$0xff] %vm976, %v916
  %1006 = vst.msk [vmem:[%s3 + $0xe8] sm:$0xff] %vm976, %v917
  %1007 = vst.msk [vmem:[%s3 + $0xf0] sm:$0xff] %vm976, %v918
  %1008 = vst.msk [vmem:[%s3 + $0xf8] sm:$0xff] %vm976, %v919
  %1009 = vst.msk [vmem:[%s3 + $0x100] sm:$0xff] %vm976, %v920
  %1010 = vst.msk [vmem:[%s3 + $0x108] sm:$0xff] %vm976, %v921
  %1011 = vst.msk [vmem:[%s3 + $0x110] sm:$0xff] %vm976, %v922
  %1012 = vst.msk [vmem:[%s3 + $0x118] sm:$0xff] %vm976, %v923
  %1013 = vst.msk [vmem:[%s3 + $0x120] sm:$0xff] %vm976, %v924
  %1014 = vst.msk [vmem:[%s3 + $0x128] sm:$0xff] %vm976, %v925
  %1015 = vst.msk [vmem:[%s3 + $0x130] sm:$0xff] %vm976, %v926
  %1016 = vst.msk [vmem:[%s3 + $0x138] sm:$0xff] %vm976, %v927
  %1017 = vst.msk [vmem:[%s3 + $0x140] sm:$0xff] %vm976, %v928
  %1018 = vst.msk [vmem:[%s3 + $0x148] sm:$0xff] %vm976, %v929
  %1019 = vst.msk [vmem:[%s3 + $0x150] sm:$0xff] %vm976, %v930
  %1020 = vst.msk [vmem:[%s3 + $0x158] sm:$0xff] %vm976, %v931
  %1021 = vst.msk [vmem:[%s3 + $0x160] sm:$0xff] %vm976, %v932
  %1022 = vst.msk [vmem:[%s3 + $0x168] sm:$0xff] %vm976, %v933
  %1023 = vst.msk [vmem:[%s3 + $0x170] sm:$0xff] %vm976, %v934
  %1024 = vst.msk [vmem:[%s3 + $0x178] sm:$0xff] %vm976, %v935
  %1025 = vst.msk [vmem:[%s3 + $0x180] sm:$0xff] %vm976, %v936
  %1026 = vst.msk [vmem:[%s3 + $0x188] sm:$0xff] %vm976, %v937
  %1027 = vst.msk [vmem:[%s3 + $0x190] sm:$0xff] %vm976, %v938
  %1028 = vst.msk [vmem:[%s3 + $0x198] sm:$0xff] %vm976, %v939
  %1029 = vst.msk [vmem:[%s3 + $0x1a0] sm:$0xff] %vm976, %v940
  %1030 = vst.msk [vmem:[%s3 + $0x1a8] sm:$0xff] %vm976, %v941
  %1031 = vst.msk [vmem:[%s3 + $0x1b0] sm:$0xff] %vm976, %v942
  %1032 = vst.msk [vmem:[%s3 + $0x1b8] sm:$0xff] %vm976, %v943
  %1033 = vst.msk [vmem:[%s3 + $0x1c0] sm:$0xff] %vm976, %v944
  %1034 = vst.msk [vmem:[%s3 + $0x1c8] sm:$0xff] %vm976, %v945
  %1035 = vst.msk [vmem:[%s3 + $0x1d0] sm:$0xff] %vm976, %v946
  %1036 = vst.msk [vmem:[%s3 + $0x1d8] sm:$0xff] %vm976, %v947
  %1037 = vst.msk [vmem:[%s3 + $0x1e0] sm:$0xff] %vm976, %v948
  %1038 = vst.msk [vmem:[%s3 + $0x1e8] sm:$0xff] %vm976, %v949
  %1039 = vst.msk [vmem:[%s3 + $0x1f0] sm:$0xff] %vm976, %v950
  %1040 = vst.msk [vmem:[%s3 + $0x1f8] sm:$0xff] %vm976, %v951
  %1041 = vst.msk [vmem:[%s3 + $0x200] sm:$0xff] %vm976, %v952
  %1042 = vst.msk [vmem:[%s3 + $0x208] sm:$0xff] %vm976, %v953
  %1043 = vst.msk [vmem:[%s3 + $0x210] sm:$0xff] %vm976, %v954
  %1044 = vst.msk [vmem:[%s3 + $0x218] sm:$0xff] %vm976, %v955
  %1045 = vst.msk [vmem:[%s3 + $0x220] sm:$0xff] %vm976, %v956
  %1046 = vst.msk [vmem:[%s3 + $0x228] sm:$0xff] %vm976, %v957
  %1047 = vst.msk [vmem:[%s3 + $0x230] sm:$0xff] %vm976, %v958
  %1048 = vst.msk [vmem:[%s3 + $0x238] sm:$0xff] %vm976, %v959
  %1049 = vst.msk [vmem:[%s3 + $0x240] sm:$0xff] %vm976, %v960
  %1050 = vst.msk [vmem:[%s3 + $0x248] sm:$0xff] %vm976, %v961
  %1051 = vst.msk [vmem:[%s3 + $0x250] sm:$0xff] %vm976, %v962
  %1052 = vst.msk [vmem:[%s3 + $0x258] sm:$0xff] %vm976, %v963
  %1053 = vst.msk [vmem:[%s3 + $0x260] sm:$0xff] %vm976, %v964
  %1054 = vst.msk [vmem:[%s3 + $0x268] sm:$0xff] %vm976, %v965
  %1055 = vst.msk [vmem:[%s3 + $0x270] sm:$0xff] %vm976, %v966
  %1056 = vst.msk [vmem:[%s3 + $0x278] sm:$0xff] %vm976, %v967
  %1057 = vst.msk [vmem:[%s3 + $0x280] sm:$0xff] %vm976, %v968
  %1058 = vst.msk [vmem:[%s3 + $0x288] sm:$0xff] %vm976, %v969
  %1059 = vst.msk [vmem:[%s3 + $0x290] sm:$0xff] %vm976, %v970
  %1060 = vst.msk [vmem:[%s3 + $0x298] sm:$0xff] %vm976, %v971
  %1061 = vst.msk [vmem:[%s3 + $0x2a0] sm:$0xff] %vm976, %v972
  %1062 = vst.msk [vmem:[%s3 + $0x2a8] sm:$0xff] %vm976, %v973
  %1063 = vst.msk [vmem:[%s3 + $0x2b0] sm:$0xff] %vm976, %v974
  %1064 = vst.msk [vmem:[%s3 + $0x2b8] sm:$0xff] %vm976, %v975
  // Predicated region
  $region14: #{forward.6} parent=0 // pred_check
    _
  $region15: #{forward.6} parent=0 // pred_check_branch
    %1066 = sbr.rel (0) target = $region17
  $region16: #{forward.6} parent=0 // pred_region
    _
  $region17: #{forward.6} parent=0 // pred_fallthru
    _
  // Predicated region
  $region18: #{forward.6} parent=0 // pred_check
    _
  $region19: #{forward.6} parent=0 // pred_check_branch
    %1068 = sbr.rel (0) target = $region21
  $region20: #{forward.6} parent=0 // pred_region
    _
  $region21: #{forward.6} parent=0 // pred_fallthru
    _

// kernel: forward.7
$region0: #{forward.7}
  #allocation0 [shape = 'u32[]', space=smem, size = 0x4, offset = 0x4, fixed_abs, tag = 'smem constant byte address 0x4 - core index']
  #allocation1 [shape = 'u32[144,128]{1,0:T(1,128)}', space=vmem, size = 0x12000, scoped, tag = 'internal scratch']
  %s0 = inlined_call_operand.vmem [shape: bf16[192,96], index: 0, kind: input, shape index: {}]
  %s1 = inlined_call_operand.vmem [shape: bf16[96,32], index: 1, kind: input, shape index: {}]
  %s2 = inlined_call_operand.vmem [shape: f32[1,32], index: 2, kind: input, shape index: {}]
  %s3 = inlined_call_operand.vmem [shape: bf16[64,192], index: 3, kind: input, shape index: {}]
  %s4 = inlined_call_operand.vmem [shape: f32[64,32], index: 4, kind: output, shape index: {}]
  %s5 = sld [smem:[#allocation0]]
  $region26: #{forward.7} parent=0
    _
  %s7 = ssub.s32 1, %s5
  %s8 = scalar_select 0, %s7, %s5
  // Predicated region
  $region2: #{forward.7} parent=0 // pred_check
    _
  $region3: #{forward.7} parent=0 // pred_check_branch
    %10 = sbr.rel (0) target = $region5
  $region4: #{forward.7} parent=0 // pred_region
    _
  $region5: #{forward.7} parent=0 // pred_fallthru
    _
  // Predicated region
  $region6: #{forward.7} parent=0 // pred_check
    _
  $region7: #{forward.7} parent=0 // pred_check_branch
    %12 = sbr.rel (0) target = $region9
  $region8: #{forward.7} parent=0 // pred_region
    _
  $region9: #{forward.7} parent=0 // pred_fallthru
    _
  // Predicated region
  $region10: #{forward.7} parent=0 // pred_check
    _
  $region11: #{forward.7} parent=0 // pred_check_branch
    %14 = sbr.rel (0) target = $region13
  $region12: #{forward.7} parent=0 // pred_region
    _
  $region13: #{forward.7} parent=0 // pred_fallthru
    _
  // Predicated region
  $region14: #{forward.7} parent=0 // pred_check
    _
  $region15: #{forward.7} parent=0 // pred_check_branch
    %16 = sbr.rel (0) target = $region17
  $region16: #{forward.7} parent=0 // pred_region
    _
  $region17: #{forward.7} parent=0 // pred_fallthru
    _
  %v18 = vld [vmem:[%s0] sm:$0xf]
  %v19 = vld [vmem:[%s0 + $0x4] sm:$0xf]
  %v20 = vld [vmem:[%s0 + $0x8] sm:$0xf]
  %v21 = vld [vmem:[%s0 + $0xc] sm:$0xf]
  %v22 = vld [vmem:[%s0 + $0x10] sm:$0xf]
  %v23 = vld [vmem:[%s0 + $0x14] sm:$0xf]
  %v24 = vld [vmem:[%s0 + $0x18] sm:$0xf]
  %v25 = vld [vmem:[%s0 + $0x1c] sm:$0xf]
  %v26 = vld [vmem:[%s0 + $0x20] sm:$0xf]
  %v27 = vld [vmem:[%s0 + $0x24] sm:$0xf]
  %v28 = vld [vmem:[%s0 + $0x28] sm:$0xf]
  %v29 = vld [vmem:[%s0 + $0x2c] sm:$0xf]
  %v30 = vld [vmem:[%s0 + $0x30] sm:$0xf]
  %v31 = vld [vmem:[%s0 + $0x34] sm:$0xf]
  %v32 = vld [vmem:[%s0 + $0x38] sm:$0xf]
  %v33 = vld [vmem:[%s0 + $0x3c] sm:$0xf]
  %v34 = vld [vmem:[%s0 + $0x40] sm:$0xf]
  %v35 = vld [vmem:[%s0 + $0x44] sm:$0xf]
  %v36 = vld [vmem:[%s0 + $0x48] sm:$0xf]
  %v37 = vld [vmem:[%s0 + $0x4c] sm:$0xf]
  %v38 = vld [vmem:[%s0 + $0x50] sm:$0xf]
  %v39 = vld [vmem:[%s0 + $0x54] sm:$0xf]
  %v40 = vld [vmem:[%s0 + $0x58] sm:$0xf]
  %v41 = vld [vmem:[%s0 + $0x5c] sm:$0xf]
  %v42 = vld [vmem:[%s1] sm:$0xf]
  %v43 = vld [vmem:[%s1 + $0x4] sm:$0xf]
  %v44 = vld [vmem:[%s1 + $0x8] sm:$0xf]
  %v45 = vld [vmem:[%s1 + $0xc] sm:$0xf]
  %v46 = vld [vmem:[%s1 + $0x10] sm:$0xf]
  %v47 = vld [vmem:[%s1 + $0x14] sm:$0xf]
  %v48 = vld [vmem:[%s1 + $0x18] sm:$0xf]
  %v49 = vld [vmem:[%s1 + $0x1c] sm:$0xf]
  %v50 = vld [vmem:[%s1 + $0x20] sm:$0xf]
  %v51 = vld [vmem:[%s1 + $0x24] sm:$0xf]
  %v52 = vld [vmem:[%s1 + $0x28] sm:$0xf]
  %v53 = vld [vmem:[%s1 + $0x2c] sm:$0xf]
  %v54 = vld [vmem:[%s2] sm:$0x1]
  %v56 = vlaneseq
  %v57 = vshrl.u32 %v56, 7
  %v58 = vsub.s32 0, %v57
  %v59 = vrot.slane %v54, %v58
  %v85 = vunpack.c.l.b16 %v18
  %v86 = vunpack.c.l.b16 %v19
  %v87 = vunpack.c.l.b16 %v20
  %v88 = vunpack.c.l.b16 %v21
  %v89 = vunpack.c.l.b16 %v22
  %v90 = vunpack.c.l.b16 %v23
  %v91 = vunpack.c.l.b16 %v24
  %v92 = vunpack.c.l.b16 %v25
  %v93 = vunpack.c.l.b16 %v26
  %v94 = vunpack.c.l.b16 %v27
  %v95 = vunpack.c.l.b16 %v28
  %v96 = vunpack.c.l.b16 %v29
  %v97 = vunpack.c.l.b16 %v30
  %v98 = vunpack.c.l.b16 %v31
  %v99 = vunpack.c.l.b16 %v32
  %v100 = vunpack.c.l.b16 %v33
  %v101 = vunpack.c.l.b16 %v34
  %v102 = vunpack.c.l.b16 %v35
  %v103 = vunpack.c.l.b16 %v36
  %v104 = vunpack.c.l.b16 %v37
  %v105 = vunpack.c.l.b16 %v38
  %v106 = vunpack.c.l.b16 %v39
  %v107 = vunpack.c.l.b16 %v40
  %v108 = vunpack.c.l.b16 %v41
  %v109 = vpack.c.b16 %v86, %v85
  %v110 = vpack.c.b16 %v88, %v87
  %v111 = vpack.c.b16 %v90, %v89
  %v112 = vpack.c.b16 %v92, %v91
  %v113 = vpack.c.b16 %v94, %v93
  %v114 = vpack.c.b16 %v96, %v95
  %v115 = vpack.c.b16 %v98, %v97
  %v116 = vpack.c.b16 %v100, %v99
  %v117 = vpack.c.b16 %v102, %v101
  %v118 = vpack.c.b16 %v104, %v103
  %v119 = vpack.c.b16 %v106, %v105
  %v120 = vpack.c.b16 %v108, %v107
  %v133 = vunpack.c.l.b16 %v42
  %v134 = vunpack.c.l.b16 %v43
  %v135 = vunpack.c.l.b16 %v44
  %v136 = vunpack.c.l.b16 %v45
  %v137 = vunpack.c.l.b16 %v46
  %v138 = vunpack.c.l.b16 %v47
  %v139 = vunpack.c.l.b16 %v48
  %v140 = vunpack.c.l.b16 %v49
  %v141 = vunpack.c.l.b16 %v50
  %v142 = vunpack.c.l.b16 %v51
  %v143 = vunpack.c.l.b16 %v52
  %v144 = vunpack.c.l.b16 %v53
  %v145 = vpack.c.b16 %v134, %v133
  %v146 = vpack.c.b16 %v136, %v135
  %v147 = vpack.c.b16 %v138, %v137
  %v148 = vpack.c.b16 %v140, %v139
  %v149 = vpack.c.b16 %v142, %v141
  %v150 = vpack.c.b16 %v144, %v143
  %vm157 = vcmask 785408
  %v159 = vsel %vm157, %v109, 0
  %v162 = vsel %vm157, %v110, 0
  %v165 = vsel %vm157, %v111, 0
  %v168 = vsel %vm157, %v112, 0
  %v171 = vsel %vm157, %v113, 0
  %v174 = vsel %vm157, %v114, 0
  %v177 = vsel %vm157, %v115, 0
  %v180 = vsel %vm157, %v116, 0
  %v183 = vsel %vm157, %v117, 0
  %v186 = vsel %vm157, %v118, 0
  %v189 = vsel %vm157, %v119, 0
  %v192 = vsel %vm157, %v120, 0
  %194 = vmatprep.subr.bf16.mxu0 0
  %195 = vmatpush1.bf16.msra.mxu0 0
  %196 = vmatprep.subr.bf16.mxu0 0
  %197 = vmatpush1.bf16.msra.mxu0 0
  %198 = vmatprep.subr.bf16.mxu0 0
  %199 = vmatpush1.bf16.msra.mxu0 %v150
  %200 = vmatprep.subr.bf16.mxu0 0
  %201 = vmatpush1.bf16.msra.mxu0 %v149
  %202 = vmatprep.subr.bf16.mxu0 0
  %203 = vmatpush1.bf16.msra.mxu0 %v148
  %204 = vmatprep.subr.bf16.mxu0 0
  %205 = vmatpush1.bf16.msra.mxu0 %v147
  %206 = vmatprep.subr.bf16.mxu0 0
  %207 = vmatpush1.bf16.msra.mxu0 %v146
  %208 = vmatprep.subr.bf16.mxu0 0
  %209 = vmatpush1.bf16.msra.mxu0 %v145
  %210 = vmatprep.subr.bf16.mxu0 0
  %211 = vmatpush2.bf16.msra.mxu0 0
  %212 = vmatprep.subr.bf16.mxu0 0
  %213 = vmatpush2.bf16.msra.mxu0 0
  %214 = vmatprep.subr.bf16.mxu0 0
  %215 = vmatpush2.bf16.msra.mxu0 0
  %216 = vmatprep.subr.bf16.mxu0 0
  %217 = vmatpush2.bf16.msra.mxu0 0
  %218 = vmatprep.subr.bf16.mxu0 0
  %219 = vmatpush2.bf16.msra.mxu0 0
  %220 = vmatprep.subr.bf16.mxu0 0
  %221 = vmatpush2.bf16.msra.mxu0 0
  %222 = vmatprep.subr.bf16.mxu0 0
  %223 = vmatpush2.bf16.msra.mxu0 0
  %224 = vmatprep.subr.bf16.mxu0 0
  %225 = vmatpush2.bf16.msra.mxu0 0
  %226 = vmatprep.mubr.bf16.mxu0 0
  %227 = vmatmul.mubr.bf16.gmra.mxu0 %v159
  %v228 = vpop.f32.mrf.mxu0
  %v229 = vadd.f32 %v59, %v228
  %v230 = vpop.f32.mrf.mxu0
  %v231 = vpop.f32.mrf.mxu0
  %v232 = vadd.f32 %v59, %v231
  %v233 = vpop.f32.mrf.mxu0
  %234 = vmatprep.mubr.bf16.mxu0 0
  %235 = vmatmul.mubr.bf16.gmra.mxu0 %v162
  %v236 = vpop.f32.mrf.mxu0
  %v237 = vadd.f32 %v59, %v236
  %v238 = vpop.f32.mrf.mxu0
  %v239 = vpop.f32.mrf.mxu0
  %v240 = vadd.f32 %v59, %v239
  %v241 = vpop.f32.mrf.mxu0
  %242 = vmatprep.mubr.bf16.mxu0 0
  %243 = vmatmul.mubr.bf16.gmra.mxu0 %v165
  %v244 = vpop.f32.mrf.mxu0
  %v245 = vadd.f32 %v59, %v244
  %v246 = vpop.f32.mrf.mxu0
  %v247 = vpop.f32.mrf.mxu0
  %v248 = vadd.f32 %v59, %v247
  %v249 = vpop.f32.mrf.mxu0
  %250 = vmatprep.mubr.bf16.mxu0 0
  %251 = vmatmul.mubr.bf16.gmra.mxu0 %v168
  %v252 = vpop.f32.mrf.mxu0
  %v253 = vadd.f32 %v59, %v252
  %v254 = vpop.f32.mrf.mxu0
  %v255 = vpop.f32.mrf.mxu0
  %v256 = vadd.f32 %v59, %v255
  %v257 = vpop.f32.mrf.mxu0
  %258 = vmatprep.mubr.bf16.mxu0 0
  %259 = vmatmul.mubr.bf16.gmra.mxu0 %v171
  %v260 = vpop.f32.mrf.mxu0
  %v261 = vadd.f32 %v59, %v260
  %v262 = vpop.f32.mrf.mxu0
  %v263 = vpop.f32.mrf.mxu0
  %v264 = vadd.f32 %v59, %v263
  %v265 = vpop.f32.mrf.mxu0
  %266 = vmatprep.mubr.bf16.mxu0 0
  %267 = vmatmul.mubr.bf16.gmra.mxu0 %v174
  %v268 = vpop.f32.mrf.mxu0
  %v269 = vadd.f32 %v59, %v268
  %v270 = vpop.f32.mrf.mxu0
  %v271 = vpop.f32.mrf.mxu0
  %v272 = vadd.f32 %v59, %v271
  %v273 = vpop.f32.mrf.mxu0
  %274 = vmatprep.mubr.bf16.mxu0 0
  %275 = vmatmul.mubr.bf16.gmra.mxu0 %v177
  %v276 = vpop.f32.mrf.mxu0
  %v277 = vadd.f32 %v59, %v276
  %v278 = vpop.f32.mrf.mxu0
  %v279 = vpop.f32.mrf.mxu0
  %v280 = vadd.f32 %v59, %v279
  %v281 = vpop.f32.mrf.mxu0
  %282 = vmatprep.mubr.bf16.mxu0 0
  %283 = vmatmul.mubr.bf16.gmra.mxu0 %v180
  %v284 = vpop.f32.mrf.mxu0
  %v285 = vadd.f32 %v59, %v284
  %v286 = vpop.f32.mrf.mxu0
  %v287 = vpop.f32.mrf.mxu0
  %v288 = vadd.f32 %v59, %v287
  %v289 = vpop.f32.mrf.mxu0
  %290 = vmatprep.mubr.bf16.mxu0 0
  %291 = vmatmul.mubr.bf16.gmra.mxu0 %v183
  %v292 = vpop.f32.mrf.mxu0
  %v293 = vadd.f32 %v59, %v292
  %v294 = vpop.f32.mrf.mxu0
  %v295 = vpop.f32.mrf.mxu0
  %v296 = vadd.f32 %v59, %v295
  %v297 = vpop.f32.mrf.mxu0
  %298 = vmatprep.mubr.bf16.mxu0 0
  %299 = vmatmul.mubr.bf16.gmra.mxu0 %v186
  %v300 = vpop.f32.mrf.mxu0
  %v301 = vadd.f32 %v59, %v300
  %v302 = vpop.f32.mrf.mxu0
  %v303 = vpop.f32.mrf.mxu0
  %v304 = vadd.f32 %v59, %v303
  %v305 = vpop.f32.mrf.mxu0
  %306 = vmatprep.mubr.bf16.mxu0 0
  %307 = vmatmul.mubr.bf16.gmra.mxu0 %v189
  %v308 = vpop.f32.mrf.mxu0
  %v309 = vadd.f32 %v59, %v308
  %v310 = vpop.f32.mrf.mxu0
  %v311 = vpop.f32.mrf.mxu0
  %v312 = vadd.f32 %v59, %v311
  %v313 = vpop.f32.mrf.mxu0
  %314 = vmatprep.mubr.bf16.mxu0 0
  %315 = vmatmul.mubr.bf16.gmra.mxu0 %v192
  %v316 = vpop.f32.mrf.mxu0
  %v317 = vadd.f32 %v59, %v316
  %v318 = vpop.f32.mrf.mxu0
  %v319 = vpop.f32.mrf.mxu0
  %v320 = vadd.f32 %v59, %v319
  %v321 = vpop.f32.mrf.mxu0
  %322 = vdwg.mxu0
  %v323 = vmax.f32 %v229, 0.0
  %v324 = vmax.f32 %v232, 0.0
  %v325 = vmax.f32 %v237, 0.0
  %v326 = vmax.f32 %v240, 0.0
  %v327 = vmax.f32 %v245, 0.0
  %v328 = vmax.f32 %v248, 0.0
  %v329 = vmax.f32 %v253, 0.0
  %v330 = vmax.f32 %v256, 0.0
  %v331 = vmax.f32 %v261, 0.0
  %v332 = vmax.f32 %v264, 0.0
  %v333 = vmax.f32 %v269, 0.0
  %v334 = vmax.f32 %v272, 0.0
  %v335 = vmax.f32 %v277, 0.0
  %v336 = vmax.f32 %v280, 0.0
  %v337 = vmax.f32 %v285, 0.0
  %v338 = vmax.f32 %v288, 0.0
  %v339 = vmax.f32 %v293, 0.0
  %v340 = vmax.f32 %v296, 0.0
  %v341 = vmax.f32 %v301, 0.0
  %v342 = vmax.f32 %v304, 0.0
  %v343 = vmax.f32 %v309, 0.0
  %v344 = vmax.f32 %v312, 0.0
  %v345 = vmax.f32 %v317, 0.0
  %v346 = vmax.f32 %v320, 0.0
  %v347 = vld [vmem:[%s3] sm:$0xff]
  %v348 = vld [vmem:[%s3 + $0x8] sm:$0xff]
  %v349 = vld [vmem:[%s3 + $0x10] sm:$0xff]
  %v350 = vld [vmem:[%s3 + $0x18] sm:$0xff]
  %v351 = vld [vmem:[%s3 + $0x20] sm:$0xff]
  %v352 = vld [vmem:[%s3 + $0x28] sm:$0xff]
  %v353 = vld [vmem:[%s3 + $0x30] sm:$0xff]
  %v354 = vld [vmem:[%s3 + $0x38] sm:$0xff]
  %v355 = vpack.c.bf16 %v324, %v323
  %v356 = vpack.c.bf16 %v326, %v325
  %v357 = vpack.c.bf16 %v328, %v327
  %v358 = vpack.c.bf16 %v330, %v329
  %v359 = vpack.c.bf16 %v332, %v331
  %v360 = vpack.c.bf16 %v334, %v333
  %v361 = vpack.c.bf16 %v336, %v335
  %v362 = vpack.c.bf16 %v338, %v337
  %v363 = vpack.c.bf16 %v340, %v339
  %v364 = vpack.c.bf16 %v342, %v341
  %v365 = vpack.c.bf16 %v344, %v343
  %v366 = vpack.c.bf16 %v346, %v345
  %v375 = vunpack.c.l.b16 %v347
  %v376 = vunpack.c.h.b16 %v347
  %v377 = vunpack.c.l.b16 %v348
  %v378 = vunpack.c.h.b16 %v348
  %v379 = vunpack.c.l.b16 %v349
  %v380 = vunpack.c.h.b16 %v349
  %v381 = vunpack.c.l.b16 %v350
  %v382 = vunpack.c.h.b16 %v350
  %v383 = vunpack.c.l.b16 %v351
  %v384 = vunpack.c.h.b16 %v351
  %v385 = vunpack.c.l.b16 %v352
  %v386 = vunpack.c.h.b16 %v352
  %v387 = vunpack.c.l.b16 %v353
  %v388 = vunpack.c.h.b16 %v353
  %v389 = vunpack.c.l.b16 %v354
  %v390 = vunpack.c.h.b16 %v354
  %v391 = vpack.c.b16 %v377, %v375
  %v392 = vpack.c.b16 %v378, %v376
  %v393 = vpack.c.b16 %v381, %v379
  %v394 = vpack.c.b16 %v382, %v380
  %v395 = vpack.c.b16 %v385, %v383
  %v396 = vpack.c.b16 %v386, %v384
  %v397 = vpack.c.b16 %v389, %v387
  %v398 = vpack.c.b16 %v390, %v388
  %vm403 = vcmask 523264
  %v405 = vsel %vm403, %v392, 0
  %v408 = vsel %vm403, %v394, 0
  %v411 = vsel %vm403, %v396, 0
  %v414 = vsel %vm403, %v398, 0
  %416 = vmatprep.subr.bf16.mxu0 0
  %417 = vmatpush1.bf16.msra.mxu0 %v362
  %418 = vmatprep.subr.bf16.mxu0 0
  %419 = vmatpush1.bf16.msra.mxu0 %v361
  %420 = vmatprep.subr.bf16.mxu0 0
  %421 = vmatpush1.bf16.msra.mxu0 %v360
  %422 = vmatprep.subr.bf16.mxu0 0
  %423 = vmatpush1.bf16.msra.mxu0 %v359
  %424 = vmatprep.subr.bf16.mxu0 0
  %425 = vmatpush1.bf16.msra.mxu0 %v358
  %426 = vmatprep.subr.bf16.mxu0 0
  %427 = vmatpush1.bf16.msra.mxu0 %v357
  %428 = vmatprep.subr.bf16.mxu0 0
  %429 = vmatpush1.bf16.msra.mxu0 %v356
  %430 = vmatprep.subr.bf16.mxu0 0
  %431 = vmatpush1.bf16.msra.mxu0 %v355
  %432 = vmatprep.subr.bf16.mxu0 0
  %433 = vmatpush2.bf16.msra.mxu0 0
  %434 = vmatprep.subr.bf16.mxu0 0
  %435 = vmatpush2.bf16.msra.mxu0 0
  %436 = vmatprep.subr.bf16.mxu0 0
  %437 = vmatpush2.bf16.msra.mxu0 0
  %438 = vmatprep.subr.bf16.mxu0 0
  %439 = vmatpush2.bf16.msra.mxu0 0
  %440 = vmatprep.subr.bf16.mxu0 0
  %441 = vmatpush2.bf16.msra.mxu0 %v366
  %442 = vmatprep.subr.bf16.mxu0 0
  %443 = vmatpush2.bf16.msra.mxu0 %v365
  %444 = vmatprep.subr.bf16.mxu0 0
  %445 = vmatpush2.bf16.msra.mxu0 %v364
  %446 = vmatprep.subr.bf16.mxu0 0
  %447 = vmatpush2.bf16.msra.mxu0 %v363
  %448 = vmatprep.mubr.bf16.mxu0 %v405
  %449 = vmatmul.mubr.bf16.gmra.mxu0 %v391
  %v450 = vpop.f32.mrf.mxu0
  %v451 = vadd.f32 0.0, %v450
  %v452 = vpop.f32.mrf.mxu0
  %v453 = vpop.f32.mrf.mxu0
  %v454 = vadd.f32 0.0, %v453
  %v455 = vpop.f32.mrf.mxu0
  %456 = vmatprep.mubr.bf16.mxu0 %v408
  %457 = vmatmul.mubr.bf16.gmra.mxu0 %v393
  %v458 = vpop.f32.mrf.mxu0
  %v459 = vadd.f32 0.0, %v458
  %v460 = vpop.f32.mrf.mxu0
  %v461 = vpop.f32.mrf.mxu0
  %v462 = vadd.f32 0.0, %v461
  %v463 = vpop.f32.mrf.mxu0
  %464 = vmatprep.mubr.bf16.mxu0 %v411
  %465 = vmatmul.mubr.bf16.gmra.mxu0 %v395
  %v466 = vpop.f32.mrf.mxu0
  %v467 = vadd.f32 0.0, %v466
  %v468 = vpop.f32.mrf.mxu0
  %v469 = vpop.f32.mrf.mxu0
  %v470 = vadd.f32 0.0, %v469
  %v471 = vpop.f32.mrf.mxu0
  %472 = vmatprep.mubr.bf16.mxu0 %v414
  %473 = vmatmul.mubr.bf16.gmra.mxu0 %v397
  %v474 = vpop.f32.mrf.mxu0
  %v475 = vadd.f32 0.0, %v474
  %v476 = vpop.f32.mrf.mxu0
  %v477 = vpop.f32.mrf.mxu0
  %v478 = vadd.f32 0.0, %v477
  %v479 = vpop.f32.mrf.mxu0
  %480 = vdwg.mxu0
  %v481 = vmul.f32 %v451, 0.33333334
  %v482 = vmul.f32 %v454, 0.33333334
  %v483 = vmul.f32 %v459, 0.33333334
  %v484 = vmul.f32 %v462, 0.33333334
  %v485 = vmul.f32 %v467, 0.33333334
  %v486 = vmul.f32 %v470, 0.33333334
  %v487 = vmul.f32 %v475, 0.33333334
  %v488 = vmul.f32 %v478, 0.33333334
  %vm489 = vcmask 261120
  %490 = vst.msk [vmem:[%s4] sm:$0xff] %vm489, %v481
  %491 = vst.msk [vmem:[%s4 + $0x8] sm:$0xff] %vm489, %v482
  %492 = vst.msk [vmem:[%s4 + $0x10] sm:$0xff] %vm489, %v483
  %493 = vst.msk [vmem:[%s4 + $0x18] sm:$0xff] %vm489, %v484
  %494 = vst.msk [vmem:[%s4 + $0x20] sm:$0xff] %vm489, %v485
  %495 = vst.msk [vmem:[%s4 + $0x28] sm:$0xff] %vm489, %v486
  %496 = vst.msk [vmem:[%s4 + $0x30] sm:$0xff] %vm489, %v487
  %497 = vst.msk [vmem:[%s4 + $0x38] sm:$0xff] %vm489, %v488
  // Predicated region
  $region18: #{forward.7} parent=0 // pred_check
    _
  $region19: #{forward.7} parent=0 // pred_check_branch
    %499 = sbr.rel (0) target = $region21
  $region20: #{forward.7} parent=0 // pred_region
    _
  $region21: #{forward.7} parent=0 // pred_fallthru
    _
  // Predicated region
  $region22: #{forward.7} parent=0 // pred_check
    _
  $region23: #{forward.7} parent=0 // pred_check_branch
    %501 = sbr.rel (0) target = $region25
  $region24: #{forward.7} parent=0 // pred_region
    _
  $region25: #{forward.7} parent=0 // pred_fallthru
    _

// kernel: forward.8
$region0: #{forward.8}
  #allocation0 [shape = 'u32[]', space=smem, size = 0x4, offset = 0x4, fixed_abs, tag = 'smem constant byte address 0x4 - core index']
  #allocation1 [shape = 'u32[144,128]{1,0:T(1,128)}', space=vmem, size = 0x12000, scoped, tag = 'internal scratch']
  %s0 = inlined_call_operand.vmem [shape: bf16[64,32], index: 0, kind: input, shape index: {}]
  %s1 = inlined_call_operand.vmem [shape: bf16[32,32], index: 1, kind: input, shape index: {}]
  %s2 = inlined_call_operand.vmem [shape: bf16[8,32], index: 2, kind: input, shape index: {}]
  %s3 = inlined_call_operand.vmem [shape: bf16[32,32], index: 3, kind: input, shape index: {}]
  %s4 = inlined_call_operand.vmem [shape: f32[1,32], index: 4, kind: input, shape index: {}]
  %s5 = inlined_call_operand.vmem [shape: bf16[32,32], index: 5, kind: input, shape index: {}]
  %s6 = inlined_call_operand.vmem [shape: f32[1,32], index: 6, kind: input, shape index: {}]
  %s7 = inlined_call_operand.vmem [shape: f32[1,32], index: 7, kind: input, shape index: {}]
  %s8 = inlined_call_operand.vmem [shape: f32[1,32], index: 8, kind: input, shape index: {}]
  %s9 = inlined_call_operand.vmem [shape: f32[16,32], index: 9, kind: output, shape index: {}]
  %s10 = sld [smem:[#allocation0]]
  $region69: #{forward.8} parent=0
    _
  %s12 = ssub.s32 1, %s10
  %s13 = scalar_select 0, %s12, %s10
  loop: start=0, step=1, limit=4
  $region2: #{forward.8} parent=0 // loop_pre_header
    _
  $region3: #{forward.8} parent=0 // loop_header
    %s15 = sphi 0, %s19
    %p16 = scmp.ge.s32.totalorder %s15, 4
    %s25 = sphi 0, %s27
    %s28 = sphi 0, %s25
    %s29 = sphi 0, %s28
    %s45 = sphi 0, %s29
    %s49 = sphi 0, %s49
    %s51 = sphi 0, %s49
    %s52 = sphi 0, %s51
    %s66 = sphi 0, %s52
    %s70 = sphi 0, %s70
    %s72 = sphi 0, %s70
    %s73 = sphi 0, %s72
    %s87 = sphi 0, %s73
    %s91 = sphi 0, %s91
    %s93 = sphi 0, %s91
    %s94 = sphi 0, %s93
    %s108 = sphi 0, %s94
    %s112 = sphi 0, %s112
    %s114 = sphi 0, %s112
    %s115 = sphi 0, %s114
    %s129 = sphi 0, %s115
    %s133 = sphi 0, %s133
    %s135 = sphi 0, %s133
    %s136 = sphi 0, %s135
    %s150 = sphi 0, %s136
    %s154 = sphi 0, %s154
    %s156 = sphi 0, %s154
    %s157 = sphi 0, %s156
    %s171 = sphi 0, %s157
    %s175 = sphi 0, %s175
    %s177 = sphi 0, %s175
    %s178 = sphi 0, %s177
    %s192 = sphi 0, %s178
    %s196 = sphi 0, %s196
    %s198 = sphi 0, %s196
    %s199 = sphi 0, %s198
    %s213 = sphi 0, %s199
    %s219 = sphi 0, %s221
    %s222 = sphi 0, %s219
    %s223 = sphi 0, %s222
    %s239 = sphi 0, %s223
  $region4: #{forward.8} parent=0 // loop_header_branch
    %18 = sbr.rel (%p16) target = $region8
  $region5: #{forward.8} parent=0 // loop_body
    %s20 = ssub.s32 %s15, 1
    %s21 = ssub.s32 %s15, 2
    %s22 = sadd.s32 %s15, 1
    %s23 = ssub.s32 %s15, %s22
    %p24 = scmp.eq.s32.totalorder %s23, 0
    %s26 = sadd.s32 %s25, 1
    %s27 = scalar_select %p24, %s25, %s26
    %p30 = pneg %p24
    %p31 = scmp.eq.s32.totalorder %s15, 1
    %p32 = por %p30, %p31
    %p33 = scmp.ne.s32.totalorder %s25, %s28
    %p34 = scmp.eq.s32.totalorder %s15, 0
    %p35 = por %p33, %p34
    %p36 = scmp.ne.s32.totalorder %s25, %s28
    %p37 = scmp.eq.s32.totalorder %s20, 1
    %p38 = por %p36, %p37
    %p39 = scmp.ne.s32.totalorder %s28, %s29
    %p40 = scmp.eq.s32.totalorder %s20, 0
    %p41 = por %p39, %p40
    %p42 = scmp.ne.s32.totalorder %s28, %s29
    %p43 = scmp.eq.s32.totalorder %s21, 1
    %p44 = por %p42, %p43
    %p46 = scmp.ne.s32.totalorder %s29, %s45
    %p47 = scmp.eq.s32.totalorder %s21, 0
    %p48 = por %p46, %p47
    %s50 = sadd.s32 %s49, 1
    %p53 = scmp.eq.s32.totalorder %s15, 1
    %p54 = scmp.ne.s32.totalorder %s49, %s51
    %p55 = scmp.eq.s32.totalorder %s15, 0
    %p56 = por %p54, %p55
    %p57 = scmp.ne.s32.totalorder %s49, %s51
    %p58 = scmp.eq.s32.totalorder %s20, 1
    %p59 = por %p57, %p58
    %p60 = scmp.ne.s32.totalorder %s51, %s52
    %p61 = scmp.eq.s32.totalorder %s20, 0
    %p62 = por %p60, %p61
    %p63 = scmp.ne.s32.totalorder %s51, %s52
    %p64 = scmp.eq.s32.totalorder %s21, 1
    %p65 = por %p63, %p64
    %p67 = scmp.ne.s32.totalorder %s52, %s66
    %p68 = scmp.eq.s32.totalorder %s21, 0
    %p69 = por %p67, %p68
    %s71 = sadd.s32 %s70, 1
    %p74 = scmp.eq.s32.totalorder %s15, 1
    %p75 = scmp.ne.s32.totalorder %s70, %s72
    %p76 = scmp.eq.s32.totalorder %s15, 0
    %p77 = por %p75, %p76
    %p78 = scmp.ne.s32.totalorder %s70, %s72
    %p79 = scmp.eq.s32.totalorder %s20, 1
    %p80 = por %p78, %p79
    %p81 = scmp.ne.s32.totalorder %s72, %s73
    %p82 = scmp.eq.s32.totalorder %s20, 0
    %p83 = por %p81, %p82
    %p84 = scmp.ne.s32.totalorder %s72, %s73
    %p85 = scmp.eq.s32.totalorder %s21, 1
    %p86 = por %p84, %p85
    %p88 = scmp.ne.s32.totalorder %s73, %s87
    %p89 = scmp.eq.s32.totalorder %s21, 0
    %p90 = por %p88, %p89
    %s92 = sadd.s32 %s91, 1
    %p95 = scmp.eq.s32.totalorder %s15, 1
    %p96 = scmp.ne.s32.totalorder %s91, %s93
    %p97 = scmp.eq.s32.totalorder %s15, 0
    %p98 = por %p96, %p97
    %p99 = scmp.ne.s32.totalorder %s91, %s93
    %p100 = scmp.eq.s32.totalorder %s20, 1
    %p101 = por %p99, %p100
    %p102 = scmp.ne.s32.totalorder %s93, %s94
    %p103 = scmp.eq.s32.totalorder %s20, 0
    %p104 = por %p102, %p103
    %p105 = scmp.ne.s32.totalorder %s93, %s94
    %p106 = scmp.eq.s32.totalorder %s21, 1
    %p107 = por %p105, %p106
    %p109 = scmp.ne.s32.totalorder %s94, %s108
    %p110 = scmp.eq.s32.totalorder %s21, 0
    %p111 = por %p109, %p110
    %s113 = sadd.s32 %s112, 1
    %p116 = scmp.eq.s32.totalorder %s15, 1
    %p117 = scmp.ne.s32.totalorder %s112, %s114
    %p118 = scmp.eq.s32.totalorder %s15, 0
    %p119 = por %p117, %p118
    %p120 = scmp.ne.s32.totalorder %s112, %s114
    %p121 = scmp.eq.s32.totalorder %s20, 1
    %p122 = por %p120, %p121
    %p123 = scmp.ne.s32.totalorder %s114, %s115
    %p124 = scmp.eq.s32.totalorder %s20, 0
    %p125 = por %p123, %p124
    %p126 = scmp.ne.s32.totalorder %s114, %s115
    %p127 = scmp.eq.s32.totalorder %s21, 1
    %p128 = por %p126, %p127
    %p130 = scmp.ne.s32.totalorder %s115, %s129
    %p131 = scmp.eq.s32.totalorder %s21, 0
    %p132 = por %p130, %p131
    %s134 = sadd.s32 %s133, 1
    %p137 = scmp.eq.s32.totalorder %s15, 1
    %p138 = scmp.ne.s32.totalorder %s133, %s135
    %p139 = scmp.eq.s32.totalorder %s15, 0
    %p140 = por %p138, %p139
    %p141 = scmp.ne.s32.totalorder %s133, %s135
    %p142 = scmp.eq.s32.totalorder %s20, 1
    %p143 = por %p141, %p142
    %p144 = scmp.ne.s32.totalorder %s135, %s136
    %p145 = scmp.eq.s32.totalorder %s20, 0
    %p146 = por %p144, %p145
    %p147 = scmp.ne.s32.totalorder %s135, %s136
    %p148 = scmp.eq.s32.totalorder %s21, 1
    %p149 = por %p147, %p148
    %p151 = scmp.ne.s32.totalorder %s136, %s150
    %p152 = scmp.eq.s32.totalorder %s21, 0
    %p153 = por %p151, %p152
    %s155 = sadd.s32 %s154, 1
    %p158 = scmp.eq.s32.totalorder %s15, 1
    %p159 = scmp.ne.s32.totalorder %s154, %s156
    %p160 = scmp.eq.s32.totalorder %s15, 0
    %p161 = por %p159, %p160
    %p162 = scmp.ne.s32.totalorder %s154, %s156
    %p163 = scmp.eq.s32.totalorder %s20, 1
    %p164 = por %p162, %p163
    %p165 = scmp.ne.s32.totalorder %s156, %s157
    %p166 = scmp.eq.s32.totalorder %s20, 0
    %p167 = por %p165, %p166
    %p168 = scmp.ne.s32.totalorder %s156, %s157
    %p169 = scmp.eq.s32.totalorder %s21, 1
    %p170 = por %p168, %p169
    %p172 = scmp.ne.s32.totalorder %s157, %s171
    %p173 = scmp.eq.s32.totalorder %s21, 0
    %p174 = por %p172, %p173
    %s176 = sadd.s32 %s175, 1
    %p179 = scmp.eq.s32.totalorder %s15, 1
    %p180 = scmp.ne.s32.totalorder %s175, %s177
    %p181 = scmp.eq.s32.totalorder %s15, 0
    %p182 = por %p180, %p181
    %p183 = scmp.ne.s32.totalorder %s175, %s177
    %p184 = scmp.eq.s32.totalorder %s20, 1
    %p185 = por %p183, %p184
    %p186 = scmp.ne.s32.totalorder %s177, %s178
    %p187 = scmp.eq.s32.totalorder %s20, 0
    %p188 = por %p186, %p187
    %p189 = scmp.ne.s32.totalorder %s177, %s178
    %p190 = scmp.eq.s32.totalorder %s21, 1
    %p191 = por %p189, %p190
    %p193 = scmp.ne.s32.totalorder %s178, %s192
    %p194 = scmp.eq.s32.totalorder %s21, 0
    %p195 = por %p193, %p194
    %s197 = sadd.s32 %s196, 1
    %p200 = scmp.eq.s32.totalorder %s15, 1
    %p201 = scmp.ne.s32.totalorder %s196, %s198
    %p202 = scmp.eq.s32.totalorder %s15, 0
    %p203 = por %p201, %p202
    %p204 = scmp.ne.s32.totalorder %s196, %s198
    %p205 = scmp.eq.s32.totalorder %s20, 1
    %p206 = por %p204, %p205
    %p207 = scmp.ne.s32.totalorder %s198, %s199
    %p208 = scmp.eq.s32.totalorder %s20, 0
    %p209 = por %p207, %p208
    %p210 = scmp.ne.s32.totalorder %s198, %s199
    %p211 = scmp.eq.s32.totalorder %s21, 1
    %p212 = por %p210, %p211
    %p214 = scmp.ne.s32.totalorder %s199, %s213
    %p215 = scmp.eq.s32.totalorder %s21, 0
    %p216 = por %p214, %p215
    %s217 = ssub.s32 %s15, %s22
    %p218 = scmp.eq.s32.totalorder %s217, 0
    %s220 = sadd.s32 %s219, 1
    %s221 = scalar_select %p218, %s219, %s220
    %p224 = pneg %p218
    %p225 = scmp.eq.s32.totalorder %s15, 1
    %p226 = por %p224, %p225
    %p227 = scmp.ne.s32.totalorder %s219, %s222
    %p228 = scmp.eq.s32.totalorder %s15, 0
    %p229 = por %p227, %p228
    %p230 = scmp.ne.s32.totalorder %s219, %s222
    %p231 = scmp.eq.s32.totalorder %s20, 1
    %p232 = por %p230, %p231
    %p233 = scmp.ne.s32.totalorder %s222, %s223
    %p234 = scmp.eq.s32.totalorder %s20, 0
    %p235 = por %p233, %p234
    %p236 = scmp.ne.s32.totalorder %s222, %s223
    %p237 = scmp.eq.s32.totalorder %s21, 1
    %p238 = por %p236, %p237
    %p240 = scmp.ne.s32.totalorder %s223, %s239
    %p241 = scmp.eq.s32.totalorder %s21, 0
    %p242 = por %p240, %p241
    %p243 = scmp.le.s32.totalorder 1, %s15
    %p244 = scmp.lt.s32.totalorder %s15, 3
    %p245 = pnand %p243, %p244
    %p246 = pneg %p245
    // Predicated region
    $region9: #{forward.8} parent=5 // pred_check
      _
    $region10: #{forward.8} parent=5 // pred_check_branch
      %248 = sbr.rel (%p245) target = $region12
    $region11: #{forward.8} parent=5 // pred_region
      %s249 = ssub.s32 %s15, 1
      // Predicated region
      $region13: #{forward.8} parent=11 // pred_check
        %p250 = pneg %p62
      $region14: #{forward.8} parent=11 // pred_check_branch
        %252 = sbr.rel (%p250) target = $region16
      $region15: #{forward.8} parent=11 // pred_region
        _
      $region16: #{forward.8} parent=11 // pred_fallthru
        _
      // Predicated region
      $region17: #{forward.8} parent=11 // pred_check
        %p253 = pneg %p83
      $region18: #{forward.8} parent=11 // pred_check_branch
        %255 = sbr.rel (%p253) target = $region20
      $region19: #{forward.8} parent=11 // pred_region
        _
      $region20: #{forward.8} parent=11 // pred_fallthru
        _
      // Predicated region
      $region21: #{forward.8} parent=11 // pred_check
        %p256 = pneg %p104
      $region22: #{forward.8} parent=11 // pred_check_branch
        %258 = sbr.rel (%p256) target = $region24
      $region23: #{forward.8} parent=11 // pred_region
        _
      $region24: #{forward.8} parent=11 // pred_fallthru
        _
      // Predicated region
      $region25: #{forward.8} parent=11 // pred_check
        %p259 = pneg %p125
      $region26: #{forward.8} parent=11 // pred_check_branch
        %261 = sbr.rel (%p259) target = $region28
      $region27: #{forward.8} parent=11 // pred_region
        _
      $region28: #{forward.8} parent=11 // pred_fallthru
        _
      // Predicated region
      $region29: #{forward.8} parent=11 // pred_check
        %p262 = pneg %p146
      $region30: #{forward.8} parent=11 // pred_check_branch
        %264 = sbr.rel (%p262) target = $region32
      $region31: #{forward.8} parent=11 // pred_region
        _
      $region32: #{forward.8} parent=11 // pred_fallthru
        _
      // Predicated region
      $region33: #{forward.8} parent=11 // pred_check
        %p265 = pneg %p167
      $region34: #{forward.8} parent=11 // pred_check_branch
        %267 = sbr.rel (%p265) target = $region36
      $region35: #{forward.8} parent=11 // pred_region
        _
      $region36: #{forward.8} parent=11 // pred_fallthru
        _
      // Predicated region
      $region37: #{forward.8} parent=11 // pred_check
        %p268 = pneg %p188
      $region38: #{forward.8} parent=11 // pred_check_branch
        %270 = sbr.rel (%p268) target = $region40
      $region39: #{forward.8} parent=11 // pred_region
        _
      $region40: #{forward.8} parent=11 // pred_fallthru
        _
      // Predicated region
      $region41: #{forward.8} parent=11 // pred_check
        %p271 = pneg %p209
      $region42: #{forward.8} parent=11 // pred_check_branch
        %273 = sbr.rel (%p271) target = $region44
      $region43: #{forward.8} parent=11 // pred_region
        _
      $region44: #{forward.8} parent=11 // pred_fallthru
        _
    $region12: #{forward.8} parent=5 // pred_fallthru
      _
    %p274 = scmp.lt.s32.totalorder %s15, 2
    // Predicated region
    $region45: #{forward.8} parent=5 // pred_check
      %p275 = pneg %p274
    $region46: #{forward.8} parent=5 // pred_check_branch
      %277 = sbr.rel (%p275) target = $region48
    $region47: #{forward.8} parent=5 // pred_region
      // Predicated region
      $region49: #{forward.8} parent=47 // pred_check
        %p278 = pneg %p35
      $region50: #{forward.8} parent=47 // pred_check_branch
        %280 = sbr.rel (%p278) target = $region52
      $region51: #{forward.8} parent=47 // pred_region
        %s281 = smul.u32 4, %s15
        %p282 = scmp.lt.s32.totalorder %s281, 7
        %s283 = scalar_select %p282, %s281, 7
        %s284 = smul.addr %s283, 4
        %s285 = scalar_lea.vmem %s0, %s284
        %s286 = smul.u32 4, %s15
      $region52: #{forward.8} parent=47 // pred_fallthru
        _
    $region48: #{forward.8} parent=5 // pred_fallthru
      _
    %p287 = scmp.le.s32.totalorder 1, %s15
    %p288 = scmp.lt.s32.totalorder %s15, 3
    %p289 = pnand %p287, %p288
    %p290 = pneg %p289
    // Predicated region
    $region53: #{forward.8} parent=5 // pred_check
      _
    $region54: #{forward.8} parent=5 // pred_check_branch
      %292 = sbr.rel (%p289) target = $region56
    $region55: #{forward.8} parent=5 // pred_region
      %s293 = ssub.s32 %s15, 1
      %s294 = smul.u32 4, %s20
      %p295 = scmp.lt.s32.totalorder %s294, 7
      %s296 = scalar_select %p295, %s294, 7
      %s297 = smul.addr %s296, 4
      %s298 = scalar_lea.vmem %s0, %s297
      %p299 = pneg %p41
      %p300 = pneg %p38
      %p301 = pneg %p62
      %p302 = pneg %p59
      %p303 = pneg %p83
      %p304 = pneg %p80
      %p305 = pneg %p104
      %p306 = pneg %p101
      %p307 = pneg %p125
      %p308 = pneg %p122
      %p309 = pneg %p146
      %p310 = pneg %p143
      %p311 = pneg %p167
      %p312 = pneg %p164
      %p313 = pneg %p188
      %p314 = pneg %p185
      %p315 = pneg %p209
      %p316 = pneg %p206
      %p317 = pneg %p235
      %p318 = pneg %p232
      %p319 = scmp.lt.s32.totalorder %s20, 1
      %s320 = scalar_select %p319, %s20, 1
      %s321 = smul.addr %s320, 8
      %s322 = scalar_lea.vmem %s9, %s321
      %s323 = smul.u32 4, %s20
      %p324 = scmp.lt.s32.totalorder %s323, 7
      %s325 = scalar_select %p324, %s323, 7
      %s326 = smul.addr %s325, 4
      %s327 = scalar_lea.vmem %s0, %s326
      %s328 = smul.u32 4, %s20
      %p329 = scmp.lt.s32.totalorder %s20, 1
      %s330 = scalar_select %p329, %s20, 1
      %s331 = smul.addr %s330, 8
      %s332 = scalar_lea.vmem %s9, %s331
      %v334 = vld [vmem:[%s327] sm:$0xf]
      %v335 = vld [vmem:[%s327 + $0x4] sm:$0xf]
      %v336 = vld [vmem:[%s327 + $0x8] sm:$0xf]
      %v337 = vld [vmem:[%s327 + $0xc] sm:$0xf]
      %v338 = vld [vmem:[%s1] sm:$0xf]
      %v339 = vld [vmem:[%s1 + $0x4] sm:$0xf]
      %v340 = vld [vmem:[%s1 + $0x8] sm:$0xf]
      %v341 = vld [vmem:[%s1 + $0xc] sm:$0xf]
      %v342 = vld [vmem:[%s3] sm:$0xf]
      %v343 = vld [vmem:[%s3 + $0x4] sm:$0xf]
      %v344 = vld [vmem:[%s3 + $0x8] sm:$0xf]
      %v345 = vld [vmem:[%s3 + $0xc] sm:$0xf]
      %v350 = vunpack.c.l.b16 %v334
      %v351 = vunpack.c.l.b16 %v335
      %v352 = vunpack.c.l.b16 %v336
      %v353 = vunpack.c.l.b16 %v337
      %v354 = vpack.c.b16 %v351, %v350
      %v355 = vpack.c.b16 %v353, %v352
      %v360 = vunpack.c.l.b16 %v342
      %v361 = vunpack.c.l.b16 %v343
      %v362 = vunpack.c.l.b16 %v344
      %v363 = vunpack.c.l.b16 %v345
      %v364 = vpack.c.b16 %v361, %v360
      %v365 = vpack.c.b16 %v363, %v362
      %vm368 = vcmask 261120
      %v370 = vsel %vm368, %v354, 0
      %v373 = vsel %vm368, %v355, 0
      %375 = vmatprep.subr.bf16.mxu0 0
      %376 = vmatpush1.bf16.msra.mxu0 0
      %377 = vmatprep.subr.bf16.mxu0 0
      %378 = vmatpush1.bf16.msra.mxu0 0
      %379 = vmatprep.subr.bf16.mxu0 0
      %380 = vmatpush1.bf16.msra.mxu0 0
      %381 = vmatprep.subr.bf16.mxu0 0
      %382 = vmatpush1.bf16.msra.mxu0 0
      %383 = vmatprep.subr.bf16.mxu0 0
      %384 = vmatpush1.bf16.msra.mxu0 0
      %385 = vmatprep.subr.bf16.mxu0 0
      %386 = vmatpush1.bf16.msra.mxu0 0
      %387 = vmatprep.subr.bf16.mxu0 0
      %388 = vmatpush1.bf16.msra.mxu0 %v365
      %389 = vmatprep.subr.bf16.mxu0 0
      %390 = vmatpush1.bf16.msra.mxu0 %v364
      %391 = vmatprep.subr.bf16.mxu0 0
      %392 = vmatpush2.bf16.msra.mxu0 0
      %393 = vmatprep.subr.bf16.mxu0 0
      %394 = vmatpush2.bf16.msra.mxu0 0
      %395 = vmatprep.subr.bf16.mxu0 0
      %396 = vmatpush2.bf16.msra.mxu0 0
      %397 = vmatprep.subr.bf16.mxu0 0
      %398 = vmatpush2.bf16.msra.mxu0 0
      %399 = vmatprep.subr.bf16.mxu0 0
      %400 = vmatpush2.bf16.msra.mxu0 0
      %401 = vmatprep.subr.bf16.mxu0 0
      %402 = vmatpush2.bf16.msra.mxu0 0
      %403 = vmatprep.subr.bf16.mxu0 0
      %404 = vmatpush2.bf16.msra.mxu0 0
      %405 = vmatprep.subr.bf16.mxu0 0
      %406 = vmatpush2.bf16.msra.mxu0 0
      %407 = vmatprep.mubr.bf16.mxu0 0
      %408 = vmatmul.mubr.bf16.gmra.mxu0 %v370
      %v409 = vpop.f32.mrf.mxu0
      %v410 = vadd.f32 0.0, %v409
      %v411 = vpop.f32.mrf.mxu0
      %v412 = vpop.f32.mrf.mxu0
      %v413 = vadd.f32 0.0, %v412
      %v414 = vpop.f32.mrf.mxu0
      %415 = vmatprep.mubr.bf16.mxu0 0
      %416 = vmatmul.mubr.bf16.gmra.mxu0 %v373
      %v417 = vpop.f32.mrf.mxu0
      %v418 = vadd.f32 0.0, %v417
      %v419 = vpop.f32.mrf.mxu0
      %v420 = vpop.f32.mrf.mxu0
      %v421 = vadd.f32 0.0, %v420
      %v422 = vpop.f32.mrf.mxu0
      %423 = vdwg.mxu0
      %v424 = vpack.c.bf16 %v413, %v410
      %v425 = vpack.c.bf16 %v421, %v418
      %v426 = vld [vmem:[%s4] sm:$0x1]
      %v428 = vlaneseq
      %v429 = vshrl.u32 %v428, 7
      %v430 = vsub.s32 0, %v429
      %v431 = vrot.slane %v426, %v430
      %v437 = vunpack.c.l.b16 %v338
      %v438 = vunpack.c.l.b16 %v339
      %v439 = vunpack.c.l.b16 %v340
      %v440 = vunpack.c.l.b16 %v341
      %v441 = vpack.c.b16 %v438, %v437
      %v442 = vpack.c.b16 %v440, %v439
      %v444 = vsel %vm368, %v441, 0
      %v447 = vsel %vm368, %v442, 0
      %449 = vmatprep.subr.bf16.mxu0 0
      %450 = vmatpush1.bf16.msra.mxu0 0
      %451 = vmatprep.subr.bf16.mxu0 0
      %452 = vmatpush1.bf16.msra.mxu0 0
      %453 = vmatprep.subr.bf16.mxu0 0
      %454 = vmatpush1.bf16.msra.mxu0 0
      %455 = vmatprep.subr.bf16.mxu0 0
      %456 = vmatpush1.bf16.msra.mxu0 0
      %457 = vmatprep.subr.bf16.mxu0 0
      %458 = vmatpush1.bf16.msra.mxu0 0
      %459 = vmatprep.subr.bf16.mxu0 0
      %460 = vmatpush1.bf16.msra.mxu0 0
      %461 = vmatprep.subr.bf16.mxu0 0
      %462 = vmatpush1.bf16.msra.mxu0 %v425
      %463 = vmatprep.subr.bf16.mxu0 0
      %464 = vmatpush1.bf16.msra.mxu0 %v424
      %465 = vmatprep.subr.bf16.mxu0 0
      %466 = vmatpush2.bf16.msra.mxu0 0
      %467 = vmatprep.subr.bf16.mxu0 0
      %468 = vmatpush2.bf16.msra.mxu0 0
      %469 = vmatprep.subr.bf16.mxu0 0
      %470 = vmatpush2.bf16.msra.mxu0 0
      %471 = vmatprep.subr.bf16.mxu0 0
      %472 = vmatpush2.bf16.msra.mxu0 0
      %473 = vmatprep.subr.bf16.mxu0 0
      %474 = vmatpush2.bf16.msra.mxu0 0
      %475 = vmatprep.subr.bf16.mxu0 0
      %476 = vmatpush2.bf16.msra.mxu0 0
      %477 = vmatprep.subr.bf16.mxu0 0
      %478 = vmatpush2.bf16.msra.mxu0 0
      %479 = vmatprep.subr.bf16.mxu0 0
      %480 = vmatpush2.bf16.msra.mxu0 0
      %481 = vmatprep.mubr.bf16.mxu0 0
      %482 = vmatmul.mubr.bf16.gmra.mxu0 %v444
      %v483 = vpop.f32.mrf.mxu0
      %v484 = vadd.f32 %v431, %v483
      %v485 = vpop.f32.mrf.mxu0
      %v486 = vpop.f32.mrf.mxu0
      %v487 = vadd.f32 %v431, %v486
      %v488 = vpop.f32.mrf.mxu0
      %489 = vmatprep.mubr.bf16.mxu0 0
      %490 = vmatmul.mubr.bf16.gmra.mxu0 %v447
      %v491 = vpop.f32.mrf.mxu0
      %v492 = vadd.f32 %v431, %v491
      %v493 = vpop.f32.mrf.mxu0
      %v494 = vpop.f32.mrf.mxu0
      %v495 = vadd.f32 %v431, %v494
      %v496 = vpop.f32.mrf.mxu0
      %497 = vdwg.mxu0
      %v498 = vmax.f32 %v484, 0.0
      %v499 = vmax.f32 %v487, 0.0
      %v500 = vmax.f32 %v492, 0.0
      %v501 = vmax.f32 %v495, 0.0
      %v502 = vpack.c.bf16 %v499, %v498
      %v503 = vpack.c.bf16 %v501, %v500
      %v504 = vld [vmem:[%s5] sm:$0xf]
      %v505 = vld [vmem:[%s5 + $0x4] sm:$0xf]
      %v506 = vld [vmem:[%s5 + $0x8] sm:$0xf]
      %v507 = vld [vmem:[%s5 + $0xc] sm:$0xf]
      %v512 = vunpack.c.l.b16 %v504
      %v513 = vunpack.c.l.b16 %v505
      %v514 = vunpack.c.l.b16 %v506
      %v515 = vunpack.c.l.b16 %v507
      %v516 = vpack.c.b16 %v513, %v512
      %v517 = vpack.c.b16 %v515, %v514
      %v521 = vsel %vm368, %v502, 0
      %v524 = vsel %vm368, %v503, 0
      %526 = vmatprep.subr.bf16.mxu0 0
      %527 = vmatpush1.bf16.msra.mxu0 0
      %528 = vmatprep.subr.bf16.mxu0 0
      %529 = vmatpush1.bf16.msra.mxu0 0
      %530 = vmatprep.subr.bf16.mxu0 0
      %531 = vmatpush1.bf16.msra.mxu0 0
      %532 = vmatprep.subr.bf16.mxu0 0
      %533 = vmatpush1.bf16.msra.mxu0 0
      %534 = vmatprep.subr.bf16.mxu0 0
      %535 = vmatpush1.bf16.msra.mxu0 0
      %536 = vmatprep.subr.bf16.mxu0 0
      %537 = vmatpush1.bf16.msra.mxu0 0
      %538 = vmatprep.subr.bf16.mxu0 0
      %539 = vmatpush1.bf16.msra.mxu0 %v517
      %540 = vmatprep.subr.bf16.mxu0 0
      %541 = vmatpush1.bf16.msra.mxu0 %v516
      %542 = vmatprep.subr.bf16.mxu0 0
      %543 = vmatpush2.bf16.msra.mxu0 0
      %544 = vmatprep.subr.bf16.mxu0 0
      %545 = vmatpush2.bf16.msra.mxu0 0
      %546 = vmatprep.subr.bf16.mxu0 0
      %547 = vmatpush2.bf16.msra.mxu0 0
      %548 = vmatprep.subr.bf16.mxu0 0
      %549 = vmatpush2.bf16.msra.mxu0 0
      %550 = vmatprep.subr.bf16.mxu0 0
      %551 = vmatpush2.bf16.msra.mxu0 0
      %552 = vmatprep.subr.bf16.mxu0 0
      %553 = vmatpush2.bf16.msra.mxu0 0
      %554 = vmatprep.subr.bf16.mxu0 0
      %555 = vmatpush2.bf16.msra.mxu0 0
      %556 = vmatprep.subr.bf16.mxu0 0
      %557 = vmatpush2.bf16.msra.mxu0 0
      %558 = vmatprep.mubr.bf16.mxu0 0
      %559 = vmatmul.mubr.bf16.gmra.mxu0 %v521
      %v560 = vpop.f32.mrf.mxu0
      %v561 = vadd.f32 0.0, %v560
      %v562 = vpop.f32.mrf.mxu0
      %v563 = vpop.f32.mrf.mxu0
      %v564 = vadd.f32 0.0, %v563
      %v565 = vpop.f32.mrf.mxu0
      %566 = vmatprep.mubr.bf16.mxu0 0
      %567 = vmatmul.mubr.bf16.gmra.mxu0 %v524
      %v568 = vpop.f32.mrf.mxu0
      %v569 = vadd.f32 0.0, %v568
      %v570 = vpop.f32.mrf.mxu0
      %v571 = vpop.f32.mrf.mxu0
      %v572 = vadd.f32 0.0, %v571
      %v573 = vpop.f32.mrf.mxu0
      %574 = vdwg.mxu0
      %v575 = vpack.c.bf16 %v564, %v561
      %v576 = vpack.c.bf16 %v572, %v569
      %v577 = vld [vmem:[%s6] sm:$0x1]
      %v579 = vlaneseq
      %v580 = vshrl.u32 %v579, 7
      %v581 = vsub.s32 0, %v580
      %v582 = vrot.slane %v577, %v581
      %584 = vmatprep.subr.bf16.mxu0 0
      %585 = vmatpush1.bf16.msra.mxu0 0
      %586 = vmatprep.subr.bf16.mxu0 0
      %587 = vmatpush1.bf16.msra.mxu0 0
      %588 = vmatprep.subr.bf16.mxu0 0
      %589 = vmatpush1.bf16.msra.mxu0 0
      %590 = vmatprep.subr.bf16.mxu0 0
      %591 = vmatpush1.bf16.msra.mxu0 0
      %592 = vmatprep.subr.bf16.mxu0 0
      %593 = vmatpush1.bf16.msra.mxu0 0
      %594 = vmatprep.subr.bf16.mxu0 0
      %595 = vmatpush1.bf16.msra.mxu0 0
      %596 = vmatprep.subr.bf16.mxu0 0
      %597 = vmatpush1.bf16.msra.mxu0 %v576
      %598 = vmatprep.subr.bf16.mxu0 0
      %599 = vmatpush1.bf16.msra.mxu0 %v575
      %600 = vmatprep.subr.bf16.mxu0 0
      %601 = vmatpush2.bf16.msra.mxu0 0
      %602 = vmatprep.subr.bf16.mxu0 0
      %603 = vmatpush2.bf16.msra.mxu0 0
      %604 = vmatprep.subr.bf16.mxu0 0
      %605 = vmatpush2.bf16.msra.mxu0 0
      %606 = vmatprep.subr.bf16.mxu0 0
      %607 = vmatpush2.bf16.msra.mxu0 0
      %608 = vmatprep.subr.bf16.mxu0 0
      %609 = vmatpush2.bf16.msra.mxu0 0
      %610 = vmatprep.subr.bf16.mxu0 0
      %611 = vmatpush2.bf16.msra.mxu0 0
      %612 = vmatprep.subr.bf16.mxu0 0
      %613 = vmatpush2.bf16.msra.mxu0 0
      %614 = vmatprep.subr.bf16.mxu0 0
      %615 = vmatpush2.bf16.msra.mxu0 0
      %616 = vmatprep.mubr.bf16.mxu0 0
      %617 = vmatmul.mubr.bf16.gmra.mxu0 %v444
      %v618 = vpop.f32.mrf.mxu0
      %v619 = vadd.f32 %v582, %v618
      %v620 = vpop.f32.mrf.mxu0
      %v621 = vpop.f32.mrf.mxu0
      %v622 = vadd.f32 %v582, %v621
      %v623 = vpop.f32.mrf.mxu0
      %624 = vmatprep.mubr.bf16.mxu0 0
      %625 = vmatmul.mubr.bf16.gmra.mxu0 %v447
      %v626 = vpop.f32.mrf.mxu0
      %v627 = vadd.f32 %v582, %v626
      %v628 = vpop.f32.mrf.mxu0
      %v629 = vpop.f32.mrf.mxu0
      %v630 = vadd.f32 %v582, %v629
      %v631 = vpop.f32.mrf.mxu0
      %632 = vdwg.mxu0
      %v633 = vsel %vm368, %v619, 0.0
      %634 = vadd.xlane.f32.xlu0 %v633
      %v635 = vpop.xlane.xlu0 %634
      %v636 = vsel %vm368, %v622, 0.0
      %637 = vadd.xlane.f32.xlu0 %v636
      %v638 = vpop.xlane.xlu0 %637
      %v639 = vsel %vm368, %v627, 0.0
      %640 = vadd.xlane.f32.xlu0 %v639
      %v641 = vpop.xlane.xlu0 %640
      %v642 = vsel %vm368, %v630, 0.0
      %643 = vadd.xlane.f32.xlu0 %v642
      %v644 = vpop.xlane.xlu0 %643
      %v645 = vrcp.pop 32.0
      %v646 = vmul.f32 %v635, %v645
      %v647 = vmul.f32 %v638, %v645
      %v648 = vmul.f32 %v641, %v645
      %v649 = vmul.f32 %v644, %v645
      %v650 = vsub.f32 %v619, %v646
      %v651 = vsub.f32 %v622, %v647
      %v652 = vsub.f32 %v627, %v648
      %v653 = vsub.f32 %v630, %v649
      %v654 = vmul.f32 %v650, %v650
      %v655 = vmul.f32 %v651, %v651
      %v656 = vmul.f32 %v652, %v652
      %v657 = vmul.f32 %v653, %v653
      %v658 = vsel %vm368, %v654, 0.0
      %659 = vadd.xlane.f32.xlu0 %v658
      %v660 = vpop.xlane.xlu0 %659
      %v661 = vsel %vm368, %v655, 0.0
      %662 = vadd.xlane.f32.xlu0 %v661
      %v663 = vpop.xlane.xlu0 %662
      %v664 = vsel %vm368, %v656, 0.0
      %665 = vadd.xlane.f32.xlu0 %v664
      %v666 = vpop.xlane.xlu0 %665
      %v667 = vsel %vm368, %v657, 0.0
      %668 = vadd.xlane.f32.xlu0 %v667
      %v669 = vpop.xlane.xlu0 %668
      %v670 = vmul.f32 %v660, %v645
      %v671 = vmul.f32 %v663, %v645
      %v672 = vmul.f32 %v666, %v645
      %v673 = vmul.f32 %v669, %v645
      %v674 = vadd.f32 %v670, 1e-05
      %v675 = vadd.f32 %v671, 1e-05
      %v676 = vadd.f32 %v672, 1e-05
      %v677 = vadd.f32 %v673, 1e-05
      %v678 = vrsqrt.pop %v674
      %v679 = vrsqrt.pop %v675
      %v680 = vrsqrt.pop %v676
      %v681 = vrsqrt.pop %v677
      %v682 = vmul.f32 %v650, %v678
      %v683 = vmul.f32 %v651, %v679
      %v684 = vmul.f32 %v652, %v680
      %v685 = vmul.f32 %v653, %v681
      %v686 = vld [vmem:[%s7] sm:$0x1]
      %v688 = vlaneseq
      %v689 = vshrl.u32 %v688, 7
      %v690 = vsub.s32 0, %v689
      %v691 = vrot.slane %v686, %v690
      %v693 = vmul.f32 %v682, %v691
      %v694 = vmul.f32 %v683, %v691
      %v695 = vmul.f32 %v684, %v691
      %v696 = vmul.f32 %v685, %v691
      %v697 = vld [vmem:[%s8] sm:$0x1]
      %v699 = vlaneseq
      %v700 = vshrl.u32 %v699, 7
      %v701 = vsub.s32 0, %v700
      %v702 = vrot.slane %v697, %v701
      %v704 = vadd.f32 %v693, %v702
      %v705 = vadd.f32 %v694, %v702
      %v706 = vadd.f32 %v695, %v702
      %v707 = vadd.f32 %v696, %v702
      %v708 = vld [vmem:[%s2] sm:$0xf]
      %v709 = vpack.c.bf16 %v705, %v704
      %v710 = vpack.c.bf16 %v707, %v706
      %v712 = vsel %vm368, %v708, 0
      %714 = vmatprep.subr.bf16.mxu0 0
      %715 = vmatpush1.bf16.msra.mxu0 0
      %716 = vmatprep.subr.bf16.mxu0 0
      %717 = vmatpush1.bf16.msra.mxu0 0
      %718 = vmatprep.subr.bf16.mxu0 0
      %719 = vmatpush1.bf16.msra.mxu0 0
      %720 = vmatprep.subr.bf16.mxu0 0
      %721 = vmatpush1.bf16.msra.mxu0 0
      %722 = vmatprep.subr.bf16.mxu0 0
      %723 = vmatpush1.bf16.msra.mxu0 0
      %724 = vmatprep.subr.bf16.mxu0 0
      %725 = vmatpush1.bf16.msra.mxu0 0
      %726 = vmatprep.subr.bf16.mxu0 0
      %727 = vmatpush1.bf16.msra.mxu0 %v710
      %728 = vmatprep.subr.bf16.mxu0 0
      %729 = vmatpush1.bf16.msra.mxu0 %v709
      %730 = vmatprep.subr.bf16.mxu0 0
      %731 = vmatpush2.bf16.msra.mxu0 0
      %732 = vmatprep.subr.bf16.mxu0 0
      %733 = vmatpush2.bf16.msra.mxu0 0
      %734 = vmatprep.subr.bf16.mxu0 0
      %735 = vmatpush2.bf16.msra.mxu0 0
      %736 = vmatprep.subr.bf16.mxu0 0
      %737 = vmatpush2.bf16.msra.mxu0 0
      %738 = vmatprep.subr.bf16.mxu0 0
      %739 = vmatpush2.bf16.msra.mxu0 0
      %740 = vmatprep.subr.bf16.mxu0 0
      %741 = vmatpush2.bf16.msra.mxu0 0
      %742 = vmatprep.subr.bf16.mxu0 0
      %743 = vmatpush2.bf16.msra.mxu0 0
      %744 = vmatprep.subr.bf16.mxu0 0
      %745 = vmatpush2.bf16.msra.mxu0 0
      %746 = vmatprep.mubr.bf16.mxu0 0
      %747 = vmatmul.mubr.bf16.gmra.mxu0 %v712
      %v748 = vpop.f32.mrf.mxu0
      %v749 = vadd.f32 0.0, %v748
      %v750 = vpop.f32.mrf.mxu0
      %v751 = vpop.f32.mrf.mxu0
      %v752 = vpop.f32.mrf.mxu0
      %753 = vdwg.mxu0
      %754 = vst.msk [vmem:[%s332] sm:$0xff] %vm368, %v749
      %p755 = scmp.lt.s32.totalorder %s20, 1
      %s756 = scalar_select %p755, %s20, 1
      %s757 = smul.addr %s756, 8
      %s758 = scalar_lea.vmem %s9, %s757
      // Predicated region
      $region57: #{forward.8} parent=55 // pred_check
        %p759 = pneg %p232
      $region58: #{forward.8} parent=55 // pred_check_branch
        %761 = sbr.rel (%p759) target = $region60
      $region59: #{forward.8} parent=55 // pred_region
        _
      $region60: #{forward.8} parent=55 // pred_fallthru
        _
    $region56: #{forward.8} parent=5 // pred_fallthru
      _
    %p762 = scmp.le.s32.totalorder 2, %s15
    // Predicated region
    $region61: #{forward.8} parent=5 // pred_check
      %p763 = pneg %p762
    $region62: #{forward.8} parent=5 // pred_check_branch
      %765 = sbr.rel (%p763) target = $region64
    $region63: #{forward.8} parent=5 // pred_region
      %s766 = ssub.s32 %s15, 2
      // Predicated region
      $region65: #{forward.8} parent=63 // pred_check
        %p767 = pneg %p238
      $region66: #{forward.8} parent=63 // pred_check_branch
        %769 = sbr.rel (%p767) target = $region68
      $region67: #{forward.8} parent=63 // pred_region
        %p770 = scmp.lt.s32.totalorder %s21, 1
        %s771 = scalar_select %p770, %s21, 1
        %s772 = smul.addr %s771, 8
        %s773 = scalar_lea.vmem %s9, %s772
      $region68: #{forward.8} parent=63 // pred_fallthru
        _
    $region64: #{forward.8} parent=5 // pred_fallthru
      _
  $region6: #{forward.8} parent=0 // loop_footer
    %s19 = sadd.s32 1, %s15
  $region7: #{forward.8} parent=0 // loop_footer_branch
    %14 = sbr.rel target = $region3
  $region8: #{forward.8} parent=0 // loop_exit
    _

// kernel: forward.9
$region0: #{forward.9}
  #allocation0 [shape = 'u32[]', space=smem, size = 0x4, offset = 0x4, fixed_abs, tag = 'smem constant byte address 0x4 - core index']
  #allocation1 [shape = 'u32[144,128]{1,0:T(1,128)}', space=vmem, size = 0x12000, scoped, tag = 'internal scratch']
  %s0 = inlined_call_operand.vmem [shape: f32[16,32], index: 0, kind: input, shape index: {}]
  %s1 = inlined_call_operand.vmem [shape: bf16[32,128], index: 1, kind: input, shape index: {}]
  %s2 = inlined_call_operand.vmem [shape: bf16[32,128], index: 2, kind: input, shape index: {}]
  %s3 = inlined_call_operand.vmem [shape: bf16[64,256], index: 3, kind: input, shape index: {}]
  %s4 = inlined_call_operand.vmem [shape: f32[1,128], index: 4, kind: input, shape index: {}]
  %s5 = inlined_call_operand.vmem [shape: f32[1,128], index: 5, kind: input, shape index: {}]
  %s6 = inlined_call_operand.vmem [shape: bf16[64,128], index: 6, kind: input, shape index: {}]
  %s7 = inlined_call_operand.vmem [shape: bf16[64,128], index: 7, kind: input, shape index: {}]
  %s8 = inlined_call_operand.vmem [shape: bf16[64,256], index: 8, kind: input, shape index: {}]
  %s9 = inlined_call_operand.vmem [shape: f32[1,128], index: 9, kind: input, shape index: {}]
  %s10 = inlined_call_operand.vmem [shape: f32[1,128], index: 10, kind: input, shape index: {}]
  %s11 = inlined_call_operand.vmem [shape: f32[1,64], index: 11, kind: input, shape index: {}]
  %s12 = inlined_call_operand.vmem [shape: f32[1,64], index: 12, kind: input, shape index: {}]
  %s13 = inlined_call_operand.vmem [shape: bf16[64,5], index: 13, kind: input, shape index: {}]
  %s14 = inlined_call_operand.vmem [shape: f32[1,5], index: 14, kind: input, shape index: {}]
  %s15 = inlined_call_operand.vmem [shape: f32[16,5], index: 15, kind: output, shape index: {}]
  %s16 = sld [smem:[#allocation0]]
  $region70: #{forward.9} parent=0
    _
  %s18 = ssub.s32 1, %s16
  %s19 = scalar_select 0, %s18, %s16
  // Predicated region
  $region2: #{forward.9} parent=0 // pred_check
    _
  $region3: #{forward.9} parent=0 // pred_check_branch
    %21 = sbr.rel (0) target = $region5
  $region4: #{forward.9} parent=0 // pred_region
    _
  $region5: #{forward.9} parent=0 // pred_fallthru
    _
  // Predicated region
  $region6: #{forward.9} parent=0 // pred_check
    _
  $region7: #{forward.9} parent=0 // pred_check_branch
    %23 = sbr.rel (0) target = $region9
  $region8: #{forward.9} parent=0 // pred_region
    _
  $region9: #{forward.9} parent=0 // pred_fallthru
    _
  // Predicated region
  $region10: #{forward.9} parent=0 // pred_check
    _
  $region11: #{forward.9} parent=0 // pred_check_branch
    %25 = sbr.rel (0) target = $region13
  $region12: #{forward.9} parent=0 // pred_region
    _
  $region13: #{forward.9} parent=0 // pred_fallthru
    _
  // Predicated region
  $region14: #{forward.9} parent=0 // pred_check
    _
  $region15: #{forward.9} parent=0 // pred_check_branch
    %27 = sbr.rel (0) target = $region17
  $region16: #{forward.9} parent=0 // pred_region
    _
  $region17: #{forward.9} parent=0 // pred_fallthru
    _
  // Predicated region
  $region18: #{forward.9} parent=0 // pred_check
    _
  $region19: #{forward.9} parent=0 // pred_check_branch
    %29 = sbr.rel (0) target = $region21
  $region20: #{forward.9} parent=0 // pred_region
    _
  $region21: #{forward.9} parent=0 // pred_fallthru
    _
  // Predicated region
  $region22: #{forward.9} parent=0 // pred_check
    _
  $region23: #{forward.9} parent=0 // pred_check_branch
    %31 = sbr.rel (0) target = $region25
  $region24: #{forward.9} parent=0 // pred_region
    _
  $region25: #{forward.9} parent=0 // pred_fallthru
    _
  // Predicated region
  $region26: #{forward.9} parent=0 // pred_check
    _
  $region27: #{forward.9} parent=0 // pred_check_branch
    %33 = sbr.rel (0) target = $region29
  $region28: #{forward.9} parent=0 // pred_region
    _
  $region29: #{forward.9} parent=0 // pred_fallthru
    _
  // Predicated region
  $region30: #{forward.9} parent=0 // pred_check
    _
  $region31: #{forward.9} parent=0 // pred_check_branch
    %35 = sbr.rel (0) target = $region33
  $region32: #{forward.9} parent=0 // pred_region
    _
  $region33: #{forward.9} parent=0 // pred_fallthru
    _
  // Predicated region
  $region34: #{forward.9} parent=0 // pred_check
    _
  $region35: #{forward.9} parent=0 // pred_check_branch
    %37 = sbr.rel (0) target = $region37
  $region36: #{forward.9} parent=0 // pred_region
    _
  $region37: #{forward.9} parent=0 // pred_fallthru
    _
  // Predicated region
  $region38: #{forward.9} parent=0 // pred_check
    _
  $region39: #{forward.9} parent=0 // pred_check_branch
    %39 = sbr.rel (0) target = $region41
  $region40: #{forward.9} parent=0 // pred_region
    _
  $region41: #{forward.9} parent=0 // pred_fallthru
    _
  // Predicated region
  $region42: #{forward.9} parent=0 // pred_check
    _
  $region43: #{forward.9} parent=0 // pred_check_branch
    %41 = sbr.rel (0) target = $region45
  $region44: #{forward.9} parent=0 // pred_region
    _
  $region45: #{forward.9} parent=0 // pred_fallthru
    _
  // Predicated region
  $region46: #{forward.9} parent=0 // pred_check
    _
  $region47: #{forward.9} parent=0 // pred_check_branch
    %43 = sbr.rel (0) target = $region49
  $region48: #{forward.9} parent=0 // pred_region
    _
  $region49: #{forward.9} parent=0 // pred_fallthru
    _
  // Predicated region
  $region50: #{forward.9} parent=0 // pred_check
    _
  $region51: #{forward.9} parent=0 // pred_check_branch
    %45 = sbr.rel (0) target = $region53
  $region52: #{forward.9} parent=0 // pred_region
    _
  $region53: #{forward.9} parent=0 // pred_fallthru
    _
  // Predicated region
  $region54: #{forward.9} parent=0 // pred_check
    _
  $region55: #{forward.9} parent=0 // pred_check_branch
    %47 = sbr.rel (0) target = $region57
  $region56: #{forward.9} parent=0 // pred_region
    _
  $region57: #{forward.9} parent=0 // pred_fallthru
    _
  // Predicated region
  $region58: #{forward.9} parent=0 // pred_check
    _
  $region59: #{forward.9} parent=0 // pred_check_branch
    %49 = sbr.rel (0) target = $region61
  $region60: #{forward.9} parent=0 // pred_region
    _
  $region61: #{forward.9} parent=0 // pred_fallthru
    _
  %v51 = vld [vmem:[%s0] sm:$0xff]
  %v52 = vld [vmem:[%s0 + $0x8] sm:$0xff]
  %v53 = vpack.c.bf16 %v52, %v51
  %v54 = vld [vmem:[%s1] sm:$0xf]
  %v55 = vld [vmem:[%s1 + $0x4] sm:$0xf]
  %v56 = vld [vmem:[%s1 + $0x8] sm:$0xf]
  %v57 = vld [vmem:[%s1 + $0xc] sm:$0xf]
  %v58 = vld [vmem:[%s2] sm:$0xf]
  %v59 = vld [vmem:[%s2 + $0x4] sm:$0xf]
  %v60 = vld [vmem:[%s2 + $0x8] sm:$0xf]
  %v61 = vld [vmem:[%s2 + $0xc] sm:$0xf]
  %v62 = vld [vmem:[%s3] sm:$0xff]
  %v63 = vld [vmem:[%s3 + $0x8] sm:$0xff]
  %v64 = vld [vmem:[%s3 + $0x10] sm:$0xff]
  %v65 = vld [vmem:[%s3 + $0x18] sm:$0xff]
  %v66 = vld [vmem:[%s3 + $0x20] sm:$0xff]
  %v67 = vld [vmem:[%s3 + $0x28] sm:$0xff]
  %v68 = vld [vmem:[%s3 + $0x30] sm:$0xff]
  %v69 = vld [vmem:[%s3 + $0x38] sm:$0xff]
  %v70 = vld [vmem:[%s4] sm:$0x1]
  %v71 = vld [vmem:[%s5] sm:$0x1]
  %v73 = vlaneseq
  %v74 = vshrl.u32 %v73, 7
  %v75 = vsub.s32 0, %v74
  %v76 = vrot.slane %v70, %v75
  %v82 = vunpack.c.l.b16 %v54
  %v83 = vunpack.c.l.b16 %v55
  %v84 = vunpack.c.l.b16 %v56
  %v85 = vunpack.c.l.b16 %v57
  %v86 = vpack.c.b16 %v83, %v82
  %v87 = vpack.c.b16 %v85, %v84
  %vm90 = vcmask 261120
  %v92 = vsel %vm90, %v53, 0
  %94 = vmatprep.subr.bf16.mxu0 0
  %95 = vmatpush1.bf16.msra.mxu0 0
  %96 = vmatprep.subr.bf16.mxu0 0
  %97 = vmatpush1.bf16.msra.mxu0 0
  %98 = vmatprep.subr.bf16.mxu0 0
  %99 = vmatpush1.bf16.msra.mxu0 0
  %100 = vmatprep.subr.bf16.mxu0 0
  %101 = vmatpush1.bf16.msra.mxu0 0
  %102 = vmatprep.subr.bf16.mxu0 0
  %103 = vmatpush1.bf16.msra.mxu0 0
  %104 = vmatprep.subr.bf16.mxu0 0
  %105 = vmatpush1.bf16.msra.mxu0 0
  %106 = vmatprep.subr.bf16.mxu0 0
  %107 = vmatpush1.bf16.msra.mxu0 %v87
  %108 = vmatprep.subr.bf16.mxu0 0
  %109 = vmatpush1.bf16.msra.mxu0 %v86
  %110 = vmatprep.subr.bf16.mxu0 0
  %111 = vmatpush2.bf16.msra.mxu0 0
  %112 = vmatprep.subr.bf16.mxu0 0
  %113 = vmatpush2.bf16.msra.mxu0 0
  %114 = vmatprep.subr.bf16.mxu0 0
  %115 = vmatpush2.bf16.msra.mxu0 0
  %116 = vmatprep.subr.bf16.mxu0 0
  %117 = vmatpush2.bf16.msra.mxu0 0
  %118 = vmatprep.subr.bf16.mxu0 0
  %119 = vmatpush2.bf16.msra.mxu0 0
  %120 = vmatprep.subr.bf16.mxu0 0
  %121 = vmatpush2.bf16.msra.mxu0 0
  %122 = vmatprep.subr.bf16.mxu0 0
  %123 = vmatpush2.bf16.msra.mxu0 0
  %124 = vmatprep.subr.bf16.mxu0 0
  %125 = vmatpush2.bf16.msra.mxu0 0
  %126 = vmatprep.mubr.bf16.mxu0 0
  %127 = vmatmul.mubr.bf16.gmra.mxu0 %v92
  %v128 = vpop.f32.mrf.mxu0
  %v129 = vadd.f32 %v76, %v128
  %v130 = vpop.f32.mrf.mxu0
  %v131 = vpop.f32.mrf.mxu0
  %v132 = vadd.f32 %v76, %v131
  %v133 = vpop.f32.mrf.mxu0
  %134 = vdwg.mxu0
  %v136 = vlaneseq
  %v137 = vshrl.u32 %v136, 7
  %v138 = vsub.s32 0, %v137
  %v139 = vrot.slane %v71, %v138
  %v145 = vunpack.c.l.b16 %v58
  %v146 = vunpack.c.l.b16 %v59
  %v147 = vunpack.c.l.b16 %v60
  %v148 = vunpack.c.l.b16 %v61
  %v149 = vpack.c.b16 %v146, %v145
  %v150 = vpack.c.b16 %v148, %v147
  %153 = vmatprep.subr.bf16.mxu0 0
  %154 = vmatpush1.bf16.msra.mxu0 0
  %155 = vmatprep.subr.bf16.mxu0 0
  %156 = vmatpush1.bf16.msra.mxu0 0
  %157 = vmatprep.subr.bf16.mxu0 0
  %158 = vmatpush1.bf16.msra.mxu0 0
  %159 = vmatprep.subr.bf16.mxu0 0
  %160 = vmatpush1.bf16.msra.mxu0 0
  %161 = vmatprep.subr.bf16.mxu0 0
  %162 = vmatpush1.bf16.msra.mxu0 0
  %163 = vmatprep.subr.bf16.mxu0 0
  %164 = vmatpush1.bf16.msra.mxu0 0
  %165 = vmatprep.subr.bf16.mxu0 0
  %166 = vmatpush1.bf16.msra.mxu0 %v150
  %167 = vmatprep.subr.bf16.mxu0 0
  %168 = vmatpush1.bf16.msra.mxu0 %v149
  %169 = vmatprep.subr.bf16.mxu0 0
  %170 = vmatpush2.bf16.msra.mxu0 0
  %171 = vmatprep.subr.bf16.mxu0 0
  %172 = vmatpush2.bf16.msra.mxu0 0
  %173 = vmatprep.subr.bf16.mxu0 0
  %174 = vmatpush2.bf16.msra.mxu0 0
  %175 = vmatprep.subr.bf16.mxu0 0
  %176 = vmatpush2.bf16.msra.mxu0 0
  %177 = vmatprep.subr.bf16.mxu0 0
  %178 = vmatpush2.bf16.msra.mxu0 0
  %179 = vmatprep.subr.bf16.mxu0 0
  %180 = vmatpush2.bf16.msra.mxu0 0
  %181 = vmatprep.subr.bf16.mxu0 0
  %182 = vmatpush2.bf16.msra.mxu0 0
  %183 = vmatprep.subr.bf16.mxu0 0
  %184 = vmatpush2.bf16.msra.mxu0 0
  %185 = vmatprep.mubr.bf16.mxu0 0
  %186 = vmatmul.mubr.bf16.gmra.mxu0 %v92
  %v187 = vpop.f32.mrf.mxu0
  %v188 = vadd.f32 %v139, %v187
  %v189 = vpop.f32.mrf.mxu0
  %v190 = vpop.f32.mrf.mxu0
  %v191 = vadd.f32 %v139, %v190
  %v192 = vpop.f32.mrf.mxu0
  %193 = vdwg.mxu0
  %v194 = vpack.c.bf16 0.0, 0.0
  %v203 = vunpack.c.l.b16 %v62
  %v204 = vunpack.c.h.b16 %v62
  %v205 = vunpack.c.l.b16 %v63
  %v206 = vunpack.c.h.b16 %v63
  %v207 = vunpack.c.l.b16 %v64
  %v208 = vunpack.c.h.b16 %v64
  %v209 = vunpack.c.l.b16 %v65
  %v210 = vunpack.c.h.b16 %v65
  %v211 = vunpack.c.l.b16 %v66
  %v212 = vunpack.c.h.b16 %v66
  %v213 = vunpack.c.l.b16 %v67
  %v214 = vunpack.c.h.b16 %v67
  %v215 = vunpack.c.l.b16 %v68
  %v216 = vunpack.c.h.b16 %v68
  %v217 = vunpack.c.l.b16 %v69
  %v218 = vunpack.c.h.b16 %v69
  %v219 = vpack.c.b16 %v205, %v203
  %v220 = vpack.c.b16 %v206, %v204
  %v221 = vpack.c.b16 %v209, %v207
  %v222 = vpack.c.b16 %v210, %v208
  %v223 = vpack.c.b16 %v213, %v211
  %v224 = vpack.c.b16 %v214, %v212
  %v225 = vpack.c.b16 %v217, %v215
  %v226 = vpack.c.b16 %v218, %v216
  %vm235 = vcmask 523264
  %v237 = vsel %vm235, %v194, 0
  %239 = vmatprep.subr.bf16.mxu0 0
  %240 = vmatpush1.bf16.msra.mxu0 0
  %241 = vmatprep.subr.bf16.mxu0 0
  %242 = vmatpush1.bf16.msra.mxu0 0
  %243 = vmatprep.subr.bf16.mxu0 0
  %244 = vmatpush1.bf16.msra.mxu0 0
  %245 = vmatprep.subr.bf16.mxu0 0
  %246 = vmatpush1.bf16.msra.mxu0 0
  %247 = vmatprep.subr.bf16.mxu0 %v226
  %248 = vmatpush1.bf16.msra.mxu0 %v225
  %249 = vmatprep.subr.bf16.mxu0 %v224
  %250 = vmatpush1.bf16.msra.mxu0 %v223
  %251 = vmatprep.subr.bf16.mxu0 %v222
  %252 = vmatpush1.bf16.msra.mxu0 %v221
  %253 = vmatprep.subr.bf16.mxu0 %v220
  %254 = vmatpush1.bf16.msra.mxu0 %v219
  %255 = vmatprep.subr.bf16.mxu0 0
  %256 = vmatpush2.bf16.msra.mxu0 0
  %257 = vmatprep.subr.bf16.mxu0 0
  %258 = vmatpush2.bf16.msra.mxu0 0
  %259 = vmatprep.subr.bf16.mxu0 0
  %260 = vmatpush2.bf16.msra.mxu0 0
  %261 = vmatprep.subr.bf16.mxu0 0
  %262 = vmatpush2.bf16.msra.mxu0 0
  %263 = vmatprep.subr.bf16.mxu0 0
  %264 = vmatpush2.bf16.msra.mxu0 0
  %265 = vmatprep.subr.bf16.mxu0 0
  %266 = vmatpush2.bf16.msra.mxu0 0
  %267 = vmatprep.subr.bf16.mxu0 0
  %268 = vmatpush2.bf16.msra.mxu0 0
  %269 = vmatprep.subr.bf16.mxu0 0
  %270 = vmatpush2.bf16.msra.mxu0 0
  %271 = vmatprep.mubr.bf16.mxu0 0
  %272 = vmatmul.mubr.bf16.gmra.mxu0 %v237
  %v273 = vpop.f32.mrf.mxu0
  %v274 = vadd.f32 0.0, %v273
  %v275 = vpop.f32.mrf.mxu0
  %v276 = vadd.f32 0.0, %v275
  %v277 = vpop.f32.mrf.mxu0
  %v278 = vpop.f32.mrf.mxu0
  %279 = vdwg.mxu0
  %v280 = vadd.f32 %v274, %v129
  %v282 = vrot.slane %v191, 6
  %v284 = vadd.f32 %v276, %v282
  %v285 = vxor.u32 %v280, 2147483648
  %v286 = vmul.f32 %v285, 1.442695
  %v287 = vpow.pop %v286
  %v288 = vadd.f32 %v287, 1.0
  %v289 = vrcp.pop %v288
  %v290 = vmul.f32 1.0, %v289
  %v291 = vtanh.pop %v280
  %v292 = vxor.u32 %v284, 2147483648
  %v293 = vmul.f32 %v292, 1.442695
  %v294 = vpow.pop %v293
  %v295 = vadd.f32 %v294, 1.0
  %v296 = vrcp.pop %v295
  %v297 = vmul.f32 1.0, %v296
  %v298 = vtanh.pop %v284
  %v299 = vmul.f32 %v290, 0.0
  %301 = vrot.lane.b32.xlu0 %v291, 32
  %v302 = vpop.permute.xlu0 %301
  %v304 = vmul.f32 %v290, %v302
  %306 = vrot.lane.b32.xlu0 %v304, 32
  %v307 = vpop.permute.xlu0 %306
  %v309 = vadd.f32 %v299, %v307
  %v310 = vtanh.pop %v309
  %312 = vrot.lane.b32.xlu0 %v310, 32
  %v313 = vpop.permute.xlu0 %312
  %v315 = vmul.f32 %v290, %v313
  %v316 = vmul.f32 %v297, 0.0
  %318 = vrot.lane.b32.xlu0 %v298, 32
  %v319 = vpop.permute.xlu0 %318
  %v321 = vmul.f32 %v297, %v319
  %323 = vrot.lane.b32.xlu0 %v321, 32
  %v324 = vpop.permute.xlu0 %323
  %v326 = vadd.f32 %v316, %v324
  %v327 = vtanh.pop %v326
  %329 = vrot.lane.b32.xlu0 %v327, 32
  %v330 = vpop.permute.xlu0 %329
  %v332 = vmul.f32 %v297, %v330
  %334 = vrot.lane.b32.xlu0 %v315, 64
  %v335 = vpop.permute.xlu0 %334
  %338 = vrot.lane.b32.xlu0 %v332, 96
  %v339 = vpop.permute.xlu0 %338
  %v341 = vsel %vm90, %v335, %v339
  %v342 = vpack.c.bf16 %v341, %v341
  %v344 = vsel %vm235, %v342, 0
  %346 = vmatprep.subr.bf16.mxu0 0
  %347 = vmatpush1.bf16.msra.mxu0 0
  %348 = vmatprep.subr.bf16.mxu0 0
  %349 = vmatpush1.bf16.msra.mxu0 0
  %350 = vmatprep.subr.bf16.mxu0 0
  %351 = vmatpush1.bf16.msra.mxu0 0
  %352 = vmatprep.subr.bf16.mxu0 0
  %353 = vmatpush1.bf16.msra.mxu0 0
  %354 = vmatprep.subr.bf16.mxu0 %v226
  %355 = vmatpush1.bf16.msra.mxu0 %v225
  %356 = vmatprep.subr.bf16.mxu0 %v224
  %357 = vmatpush1.bf16.msra.mxu0 %v223
  %358 = vmatprep.subr.bf16.mxu0 %v222
  %359 = vmatpush1.bf16.msra.mxu0 %v221
  %360 = vmatprep.subr.bf16.mxu0 %v220
  %361 = vmatpush1.bf16.msra.mxu0 %v219
  %362 = vmatprep.subr.bf16.mxu0 0
  %363 = vmatpush2.bf16.msra.mxu0 0
  %364 = vmatprep.subr.bf16.mxu0 0
  %365 = vmatpush2.bf16.msra.mxu0 0
  %366 = vmatprep.subr.bf16.mxu0 0
  %367 = vmatpush2.bf16.msra.mxu0 0
  %368 = vmatprep.subr.bf16.mxu0 0
  %369 = vmatpush2.bf16.msra.mxu0 0
  %370 = vmatprep.subr.bf16.mxu0 0
  %371 = vmatpush2.bf16.msra.mxu0 0
  %372 = vmatprep.subr.bf16.mxu0 0
  %373 = vmatpush2.bf16.msra.mxu0 0
  %374 = vmatprep.subr.bf16.mxu0 0
  %375 = vmatpush2.bf16.msra.mxu0 0
  %376 = vmatprep.subr.bf16.mxu0 0
  %377 = vmatpush2.bf16.msra.mxu0 0
  %378 = vmatprep.mubr.bf16.mxu0 0
  %379 = vmatmul.mubr.bf16.gmra.mxu0 %v344
  %v380 = vpop.f32.mrf.mxu0
  %v381 = vadd.f32 0.0, %v380
  %v382 = vpop.f32.mrf.mxu0
  %v383 = vadd.f32 0.0, %v382
  %v384 = vpop.f32.mrf.mxu0
  %v385 = vpop.f32.mrf.mxu0
  %386 = vdwg.mxu0
  %v388 = vrot.slane %v129, 2
  %v390 = vadd.f32 %v381, %v388
  %v391 = vrot.slane %v191, 4
  %v393 = vadd.f32 %v383, %v391
  %v394 = vxor.u32 %v390, 2147483648
  %v395 = vmul.f32 %v394, 1.442695
  %v396 = vpow.pop %v395
  %v397 = vadd.f32 %v396, 1.0
  %v398 = vrcp.pop %v397
  %v399 = vmul.f32 1.0, %v398
  %v400 = vtanh.pop %v390
  %v401 = vxor.u32 %v393, 2147483648
  %v402 = vmul.f32 %v401, 1.442695
  %v403 = vpow.pop %v402
  %v404 = vadd.f32 %v403, 1.0
  %v405 = vrcp.pop %v404
  %v406 = vmul.f32 1.0, %v405
  %v407 = vtanh.pop %v393
  %v408 = vmul.f32 %v399, %v309
  %410 = vrot.lane.b32.xlu0 %v400, 32
  %v411 = vpop.permute.xlu0 %410
  %v413 = vmul.f32 %v399, %v411
  %415 = vrot.lane.b32.xlu0 %v413, 32
  %v416 = vpop.permute.xlu0 %415
  %v418 = vadd.f32 %v408, %v416
  %v419 = vtanh.pop %v418
  %421 = vrot.lane.b32.xlu0 %v419, 32
  %v422 = vpop.permute.xlu0 %421
  %v424 = vmul.f32 %v399, %v422
  %v425 = vmul.f32 %v406, %v326
  %427 = vrot.lane.b32.xlu0 %v407, 32
  %v428 = vpop.permute.xlu0 %427
  %v430 = vmul.f32 %v406, %v428
  %432 = vrot.lane.b32.xlu0 %v430, 32
  %v433 = vpop.permute.xlu0 %432
  %v435 = vadd.f32 %v425, %v433
  %v436 = vtanh.pop %v435
  %438 = vrot.lane.b32.xlu0 %v436, 32
  %v439 = vpop.permute.xlu0 %438
  %v441 = vmul.f32 %v406, %v439
  %443 = vrot.lane.b32.xlu0 %v424, 64
  %v444 = vpop.permute.xlu0 %443
  %447 = vrot.lane.b32.xlu0 %v441, 96
  %v448 = vpop.permute.xlu0 %447
  %v450 = vsel %vm90, %v444, %v448
  %v451 = vpack.c.bf16 %v450, %v450
  %v453 = vsel %vm235, %v451, 0
  %455 = vmatprep.subr.bf16.mxu0 0
  %456 = vmatpush1.bf16.msra.mxu0 0
  %457 = vmatprep.subr.bf16.mxu0 0
  %458 = vmatpush1.bf16.msra.mxu0 0
  %459 = vmatprep.subr.bf16.mxu0 0
  %460 = vmatpush1.bf16.msra.mxu0 0
  %461 = vmatprep.subr.bf16.mxu0 0
  %462 = vmatpush1.bf16.msra.mxu0 0
  %463 = vmatprep.subr.bf16.mxu0 %v226
  %464 = vmatpush1.bf16.msra.mxu0 %v225
  %465 = vmatprep.subr.bf16.mxu0 %v224
  %466 = vmatpush1.bf16.msra.mxu0 %v223
  %467 = vmatprep.subr.bf16.mxu0 %v222
  %468 = vmatpush1.bf16.msra.mxu0 %v221
  %469 = vmatprep.subr.bf16.mxu0 %v220
  %470 = vmatpush1.bf16.msra.mxu0 %v219
  %471 = vmatprep.subr.bf16.mxu0 0
  %472 = vmatpush2.bf16.msra.mxu0 0
  %473 = vmatprep.subr.bf16.mxu0 0
  %474 = vmatpush2.bf16.msra.mxu0 0
  %475 = vmatprep.subr.bf16.mxu0 0
  %476 = vmatpush2.bf16.msra.mxu0 0
  %477 = vmatprep.subr.bf16.mxu0 0
  %478 = vmatpush2.bf16.msra.mxu0 0
  %479 = vmatprep.subr.bf16.mxu0 0
  %480 = vmatpush2.bf16.msra.mxu0 0
  %481 = vmatprep.subr.bf16.mxu0 0
  %482 = vmatpush2.bf16.msra.mxu0 0
  %483 = vmatprep.subr.bf16.mxu0 0
  %484 = vmatpush2.bf16.msra.mxu0 0
  %485 = vmatprep.subr.bf16.mxu0 0
  %486 = vmatpush2.bf16.msra.mxu0 0
  %487 = vmatprep.mubr.bf16.mxu0 0
  %488 = vmatmul.mubr.bf16.gmra.mxu0 %v453
  %v489 = vpop.f32.mrf.mxu0
  %v490 = vadd.f32 0.0, %v489
  %v491 = vpop.f32.mrf.mxu0
  %v492 = vadd.f32 0.0, %v491
  %v493 = vpop.f32.mrf.mxu0
  %v494 = vpop.f32.mrf.mxu0
  %495 = vdwg.mxu0
  %v496 = vrot.slane %v129, 4
  %v498 = vadd.f32 %v490, %v496
  %v499 = vrot.slane %v191, 2
  %v501 = vadd.f32 %v492, %v499
  %v502 = vxor.u32 %v498, 2147483648
  %v503 = vmul.f32 %v502, 1.442695
  %v504 = vpow.pop %v503
  %v505 = vadd.f32 %v504, 1.0
  %v506 = vrcp.pop %v505
  %v507 = vmul.f32 1.0, %v506
  %v508 = vtanh.pop %v498
  %v509 = vxor.u32 %v501, 2147483648
  %v510 = vmul.f32 %v509, 1.442695
  %v511 = vpow.pop %v510
  %v512 = vadd.f32 %v511, 1.0
  %v513 = vrcp.pop %v512
  %v514 = vmul.f32 1.0, %v513
  %v515 = vtanh.pop %v501
  %v516 = vmul.f32 %v507, %v418
  %518 = vrot.lane.b32.xlu0 %v508, 32
  %v519 = vpop.permute.xlu0 %518
  %v521 = vmul.f32 %v507, %v519
  %523 = vrot.lane.b32.xlu0 %v521, 32
  %v524 = vpop.permute.xlu0 %523
  %v526 = vadd.f32 %v516, %v524
  %v527 = vtanh.pop %v526
  %529 = vrot.lane.b32.xlu0 %v527, 32
  %v530 = vpop.permute.xlu0 %529
  %v532 = vmul.f32 %v507, %v530
  %v533 = vmul.f32 %v514, %v435
  %535 = vrot.lane.b32.xlu0 %v515, 32
  %v536 = vpop.permute.xlu0 %535
  %v538 = vmul.f32 %v514, %v536
  %540 = vrot.lane.b32.xlu0 %v538, 32
  %v541 = vpop.permute.xlu0 %540
  %v543 = vadd.f32 %v533, %v541
  %v544 = vtanh.pop %v543
  %546 = vrot.lane.b32.xlu0 %v544, 32
  %v547 = vpop.permute.xlu0 %546
  %v549 = vmul.f32 %v514, %v547
  %551 = vrot.lane.b32.xlu0 %v532, 64
  %v552 = vpop.permute.xlu0 %551
  %555 = vrot.lane.b32.xlu0 %v549, 96
  %v556 = vpop.permute.xlu0 %555
  %v558 = vsel %vm90, %v552, %v556
  %v559 = vpack.c.bf16 %v558, %v558
  %v561 = vsel %vm235, %v559, 0
  %563 = vmatprep.subr.bf16.mxu0 0
  %564 = vmatpush1.bf16.msra.mxu0 0
  %565 = vmatprep.subr.bf16.mxu0 0
  %566 = vmatpush1.bf16.msra.mxu0 0
  %567 = vmatprep.subr.bf16.mxu0 0
  %568 = vmatpush1.bf16.msra.mxu0 0
  %569 = vmatprep.subr.bf16.mxu0 0
  %570 = vmatpush1.bf16.msra.mxu0 0
  %571 = vmatprep.subr.bf16.mxu0 %v226
  %572 = vmatpush1.bf16.msra.mxu0 %v225
  %573 = vmatprep.subr.bf16.mxu0 %v224
  %574 = vmatpush1.bf16.msra.mxu0 %v223
  %575 = vmatprep.subr.bf16.mxu0 %v222
  %576 = vmatpush1.bf16.msra.mxu0 %v221
  %577 = vmatprep.subr.bf16.mxu0 %v220
  %578 = vmatpush1.bf16.msra.mxu0 %v219
  %579 = vmatprep.subr.bf16.mxu0 0
  %580 = vmatpush2.bf16.msra.mxu0 0
  %581 = vmatprep.subr.bf16.mxu0 0
  %582 = vmatpush2.bf16.msra.mxu0 0
  %583 = vmatprep.subr.bf16.mxu0 0
  %584 = vmatpush2.bf16.msra.mxu0 0
  %585 = vmatprep.subr.bf16.mxu0 0
  %586 = vmatpush2.bf16.msra.mxu0 0
  %587 = vmatprep.subr.bf16.mxu0 0
  %588 = vmatpush2.bf16.msra.mxu0 0
  %589 = vmatprep.subr.bf16.mxu0 0
  %590 = vmatpush2.bf16.msra.mxu0 0
  %591 = vmatprep.subr.bf16.mxu0 0
  %592 = vmatpush2.bf16.msra.mxu0 0
  %593 = vmatprep.subr.bf16.mxu0 0
  %594 = vmatpush2.bf16.msra.mxu0 0
  %595 = vmatprep.mubr.bf16.mxu0 0
  %596 = vmatmul.mubr.bf16.gmra.mxu0 %v561
  %v597 = vpop.f32.mrf.mxu0
  %v598 = vadd.f32 0.0, %v597
  %v599 = vpop.f32.mrf.mxu0
  %v600 = vadd.f32 0.0, %v599
  %v601 = vpop.f32.mrf.mxu0
  %v602 = vpop.f32.mrf.mxu0
  %603 = vdwg.mxu0
  %v604 = vrot.slane %v129, 6
  %v606 = vadd.f32 %v598, %v604
  %v607 = vadd.f32 %v600, %v191
  %v608 = vxor.u32 %v606, 2147483648
  %v609 = vmul.f32 %v608, 1.442695
  %v610 = vpow.pop %v609
  %v611 = vadd.f32 %v610, 1.0
  %v612 = vrcp.pop %v611
  %v613 = vmul.f32 1.0, %v612
  %v614 = vtanh.pop %v606
  %v615 = vxor.u32 %v607, 2147483648
  %v616 = vmul.f32 %v615, 1.442695
  %v617 = vpow.pop %v616
  %v618 = vadd.f32 %v617, 1.0
  %v619 = vrcp.pop %v618
  %v620 = vmul.f32 1.0, %v619
  %v621 = vtanh.pop %v607
  %v622 = vmul.f32 %v613, %v526
  %624 = vrot.lane.b32.xlu0 %v614, 32
  %v625 = vpop.permute.xlu0 %624
  %v627 = vmul.f32 %v613, %v625
  %629 = vrot.lane.b32.xlu0 %v627, 32
  %v630 = vpop.permute.xlu0 %629
  %v632 = vadd.f32 %v622, %v630
  %v633 = vtanh.pop %v632
  %635 = vrot.lane.b32.xlu0 %v633, 32
  %v636 = vpop.permute.xlu0 %635
  %v638 = vmul.f32 %v613, %v636
  %v639 = vmul.f32 %v620, %v543
  %641 = vrot.lane.b32.xlu0 %v621, 32
  %v642 = vpop.permute.xlu0 %641
  %v644 = vmul.f32 %v620, %v642
  %646 = vrot.lane.b32.xlu0 %v644, 32
  %v647 = vpop.permute.xlu0 %646
  %v649 = vadd.f32 %v639, %v647
  %v650 = vtanh.pop %v649
  %652 = vrot.lane.b32.xlu0 %v650, 32
  %v653 = vpop.permute.xlu0 %652
  %v655 = vmul.f32 %v620, %v653
  %657 = vrot.lane.b32.xlu0 %v638, 64
  %v658 = vpop.permute.xlu0 %657
  %661 = vrot.lane.b32.xlu0 %v655, 96
  %v662 = vpop.permute.xlu0 %661
  %v664 = vsel %vm90, %v658, %v662
  %v665 = vpack.c.bf16 %v664, %v664
  %v667 = vsel %vm235, %v665, 0
  %669 = vmatprep.subr.bf16.mxu0 0
  %670 = vmatpush1.bf16.msra.mxu0 0
  %671 = vmatprep.subr.bf16.mxu0 0
  %672 = vmatpush1.bf16.msra.mxu0 0
  %673 = vmatprep.subr.bf16.mxu0 0
  %674 = vmatpush1.bf16.msra.mxu0 0
  %675 = vmatprep.subr.bf16.mxu0 0
  %676 = vmatpush1.bf16.msra.mxu0 0
  %677 = vmatprep.subr.bf16.mxu0 %v226
  %678 = vmatpush1.bf16.msra.mxu0 %v225
  %679 = vmatprep.subr.bf16.mxu0 %v224
  %680 = vmatpush1.bf16.msra.mxu0 %v223
  %681 = vmatprep.subr.bf16.mxu0 %v222
  %682 = vmatpush1.bf16.msra.mxu0 %v221
  %683 = vmatprep.subr.bf16.mxu0 %v220
  %684 = vmatpush1.bf16.msra.mxu0 %v219
  %685 = vmatprep.subr.bf16.mxu0 0
  %686 = vmatpush2.bf16.msra.mxu0 0
  %687 = vmatprep.subr.bf16.mxu0 0
  %688 = vmatpush2.bf16.msra.mxu0 0
  %689 = vmatprep.subr.bf16.mxu0 0
  %690 = vmatpush2.bf16.msra.mxu0 0
  %691 = vmatprep.subr.bf16.mxu0 0
  %692 = vmatpush2.bf16.msra.mxu0 0
  %693 = vmatprep.subr.bf16.mxu0 0
  %694 = vmatpush2.bf16.msra.mxu0 0
  %695 = vmatprep.subr.bf16.mxu0 0
  %696 = vmatpush2.bf16.msra.mxu0 0
  %697 = vmatprep.subr.bf16.mxu0 0
  %698 = vmatpush2.bf16.msra.mxu0 0
  %699 = vmatprep.subr.bf16.mxu0 0
  %700 = vmatpush2.bf16.msra.mxu0 0
  %701 = vmatprep.mubr.bf16.mxu0 0
  %702 = vmatmul.mubr.bf16.gmra.mxu0 %v667
  %v703 = vpop.f32.mrf.mxu0
  %v704 = vadd.f32 0.0, %v703
  %v705 = vpop.f32.mrf.mxu0
  %v706 = vadd.f32 0.0, %v705
  %v707 = vpop.f32.mrf.mxu0
  %v708 = vpop.f32.mrf.mxu0
  %709 = vdwg.mxu0
  %v710 = vadd.f32 %v704, %v132
  %v712 = vrot.slane %v188, 6
  %v714 = vadd.f32 %v706, %v712
  %v715 = vxor.u32 %v710, 2147483648
  %v716 = vmul.f32 %v715, 1.442695
  %v717 = vpow.pop %v716
  %v718 = vadd.f32 %v717, 1.0
  %v719 = vrcp.pop %v718
  %v720 = vmul.f32 1.0, %v719
  %v721 = vtanh.pop %v710
  %v722 = vxor.u32 %v714, 2147483648
  %v723 = vmul.f32 %v722, 1.442695
  %v724 = vpow.pop %v723
  %v725 = vadd.f32 %v724, 1.0
  %v726 = vrcp.pop %v725
  %v727 = vmul.f32 1.0, %v726
  %v728 = vtanh.pop %v714
  %v729 = vmul.f32 %v720, %v632
  %731 = vrot.lane.b32.xlu0 %v721, 32
  %v732 = vpop.permute.xlu0 %731
  %v734 = vmul.f32 %v720, %v732
  %736 = vrot.lane.b32.xlu0 %v734, 32
  %v737 = vpop.permute.xlu0 %736
  %v739 = vadd.f32 %v729, %v737
  %v740 = vtanh.pop %v739
  %742 = vrot.lane.b32.xlu0 %v740, 32
  %v743 = vpop.permute.xlu0 %742
  %v745 = vmul.f32 %v720, %v743
  %v746 = vmul.f32 %v727, %v649
  %748 = vrot.lane.b32.xlu0 %v728, 32
  %v749 = vpop.permute.xlu0 %748
  %v751 = vmul.f32 %v727, %v749
  %753 = vrot.lane.b32.xlu0 %v751, 32
  %v754 = vpop.permute.xlu0 %753
  %v756 = vadd.f32 %v746, %v754
  %v757 = vtanh.pop %v756
  %759 = vrot.lane.b32.xlu0 %v757, 32
  %v760 = vpop.permute.xlu0 %759
  %v762 = vmul.f32 %v727, %v760
  %764 = vrot.lane.b32.xlu0 %v745, 64
  %v765 = vpop.permute.xlu0 %764
  %768 = vrot.lane.b32.xlu0 %v762, 96
  %v769 = vpop.permute.xlu0 %768
  %v771 = vsel %vm90, %v765, %v769
  %v772 = vpack.c.bf16 %v771, %v771
  %v774 = vsel %vm235, %v772, 0
  %776 = vmatprep.subr.bf16.mxu0 0
  %777 = vmatpush1.bf16.msra.mxu0 0
  %778 = vmatprep.subr.bf16.mxu0 0
  %779 = vmatpush1.bf16.msra.mxu0 0
  %780 = vmatprep.subr.bf16.mxu0 0
  %781 = vmatpush1.bf16.msra.mxu0 0
  %782 = vmatprep.subr.bf16.mxu0 0
  %783 = vmatpush1.bf16.msra.mxu0 0
  %784 = vmatprep.subr.bf16.mxu0 %v226
  %785 = vmatpush1.bf16.msra.mxu0 %v225
  %786 = vmatprep.subr.bf16.mxu0 %v224
  %787 = vmatpush1.bf16.msra.mxu0 %v223
  %788 = vmatprep.subr.bf16.mxu0 %v222
  %789 = vmatpush1.bf16.msra.mxu0 %v221
  %790 = vmatprep.subr.bf16.mxu0 %v220
  %791 = vmatpush1.bf16.msra.mxu0 %v219
  %792 = vmatprep.subr.bf16.mxu0 0
  %793 = vmatpush2.bf16.msra.mxu0 0
  %794 = vmatprep.subr.bf16.mxu0 0
  %795 = vmatpush2.bf16.msra.mxu0 0
  %796 = vmatprep.subr.bf16.mxu0 0
  %797 = vmatpush2.bf16.msra.mxu0 0
  %798 = vmatprep.subr.bf16.mxu0 0
  %799 = vmatpush2.bf16.msra.mxu0 0
  %800 = vmatprep.subr.bf16.mxu0 0
  %801 = vmatpush2.bf16.msra.mxu0 0
  %802 = vmatprep.subr.bf16.mxu0 0
  %803 = vmatpush2.bf16.msra.mxu0 0
  %804 = vmatprep.subr.bf16.mxu0 0
  %805 = vmatpush2.bf16.msra.mxu0 0
  %806 = vmatprep.subr.bf16.mxu0 0
  %807 = vmatpush2.bf16.msra.mxu0 0
  %808 = vmatprep.mubr.bf16.mxu0 0
  %809 = vmatmul.mubr.bf16.gmra.mxu0 %v774
  %v810 = vpop.f32.mrf.mxu0
  %v811 = vadd.f32 0.0, %v810
  %v812 = vpop.f32.mrf.mxu0
  %v813 = vadd.f32 0.0, %v812
  %v814 = vpop.f32.mrf.mxu0
  %v815 = vpop.f32.mrf.mxu0
  %816 = vdwg.mxu0
  %v818 = vrot.slane %v132, 2
  %v820 = vadd.f32 %v811, %v818
  %v821 = vrot.slane %v188, 4
  %v823 = vadd.f32 %v813, %v821
  %v824 = vxor.u32 %v820, 2147483648
  %v825 = vmul.f32 %v824, 1.442695
  %v826 = vpow.pop %v825
  %v827 = vadd.f32 %v826, 1.0
  %v828 = vrcp.pop %v827
  %v829 = vmul.f32 1.0, %v828
  %v830 = vtanh.pop %v820
  %v831 = vxor.u32 %v823, 2147483648
  %v832 = vmul.f32 %v831, 1.442695
  %v833 = vpow.pop %v832
  %v834 = vadd.f32 %v833, 1.0
  %v835 = vrcp.pop %v834
  %v836 = vmul.f32 1.0, %v835
  %v837 = vtanh.pop %v823
  %v838 = vmul.f32 %v829, %v739
  %840 = vrot.lane.b32.xlu0 %v830, 32
  %v841 = vpop.permute.xlu0 %840
  %v843 = vmul.f32 %v829, %v841
  %845 = vrot.lane.b32.xlu0 %v843, 32
  %v846 = vpop.permute.xlu0 %845
  %v848 = vadd.f32 %v838, %v846
  %v849 = vtanh.pop %v848
  %851 = vrot.lane.b32.xlu0 %v849, 32
  %v852 = vpop.permute.xlu0 %851
  %v854 = vmul.f32 %v829, %v852
  %v855 = vmul.f32 %v836, %v756
  %857 = vrot.lane.b32.xlu0 %v837, 32
  %v858 = vpop.permute.xlu0 %857
  %v860 = vmul.f32 %v836, %v858
  %862 = vrot.lane.b32.xlu0 %v860, 32
  %v863 = vpop.permute.xlu0 %862
  %v865 = vadd.f32 %v855, %v863
  %v866 = vtanh.pop %v865
  %868 = vrot.lane.b32.xlu0 %v866, 32
  %v869 = vpop.permute.xlu0 %868
  %v871 = vmul.f32 %v836, %v869
  %873 = vrot.lane.b32.xlu0 %v854, 64
  %v874 = vpop.permute.xlu0 %873
  %877 = vrot.lane.b32.xlu0 %v871, 96
  %v878 = vpop.permute.xlu0 %877
  %v880 = vsel %vm90, %v874, %v878
  %v881 = vpack.c.bf16 %v880, %v880
  %v883 = vsel %vm235, %v881, 0
  %885 = vmatprep.subr.bf16.mxu0 0
  %886 = vmatpush1.bf16.msra.mxu0 0
  %887 = vmatprep.subr.bf16.mxu0 0
  %888 = vmatpush1.bf16.msra.mxu0 0
  %889 = vmatprep.subr.bf16.mxu0 0
  %890 = vmatpush1.bf16.msra.mxu0 0
  %891 = vmatprep.subr.bf16.mxu0 0
  %892 = vmatpush1.bf16.msra.mxu0 0
  %893 = vmatprep.subr.bf16.mxu0 %v226
  %894 = vmatpush1.bf16.msra.mxu0 %v225
  %895 = vmatprep.subr.bf16.mxu0 %v224
  %896 = vmatpush1.bf16.msra.mxu0 %v223
  %897 = vmatprep.subr.bf16.mxu0 %v222
  %898 = vmatpush1.bf16.msra.mxu0 %v221
  %899 = vmatprep.subr.bf16.mxu0 %v220
  %900 = vmatpush1.bf16.msra.mxu0 %v219
  %901 = vmatprep.subr.bf16.mxu0 0
  %902 = vmatpush2.bf16.msra.mxu0 0
  %903 = vmatprep.subr.bf16.mxu0 0
  %904 = vmatpush2.bf16.msra.mxu0 0
  %905 = vmatprep.subr.bf16.mxu0 0
  %906 = vmatpush2.bf16.msra.mxu0 0
  %907 = vmatprep.subr.bf16.mxu0 0
  %908 = vmatpush2.bf16.msra.mxu0 0
  %909 = vmatprep.subr.bf16.mxu0 0
  %910 = vmatpush2.bf16.msra.mxu0 0
  %911 = vmatprep.subr.bf16.mxu0 0
  %912 = vmatpush2.bf16.msra.mxu0 0
  %913 = vmatprep.subr.bf16.mxu0 0
  %914 = vmatpush2.bf16.msra.mxu0 0
  %915 = vmatprep.subr.bf16.mxu0 0
  %916 = vmatpush2.bf16.msra.mxu0 0
  %917 = vmatprep.mubr.bf16.mxu0 0
  %918 = vmatmul.mubr.bf16.gmra.mxu0 %v883
  %v919 = vpop.f32.mrf.mxu0
  %v920 = vadd.f32 0.0, %v919
  %v921 = vpop.f32.mrf.mxu0
  %v922 = vadd.f32 0.0, %v921
  %v923 = vpop.f32.mrf.mxu0
  %v924 = vpop.f32.mrf.mxu0
  %925 = vdwg.mxu0
  %v926 = vrot.slane %v132, 4
  %v928 = vadd.f32 %v920, %v926
  %v929 = vrot.slane %v188, 2
  %v931 = vadd.f32 %v922, %v929
  %v932 = vxor.u32 %v928, 2147483648
  %v933 = vmul.f32 %v932, 1.442695
  %v934 = vpow.pop %v933
  %v935 = vadd.f32 %v934, 1.0
  %v936 = vrcp.pop %v935
  %v937 = vmul.f32 1.0, %v936
  %v938 = vtanh.pop %v928
  %v939 = vxor.u32 %v931, 2147483648
  %v940 = vmul.f32 %v939, 1.442695
  %v941 = vpow.pop %v940
  %v942 = vadd.f32 %v941, 1.0
  %v943 = vrcp.pop %v942
  %v944 = vmul.f32 1.0, %v943
  %v945 = vtanh.pop %v931
  %v946 = vmul.f32 %v937, %v848
  %948 = vrot.lane.b32.xlu0 %v938, 32
  %v949 = vpop.permute.xlu0 %948
  %v951 = vmul.f32 %v937, %v949
  %953 = vrot.lane.b32.xlu0 %v951, 32
  %v954 = vpop.permute.xlu0 %953
  %v956 = vadd.f32 %v946, %v954
  %v957 = vtanh.pop %v956
  %959 = vrot.lane.b32.xlu0 %v957, 32
  %v960 = vpop.permute.xlu0 %959
  %v962 = vmul.f32 %v937, %v960
  %v963 = vmul.f32 %v944, %v865
  %965 = vrot.lane.b32.xlu0 %v945, 32
  %v966 = vpop.permute.xlu0 %965
  %v968 = vmul.f32 %v944, %v966
  %970 = vrot.lane.b32.xlu0 %v968, 32
  %v971 = vpop.permute.xlu0 %970
  %v973 = vadd.f32 %v963, %v971
  %v974 = vtanh.pop %v973
  %976 = vrot.lane.b32.xlu0 %v974, 32
  %v977 = vpop.permute.xlu0 %976
  %v979 = vmul.f32 %v944, %v977
  %981 = vrot.lane.b32.xlu0 %v962, 64
  %v982 = vpop.permute.xlu0 %981
  %985 = vrot.lane.b32.xlu0 %v979, 96
  %v986 = vpop.permute.xlu0 %985
  %v988 = vsel %vm90, %v982, %v986
  %v989 = vpack.c.bf16 %v988, %v988
  %v991 = vsel %vm235, %v989, 0
  %993 = vmatprep.subr.bf16.mxu0 0
  %994 = vmatpush1.bf16.msra.mxu0 0
  %995 = vmatprep.subr.bf16.mxu0 0
  %996 = vmatpush1.bf16.msra.mxu0 0
  %997 = vmatprep.subr.bf16.mxu0 0
  %998 = vmatpush1.bf16.msra.mxu0 0
  %999 = vmatprep.subr.bf16.mxu0 0
  %1000 = vmatpush1.bf16.msra.mxu0 0
  %1001 = vmatprep.subr.bf16.mxu0 %v226
  %1002 = vmatpush1.bf16.msra.mxu0 %v225
  %1003 = vmatprep.subr.bf16.mxu0 %v224
  %1004 = vmatpush1.bf16.msra.mxu0 %v223
  %1005 = vmatprep.subr.bf16.mxu0 %v222
  %1006 = vmatpush1.bf16.msra.mxu0 %v221
  %1007 = vmatprep.subr.bf16.mxu0 %v220
  %1008 = vmatpush1.bf16.msra.mxu0 %v219
  %1009 = vmatprep.subr.bf16.mxu0 0
  %1010 = vmatpush2.bf16.msra.mxu0 0
  %1011 = vmatprep.subr.bf16.mxu0 0
  %1012 = vmatpush2.bf16.msra.mxu0 0
  %1013 = vmatprep.subr.bf16.mxu0 0
  %1014 = vmatpush2.bf16.msra.mxu0 0
  %1015 = vmatprep.subr.bf16.mxu0 0
  %1016 = vmatpush2.bf16.msra.mxu0 0
  %1017 = vmatprep.subr.bf16.mxu0 0
  %1018 = vmatpush2.bf16.msra.mxu0 0
  %1019 = vmatprep.subr.bf16.mxu0 0
  %1020 = vmatpush2.bf16.msra.mxu0 0
  %1021 = vmatprep.subr.bf16.mxu0 0
  %1022 = vmatpush2.bf16.msra.mxu0 0
  %1023 = vmatprep.subr.bf16.mxu0 0
  %1024 = vmatpush2.bf16.msra.mxu0 0
  %1025 = vmatprep.mubr.bf16.mxu0 0
  %1026 = vmatmul.mubr.bf16.gmra.mxu0 %v991
  %v1027 = vpop.f32.mrf.mxu0
  %v1028 = vadd.f32 0.0, %v1027
  %v1029 = vpop.f32.mrf.mxu0
  %v1030 = vadd.f32 0.0, %v1029
  %v1031 = vpop.f32.mrf.mxu0
  %v1032 = vpop.f32.mrf.mxu0
  %1033 = vdwg.mxu0
  %v1034 = vrot.slane %v132, 6
  %v1036 = vadd.f32 %v1028, %v1034
  %v1037 = vadd.f32 %v1030, %v188
  %v1038 = vxor.u32 %v1036, 2147483648
  %v1039 = vmul.f32 %v1038, 1.442695
  %v1040 = vpow.pop %v1039
  %v1041 = vadd.f32 %v1040, 1.0
  %v1042 = vrcp.pop %v1041
  %v1043 = vmul.f32 1.0, %v1042
  %v1044 = vtanh.pop %v1036
  %v1045 = vxor.u32 %v1037, 2147483648
  %v1046 = vmul.f32 %v1045, 1.442695
  %v1047 = vpow.pop %v1046
  %v1048 = vadd.f32 %v1047, 1.0
  %v1049 = vrcp.pop %v1048
  %v1050 = vmul.f32 1.0, %v1049
  %v1051 = vtanh.pop %v1037
  %v1052 = vmul.f32 %v1043, %v956
  %1054 = vrot.lane.b32.xlu0 %v1044, 32
  %v1055 = vpop.permute.xlu0 %1054
  %v1057 = vmul.f32 %v1043, %v1055
  %1059 = vrot.lane.b32.xlu0 %v1057, 32
  %v1060 = vpop.permute.xlu0 %1059
  %v1062 = vadd.f32 %v1052, %v1060
  %v1063 = vtanh.pop %v1062
  %1065 = vrot.lane.b32.xlu0 %v1063, 32
  %v1066 = vpop.permute.xlu0 %1065
  %v1068 = vmul.f32 %v1043, %v1066
  %v1069 = vmul.f32 %v1050, %v973
  %1071 = vrot.lane.b32.xlu0 %v1051, 32
  %v1072 = vpop.permute.xlu0 %1071
  %v1074 = vmul.f32 %v1050, %v1072
  %1076 = vrot.lane.b32.xlu0 %v1074, 32
  %v1077 = vpop.permute.xlu0 %1076
  %v1079 = vadd.f32 %v1069, %v1077
  %v1080 = vtanh.pop %v1079
  %1082 = vrot.lane.b32.xlu0 %v1080, 32
  %v1083 = vpop.permute.xlu0 %1082
  %v1085 = vmul.f32 %v1050, %v1083
  %1087 = vrot.lane.b32.xlu0 %v1085, 96
  %v1088 = vpop.permute.xlu0 %1087
  %v1090 = vsel %vm90, %v335, %v1088
  %v1091 = vsel %vm90, %v444, %v986
  %v1092 = vsel %vm90, %v552, %v878
  %v1093 = vsel %vm90, %v658, %v769
  %v1094 = vsel %vm90, %v765, %v662
  %v1095 = vsel %vm90, %v874, %v556
  %v1096 = vsel %vm90, %v982, %v448
  %1098 = vrot.lane.b32.xlu0 %v1068, 64
  %v1099 = vpop.permute.xlu0 %1098
  %v1101 = vsel %vm90, %v1099, %v339
  %v1103 = vrot.slane %v1091, 6
  %v1106 = vrot.slane %v1092, 4
  %v1109 = vrot.slane %v1093, 2
  %v1112 = vrot.slane %v1095, 6
  %v1115 = vrot.slane %v1096, 4
  %v1118 = vrot.slane %v1101, 2
  %vm1120 = vcmask 1041408
  %v1121 = vsel %vm1120, %v1090, %v1103
  %vm1122 = vcmask 1043456
  %v1123 = vsel %vm1122, %v1121, %v1106
  %vm1124 = vcmask 1045504
  %v1125 = vsel %vm1124, %v1123, %v1109
  %v1126 = vsel %vm1120, %v1094, %v1112
  %v1127 = vsel %vm1122, %v1126, %v1115
  %v1128 = vsel %vm1124, %v1127, %v1118
  %v1129 = vpack.c.bf16 %v1128, %v1125
  %v1130 = vld [vmem:[%s6] sm:$0xf]
  %v1131 = vld [vmem:[%s6 + $0x4] sm:$0xf]
  %v1132 = vld [vmem:[%s6 + $0x8] sm:$0xf]
  %v1133 = vld [vmem:[%s6 + $0xc] sm:$0xf]
  %v1134 = vld [vmem:[%s6 + $0x10] sm:$0xf]
  %v1135 = vld [vmem:[%s6 + $0x14] sm:$0xf]
  %v1136 = vld [vmem:[%s6 + $0x18] sm:$0xf]
  %v1137 = vld [vmem:[%s6 + $0x1c] sm:$0xf]
  %v1138 = vld [vmem:[%s7] sm:$0xf]
  %v1139 = vld [vmem:[%s7 + $0x4] sm:$0xf]
  %v1140 = vld [vmem:[%s7 + $0x8] sm:$0xf]
  %v1141 = vld [vmem:[%s7 + $0xc] sm:$0xf]
  %v1142 = vld [vmem:[%s7 + $0x10] sm:$0xf]
  %v1143 = vld [vmem:[%s7 + $0x14] sm:$0xf]
  %v1144 = vld [vmem:[%s7 + $0x18] sm:$0xf]
  %v1145 = vld [vmem:[%s7 + $0x1c] sm:$0xf]
  %v1146 = vld [vmem:[%s8] sm:$0xff]
  %v1147 = vld [vmem:[%s8 + $0x8] sm:$0xff]
  %v1148 = vld [vmem:[%s8 + $0x10] sm:$0xff]
  %v1149 = vld [vmem:[%s8 + $0x18] sm:$0xff]
  %v1150 = vld [vmem:[%s8 + $0x20] sm:$0xff]
  %v1151 = vld [vmem:[%s8 + $0x28] sm:$0xff]
  %v1152 = vld [vmem:[%s8 + $0x30] sm:$0xff]
  %v1153 = vld [vmem:[%s8 + $0x38] sm:$0xff]
  %v1154 = vld [vmem:[%s9] sm:$0x1]
  %v1155 = vld [vmem:[%s10] sm:$0x1]
  %v1157 = vlaneseq
  %v1158 = vshrl.u32 %v1157, 7
  %v1159 = vsub.s32 0, %v1158
  %v1160 = vrot.slane %v1154, %v1159
  %v1170 = vunpack.c.l.b16 %v1130
  %v1171 = vunpack.c.l.b16 %v1131
  %v1172 = vunpack.c.l.b16 %v1132
  %v1173 = vunpack.c.l.b16 %v1133
  %v1174 = vunpack.c.l.b16 %v1134
  %v1175 = vunpack.c.l.b16 %v1135
  %v1176 = vunpack.c.l.b16 %v1136
  %v1177 = vunpack.c.l.b16 %v1137
  %v1178 = vpack.c.b16 %v1171, %v1170
  %v1179 = vpack.c.b16 %v1173, %v1172
  %v1180 = vpack.c.b16 %v1175, %v1174
  %v1181 = vpack.c.b16 %v1177, %v1176
  %v1187 = vsel %vm235, %v1129, 0
  %1189 = vmatprep.subr.bf16.mxu0 0
  %1190 = vmatpush1.bf16.msra.mxu0 0
  %1191 = vmatprep.subr.bf16.mxu0 0
  %1192 = vmatpush1.bf16.msra.mxu0 0
  %1193 = vmatprep.subr.bf16.mxu0 0
  %1194 = vmatpush1.bf16.msra.mxu0 0
  %1195 = vmatprep.subr.bf16.mxu0 0
  %1196 = vmatpush1.bf16.msra.mxu0 0
  %1197 = vmatprep.subr.bf16.mxu0 0
  %1198 = vmatpush1.bf16.msra.mxu0 %v1181
  %1199 = vmatprep.subr.bf16.mxu0 0
  %1200 = vmatpush1.bf16.msra.mxu0 %v1180
  %1201 = vmatprep.subr.bf16.mxu0 0
  %1202 = vmatpush1.bf16.msra.mxu0 %v1179
  %1203 = vmatprep.subr.bf16.mxu0 0
  %1204 = vmatpush1.bf16.msra.mxu0 %v1178
  %1205 = vmatprep.subr.bf16.mxu0 0
  %1206 = vmatpush2.bf16.msra.mxu0 0
  %1207 = vmatprep.subr.bf16.mxu0 0
  %1208 = vmatpush2.bf16.msra.mxu0 0
  %1209 = vmatprep.subr.bf16.mxu0 0
  %1210 = vmatpush2.bf16.msra.mxu0 0
  %1211 = vmatprep.subr.bf16.mxu0 0
  %1212 = vmatpush2.bf16.msra.mxu0 0
  %1213 = vmatprep.subr.bf16.mxu0 0
  %1214 = vmatpush2.bf16.msra.mxu0 0
  %1215 = vmatprep.subr.bf16.mxu0 0
  %1216 = vmatpush2.bf16.msra.mxu0 0
  %1217 = vmatprep.subr.bf16.mxu0 0
  %1218 = vmatpush2.bf16.msra.mxu0 0
  %1219 = vmatprep.subr.bf16.mxu0 0
  %1220 = vmatpush2.bf16.msra.mxu0 0
  %1221 = vmatprep.mubr.bf16.mxu0 0
  %1222 = vmatmul.mubr.bf16.gmra.mxu0 %v1187
  %v1223 = vpop.f32.mrf.mxu0
  %v1224 = vadd.f32 %v1160, %v1223
  %v1225 = vpop.f32.mrf.mxu0
  %v1226 = vpop.f32.mrf.mxu0
  %v1227 = vadd.f32 %v1160, %v1226
  %v1228 = vpop.f32.mrf.mxu0
  %1229 = vdwg.mxu0
  %v1231 = vlaneseq
  %v1232 = vshrl.u32 %v1231, 7
  %v1233 = vsub.s32 0, %v1232
  %v1234 = vrot.slane %v1155, %v1233
  %v1244 = vunpack.c.l.b16 %v1138
  %v1245 = vunpack.c.l.b16 %v1139
  %v1246 = vunpack.c.l.b16 %v1140
  %v1247 = vunpack.c.l.b16 %v1141
  %v1248 = vunpack.c.l.b16 %v1142
  %v1249 = vunpack.c.l.b16 %v1143
  %v1250 = vunpack.c.l.b16 %v1144
  %v1251 = vunpack.c.l.b16 %v1145
  %v1252 = vpack.c.b16 %v1245, %v1244
  %v1253 = vpack.c.b16 %v1247, %v1246
  %v1254 = vpack.c.b16 %v1249, %v1248
  %v1255 = vpack.c.b16 %v1251, %v1250
  %1260 = vmatprep.subr.bf16.mxu0 0
  %1261 = vmatpush1.bf16.msra.mxu0 0
  %1262 = vmatprep.subr.bf16.mxu0 0
  %1263 = vmatpush1.bf16.msra.mxu0 0
  %1264 = vmatprep.subr.bf16.mxu0 0
  %1265 = vmatpush1.bf16.msra.mxu0 0
  %1266 = vmatprep.subr.bf16.mxu0 0
  %1267 = vmatpush1.bf16.msra.mxu0 0
  %1268 = vmatprep.subr.bf16.mxu0 0
  %1269 = vmatpush1.bf16.msra.mxu0 %v1255
  %1270 = vmatprep.subr.bf16.mxu0 0
  %1271 = vmatpush1.bf16.msra.mxu0 %v1254
  %1272 = vmatprep.subr.bf16.mxu0 0
  %1273 = vmatpush1.bf16.msra.mxu0 %v1253
  %1274 = vmatprep.subr.bf16.mxu0 0
  %1275 = vmatpush1.bf16.msra.mxu0 %v1252
  %1276 = vmatprep.subr.bf16.mxu0 0
  %1277 = vmatpush2.bf16.msra.mxu0 0
  %1278 = vmatprep.subr.bf16.mxu0 0
  %1279 = vmatpush2.bf16.msra.mxu0 0
  %1280 = vmatprep.subr.bf16.mxu0 0
  %1281 = vmatpush2.bf16.msra.mxu0 0
  %1282 = vmatprep.subr.bf16.mxu0 0
  %1283 = vmatpush2.bf16.msra.mxu0 0
  %1284 = vmatprep.subr.bf16.mxu0 0
  %1285 = vmatpush2.bf16.msra.mxu0 0
  %1286 = vmatprep.subr.bf16.mxu0 0
  %1287 = vmatpush2.bf16.msra.mxu0 0
  %1288 = vmatprep.subr.bf16.mxu0 0
  %1289 = vmatpush2.bf16.msra.mxu0 0
  %1290 = vmatprep.subr.bf16.mxu0 0
  %1291 = vmatpush2.bf16.msra.mxu0 0
  %1292 = vmatprep.mubr.bf16.mxu0 0
  %1293 = vmatmul.mubr.bf16.gmra.mxu0 %v1187
  %v1294 = vpop.f32.mrf.mxu0
  %v1295 = vadd.f32 %v1234, %v1294
  %v1296 = vpop.f32.mrf.mxu0
  %v1297 = vpop.f32.mrf.mxu0
  %v1298 = vadd.f32 %v1234, %v1297
  %v1299 = vpop.f32.mrf.mxu0
  %1300 = vdwg.mxu0
  %v1309 = vunpack.c.l.b16 %v1146
  %v1310 = vunpack.c.h.b16 %v1146
  %v1311 = vunpack.c.l.b16 %v1147
  %v1312 = vunpack.c.h.b16 %v1147
  %v1313 = vunpack.c.l.b16 %v1148
  %v1314 = vunpack.c.h.b16 %v1148
  %v1315 = vunpack.c.l.b16 %v1149
  %v1316 = vunpack.c.h.b16 %v1149
  %v1317 = vunpack.c.l.b16 %v1150
  %v1318 = vunpack.c.h.b16 %v1150
  %v1319 = vunpack.c.l.b16 %v1151
  %v1320 = vunpack.c.h.b16 %v1151
  %v1321 = vunpack.c.l.b16 %v1152
  %v1322 = vunpack.c.h.b16 %v1152
  %v1323 = vunpack.c.l.b16 %v1153
  %v1324 = vunpack.c.h.b16 %v1153
  %v1325 = vpack.c.b16 %v1311, %v1309
  %v1326 = vpack.c.b16 %v1312, %v1310
  %v1327 = vpack.c.b16 %v1315, %v1313
  %v1328 = vpack.c.b16 %v1316, %v1314
  %v1329 = vpack.c.b16 %v1319, %v1317
  %v1330 = vpack.c.b16 %v1320, %v1318
  %v1331 = vpack.c.b16 %v1323, %v1321
  %v1332 = vpack.c.b16 %v1324, %v1322
  %1341 = vmatprep.subr.bf16.mxu0 0
  %1342 = vmatpush1.bf16.msra.mxu0 0
  %1343 = vmatprep.subr.bf16.mxu0 0
  %1344 = vmatpush1.bf16.msra.mxu0 0
  %1345 = vmatprep.subr.bf16.mxu0 0
  %1346 = vmatpush1.bf16.msra.mxu0 0
  %1347 = vmatprep.subr.bf16.mxu0 0
  %1348 = vmatpush1.bf16.msra.mxu0 0
  %1349 = vmatprep.subr.bf16.mxu0 %v1332
  %1350 = vmatpush1.bf16.msra.mxu0 %v1331
  %1351 = vmatprep.subr.bf16.mxu0 %v1330
  %1352 = vmatpush1.bf16.msra.mxu0 %v1329
  %1353 = vmatprep.subr.bf16.mxu0 %v1328
  %1354 = vmatpush1.bf16.msra.mxu0 %v1327
  %1355 = vmatprep.subr.bf16.mxu0 %v1326
  %1356 = vmatpush1.bf16.msra.mxu0 %v1325
  %1357 = vmatprep.subr.bf16.mxu0 0
  %1358 = vmatpush2.bf16.msra.mxu0 0
  %1359 = vmatprep.subr.bf16.mxu0 0
  %1360 = vmatpush2.bf16.msra.mxu0 0
  %1361 = vmatprep.subr.bf16.mxu0 0
  %1362 = vmatpush2.bf16.msra.mxu0 0
  %1363 = vmatprep.subr.bf16.mxu0 0
  %1364 = vmatpush2.bf16.msra.mxu0 0
  %1365 = vmatprep.subr.bf16.mxu0 0
  %1366 = vmatpush2.bf16.msra.mxu0 0
  %1367 = vmatprep.subr.bf16.mxu0 0
  %1368 = vmatpush2.bf16.msra.mxu0 0
  %1369 = vmatprep.subr.bf16.mxu0 0
  %1370 = vmatpush2.bf16.msra.mxu0 0
  %1371 = vmatprep.subr.bf16.mxu0 0
  %1372 = vmatpush2.bf16.msra.mxu0 0
  %1373 = vmatprep.mubr.bf16.mxu0 0
  %1374 = vmatmul.mubr.bf16.gmra.mxu0 %v237
  %v1375 = vpop.f32.mrf.mxu0
  %v1376 = vadd.f32 0.0, %v1375
  %v1377 = vpop.f32.mrf.mxu0
  %v1378 = vadd.f32 0.0, %v1377
  %v1379 = vpop.f32.mrf.mxu0
  %v1380 = vpop.f32.mrf.mxu0
  %1381 = vdwg.mxu0
  %v1382 = vadd.f32 %v1376, %v1224
  %v1384 = vrot.slane %v1298, 6
  %v1386 = vadd.f32 %v1378, %v1384
  %v1387 = vxor.u32 %v1382, 2147483648
  %v1388 = vmul.f32 %v1387, 1.442695
  %v1389 = vpow.pop %v1388
  %v1390 = vadd.f32 %v1389, 1.0
  %v1391 = vrcp.pop %v1390
  %v1392 = vmul.f32 1.0, %v1391
  %v1393 = vtanh.pop %v1382
  %v1394 = vxor.u32 %v1386, 2147483648
  %v1395 = vmul.f32 %v1394, 1.442695
  %v1396 = vpow.pop %v1395
  %v1397 = vadd.f32 %v1396, 1.0
  %v1398 = vrcp.pop %v1397
  %v1399 = vmul.f32 1.0, %v1398
  %v1400 = vtanh.pop %v1386
  %v1401 = vmul.f32 %v1392, 0.0
  %1403 = vrot.lane.b32.xlu0 %v1393, 32
  %v1404 = vpop.permute.xlu0 %1403
  %v1406 = vmul.f32 %v1392, %v1404
  %1408 = vrot.lane.b32.xlu0 %v1406, 32
  %v1409 = vpop.permute.xlu0 %1408
  %v1411 = vadd.f32 %v1401, %v1409
  %v1412 = vtanh.pop %v1411
  %1414 = vrot.lane.b32.xlu0 %v1412, 32
  %v1415 = vpop.permute.xlu0 %1414
  %v1417 = vmul.f32 %v1392, %v1415
  %v1418 = vmul.f32 %v1399, 0.0
  %1420 = vrot.lane.b32.xlu0 %v1400, 32
  %v1421 = vpop.permute.xlu0 %1420
  %v1423 = vmul.f32 %v1399, %v1421
  %1425 = vrot.lane.b32.xlu0 %v1423, 32
  %v1426 = vpop.permute.xlu0 %1425
  %v1428 = vadd.f32 %v1418, %v1426
  %v1429 = vtanh.pop %v1428
  %1431 = vrot.lane.b32.xlu0 %v1429, 32
  %v1432 = vpop.permute.xlu0 %1431
  %v1434 = vmul.f32 %v1399, %v1432
  %1436 = vrot.lane.b32.xlu0 %v1417, 64
  %v1437 = vpop.permute.xlu0 %1436
  %1440 = vrot.lane.b32.xlu0 %v1434, 96
  %v1441 = vpop.permute.xlu0 %1440
  %v1443 = vsel %vm90, %v1437, %v1441
  %v1444 = vpack.c.bf16 %v1443, %v1443
  %v1446 = vsel %vm235, %v1444, 0
  %1448 = vmatprep.subr.bf16.mxu0 0
  %1449 = vmatpush1.bf16.msra.mxu0 0
  %1450 = vmatprep.subr.bf16.mxu0 0
  %1451 = vmatpush1.bf16.msra.mxu0 0
  %1452 = vmatprep.subr.bf16.mxu0 0
  %1453 = vmatpush1.bf16.msra.mxu0 0
  %1454 = vmatprep.subr.bf16.mxu0 0
  %1455 = vmatpush1.bf16.msra.mxu0 0
  %1456 = vmatprep.subr.bf16.mxu0 %v1332
  %1457 = vmatpush1.bf16.msra.mxu0 %v1331
  %1458 = vmatprep.subr.bf16.mxu0 %v1330
  %1459 = vmatpush1.bf16.msra.mxu0 %v1329
  %1460 = vmatprep.subr.bf16.mxu0 %v1328
  %1461 = vmatpush1.bf16.msra.mxu0 %v1327
  %1462 = vmatprep.subr.bf16.mxu0 %v1326
  %1463 = vmatpush1.bf16.msra.mxu0 %v1325
  %1464 = vmatprep.subr.bf16.mxu0 0
  %1465 = vmatpush2.bf16.msra.mxu0 0
  %1466 = vmatprep.subr.bf16.mxu0 0
  %1467 = vmatpush2.bf16.msra.mxu0 0
  %1468 = vmatprep.subr.bf16.mxu0 0
  %1469 = vmatpush2.bf16.msra.mxu0 0
  %1470 = vmatprep.subr.bf16.mxu0 0
  %1471 = vmatpush2.bf16.msra.mxu0 0
  %1472 = vmatprep.subr.bf16.mxu0 0
  %1473 = vmatpush2.bf16.msra.mxu0 0
  %1474 = vmatprep.subr.bf16.mxu0 0
  %1475 = vmatpush2.bf16.msra.mxu0 0
  %1476 = vmatprep.subr.bf16.mxu0 0
  %1477 = vmatpush2.bf16.msra.mxu0 0
  %1478 = vmatprep.subr.bf16.mxu0 0
  %1479 = vmatpush2.bf16.msra.mxu0 0
  %1480 = vmatprep.mubr.bf16.mxu0 0
  %1481 = vmatmul.mubr.bf16.gmra.mxu0 %v1446
  %v1482 = vpop.f32.mrf.mxu0
  %v1483 = vadd.f32 0.0, %v1482
  %v1484 = vpop.f32.mrf.mxu0
  %v1485 = vadd.f32 0.0, %v1484
  %v1486 = vpop.f32.mrf.mxu0
  %v1487 = vpop.f32.mrf.mxu0
  %1488 = vdwg.mxu0
  %v1490 = vrot.slane %v1224, 2
  %v1492 = vadd.f32 %v1483, %v1490
  %v1493 = vrot.slane %v1298, 4
  %v1495 = vadd.f32 %v1485, %v1493
  %v1496 = vxor.u32 %v1492, 2147483648
  %v1497 = vmul.f32 %v1496, 1.442695
  %v1498 = vpow.pop %v1497
  %v1499 = vadd.f32 %v1498, 1.0
  %v1500 = vrcp.pop %v1499
  %v1501 = vmul.f32 1.0, %v1500
  %v1502 = vtanh.pop %v1492
  %v1503 = vxor.u32 %v1495, 2147483648
  %v1504 = vmul.f32 %v1503, 1.442695
  %v1505 = vpow.pop %v1504
  %v1506 = vadd.f32 %v1505, 1.0
  %v1507 = vrcp.pop %v1506
  %v1508 = vmul.f32 1.0, %v1507
  %v1509 = vtanh.pop %v1495
  %v1510 = vmul.f32 %v1501, %v1411
  %1512 = vrot.lane.b32.xlu0 %v1502, 32
  %v1513 = vpop.permute.xlu0 %1512
  %v1515 = vmul.f32 %v1501, %v1513
  %1517 = vrot.lane.b32.xlu0 %v1515, 32
  %v1518 = vpop.permute.xlu0 %1517
  %v1520 = vadd.f32 %v1510, %v1518
  %v1521 = vtanh.pop %v1520
  %1523 = vrot.lane.b32.xlu0 %v1521, 32
  %v1524 = vpop.permute.xlu0 %1523
  %v1526 = vmul.f32 %v1501, %v1524
  %v1527 = vmul.f32 %v1508, %v1428
  %1529 = vrot.lane.b32.xlu0 %v1509, 32
  %v1530 = vpop.permute.xlu0 %1529
  %v1532 = vmul.f32 %v1508, %v1530
  %1534 = vrot.lane.b32.xlu0 %v1532, 32
  %v1535 = vpop.permute.xlu0 %1534
  %v1537 = vadd.f32 %v1527, %v1535
  %v1538 = vtanh.pop %v1537
  %1540 = vrot.lane.b32.xlu0 %v1538, 32
  %v1541 = vpop.permute.xlu0 %1540
  %v1543 = vmul.f32 %v1508, %v1541
  %1545 = vrot.lane.b32.xlu0 %v1526, 64
  %v1546 = vpop.permute.xlu0 %1545
  %1549 = vrot.lane.b32.xlu0 %v1543, 96
  %v1550 = vpop.permute.xlu0 %1549
  %v1552 = vsel %vm90, %v1546, %v1550
  %v1553 = vpack.c.bf16 %v1552, %v1552
  %v1555 = vsel %vm235, %v1553, 0
  %1557 = vmatprep.subr.bf16.mxu0 0
  %1558 = vmatpush1.bf16.msra.mxu0 0
  %1559 = vmatprep.subr.bf16.mxu0 0
  %1560 = vmatpush1.bf16.msra.mxu0 0
  %1561 = vmatprep.subr.bf16.mxu0 0
  %1562 = vmatpush1.bf16.msra.mxu0 0
  %1563 = vmatprep.subr.bf16.mxu0 0
  %1564 = vmatpush1.bf16.msra.mxu0 0
  %1565 = vmatprep.subr.bf16.mxu0 %v1332
  %1566 = vmatpush1.bf16.msra.mxu0 %v1331
  %1567 = vmatprep.subr.bf16.mxu0 %v1330
  %1568 = vmatpush1.bf16.msra.mxu0 %v1329
  %1569 = vmatprep.subr.bf16.mxu0 %v1328
  %1570 = vmatpush1.bf16.msra.mxu0 %v1327
  %1571 = vmatprep.subr.bf16.mxu0 %v1326
  %1572 = vmatpush1.bf16.msra.mxu0 %v1325
  %1573 = vmatprep.subr.bf16.mxu0 0
  %1574 = vmatpush2.bf16.msra.mxu0 0
  %1575 = vmatprep.subr.bf16.mxu0 0
  %1576 = vmatpush2.bf16.msra.mxu0 0
  %1577 = vmatprep.subr.bf16.mxu0 0
  %1578 = vmatpush2.bf16.msra.mxu0 0
  %1579 = vmatprep.subr.bf16.mxu0 0
  %1580 = vmatpush2.bf16.msra.mxu0 0
  %1581 = vmatprep.subr.bf16.mxu0 0
  %1582 = vmatpush2.bf16.msra.mxu0 0
  %1583 = vmatprep.subr.bf16.mxu0 0
  %1584 = vmatpush2.bf16.msra.mxu0 0
  %1585 = vmatprep.subr.bf16.mxu0 0
  %1586 = vmatpush2.bf16.msra.mxu0 0
  %1587 = vmatprep.subr.bf16.mxu0 0
  %1588 = vmatpush2.bf16.msra.mxu0 0
  %1589 = vmatprep.mubr.bf16.mxu0 0
  %1590 = vmatmul.mubr.bf16.gmra.mxu0 %v1555
  %v1591 = vpop.f32.mrf.mxu0
  %v1592 = vadd.f32 0.0, %v1591
  %v1593 = vpop.f32.mrf.mxu0
  %v1594 = vadd.f32 0.0, %v1593
  %v1595 = vpop.f32.mrf.mxu0
  %v1596 = vpop.f32.mrf.mxu0
  %1597 = vdwg.mxu0
  %v1598 = vrot.slane %v1224, 4
  %v1600 = vadd.f32 %v1592, %v1598
  %v1601 = vrot.slane %v1298, 2
  %v1603 = vadd.f32 %v1594, %v1601
  %v1604 = vxor.u32 %v1600, 2147483648
  %v1605 = vmul.f32 %v1604, 1.442695
  %v1606 = vpow.pop %v1605
  %v1607 = vadd.f32 %v1606, 1.0
  %v1608 = vrcp.pop %v1607
  %v1609 = vmul.f32 1.0, %v1608
  %v1610 = vtanh.pop %v1600
  %v1611 = vxor.u32 %v1603, 2147483648
  %v1612 = vmul.f32 %v1611, 1.442695
  %v1613 = vpow.pop %v1612
  %v1614 = vadd.f32 %v1613, 1.0
  %v1615 = vrcp.pop %v1614
  %v1616 = vmul.f32 1.0, %v1615
  %v1617 = vtanh.pop %v1603
  %v1618 = vmul.f32 %v1609, %v1520
  %1620 = vrot.lane.b32.xlu0 %v1610, 32
  %v1621 = vpop.permute.xlu0 %1620
  %v1623 = vmul.f32 %v1609, %v1621
  %1625 = vrot.lane.b32.xlu0 %v1623, 32
  %v1626 = vpop.permute.xlu0 %1625
  %v1628 = vadd.f32 %v1618, %v1626
  %v1629 = vtanh.pop %v1628
  %1631 = vrot.lane.b32.xlu0 %v1629, 32
  %v1632 = vpop.permute.xlu0 %1631
  %v1634 = vmul.f32 %v1609, %v1632
  %v1635 = vmul.f32 %v1616, %v1537
  %1637 = vrot.lane.b32.xlu0 %v1617, 32
  %v1638 = vpop.permute.xlu0 %1637
  %v1640 = vmul.f32 %v1616, %v1638
  %1642 = vrot.lane.b32.xlu0 %v1640, 32
  %v1643 = vpop.permute.xlu0 %1642
  %v1645 = vadd.f32 %v1635, %v1643
  %v1646 = vtanh.pop %v1645
  %1648 = vrot.lane.b32.xlu0 %v1646, 32
  %v1649 = vpop.permute.xlu0 %1648
  %v1651 = vmul.f32 %v1616, %v1649
  %1653 = vrot.lane.b32.xlu0 %v1634, 64
  %v1654 = vpop.permute.xlu0 %1653
  %1657 = vrot.lane.b32.xlu0 %v1651, 96
  %v1658 = vpop.permute.xlu0 %1657
  %v1660 = vsel %vm90, %v1654, %v1658
  %v1661 = vpack.c.bf16 %v1660, %v1660
  %v1663 = vsel %vm235, %v1661, 0
  %1665 = vmatprep.subr.bf16.mxu0 0
  %1666 = vmatpush1.bf16.msra.mxu0 0
  %1667 = vmatprep.subr.bf16.mxu0 0
  %1668 = vmatpush1.bf16.msra.mxu0 0
  %1669 = vmatprep.subr.bf16.mxu0 0
  %1670 = vmatpush1.bf16.msra.mxu0 0
  %1671 = vmatprep.subr.bf16.mxu0 0
  %1672 = vmatpush1.bf16.msra.mxu0 0
  %1673 = vmatprep.subr.bf16.mxu0 %v1332
  %1674 = vmatpush1.bf16.msra.mxu0 %v1331
  %1675 = vmatprep.subr.bf16.mxu0 %v1330
  %1676 = vmatpush1.bf16.msra.mxu0 %v1329
  %1677 = vmatprep.subr.bf16.mxu0 %v1328
  %1678 = vmatpush1.bf16.msra.mxu0 %v1327
  %1679 = vmatprep.subr.bf16.mxu0 %v1326
  %1680 = vmatpush1.bf16.msra.mxu0 %v1325
  %1681 = vmatprep.subr.bf16.mxu0 0
  %1682 = vmatpush2.bf16.msra.mxu0 0
  %1683 = vmatprep.subr.bf16.mxu0 0
  %1684 = vmatpush2.bf16.msra.mxu0 0
  %1685 = vmatprep.subr.bf16.mxu0 0
  %1686 = vmatpush2.bf16.msra.mxu0 0
  %1687 = vmatprep.subr.bf16.mxu0 0
  %1688 = vmatpush2.bf16.msra.mxu0 0
  %1689 = vmatprep.subr.bf16.mxu0 0
  %1690 = vmatpush2.bf16.msra.mxu0 0
  %1691 = vmatprep.subr.bf16.mxu0 0
  %1692 = vmatpush2.bf16.msra.mxu0 0
  %1693 = vmatprep.subr.bf16.mxu0 0
  %1694 = vmatpush2.bf16.msra.mxu0 0
  %1695 = vmatprep.subr.bf16.mxu0 0
  %1696 = vmatpush2.bf16.msra.mxu0 0
  %1697 = vmatprep.mubr.bf16.mxu0 0
  %1698 = vmatmul.mubr.bf16.gmra.mxu0 %v1663
  %v1699 = vpop.f32.mrf.mxu0
  %v1700 = vadd.f32 0.0, %v1699
  %v1701 = vpop.f32.mrf.mxu0
  %v1702 = vadd.f32 0.0, %v1701
  %v1703 = vpop.f32.mrf.mxu0
  %v1704 = vpop.f32.mrf.mxu0
  %1705 = vdwg.mxu0
  %v1706 = vrot.slane %v1224, 6
  %v1708 = vadd.f32 %v1700, %v1706
  %v1709 = vadd.f32 %v1702, %v1298
  %v1710 = vxor.u32 %v1708, 2147483648
  %v1711 = vmul.f32 %v1710, 1.442695
  %v1712 = vpow.pop %v1711
  %v1713 = vadd.f32 %v1712, 1.0
  %v1714 = vrcp.pop %v1713
  %v1715 = vmul.f32 1.0, %v1714
  %v1716 = vtanh.pop %v1708
  %v1717 = vxor.u32 %v1709, 2147483648
  %v1718 = vmul.f32 %v1717, 1.442695
  %v1719 = vpow.pop %v1718
  %v1720 = vadd.f32 %v1719, 1.0
  %v1721 = vrcp.pop %v1720
  %v1722 = vmul.f32 1.0, %v1721
  %v1723 = vtanh.pop %v1709
  %v1724 = vmul.f32 %v1715, %v1628
  %1726 = vrot.lane.b32.xlu0 %v1716, 32
  %v1727 = vpop.permute.xlu0 %1726
  %v1729 = vmul.f32 %v1715, %v1727
  %1731 = vrot.lane.b32.xlu0 %v1729, 32
  %v1732 = vpop.permute.xlu0 %1731
  %v1734 = vadd.f32 %v1724, %v1732
  %v1735 = vtanh.pop %v1734
  %1737 = vrot.lane.b32.xlu0 %v1735, 32
  %v1738 = vpop.permute.xlu0 %1737
  %v1740 = vmul.f32 %v1715, %v1738
  %v1741 = vmul.f32 %v1722, %v1645
  %1743 = vrot.lane.b32.xlu0 %v1723, 32
  %v1744 = vpop.permute.xlu0 %1743
  %v1746 = vmul.f32 %v1722, %v1744
  %1748 = vrot.lane.b32.xlu0 %v1746, 32
  %v1749 = vpop.permute.xlu0 %1748
  %v1751 = vadd.f32 %v1741, %v1749
  %v1752 = vtanh.pop %v1751
  %1754 = vrot.lane.b32.xlu0 %v1752, 32
  %v1755 = vpop.permute.xlu0 %1754
  %v1757 = vmul.f32 %v1722, %v1755
  %1759 = vrot.lane.b32.xlu0 %v1740, 64
  %v1760 = vpop.permute.xlu0 %1759
  %1763 = vrot.lane.b32.xlu0 %v1757, 96
  %v1764 = vpop.permute.xlu0 %1763
  %v1766 = vsel %vm90, %v1760, %v1764
  %v1767 = vpack.c.bf16 %v1766, %v1766
  %v1769 = vsel %vm235, %v1767, 0
  %1771 = vmatprep.subr.bf16.mxu0 0
  %1772 = vmatpush1.bf16.msra.mxu0 0
  %1773 = vmatprep.subr.bf16.mxu0 0
  %1774 = vmatpush1.bf16.msra.mxu0 0
  %1775 = vmatprep.subr.bf16.mxu0 0
  %1776 = vmatpush1.bf16.msra.mxu0 0
  %1777 = vmatprep.subr.bf16.mxu0 0
  %1778 = vmatpush1.bf16.msra.mxu0 0
  %1779 = vmatprep.subr.bf16.mxu0 %v1332
  %1780 = vmatpush1.bf16.msra.mxu0 %v1331
  %1781 = vmatprep.subr.bf16.mxu0 %v1330
  %1782 = vmatpush1.bf16.msra.mxu0 %v1329
  %1783 = vmatprep.subr.bf16.mxu0 %v1328
  %1784 = vmatpush1.bf16.msra.mxu0 %v1327
  %1785 = vmatprep.subr.bf16.mxu0 %v1326
  %1786 = vmatpush1.bf16.msra.mxu0 %v1325
  %1787 = vmatprep.subr.bf16.mxu0 0
  %1788 = vmatpush2.bf16.msra.mxu0 0
  %1789 = vmatprep.subr.bf16.mxu0 0
  %1790 = vmatpush2.bf16.msra.mxu0 0
  %1791 = vmatprep.subr.bf16.mxu0 0
  %1792 = vmatpush2.bf16.msra.mxu0 0
  %1793 = vmatprep.subr.bf16.mxu0 0
  %1794 = vmatpush2.bf16.msra.mxu0 0
  %1795 = vmatprep.subr.bf16.mxu0 0
  %1796 = vmatpush2.bf16.msra.mxu0 0
  %1797 = vmatprep.subr.bf16.mxu0 0
  %1798 = vmatpush2.bf16.msra.mxu0 0
  %1799 = vmatprep.subr.bf16.mxu0 0
  %1800 = vmatpush2.bf16.msra.mxu0 0
  %1801 = vmatprep.subr.bf16.mxu0 0
  %1802 = vmatpush2.bf16.msra.mxu0 0
  %1803 = vmatprep.mubr.bf16.mxu0 0
  %1804 = vmatmul.mubr.bf16.gmra.mxu0 %v1769
  %v1805 = vpop.f32.mrf.mxu0
  %v1806 = vadd.f32 0.0, %v1805
  %v1807 = vpop.f32.mrf.mxu0
  %v1808 = vadd.f32 0.0, %v1807
  %v1809 = vpop.f32.mrf.mxu0
  %v1810 = vpop.f32.mrf.mxu0
  %1811 = vdwg.mxu0
  %v1812 = vadd.f32 %v1806, %v1227
  %v1814 = vrot.slane %v1295, 6
  %v1816 = vadd.f32 %v1808, %v1814
  %v1817 = vxor.u32 %v1812, 2147483648
  %v1818 = vmul.f32 %v1817, 1.442695
  %v1819 = vpow.pop %v1818
  %v1820 = vadd.f32 %v1819, 1.0
  %v1821 = vrcp.pop %v1820
  %v1822 = vmul.f32 1.0, %v1821
  %v1823 = vtanh.pop %v1812
  %v1824 = vxor.u32 %v1816, 2147483648
  %v1825 = vmul.f32 %v1824, 1.442695
  %v1826 = vpow.pop %v1825
  %v1827 = vadd.f32 %v1826, 1.0
  %v1828 = vrcp.pop %v1827
  %v1829 = vmul.f32 1.0, %v1828
  %v1830 = vtanh.pop %v1816
  %v1831 = vmul.f32 %v1822, %v1734
  %1833 = vrot.lane.b32.xlu0 %v1823, 32
  %v1834 = vpop.permute.xlu0 %1833
  %v1836 = vmul.f32 %v1822, %v1834
  %1838 = vrot.lane.b32.xlu0 %v1836, 32
  %v1839 = vpop.permute.xlu0 %1838
  %v1841 = vadd.f32 %v1831, %v1839
  %v1842 = vtanh.pop %v1841
  %1844 = vrot.lane.b32.xlu0 %v1842, 32
  %v1845 = vpop.permute.xlu0 %1844
  %v1847 = vmul.f32 %v1822, %v1845
  %v1848 = vmul.f32 %v1829, %v1751
  %1850 = vrot.lane.b32.xlu0 %v1830, 32
  %v1851 = vpop.permute.xlu0 %1850
  %v1853 = vmul.f32 %v1829, %v1851
  %1855 = vrot.lane.b32.xlu0 %v1853, 32
  %v1856 = vpop.permute.xlu0 %1855
  %v1858 = vadd.f32 %v1848, %v1856
  %v1859 = vtanh.pop %v1858
  %1861 = vrot.lane.b32.xlu0 %v1859, 32
  %v1862 = vpop.permute.xlu0 %1861
  %v1864 = vmul.f32 %v1829, %v1862
  %1866 = vrot.lane.b32.xlu0 %v1847, 64
  %v1867 = vpop.permute.xlu0 %1866
  %1870 = vrot.lane.b32.xlu0 %v1864, 96
  %v1871 = vpop.permute.xlu0 %1870
  %v1873 = vsel %vm90, %v1867, %v1871
  %v1874 = vpack.c.bf16 %v1873, %v1873
  %v1876 = vsel %vm235, %v1874, 0
  %1878 = vmatprep.subr.bf16.mxu0 0
  %1879 = vmatpush1.bf16.msra.mxu0 0
  %1880 = vmatprep.subr.bf16.mxu0 0
  %1881 = vmatpush1.bf16.msra.mxu0 0
  %1882 = vmatprep.subr.bf16.mxu0 0
  %1883 = vmatpush1.bf16.msra.mxu0 0
  %1884 = vmatprep.subr.bf16.mxu0 0
  %1885 = vmatpush1.bf16.msra.mxu0 0
  %1886 = vmatprep.subr.bf16.mxu0 %v1332
  %1887 = vmatpush1.bf16.msra.mxu0 %v1331
  %1888 = vmatprep.subr.bf16.mxu0 %v1330
  %1889 = vmatpush1.bf16.msra.mxu0 %v1329
  %1890 = vmatprep.subr.bf16.mxu0 %v1328
  %1891 = vmatpush1.bf16.msra.mxu0 %v1327
  %1892 = vmatprep.subr.bf16.mxu0 %v1326
  %1893 = vmatpush1.bf16.msra.mxu0 %v1325
  %1894 = vmatprep.subr.bf16.mxu0 0
  %1895 = vmatpush2.bf16.msra.mxu0 0
  %1896 = vmatprep.subr.bf16.mxu0 0
  %1897 = vmatpush2.bf16.msra.mxu0 0
  %1898 = vmatprep.subr.bf16.mxu0 0
  %1899 = vmatpush2.bf16.msra.mxu0 0
  %1900 = vmatprep.subr.bf16.mxu0 0
  %1901 = vmatpush2.bf16.msra.mxu0 0
  %1902 = vmatprep.subr.bf16.mxu0 0
  %1903 = vmatpush2.bf16.msra.mxu0 0
  %1904 = vmatprep.subr.bf16.mxu0 0
  %1905 = vmatpush2.bf16.msra.mxu0 0
  %1906 = vmatprep.subr.bf16.mxu0 0
  %1907 = vmatpush2.bf16.msra.mxu0 0
  %1908 = vmatprep.subr.bf16.mxu0 0
  %1909 = vmatpush2.bf16.msra.mxu0 0
  %1910 = vmatprep.mubr.bf16.mxu0 0
  %1911 = vmatmul.mubr.bf16.gmra.mxu0 %v1876
  %v1912 = vpop.f32.mrf.mxu0
  %v1913 = vadd.f32 0.0, %v1912
  %v1914 = vpop.f32.mrf.mxu0
  %v1915 = vadd.f32 0.0, %v1914
  %v1916 = vpop.f32.mrf.mxu0
  %v1917 = vpop.f32.mrf.mxu0
  %1918 = vdwg.mxu0
  %v1920 = vrot.slane %v1227, 2
  %v1922 = vadd.f32 %v1913, %v1920
  %v1923 = vrot.slane %v1295, 4
  %v1925 = vadd.f32 %v1915, %v1923
  %v1926 = vxor.u32 %v1922, 2147483648
  %v1927 = vmul.f32 %v1926, 1.442695
  %v1928 = vpow.pop %v1927
  %v1929 = vadd.f32 %v1928, 1.0
  %v1930 = vrcp.pop %v1929
  %v1931 = vmul.f32 1.0, %v1930
  %v1932 = vtanh.pop %v1922
  %v1933 = vxor.u32 %v1925, 2147483648
  %v1934 = vmul.f32 %v1933, 1.442695
  %v1935 = vpow.pop %v1934
  %v1936 = vadd.f32 %v1935, 1.0
  %v1937 = vrcp.pop %v1936
  %v1938 = vmul.f32 1.0, %v1937
  %v1939 = vtanh.pop %v1925
  %v1940 = vmul.f32 %v1931, %v1841
  %1942 = vrot.lane.b32.xlu0 %v1932, 32
  %v1943 = vpop.permute.xlu0 %1942
  %v1945 = vmul.f32 %v1931, %v1943
  %1947 = vrot.lane.b32.xlu0 %v1945, 32
  %v1948 = vpop.permute.xlu0 %1947
  %v1950 = vadd.f32 %v1940, %v1948
  %v1951 = vtanh.pop %v1950
  %1953 = vrot.lane.b32.xlu0 %v1951, 32
  %v1954 = vpop.permute.xlu0 %1953
  %v1956 = vmul.f32 %v1931, %v1954
  %v1957 = vmul.f32 %v1938, %v1858
  %1959 = vrot.lane.b32.xlu0 %v1939, 32
  %v1960 = vpop.permute.xlu0 %1959
  %v1962 = vmul.f32 %v1938, %v1960
  %1964 = vrot.lane.b32.xlu0 %v1962, 32
  %v1965 = vpop.permute.xlu0 %1964
  %v1967 = vadd.f32 %v1957, %v1965
  %v1968 = vtanh.pop %v1967
  %1970 = vrot.lane.b32.xlu0 %v1968, 32
  %v1971 = vpop.permute.xlu0 %1970
  %v1973 = vmul.f32 %v1938, %v1971
  %1975 = vrot.lane.b32.xlu0 %v1956, 64
  %v1976 = vpop.permute.xlu0 %1975
  %1979 = vrot.lane.b32.xlu0 %v1973, 96
  %v1980 = vpop.permute.xlu0 %1979
  %v1982 = vsel %vm90, %v1976, %v1980
  %v1983 = vpack.c.bf16 %v1982, %v1982
  %v1985 = vsel %vm235, %v1983, 0
  %1987 = vmatprep.subr.bf16.mxu0 0
  %1988 = vmatpush1.bf16.msra.mxu0 0
  %1989 = vmatprep.subr.bf16.mxu0 0
  %1990 = vmatpush1.bf16.msra.mxu0 0
  %1991 = vmatprep.subr.bf16.mxu0 0
  %1992 = vmatpush1.bf16.msra.mxu0 0
  %1993 = vmatprep.subr.bf16.mxu0 0
  %1994 = vmatpush1.bf16.msra.mxu0 0
  %1995 = vmatprep.subr.bf16.mxu0 %v1332
  %1996 = vmatpush1.bf16.msra.mxu0 %v1331
  %1997 = vmatprep.subr.bf16.mxu0 %v1330
  %1998 = vmatpush1.bf16.msra.mxu0 %v1329
  %1999 = vmatprep.subr.bf16.mxu0 %v1328
  %2000 = vmatpush1.bf16.msra.mxu0 %v1327
  %2001 = vmatprep.subr.bf16.mxu0 %v1326
  %2002 = vmatpush1.bf16.msra.mxu0 %v1325
  %2003 = vmatprep.subr.bf16.mxu0 0
  %2004 = vmatpush2.bf16.msra.mxu0 0
  %2005 = vmatprep.subr.bf16.mxu0 0
  %2006 = vmatpush2.bf16.msra.mxu0 0
  %2007 = vmatprep.subr.bf16.mxu0 0
  %2008 = vmatpush2.bf16.msra.mxu0 0
  %2009 = vmatprep.subr.bf16.mxu0 0
  %2010 = vmatpush2.bf16.msra.mxu0 0
  %2011 = vmatprep.subr.bf16.mxu0 0
  %2012 = vmatpush2.bf16.msra.mxu0 0
  %2013 = vmatprep.subr.bf16.mxu0 0
  %2014 = vmatpush2.bf16.msra.mxu0 0
  %2015 = vmatprep.subr.bf16.mxu0 0
  %2016 = vmatpush2.bf16.msra.mxu0 0
  %2017 = vmatprep.subr.bf16.mxu0 0
  %2018 = vmatpush2.bf16.msra.mxu0 0
  %2019 = vmatprep.mubr.bf16.mxu0 0
  %2020 = vmatmul.mubr.bf16.gmra.mxu0 %v1985
  %v2021 = vpop.f32.mrf.mxu0
  %v2022 = vadd.f32 0.0, %v2021
  %v2023 = vpop.f32.mrf.mxu0
  %v2024 = vadd.f32 0.0, %v2023
  %v2025 = vpop.f32.mrf.mxu0
  %v2026 = vpop.f32.mrf.mxu0
  %2027 = vdwg.mxu0
  %v2028 = vrot.slane %v1227, 4
  %v2030 = vadd.f32 %v2022, %v2028
  %v2031 = vrot.slane %v1295, 2
  %v2033 = vadd.f32 %v2024, %v2031
  %v2034 = vxor.u32 %v2030, 2147483648
  %v2035 = vmul.f32 %v2034, 1.442695
  %v2036 = vpow.pop %v2035
  %v2037 = vadd.f32 %v2036, 1.0
  %v2038 = vrcp.pop %v2037
  %v2039 = vmul.f32 1.0, %v2038
  %v2040 = vtanh.pop %v2030
  %v2041 = vxor.u32 %v2033, 2147483648
  %v2042 = vmul.f32 %v2041, 1.442695
  %v2043 = vpow.pop %v2042
  %v2044 = vadd.f32 %v2043, 1.0
  %v2045 = vrcp.pop %v2044
  %v2046 = vmul.f32 1.0, %v2045
  %v2047 = vtanh.pop %v2033
  %v2048 = vmul.f32 %v2039, %v1950
  %2050 = vrot.lane.b32.xlu0 %v2040, 32
  %v2051 = vpop.permute.xlu0 %2050
  %v2053 = vmul.f32 %v2039, %v2051
  %2055 = vrot.lane.b32.xlu0 %v2053, 32
  %v2056 = vpop.permute.xlu0 %2055
  %v2058 = vadd.f32 %v2048, %v2056
  %v2059 = vtanh.pop %v2058
  %2061 = vrot.lane.b32.xlu0 %v2059, 32
  %v2062 = vpop.permute.xlu0 %2061
  %v2064 = vmul.f32 %v2039, %v2062
  %v2065 = vmul.f32 %v2046, %v1967
  %2067 = vrot.lane.b32.xlu0 %v2047, 32
  %v2068 = vpop.permute.xlu0 %2067
  %v2070 = vmul.f32 %v2046, %v2068
  %2072 = vrot.lane.b32.xlu0 %v2070, 32
  %v2073 = vpop.permute.xlu0 %2072
  %v2075 = vadd.f32 %v2065, %v2073
  %v2076 = vtanh.pop %v2075
  %2078 = vrot.lane.b32.xlu0 %v2076, 32
  %v2079 = vpop.permute.xlu0 %2078
  %v2081 = vmul.f32 %v2046, %v2079
  %2083 = vrot.lane.b32.xlu0 %v2064, 64
  %v2084 = vpop.permute.xlu0 %2083
  %2087 = vrot.lane.b32.xlu0 %v2081, 96
  %v2088 = vpop.permute.xlu0 %2087
  %v2090 = vsel %vm90, %v2084, %v2088
  %v2091 = vpack.c.bf16 %v2090, %v2090
  %v2093 = vsel %vm235, %v2091, 0
  %2095 = vmatprep.subr.bf16.mxu0 0
  %2096 = vmatpush1.bf16.msra.mxu0 0
  %2097 = vmatprep.subr.bf16.mxu0 0
  %2098 = vmatpush1.bf16.msra.mxu0 0
  %2099 = vmatprep.subr.bf16.mxu0 0
  %2100 = vmatpush1.bf16.msra.mxu0 0
  %2101 = vmatprep.subr.bf16.mxu0 0
  %2102 = vmatpush1.bf16.msra.mxu0 0
  %2103 = vmatprep.subr.bf16.mxu0 %v1332
  %2104 = vmatpush1.bf16.msra.mxu0 %v1331
  %2105 = vmatprep.subr.bf16.mxu0 %v1330
  %2106 = vmatpush1.bf16.msra.mxu0 %v1329
  %2107 = vmatprep.subr.bf16.mxu0 %v1328
  %2108 = vmatpush1.bf16.msra.mxu0 %v1327
  %2109 = vmatprep.subr.bf16.mxu0 %v1326
  %2110 = vmatpush1.bf16.msra.mxu0 %v1325
  %2111 = vmatprep.subr.bf16.mxu0 0
  %2112 = vmatpush2.bf16.msra.mxu0 0
  %2113 = vmatprep.subr.bf16.mxu0 0
  %2114 = vmatpush2.bf16.msra.mxu0 0
  %2115 = vmatprep.subr.bf16.mxu0 0
  %2116 = vmatpush2.bf16.msra.mxu0 0
  %2117 = vmatprep.subr.bf16.mxu0 0
  %2118 = vmatpush2.bf16.msra.mxu0 0
  %2119 = vmatprep.subr.bf16.mxu0 0
  %2120 = vmatpush2.bf16.msra.mxu0 0
  %2121 = vmatprep.subr.bf16.mxu0 0
  %2122 = vmatpush2.bf16.msra.mxu0 0
  %2123 = vmatprep.subr.bf16.mxu0 0
  %2124 = vmatpush2.bf16.msra.mxu0 0
  %2125 = vmatprep.subr.bf16.mxu0 0
  %2126 = vmatpush2.bf16.msra.mxu0 0
  %2127 = vmatprep.mubr.bf16.mxu0 0
  %2128 = vmatmul.mubr.bf16.gmra.mxu0 %v2093
  %v2129 = vpop.f32.mrf.mxu0
  %v2130 = vadd.f32 0.0, %v2129
  %v2131 = vpop.f32.mrf.mxu0
  %v2132 = vadd.f32 0.0, %v2131
  %v2133 = vpop.f32.mrf.mxu0
  %v2134 = vpop.f32.mrf.mxu0
  %2135 = vdwg.mxu0
  %v2136 = vrot.slane %v1227, 6
  %v2138 = vadd.f32 %v2130, %v2136
  %v2139 = vadd.f32 %v2132, %v1295
  %v2140 = vxor.u32 %v2138, 2147483648
  %v2141 = vmul.f32 %v2140, 1.442695
  %v2142 = vpow.pop %v2141
  %v2143 = vadd.f32 %v2142, 1.0
  %v2144 = vrcp.pop %v2143
  %v2145 = vmul.f32 1.0, %v2144
  %v2146 = vtanh.pop %v2138
  %v2147 = vxor.u32 %v2139, 2147483648
  %v2148 = vmul.f32 %v2147, 1.442695
  %v2149 = vpow.pop %v2148
  %v2150 = vadd.f32 %v2149, 1.0
  %v2151 = vrcp.pop %v2150
  %v2152 = vmul.f32 1.0, %v2151
  %v2153 = vtanh.pop %v2139
  %v2154 = vmul.f32 %v2145, %v2058
  %2156 = vrot.lane.b32.xlu0 %v2146, 32
  %v2157 = vpop.permute.xlu0 %2156
  %v2159 = vmul.f32 %v2145, %v2157
  %2161 = vrot.lane.b32.xlu0 %v2159, 32
  %v2162 = vpop.permute.xlu0 %2161
  %v2164 = vadd.f32 %v2154, %v2162
  %v2165 = vtanh.pop %v2164
  %2167 = vrot.lane.b32.xlu0 %v2165, 32
  %v2168 = vpop.permute.xlu0 %2167
  %v2170 = vmul.f32 %v2145, %v2168
  %v2171 = vmul.f32 %v2152, %v2075
  %2173 = vrot.lane.b32.xlu0 %v2153, 32
  %v2174 = vpop.permute.xlu0 %2173
  %v2176 = vmul.f32 %v2152, %v2174
  %2178 = vrot.lane.b32.xlu0 %v2176, 32
  %v2179 = vpop.permute.xlu0 %2178
  %v2181 = vadd.f32 %v2171, %v2179
  %v2182 = vtanh.pop %v2181
  %2184 = vrot.lane.b32.xlu0 %v2182, 32
  %v2185 = vpop.permute.xlu0 %2184
  %v2187 = vmul.f32 %v2152, %v2185
  %2189 = vrot.lane.b32.xlu0 %v2187, 96
  %v2190 = vpop.permute.xlu0 %2189
  %v2192 = vsel %vm90, %v1437, %v2190
  %v2193 = vsel %vm90, %v1546, %v2088
  %v2194 = vsel %vm90, %v1654, %v1980
  %v2195 = vsel %vm90, %v1760, %v1871
  %v2196 = vsel %vm90, %v1867, %v1764
  %v2197 = vsel %vm90, %v1976, %v1658
  %v2198 = vsel %vm90, %v2084, %v1550
  %2200 = vrot.lane.b32.xlu0 %v2170, 64
  %v2201 = vpop.permute.xlu0 %2200
  %v2203 = vsel %vm90, %v2201, %v1441
  %v2205 = vrot.slane %v2193, 6
  %v2208 = vrot.slane %v2194, 4
  %v2211 = vrot.slane %v2195, 2
  %v2214 = vrot.slane %v2197, 6
  %v2217 = vrot.slane %v2198, 4
  %v2220 = vrot.slane %v2203, 2
  %v2222 = vsel %vm1120, %v2192, %v2205
  %v2223 = vsel %vm1122, %v2222, %v2208
  %v2224 = vsel %vm1124, %v2223, %v2211
  %v2225 = vsel %vm1120, %v2196, %v2214
  %v2226 = vsel %vm1122, %v2225, %v2217
  %v2227 = vsel %vm1124, %v2226, %v2220
  %v2228 = vsel %vm235, %v2224, 0.0
  %2229 = vadd.xlane.f32.xlu0 %v2228
  %v2230 = vpop.xlane.xlu0 %2229
  %v2231 = vsel %vm235, %v2227, 0.0
  %2232 = vadd.xlane.f32.xlu0 %v2231
  %v2233 = vpop.xlane.xlu0 %2232
  %v2234 = vrcp.pop 64.0
  %v2235 = vmul.f32 %v2230, %v2234
  %v2236 = vmul.f32 %v2233, %v2234
  %v2237 = vsub.f32 %v2224, %v2235
  %v2238 = vsub.f32 %v2227, %v2236
  %v2239 = vmul.f32 %v2237, %v2237
  %v2240 = vmul.f32 %v2238, %v2238
  %v2241 = vsel %vm235, %v2239, 0.0
  %2242 = vadd.xlane.f32.xlu0 %v2241
  %v2243 = vpop.xlane.xlu0 %2242
  %v2244 = vsel %vm235, %v2240, 0.0
  %2245 = vadd.xlane.f32.xlu0 %v2244
  %v2246 = vpop.xlane.xlu0 %2245
  %v2247 = vmul.f32 %v2243, %v2234
  %v2248 = vmul.f32 %v2246, %v2234
  %v2249 = vadd.f32 %v2247, 1e-05
  %v2250 = vadd.f32 %v2248, 1e-05
  %v2251 = vrsqrt.pop %v2249
  %v2252 = vrsqrt.pop %v2250
  %v2253 = vmul.f32 %v2237, %v2251
  %v2254 = vmul.f32 %v2238, %v2252
  %v2255 = vld [vmem:[%s11] sm:$0x1]
  %v2257 = vlaneseq
  %v2258 = vshrl.u32 %v2257, 7
  %v2259 = vsub.s32 0, %v2258
  %v2260 = vrot.slane %v2255, %v2259
  %v2262 = vmul.f32 %v2253, %v2260
  %v2263 = vmul.f32 %v2254, %v2260
  %v2264 = vld [vmem:[%s12] sm:$0x1]
  %v2266 = vlaneseq
  %v2267 = vshrl.u32 %v2266, 7
  %v2268 = vsub.s32 0, %v2267
  %v2269 = vrot.slane %v2264, %v2268
  %v2271 = vadd.f32 %v2262, %v2269
  %v2272 = vadd.f32 %v2263, %v2269
  %v2273 = vpack.c.bf16 %v2272, %v2271
  %v2274 = vld [vmem:[%s13] sm:$0xf]
  %v2275 = vld [vmem:[%s13 + $0x4] sm:$0xf]
  %v2276 = vld [vmem:[%s13 + $0x8] sm:$0xf]
  %v2277 = vld [vmem:[%s13 + $0xc] sm:$0xf]
  %v2278 = vld [vmem:[%s13 + $0x10] sm:$0xf]
  %v2279 = vld [vmem:[%s13 + $0x14] sm:$0xf]
  %v2280 = vld [vmem:[%s13 + $0x18] sm:$0xf]
  %v2281 = vld [vmem:[%s13 + $0x1c] sm:$0xf]
  %v2282 = vld [vmem:[%s14] sm:$0x1]
  %v2284 = vlaneseq
  %v2285 = vshrl.u32 %v2284, 7
  %v2286 = vsub.s32 0, %v2285
  %v2287 = vrot.slane %v2282, %v2286
  %v2297 = vunpack.c.l.b16 %v2274
  %v2298 = vunpack.c.l.b16 %v2275
  %v2299 = vunpack.c.l.b16 %v2276
  %v2300 = vunpack.c.l.b16 %v2277
  %v2301 = vunpack.c.l.b16 %v2278
  %v2302 = vunpack.c.l.b16 %v2279
  %v2303 = vunpack.c.l.b16 %v2280
  %v2304 = vunpack.c.l.b16 %v2281
  %v2305 = vpack.c.b16 %v2298, %v2297
  %v2306 = vpack.c.b16 %v2300, %v2299
  %v2307 = vpack.c.b16 %v2302, %v2301
  %v2308 = vpack.c.b16 %v2304, %v2303
  %v2314 = vsel %vm235, %v2273, 0
  %2316 = vmatprep.subr.bf16.mxu0 0
  %2317 = vmatpush1.bf16.msra.mxu0 0
  %2318 = vmatprep.subr.bf16.mxu0 0
  %2319 = vmatpush1.bf16.msra.mxu0 0
  %2320 = vmatprep.subr.bf16.mxu0 0
  %2321 = vmatpush1.bf16.msra.mxu0 0
  %2322 = vmatprep.subr.bf16.mxu0 0
  %2323 = vmatpush1.bf16.msra.mxu0 0
  %2324 = vmatprep.subr.bf16.mxu0 0
  %2325 = vmatpush1.bf16.msra.mxu0 %v2308
  %2326 = vmatprep.subr.bf16.mxu0 0
  %2327 = vmatpush1.bf16.msra.mxu0 %v2307
  %2328 = vmatprep.subr.bf16.mxu0 0
  %2329 = vmatpush1.bf16.msra.mxu0 %v2306
  %2330 = vmatprep.subr.bf16.mxu0 0
  %2331 = vmatpush1.bf16.msra.mxu0 %v2305
  %2332 = vmatprep.subr.bf16.mxu0 0
  %2333 = vmatpush2.bf16.msra.mxu0 0
  %2334 = vmatprep.subr.bf16.mxu0 0
  %2335 = vmatpush2.bf16.msra.mxu0 0
  %2336 = vmatprep.subr.bf16.mxu0 0
  %2337 = vmatpush2.bf16.msra.mxu0 0
  %2338 = vmatprep.subr.bf16.mxu0 0
  %2339 = vmatpush2.bf16.msra.mxu0 0
  %2340 = vmatprep.subr.bf16.mxu0 0
  %2341 = vmatpush2.bf16.msra.mxu0 0
  %2342 = vmatprep.subr.bf16.mxu0 0
  %2343 = vmatpush2.bf16.msra.mxu0 0
  %2344 = vmatprep.subr.bf16.mxu0 0
  %2345 = vmatpush2.bf16.msra.mxu0 0
  %2346 = vmatprep.subr.bf16.mxu0 0
  %2347 = vmatpush2.bf16.msra.mxu0 0
  %2348 = vmatprep.mubr.bf16.mxu0 0
  %2349 = vmatmul.mubr.bf16.gmra.mxu0 %v2314
  %v2350 = vpop.f32.mrf.mxu0
  %v2351 = vadd.f32 %v2287, %v2350
  %v2352 = vpop.f32.mrf.mxu0
  %v2353 = vpop.f32.mrf.mxu0
  %v2354 = vadd.f32 %v2287, %v2353
  %v2355 = vpop.f32.mrf.mxu0
  %2356 = vdwg.mxu0
  %vm2357 = vcmask 39936
  %2358 = vst.msk [vmem:[%s15] sm:$0xff] %vm2357, %v2351
  %2359 = vst.msk [vmem:[%s15 + $0x8] sm:$0xff] %vm2357, %v2354
  // Predicated region
  $region62: #{forward.9} parent=0 // pred_check
    _
  $region63: #{forward.9} parent=0 // pred_check_branch
    %2361 = sbr.rel (0) target = $region65
  $region64: #{forward.9} parent=0 // pred_region
    _
  $region65: #{forward.9} parent=0 // pred_fallthru
    _
  // Predicated region
  $region66: #{forward.9} parent=0 // pred_check
    _
  $region67: #{forward.9} parent=0 // pred_check_branch
    %2363 = sbr.rel (0) target = $region69
  $region68: #{forward.9} parent=0 // pred_region
    _
  $region69: #{forward.9} parent=0 // pred_fallthru
    _

</llo_original>
